<compile_context>
chip_gen: v7x
topology: tpu7x:2x2x1
jax: 0.10.0
libtpu: 0.0.40
codegen_flags: <defaults>
</compile_context>

<pallas_src>
import functools

import jax
import jax.numpy as jnp
from jax.experimental import pallas as pl
from jax.experimental.pallas import tpu as pltpu


CHANNEL_SIZES = [1, 37, 74, 110, 147, 183, 220, 256, 171, 86, 1]
N_LAYERS = len(CHANNEL_SIZES) - 1
LANE = 128


def _round_up(c, m=LANE):
    return ((c + m - 1) // m) * m


# Per-boundary padded channel widths (128-granular): [128]*4 + [256]*5 + [128]*2
PAD = tuple(_round_up(c) for c in CHANNEL_SIZES)


def _deconvnet_kernel(*refs, n_layers, seq_len, block_rows, pad):
    """Fused Conv1d(k=3, pad=1) stack on one (block_rows, *) row-block.

    refs = [x, w0, b0, w1, b1, ..., w_{n-1}, b_{n-1}, out, h_scratch]
      x        : (block_rows, 1)             f32 flattened NLC input (Cin == 1)
      w0, b0   : (3, pad[1]), (1, pad[1])    f32 layer-0 tap weights / bias
      w_i, b_i : (3, pad[i], pad[i+1]) bf16, (1, pad[i+1]) f32   for i >= 1
      out      : (block_rows, pad[-1])       f32, lane 0 holds the real channel
      h        : (block_rows, max_width)     f32 activation slab (in-place)
    """
    x_ref = refs[0]
    w_refs = refs[1:1 + 2 * n_layers:2]
    b_refs = refs[2:2 + 2 * n_layers:2]
    o_ref = refs[1 + 2 * n_layers]
    h_ref = refs[2 + 2 * n_layers]

    # padding=1 boundary masks, hoisted out of the layer loop: one iota plus one
    # broadcast per distinct activation width.
    pos = jax.lax.broadcasted_iota(jnp.int32, (block_rows, 1), 0) % seq_len
    not_first = pos != 0                 # row has a "previous" neighbor
    not_last = pos != (seq_len - 1)      # row has a "next" neighbor
    widths = sorted({pad[i] for i in range(1, n_layers)})
    keep_prev = {w: jnp.broadcast_to(not_first, (block_rows, w)) for w in widths}
    keep_next = {w: jnp.broadcast_to(not_last, (block_rows, w)) for w in widths}

    def shift_prev(v):   # row r <- row r-1 (zero at sample starts)
        return jnp.where(keep_prev[v.shape[1]],
                         pltpu.roll(v, shift=1, axis=0), 0.0)

    def shift_next(v):   # row r <- row r+1 (zero at sample ends)
        return jnp.where(keep_next[v.shape[1]],
                         pltpu.roll(v, shift=block_rows - 1, axis=0), 0.0)

    # ---- Layer 0 (Cin = 1): three VPU broadcast-FMAs, no matmul. ------------
    c0 = pad[1]
    x_c = x_ref[...].astype(jnp.float32)                    # (R, 1)
    w0 = w_refs[0][...]                                      # (3, c0) f32
    h = (shift_prev(x_c * w0[0:1, :]) + x_c * w0[1:2, :]
         + shift_next(x_c * w0[2:3, :]) + b_refs[0][...])
    h_ref[:, :c0] = jnp.maximum(h, 0.0)

    # ---- Layers 1 .. n-1: one conv == three accumulated bf16 MXU dots. ------
    for i in range(1, n_layers):
        ci, co = pad[i], pad[i + 1]
        x = h_ref[:, :ci]                                    # (R, ci) f32
        xp = shift_prev(x).astype(jnp.bfloat16)
        xn = shift_next(x).astype(jnp.bfloat16)
        xc = x.astype(jnp.bfloat16)
        w = w_refs[i]                                        # (3, ci, co) bf16
        acc = jnp.dot(xp, w[0], preferred_element_type=jnp.float32)
        acc = acc + jnp.dot(xc, w[1], preferred_element_type=jnp.float32)
        acc = acc + jnp.dot(xn, w[2], preferred_element_type=jnp.float32)
        acc = acc + b_refs[i][...]
        if i < n_layers - 1:
            h_ref[:, :co] = jnp.maximum(acc, 0.0)            # ReLU, stay in VMEM
        else:
            o_ref[...] = acc.astype(o_ref.dtype)             # last layer: no ReLU


def init_params(key):
    """Per-layer (w: (3, Cin, Cout) f32, b: (Cout,) f32), torch-style fan-in init."""
    params = []
    for i in range(N_LAYERS):
        cin, cout = CHANNEL_SIZES[i], CHANNEL_SIZES[i + 1]
        key, kw, kb = jax.random.split(key, 3)
        bound = 1.0 / jnp.sqrt(jnp.float32(cin * 3))
        w = jax.random.uniform(kw, (3, cin, cout), jnp.float32, -bound, bound)
        b = jax.random.uniform(kb, (cout,), jnp.float32, -bound, bound)
        params.append((w, b))
    return params


def pack_params(params):
    """Zero-pad each layer to 128-granular widths; layers >= 1 weights -> bf16.

    Padded input channels get zero weight rows and padded output channels get
    zero weights + zero bias, so padded lanes carry exact zeros and never
    perturb the real channels.
    """
    packed = []
    w0, b0 = params[0]                                       # (3, 1, c1), (c1,)
    c1 = PAD[1]
    w0p = jnp.zeros((3, c1), jnp.float32).at[:, :w0.shape[2]].set(w0[:, 0, :])
    b0p = jnp.zeros((1, c1), jnp.float32).at[0, :b0.shape[0]].set(b0)
    packed += [w0p, b0p]
    for i in range(1, N_LAYERS):
        w, b = params[i]
        cin, cout = w.shape[1], w.shape[2]
        ci, co = PAD[i], PAD[i + 1]
        wp = jnp.zeros((3, ci, co), jnp.float32).at[:, :cin, :cout].set(w)
        bp = jnp.zeros((1, co), jnp.float32).at[0, :cout].set(b)
        packed += [wp.astype(jnp.bfloat16), bp]
    return tuple(packed)


def _pick_samples_per_block(n, seq_len, target_rows):
    """Largest divisor s of n with s*seq_len <= target_rows and a sublane-legal
    block (s*seq_len % 8 == 0, or the whole-array block s == n)."""
    legal = [s for s in range(1, n + 1)
             if n % s == 0 and ((s * seq_len) % 8 == 0 or s == n)]
    fitting = [s for s in legal if s * seq_len <= target_rows]
    return max(fitting) if fitting else min(legal)


@functools.partial(jax.jit, static_argnames=("block_rows_target",))
def deconvnet_forward(x_ncl, packed, *, block_rows_target=1024):
    """x_ncl: (N, 1, L) in PyTorch NCL layout -> (N, 1, L)."""
    # TODO(synk): Dropout layers are identity at inference; train-mode masking
    # is not implemented.
    # TODO(synk): for repeated calls, the ~2.3 MB bf16 weight slab could be kept
    # resident / prefetched across calls (cross-pallas_call DMA future).
    n, cin, seq_len = x_ncl.shape
    assert cin == CHANNEL_SIZES[0]
    rows = n * seq_len
    spb = _pick_samples_per_block(n, seq_len, block_rows_target)
    block_rows = spb * seq_len
    n_blocks = n // spb

    # NCL -> flattened NLC column (rows, 1).
    x2d = jnp.transpose(x_ncl, (0, 2, 1)).reshape(rows, cin).astype(jnp.float32)

    kernel = functools.partial(_deconvnet_kernel, n_layers=N_LAYERS,
                               seq_len=seq_len, block_rows=block_rows, pad=PAD)

    in_specs = [pl.BlockSpec((block_rows, cin), lambda i: (i, 0))]
    for arr in packed:   # weights/biases: full-array blocks, constant index map
        zeros = (0,) * arr.ndim
        in_specs.append(pl.BlockSpec(arr.shape, lambda i, z=zeros: z))

    c_out_pad = PAD[-1]
    w_max = max(PAD[1:N_LAYERS])   # widest inter-layer activation (256)

    out2d = pl.pallas_call(
        kernel,
        out_shape=jax.ShapeDtypeStruct((rows, c_out_pad), jnp.float32),
        grid=(n_blocks,),
        in_specs=in_specs,
        out_specs=pl.BlockSpec((block_rows, c_out_pad), lambda i: (i, 0)),
        scratch_shapes=[pltpu.VMEM((block_rows, w_max), jnp.float32)],
        compiler_params=pltpu.CompilerParams(
            dimension_semantics=("parallel",),
            vmem_limit_bytes=48 * 1024 * 1024),
    )(x2d, *packed)

    out = out2d[:, :CHANNEL_SIZES[-1]].reshape(n, seq_len, CHANNEL_SIZES[-1])
    return jnp.transpose(out, (0, 2, 1))   # back to NCL


def _bf16_round(a):
    return a.astype(jnp.bfloat16).astype(jnp.float32)


def deconvnet_reference(x_ncl, params, *, emulate_bf16=False):
    """Pure-JAX reference (lax conv == torch Conv1d cross-correlation).

    With emulate_bf16=True it reproduces the kernel's numerics (bf16-rounded
    weights/activations for layers >= 1, f32 accumulation) up to f32 summation
    order.
    """
    h = x_ncl.astype(jnp.float32)
    for i, (w, b) in enumerate(params):
        if emulate_bf16 and i > 0:
            w = _bf16_round(w)
            h = _bf16_round(h)
        w_oik = jnp.transpose(w, (2, 1, 0))      # (Cout, Cin, K), torch layout
        h = jax.lax.conv_general_dilated(
            h, w_oik, window_strides=(1,), padding=[(1, 1)],
            dimension_numbers=("NCH", "OIH", "NCH"))
        h = h + b[None, :, None]
        if i < len(params) - 1:
            h = jnp.maximum(h, 0.0)
    return h


if __name__ == "__main__":
    key = jax.random.PRNGKey(0)
    kx, kparams = jax.random.split(key)

    # Small NCL input consistent with the module (Cin must be 1).
    batch, length = 4, 16
    x = jax.random.normal(kx, (batch, 1, length), jnp.float32)
    params = init_params(kparams)
    packed = pack_params(params)

    # Exercise both a multi-block parallel grid (2 blocks of 2 samples) and the
    # default single-block path.
    out_grid = deconvnet_forward(x, packed, block_rows_target=32)
    out_one = deconvnet_forward(x, packed, block_rows_target=4096)
    jax.block_until_ready((out_grid, out_one))
    assert out_grid.shape == x.shape and out_one.shape == x.shape

    ref_f32 = deconvnet_reference(x, params)
    ref_bf16 = deconvnet_reference(x, params, emulate_bf16=True)
    tol_q = 1e-3 * (1.0 + float(jnp.max(jnp.abs(ref_bf16))))   # tight, same numerics
    tol_f = 3e-2 * (1.0 + float(jnp.max(jnp.abs(ref_f32))))    # bf16-vs-f32 sanity
    for out in (out_grid, out_one):
        err_q = float(jnp.max(jnp.abs(out - ref_bf16)))
        err_f = float(jnp.max(jnp.abs(out - ref_f32)))
        assert err_q <= tol_q, f"bf16-emulated ref mismatch: {err_q} > {tol_q}"
        assert err_f <= tol_f, f"f32 ref mismatch: {err_f} > {tol_f}"

    print("KERNEL_OK")
</pallas_src>

<mosaic_0001>
module attributes {stable_mosaic.version = 11 : i64} {
  func.func @_deconvnet_kernel(%arg0: i32, %arg1: memref<32x1xf32, #tpu.memory_space<vmem>>, %arg2: memref<3x128xf32, #tpu.memory_space<vmem>>, %arg3: memref<1x128xf32, #tpu.memory_space<vmem>>, %arg4: memref<3x128x128xbf16, #tpu.memory_space<vmem>>, %arg5: memref<1x128xf32, #tpu.memory_space<vmem>>, %arg6: memref<3x128x128xbf16, #tpu.memory_space<vmem>>, %arg7: memref<1x128xf32, #tpu.memory_space<vmem>>, %arg8: memref<3x128x256xbf16, #tpu.memory_space<vmem>>, %arg9: memref<1x256xf32, #tpu.memory_space<vmem>>, %arg10: memref<3x256x256xbf16, #tpu.memory_space<vmem>>, %arg11: memref<1x256xf32, #tpu.memory_space<vmem>>, %arg12: memref<3x256x256xbf16, #tpu.memory_space<vmem>>, %arg13: memref<1x256xf32, #tpu.memory_space<vmem>>, %arg14: memref<3x256x256xbf16, #tpu.memory_space<vmem>>, %arg15: memref<1x256xf32, #tpu.memory_space<vmem>>, %arg16: memref<3x256x256xbf16, #tpu.memory_space<vmem>>, %arg17: memref<1x256xf32, #tpu.memory_space<vmem>>, %arg18: memref<3x256x128xbf16, #tpu.memory_space<vmem>>, %arg19: memref<1x128xf32, #tpu.memory_space<vmem>>, %arg20: memref<3x128x128xbf16, #tpu.memory_space<vmem>>, %arg21: memref<1x128xf32, #tpu.memory_space<vmem>>, %arg22: memref<32x128xf32, #tpu.memory_space<vmem>>, %arg23: memref<32x256xf32, #tpu.memory_space<vmem>>) attributes {dimension_semantics = [#tpu.dimension_semantics<parallel>], iteration_bounds = array<i64: 2>, scalar_prefetch = 0 : i64, scratch_operands = 1 : i64, tpu.core_type = #tpu.core_type<tc>, window_params = [{transform_indices = @transform_0, window_bounds = array<i64: 32, 1>}, {pipeline_mode = #tpu.pipeline_mode<synchronous>, transform_indices = @transform_1, window_bounds = array<i64: 3, 128>}, {pipeline_mode = #tpu.pipeline_mode<synchronous>, transform_indices = @transform_2, window_bounds = array<i64: 1, 128>}, {pipeline_mode = #tpu.pipeline_mode<synchronous>, transform_indices = @transform_3, window_bounds = array<i64: 3, 128, 128>}, {pipeline_mode = #tpu.pipeline_mode<synchronous>, transform_indices = @transform_4, window_bounds = array<i64: 1, 128>}, {pipeline_mode = #tpu.pipeline_mode<synchronous>, transform_indices = @transform_5, window_bounds = array<i64: 3, 128, 128>}, {pipeline_mode = #tpu.pipeline_mode<synchronous>, transform_indices = @transform_6, window_bounds = array<i64: 1, 128>}, {pipeline_mode = #tpu.pipeline_mode<synchronous>, transform_indices = @transform_7, window_bounds = array<i64: 3, 128, 256>}, {pipeline_mode = #tpu.pipeline_mode<synchronous>, transform_indices = @transform_8, window_bounds = array<i64: 1, 256>}, {pipeline_mode = #tpu.pipeline_mode<synchronous>, transform_indices = @transform_9, window_bounds = array<i64: 3, 256, 256>}, {pipeline_mode = #tpu.pipeline_mode<synchronous>, transform_indices = @transform_10, window_bounds = array<i64: 1, 256>}, {pipeline_mode = #tpu.pipeline_mode<synchronous>, transform_indices = @transform_11, window_bounds = array<i64: 3, 256, 256>}, {pipeline_mode = #tpu.pipeline_mode<synchronous>, transform_indices = @transform_12, window_bounds = array<i64: 1, 256>}, {pipeline_mode = #tpu.pipeline_mode<synchronous>, transform_indices = @transform_13, window_bounds = array<i64: 3, 256, 256>}, {pipeline_mode = #tpu.pipeline_mode<synchronous>, transform_indices = @transform_14, window_bounds = array<i64: 1, 256>}, {pipeline_mode = #tpu.pipeline_mode<synchronous>, transform_indices = @transform_15, window_bounds = array<i64: 3, 256, 256>}, {pipeline_mode = #tpu.pipeline_mode<synchronous>, transform_indices = @transform_16, window_bounds = array<i64: 1, 256>}, {pipeline_mode = #tpu.pipeline_mode<synchronous>, transform_indices = @transform_17, window_bounds = array<i64: 3, 256, 128>}, {pipeline_mode = #tpu.pipeline_mode<synchronous>, transform_indices = @transform_18, window_bounds = array<i64: 1, 128>}, {pipeline_mode = #tpu.pipeline_mode<synchronous>, transform_indices = @transform_19, window_bounds = array<i64: 3, 128, 128>}, {pipeline_mode = #tpu.pipeline_mode<synchronous>, transform_indices = @transform_20, window_bounds = array<i64: 1, 128>}, {transform_indices = @transform_21, window_bounds = array<i64: 32, 128>}]} {
    %0 = tpu.iota {dimensions = array<i32: 0>} : vector<32x1xi32>
    %c16_i32 = arith.constant 16 : i32
    %c0_i32 = arith.constant 0 : i32
    %1 = arith.cmpi eq, %c16_i32, %c0_i32 : i32
    %c1_i32 = arith.constant 1 : i32
    %2 = arith.select %1, %c1_i32, %c16_i32 : i32
    %3 = vector.broadcast %2 : i32 to vector<32x1xi32>
    %4 = arith.remsi %0, %3 : vector<32x1xi32>
    %c0_i32_0 = arith.constant 0 : i32
    %5 = vector.broadcast %c0_i32_0 : i32 to vector<32x1xi32>
    %6 = arith.cmpi ne, %4, %5 : vector<32x1xi32>
    %c0_i32_1 = arith.constant 0 : i32
    %7 = vector.broadcast %c0_i32_1 : i32 to vector<32x1xi32>
    %8 = arith.cmpi slt, %4, %7 : vector<32x1xi32>
    %c0_i32_2 = arith.constant 0 : i32
    %9 = arith.cmpi slt, %2, %c0_i32_2 : i32
    %10 = vector.broadcast %9 : i1 to vector<32x1xi1>
    %11 = vector.broadcast %10 : vector<32x1xi1> to vector<32x1xi1>
    %12 = arith.xori %8, %11 : vector<32x1xi1>
    %13 = arith.andi %12, %6 : vector<32x1xi1>
    %14 = vector.broadcast %2 : i32 to vector<32x1xi32>
    %15 = arith.addi %4, %14 : vector<32x1xi32>
    %16 = arith.select %13, %15, %4 : vector<32x1xi1>, vector<32x1xi32>
    %c0_i32_3 = arith.constant 0 : i32
    %17 = vector.broadcast %c0_i32_3 : i32 to vector<32x1xi32>
    %18 = arith.cmpi ne, %16, %17 : vector<32x1xi32>
    %c15_i32 = arith.constant 15 : i32
    %19 = vector.broadcast %c15_i32 : i32 to vector<32x1xi32>
    %20 = arith.cmpi ne, %16, %19 : vector<32x1xi32>
    %21 = vector.shape_cast %18 : vector<32x1xi1> to vector<32x1xi1>
    %22 = vector.broadcast %21 : vector<32x1xi1> to vector<32x128xi1>
    %23 = vector.shape_cast %18 : vector<32x1xi1> to vector<32x1xi1>
    %24 = vector.broadcast %23 : vector<32x1xi1> to vector<32x256xi1>
    %25 = vector.shape_cast %20 : vector<32x1xi1> to vector<32x1xi1>
    %26 = vector.broadcast %25 : vector<32x1xi1> to vector<32x128xi1>
    %27 = vector.shape_cast %20 : vector<32x1xi1> to vector<32x1xi1>
    %28 = vector.broadcast %27 : vector<32x1xi1> to vector<32x256xi1>
    %c0 = arith.constant 0 : index
    %c0_4 = arith.constant 0 : index
    %29 = vector.load %arg1[%c0, %c0_4] : memref<32x1xf32, #tpu.memory_space<vmem>>, vector<32x1xf32>
    %c0_5 = arith.constant 0 : index
    %c0_6 = arith.constant 0 : index
    %30 = vector.load %arg2[%c0_5, %c0_6] : memref<3x128xf32, #tpu.memory_space<vmem>>, vector<3x128xf32>
    %31 = vector.extract_strided_slice %30 {offsets = [0, 0], sizes = [1, 128], strides = [1, 1]} : vector<3x128xf32> to vector<1x128xf32>
    %32 = vector.broadcast %29 : vector<32x1xf32> to vector<32x128xf32>
    %33 = vector.broadcast %31 : vector<1x128xf32> to vector<32x128xf32>
    %34 = arith.mulf %32, %33 : vector<32x128xf32>
    %c1_i32_7 = arith.constant 1 : i32
    %35 = tpu.dynamic_rotate %34 by %c1_i32_7 dim 0 : vector<32x128xf32>, i32 -> vector<32x128xf32>
    %cst = arith.constant 0.000000e+00 : f32
    %36 = vector.broadcast %cst : f32 to vector<32x128xf32>
    %37 = arith.select %22, %35, %36 : vector<32x128xi1>, vector<32x128xf32>
    %38 = vector.extract_strided_slice %30 {offsets = [1, 0], sizes = [1, 128], strides = [1, 1]} : vector<3x128xf32> to vector<1x128xf32>
    %39 = vector.broadcast %29 : vector<32x1xf32> to vector<32x128xf32>
    %40 = vector.broadcast %38 : vector<1x128xf32> to vector<32x128xf32>
    %41 = arith.mulf %39, %40 : vector<32x128xf32>
    %42 = arith.addf %37, %41 : vector<32x128xf32>
    %43 = vector.extract_strided_slice %30 {offsets = [2, 0], sizes = [1, 128], strides = [1, 1]} : vector<3x128xf32> to vector<1x128xf32>
    %44 = vector.broadcast %29 : vector<32x1xf32> to vector<32x128xf32>
    %45 = vector.broadcast %43 : vector<1x128xf32> to vector<32x128xf32>
    %46 = arith.mulf %44, %45 : vector<32x128xf32>
    %c31_i32 = arith.constant 31 : i32
    %47 = tpu.dynamic_rotate %46 by %c31_i32 dim 0 : vector<32x128xf32>, i32 -> vector<32x128xf32>
    %cst_8 = arith.constant 0.000000e+00 : f32
    %48 = vector.broadcast %cst_8 : f32 to vector<32x128xf32>
    %49 = arith.select %26, %47, %48 : vector<32x128xi1>, vector<32x128xf32>
    %50 = arith.addf %42, %49 : vector<32x128xf32>
    %c0_9 = arith.constant 0 : index
    %c0_10 = arith.constant 0 : index
    %51 = vector.load %arg3[%c0_9, %c0_10] : memref<1x128xf32, #tpu.memory_space<vmem>>, vector<1x128xf32>
    %52 = vector.broadcast %51 : vector<1x128xf32> to vector<32x128xf32>
    %53 = arith.addf %50, %52 : vector<32x128xf32>
    %cst_11 = arith.constant 0.000000e+00 : f32
    %54 = vector.broadcast %cst_11 : f32 to vector<32x128xf32>
    %55 = arith.maximumf %53, %54 : vector<32x128xf32>
    %c0_12 = arith.constant 0 : index
    %c0_13 = arith.constant 0 : index
    %56 = vector.load %arg23[%c0_12, %c0_13] : memref<32x256xf32, #tpu.memory_space<vmem>>, vector<32x128xf32>
    tpu.vector_store %arg23[%c0_12, %c0_13], %55 {strides = array<i32>} : memref<32x256xf32, #tpu.memory_space<vmem>>, vector<32x128xf32>,
    %c0_14 = arith.constant 0 : index
    %c0_15 = arith.constant 0 : index
    %57 = vector.load %arg23[%c0_14, %c0_15] : memref<32x256xf32, #tpu.memory_space<vmem>>, vector<32x128xf32>
    %c1_i32_16 = arith.constant 1 : i32
    %58 = tpu.dynamic_rotate %57 by %c1_i32_16 dim 0 : vector<32x128xf32>, i32 -> vector<32x128xf32>
    %cst_17 = arith.constant 0.000000e+00 : f32
    %59 = vector.broadcast %cst_17 : f32 to vector<32x128xf32>
    %60 = arith.select %22, %58, %59 : vector<32x128xi1>, vector<32x128xf32>
    %61 = arith.truncf %60 : vector<32x128xf32> to vector<32x128xbf16>
    %c31_i32_18 = arith.constant 31 : i32
    %62 = tpu.dynamic_rotate %57 by %c31_i32_18 dim 0 : vector<32x128xf32>, i32 -> vector<32x128xf32>
    %cst_19 = arith.constant 0.000000e+00 : f32
    %63 = vector.broadcast %cst_19 : f32 to vector<32x128xf32>
    %64 = arith.select %26, %62, %63 : vector<32x128xi1>, vector<32x128xf32>
    %65 = arith.truncf %64 : vector<32x128xf32> to vector<32x128xbf16>
    %66 = arith.truncf %57 : vector<32x128xf32> to vector<32x128xbf16>
    %c0_20 = arith.constant 0 : index
    %c0_21 = arith.constant 0 : index
    %c0_22 = arith.constant 0 : index
    %67 = vector.load %arg4[%c0_20, %c0_21, %c0_22] : memref<3x128x128xbf16, #tpu.memory_space<vmem>>, vector<1x128x128xbf16>
    %68 = vector.shape_cast %67 : vector<1x128x128xbf16> to vector<128x128xbf16>
    %cst_23 = arith.constant dense<0.000000e+00> : vector<32x128xf32>
    %69 = tpu.matmul %61, %68, %cst_23 {dimension_numbers = #tpu.dot_dimension_numbers<[1], [0], [0], [1], [0, 0, 1, 1], [], []>} : vector<32x128xbf16>, vector<128x128xbf16>, vector<32x128xf32> -> vector<32x128xf32>
    %c1 = arith.constant 1 : index
    %c0_24 = arith.constant 0 : index
    %c0_25 = arith.constant 0 : index
    %70 = vector.load %arg4[%c1, %c0_24, %c0_25] : memref<3x128x128xbf16, #tpu.memory_space<vmem>>, vector<1x128x128xbf16>
    %71 = vector.shape_cast %70 : vector<1x128x128xbf16> to vector<128x128xbf16>
    %cst_26 = arith.constant dense<0.000000e+00> : vector<32x128xf32>
    %72 = tpu.matmul %66, %71, %cst_26 {dimension_numbers = #tpu.dot_dimension_numbers<[1], [0], [0], [1], [0, 0, 1, 1], [], []>} : vector<32x128xbf16>, vector<128x128xbf16>, vector<32x128xf32> -> vector<32x128xf32>
    %73 = arith.addf %69, %72 : vector<32x128xf32>
    %c2 = arith.constant 2 : index
    %c0_27 = arith.constant 0 : index
    %c0_28 = arith.constant 0 : index
    %74 = vector.load %arg4[%c2, %c0_27, %c0_28] : memref<3x128x128xbf16, #tpu.memory_space<vmem>>, vector<1x128x128xbf16>
    %75 = vector.shape_cast %74 : vector<1x128x128xbf16> to vector<128x128xbf16>
    %cst_29 = arith.constant dense<0.000000e+00> : vector<32x128xf32>
    %76 = tpu.matmul %65, %75, %cst_29 {dimension_numbers = #tpu.dot_dimension_numbers<[1], [0], [0], [1], [0, 0, 1, 1], [], []>} : vector<32x128xbf16>, vector<128x128xbf16>, vector<32x128xf32> -> vector<32x128xf32>
    %77 = arith.addf %73, %76 : vector<32x128xf32>
    %c0_30 = arith.constant 0 : index
    %c0_31 = arith.constant 0 : index
    %78 = vector.load %arg5[%c0_30, %c0_31] : memref<1x128xf32, #tpu.memory_space<vmem>>, vector<1x128xf32>
    %79 = vector.broadcast %78 : vector<1x128xf32> to vector<32x128xf32>
    %80 = arith.addf %77, %79 : vector<32x128xf32>
    %cst_32 = arith.constant 0.000000e+00 : f32
    %81 = vector.broadcast %cst_32 : f32 to vector<32x128xf32>
    %82 = arith.maximumf %80, %81 : vector<32x128xf32>
    %c0_33 = arith.constant 0 : index
    %c0_34 = arith.constant 0 : index
    %83 = vector.load %arg23[%c0_33, %c0_34] : memref<32x256xf32, #tpu.memory_space<vmem>>, vector<32x128xf32>
    tpu.vector_store %arg23[%c0_33, %c0_34], %82 {strides = array<i32>} : memref<32x256xf32, #tpu.memory_space<vmem>>, vector<32x128xf32>,
    %c0_35 = arith.constant 0 : index
    %c0_36 = arith.constant 0 : index
    %84 = vector.load %arg23[%c0_35, %c0_36] : memref<32x256xf32, #tpu.memory_space<vmem>>, vector<32x128xf32>
    %c1_i32_37 = arith.constant 1 : i32
    %85 = tpu.dynamic_rotate %84 by %c1_i32_37 dim 0 : vector<32x128xf32>, i32 -> vector<32x128xf32>
    %cst_38 = arith.constant 0.000000e+00 : f32
    %86 = vector.broadcast %cst_38 : f32 to vector<32x128xf32>
    %87 = arith.select %22, %85, %86 : vector<32x128xi1>, vector<32x128xf32>
    %88 = arith.truncf %87 : vector<32x128xf32> to vector<32x128xbf16>
    %c31_i32_39 = arith.constant 31 : i32
    %89 = tpu.dynamic_rotate %84 by %c31_i32_39 dim 0 : vector<32x128xf32>, i32 -> vector<32x128xf32>
    %cst_40 = arith.constant 0.000000e+00 : f32
    %90 = vector.broadcast %cst_40 : f32 to vector<32x128xf32>
    %91 = arith.select %26, %89, %90 : vector<32x128xi1>, vector<32x128xf32>
    %92 = arith.truncf %91 : vector<32x128xf32> to vector<32x128xbf16>
    %93 = arith.truncf %84 : vector<32x128xf32> to vector<32x128xbf16>
    %c0_41 = arith.constant 0 : index
    %c0_42 = arith.constant 0 : index
    %c0_43 = arith.constant 0 : index
    %94 = vector.load %arg6[%c0_41, %c0_42, %c0_43] : memref<3x128x128xbf16, #tpu.memory_space<vmem>>, vector<1x128x128xbf16>
    %95 = vector.shape_cast %94 : vector<1x128x128xbf16> to vector<128x128xbf16>
    %cst_44 = arith.constant dense<0.000000e+00> : vector<32x128xf32>
    %96 = tpu.matmul %88, %95, %cst_44 {dimension_numbers = #tpu.dot_dimension_numbers<[1], [0], [0], [1], [0, 0, 1, 1], [], []>} : vector<32x128xbf16>, vector<128x128xbf16>, vector<32x128xf32> -> vector<32x128xf32>
    %c1_45 = arith.constant 1 : index
    %c0_46 = arith.constant 0 : index
    %c0_47 = arith.constant 0 : index
    %97 = vector.load %arg6[%c1_45, %c0_46, %c0_47] : memref<3x128x128xbf16, #tpu.memory_space<vmem>>, vector<1x128x128xbf16>
    %98 = vector.shape_cast %97 : vector<1x128x128xbf16> to vector<128x128xbf16>
    %cst_48 = arith.constant dense<0.000000e+00> : vector<32x128xf32>
    %99 = tpu.matmul %93, %98, %cst_48 {dimension_numbers = #tpu.dot_dimension_numbers<[1], [0], [0], [1], [0, 0, 1, 1], [], []>} : vector<32x128xbf16>, vector<128x128xbf16>, vector<32x128xf32> -> vector<32x128xf32>
    %100 = arith.addf %96, %99 : vector<32x128xf32>
    %c2_49 = arith.constant 2 : index
    %c0_50 = arith.constant 0 : index
    %c0_51 = arith.constant 0 : index
    %101 = vector.load %arg6[%c2_49, %c0_50, %c0_51] : memref<3x128x128xbf16, #tpu.memory_space<vmem>>, vector<1x128x128xbf16>
    %102 = vector.shape_cast %101 : vector<1x128x128xbf16> to vector<128x128xbf16>
    %cst_52 = arith.constant dense<0.000000e+00> : vector<32x128xf32>
    %103 = tpu.matmul %92, %102, %cst_52 {dimension_numbers = #tpu.dot_dimension_numbers<[1], [0], [0], [1], [0, 0, 1, 1], [], []>} : vector<32x128xbf16>, vector<128x128xbf16>, vector<32x128xf32> -> vector<32x128xf32>
    %104 = arith.addf %100, %103 : vector<32x128xf32>
    %c0_53 = arith.constant 0 : index
    %c0_54 = arith.constant 0 : index
    %105 = vector.load %arg7[%c0_53, %c0_54] : memref<1x128xf32, #tpu.memory_space<vmem>>, vector<1x128xf32>
    %106 = vector.broadcast %105 : vector<1x128xf32> to vector<32x128xf32>
    %107 = arith.addf %104, %106 : vector<32x128xf32>
    %cst_55 = arith.constant 0.000000e+00 : f32
    %108 = vector.broadcast %cst_55 : f32 to vector<32x128xf32>
    %109 = arith.maximumf %107, %108 : vector<32x128xf32>
    %c0_56 = arith.constant 0 : index
    %c0_57 = arith.constant 0 : index
    %110 = vector.load %arg23[%c0_56, %c0_57] : memref<32x256xf32, #tpu.memory_space<vmem>>, vector<32x128xf32>
    tpu.vector_store %arg23[%c0_56, %c0_57], %109 {strides = array<i32>} : memref<32x256xf32, #tpu.memory_space<vmem>>, vector<32x128xf32>,
    %c0_58 = arith.constant 0 : index
    %c0_59 = arith.constant 0 : index
    %111 = vector.load %arg23[%c0_58, %c0_59] : memref<32x256xf32, #tpu.memory_space<vmem>>, vector<32x128xf32>
    %c1_i32_60 = arith.constant 1 : i32
    %112 = tpu.dynamic_rotate %111 by %c1_i32_60 dim 0 : vector<32x128xf32>, i32 -> vector<32x128xf32>
    %cst_61 = arith.constant 0.000000e+00 : f32
    %113 = vector.broadcast %cst_61 : f32 to vector<32x128xf32>
    %114 = arith.select %22, %112, %113 : vector<32x128xi1>, vector<32x128xf32>
    %115 = arith.truncf %114 : vector<32x128xf32> to vector<32x128xbf16>
    %c31_i32_62 = arith.constant 31 : i32
    %116 = tpu.dynamic_rotate %111 by %c31_i32_62 dim 0 : vector<32x128xf32>, i32 -> vector<32x128xf32>
    %cst_63 = arith.constant 0.000000e+00 : f32
    %117 = vector.broadcast %cst_63 : f32 to vector<32x128xf32>
    %118 = arith.select %26, %116, %117 : vector<32x128xi1>, vector<32x128xf32>
    %119 = arith.truncf %118 : vector<32x128xf32> to vector<32x128xbf16>
    %120 = arith.truncf %111 : vector<32x128xf32> to vector<32x128xbf16>
    %c0_64 = arith.constant 0 : index
    %c0_65 = arith.constant 0 : index
    %c0_66 = arith.constant 0 : index
    %121 = vector.load %arg8[%c0_64, %c0_65, %c0_66] : memref<3x128x256xbf16, #tpu.memory_space<vmem>>, vector<1x128x256xbf16>
    %122 = vector.shape_cast %121 : vector<1x128x256xbf16> to vector<128x256xbf16>
    %cst_67 = arith.constant dense<0.000000e+00> : vector<32x256xf32>
    %123 = tpu.matmul %115, %122, %cst_67 {dimension_numbers = #tpu.dot_dimension_numbers<[1], [0], [0], [1], [0, 0, 1, 1], [], []>} : vector<32x128xbf16>, vector<128x256xbf16>, vector<32x256xf32> -> vector<32x256xf32>
    %c1_68 = arith.constant 1 : index
    %c0_69 = arith.constant 0 : index
    %c0_70 = arith.constant 0 : index
    %124 = vector.load %arg8[%c1_68, %c0_69, %c0_70] : memref<3x128x256xbf16, #tpu.memory_space<vmem>>, vector<1x128x256xbf16>
    %125 = vector.shape_cast %124 : vector<1x128x256xbf16> to vector<128x256xbf16>
    %cst_71 = arith.constant dense<0.000000e+00> : vector<32x256xf32>
    %126 = tpu.matmul %120, %125, %cst_71 {dimension_numbers = #tpu.dot_dimension_numbers<[1], [0], [0], [1], [0, 0, 1, 1], [], []>} : vector<32x128xbf16>, vector<128x256xbf16>, vector<32x256xf32> -> vector<32x256xf32>
    %127 = arith.addf %123, %126 : vector<32x256xf32>
    %c2_72 = arith.constant 2 : index
    %c0_73 = arith.constant 0 : index
    %c0_74 = arith.constant 0 : index
    %128 = vector.load %arg8[%c2_72, %c0_73, %c0_74] : memref<3x128x256xbf16, #tpu.memory_space<vmem>>, vector<1x128x256xbf16>
    %129 = vector.shape_cast %128 : vector<1x128x256xbf16> to vector<128x256xbf16>
    %cst_75 = arith.constant dense<0.000000e+00> : vector<32x256xf32>
    %130 = tpu.matmul %119, %129, %cst_75 {dimension_numbers = #tpu.dot_dimension_numbers<[1], [0], [0], [1], [0, 0, 1, 1], [], []>} : vector<32x128xbf16>, vector<128x256xbf16>, vector<32x256xf32> -> vector<32x256xf32>
    %131 = arith.addf %127, %130 : vector<32x256xf32>
    %c0_76 = arith.constant 0 : index
    %c0_77 = arith.constant 0 : index
    %132 = vector.load %arg9[%c0_76, %c0_77] : memref<1x256xf32, #tpu.memory_space<vmem>>, vector<1x256xf32>
    %133 = vector.broadcast %132 : vector<1x256xf32> to vector<32x256xf32>
    %134 = arith.addf %131, %133 : vector<32x256xf32>
    %cst_78 = arith.constant 0.000000e+00 : f32
    %135 = vector.broadcast %cst_78 : f32 to vector<32x256xf32>
    %136 = arith.maximumf %134, %135 : vector<32x256xf32>
    %c0_79 = arith.constant 0 : index
    %c0_80 = arith.constant 0 : index
    %137 = vector.load %arg23[%c0_79, %c0_80] : memref<32x256xf32, #tpu.memory_space<vmem>>, vector<32x256xf32>
    tpu.vector_store %arg23[%c0_79, %c0_80], %136 {strides = array<i32>} : memref<32x256xf32, #tpu.memory_space<vmem>>, vector<32x256xf32>,
    %c0_81 = arith.constant 0 : index
    %c0_82 = arith.constant 0 : index
    %138 = vector.load %arg23[%c0_81, %c0_82] : memref<32x256xf32, #tpu.memory_space<vmem>>, vector<32x256xf32>
    %c1_i32_83 = arith.constant 1 : i32
    %139 = tpu.dynamic_rotate %138 by %c1_i32_83 dim 0 : vector<32x256xf32>, i32 -> vector<32x256xf32>
    %cst_84 = arith.constant 0.000000e+00 : f32
    %140 = vector.broadcast %cst_84 : f32 to vector<32x256xf32>
    %141 = arith.select %24, %139, %140 : vector<32x256xi1>, vector<32x256xf32>
    %142 = arith.truncf %141 : vector<32x256xf32> to vector<32x256xbf16>
    %c31_i32_85 = arith.constant 31 : i32
    %143 = tpu.dynamic_rotate %138 by %c31_i32_85 dim 0 : vector<32x256xf32>, i32 -> vector<32x256xf32>
    %cst_86 = arith.constant 0.000000e+00 : f32
    %144 = vector.broadcast %cst_86 : f32 to vector<32x256xf32>
    %145 = arith.select %28, %143, %144 : vector<32x256xi1>, vector<32x256xf32>
    %146 = arith.truncf %145 : vector<32x256xf32> to vector<32x256xbf16>
    %147 = arith.truncf %138 : vector<32x256xf32> to vector<32x256xbf16>
    %c0_87 = arith.constant 0 : index
    %c0_88 = arith.constant 0 : index
    %c0_89 = arith.constant 0 : index
    %148 = vector.load %arg10[%c0_87, %c0_88, %c0_89] : memref<3x256x256xbf16, #tpu.memory_space<vmem>>, vector<1x256x256xbf16>
    %149 = vector.shape_cast %148 : vector<1x256x256xbf16> to vector<256x256xbf16>
    %cst_90 = arith.constant dense<0.000000e+00> : vector<32x256xf32>
    %150 = tpu.matmul %142, %149, %cst_90 {dimension_numbers = #tpu.dot_dimension_numbers<[1], [0], [0], [1], [0, 0, 1, 1], [], []>} : vector<32x256xbf16>, vector<256x256xbf16>, vector<32x256xf32> -> vector<32x256xf32>
    %c1_91 = arith.constant 1 : index
    %c0_92 = arith.constant 0 : index
    %c0_93 = arith.constant 0 : index
    %151 = vector.load %arg10[%c1_91, %c0_92, %c0_93] : memref<3x256x256xbf16, #tpu.memory_space<vmem>>, vector<1x256x256xbf16>
    %152 = vector.shape_cast %151 : vector<1x256x256xbf16> to vector<256x256xbf16>
    %cst_94 = arith.constant dense<0.000000e+00> : vector<32x256xf32>
    %153 = tpu.matmul %147, %152, %cst_94 {dimension_numbers = #tpu.dot_dimension_numbers<[1], [0], [0], [1], [0, 0, 1, 1], [], []>} : vector<32x256xbf16>, vector<256x256xbf16>, vector<32x256xf32> -> vector<32x256xf32>
    %154 = arith.addf %150, %153 : vector<32x256xf32>
    %c2_95 = arith.constant 2 : index
    %c0_96 = arith.constant 0 : index
    %c0_97 = arith.constant 0 : index
    %155 = vector.load %arg10[%c2_95, %c0_96, %c0_97] : memref<3x256x256xbf16, #tpu.memory_space<vmem>>, vector<1x256x256xbf16>
    %156 = vector.shape_cast %155 : vector<1x256x256xbf16> to vector<256x256xbf16>
    %cst_98 = arith.constant dense<0.000000e+00> : vector<32x256xf32>
    %157 = tpu.matmul %146, %156, %cst_98 {dimension_numbers = #tpu.dot_dimension_numbers<[1], [0], [0], [1], [0, 0, 1, 1], [], []>} : vector<32x256xbf16>, vector<256x256xbf16>, vector<32x256xf32> -> vector<32x256xf32>
    %158 = arith.addf %154, %157 : vector<32x256xf32>
    %c0_99 = arith.constant 0 : index
    %c0_100 = arith.constant 0 : index
    %159 = vector.load %arg11[%c0_99, %c0_100] : memref<1x256xf32, #tpu.memory_space<vmem>>, vector<1x256xf32>
    %160 = vector.broadcast %159 : vector<1x256xf32> to vector<32x256xf32>
    %161 = arith.addf %158, %160 : vector<32x256xf32>
    %cst_101 = arith.constant 0.000000e+00 : f32
    %162 = vector.broadcast %cst_101 : f32 to vector<32x256xf32>
    %163 = arith.maximumf %161, %162 : vector<32x256xf32>
    %c0_102 = arith.constant 0 : index
    %c0_103 = arith.constant 0 : index
    %164 = vector.load %arg23[%c0_102, %c0_103] : memref<32x256xf32, #tpu.memory_space<vmem>>, vector<32x256xf32>
    tpu.vector_store %arg23[%c0_102, %c0_103], %163 {strides = array<i32>} : memref<32x256xf32, #tpu.memory_space<vmem>>, vector<32x256xf32>,
    %c0_104 = arith.constant 0 : index
    %c0_105 = arith.constant 0 : index
    %165 = vector.load %arg23[%c0_104, %c0_105] : memref<32x256xf32, #tpu.memory_space<vmem>>, vector<32x256xf32>
    %c1_i32_106 = arith.constant 1 : i32
    %166 = tpu.dynamic_rotate %165 by %c1_i32_106 dim 0 : vector<32x256xf32>, i32 -> vector<32x256xf32>
    %cst_107 = arith.constant 0.000000e+00 : f32
    %167 = vector.broadcast %cst_107 : f32 to vector<32x256xf32>
    %168 = arith.select %24, %166, %167 : vector<32x256xi1>, vector<32x256xf32>
    %169 = arith.truncf %168 : vector<32x256xf32> to vector<32x256xbf16>
    %c31_i32_108 = arith.constant 31 : i32
    %170 = tpu.dynamic_rotate %165 by %c31_i32_108 dim 0 : vector<32x256xf32>, i32 -> vector<32x256xf32>
    %cst_109 = arith.constant 0.000000e+00 : f32
    %171 = vector.broadcast %cst_109 : f32 to vector<32x256xf32>
    %172 = arith.select %28, %170, %171 : vector<32x256xi1>, vector<32x256xf32>
    %173 = arith.truncf %172 : vector<32x256xf32> to vector<32x256xbf16>
    %174 = arith.truncf %165 : vector<32x256xf32> to vector<32x256xbf16>
    %c0_110 = arith.constant 0 : index
    %c0_111 = arith.constant 0 : index
    %c0_112 = arith.constant 0 : index
    %175 = vector.load %arg12[%c0_110, %c0_111, %c0_112] : memref<3x256x256xbf16, #tpu.memory_space<vmem>>, vector<1x256x256xbf16>
    %176 = vector.shape_cast %175 : vector<1x256x256xbf16> to vector<256x256xbf16>
    %cst_113 = arith.constant dense<0.000000e+00> : vector<32x256xf32>
    %177 = tpu.matmul %169, %176, %cst_113 {dimension_numbers = #tpu.dot_dimension_numbers<[1], [0], [0], [1], [0, 0, 1, 1], [], []>} : vector<32x256xbf16>, vector<256x256xbf16>, vector<32x256xf32> -> vector<32x256xf32>
    %c1_114 = arith.constant 1 : index
    %c0_115 = arith.constant 0 : index
    %c0_116 = arith.constant 0 : index
    %178 = vector.load %arg12[%c1_114, %c0_115, %c0_116] : memref<3x256x256xbf16, #tpu.memory_space<vmem>>, vector<1x256x256xbf16>
    %179 = vector.shape_cast %178 : vector<1x256x256xbf16> to vector<256x256xbf16>
    %cst_117 = arith.constant dense<0.000000e+00> : vector<32x256xf32>
    %180 = tpu.matmul %174, %179, %cst_117 {dimension_numbers = #tpu.dot_dimension_numbers<[1], [0], [0], [1], [0, 0, 1, 1], [], []>} : vector<32x256xbf16>, vector<256x256xbf16>, vector<32x256xf32> -> vector<32x256xf32>
    %181 = arith.addf %177, %180 : vector<32x256xf32>
    %c2_118 = arith.constant 2 : index
    %c0_119 = arith.constant 0 : index
    %c0_120 = arith.constant 0 : index
    %182 = vector.load %arg12[%c2_118, %c0_119, %c0_120] : memref<3x256x256xbf16, #tpu.memory_space<vmem>>, vector<1x256x256xbf16>
    %183 = vector.shape_cast %182 : vector<1x256x256xbf16> to vector<256x256xbf16>
    %cst_121 = arith.constant dense<0.000000e+00> : vector<32x256xf32>
    %184 = tpu.matmul %173, %183, %cst_121 {dimension_numbers = #tpu.dot_dimension_numbers<[1], [0], [0], [1], [0, 0, 1, 1], [], []>} : vector<32x256xbf16>, vector<256x256xbf16>, vector<32x256xf32> -> vector<32x256xf32>
    %185 = arith.addf %181, %184 : vector<32x256xf32>
    %c0_122 = arith.constant 0 : index
    %c0_123 = arith.constant 0 : index
    %186 = vector.load %arg13[%c0_122, %c0_123] : memref<1x256xf32, #tpu.memory_space<vmem>>, vector<1x256xf32>
    %187 = vector.broadcast %186 : vector<1x256xf32> to vector<32x256xf32>
    %188 = arith.addf %185, %187 : vector<32x256xf32>
    %cst_124 = arith.constant 0.000000e+00 : f32
    %189 = vector.broadcast %cst_124 : f32 to vector<32x256xf32>
    %190 = arith.maximumf %188, %189 : vector<32x256xf32>
    %c0_125 = arith.constant 0 : index
    %c0_126 = arith.constant 0 : index
    %191 = vector.load %arg23[%c0_125, %c0_126] : memref<32x256xf32, #tpu.memory_space<vmem>>, vector<32x256xf32>
    tpu.vector_store %arg23[%c0_125, %c0_126], %190 {strides = array<i32>} : memref<32x256xf32, #tpu.memory_space<vmem>>, vector<32x256xf32>,
    %c0_127 = arith.constant 0 : index
    %c0_128 = arith.constant 0 : index
    %192 = vector.load %arg23[%c0_127, %c0_128] : memref<32x256xf32, #tpu.memory_space<vmem>>, vector<32x256xf32>
    %c1_i32_129 = arith.constant 1 : i32
    %193 = tpu.dynamic_rotate %192 by %c1_i32_129 dim 0 : vector<32x256xf32>, i32 -> vector<32x256xf32>
    %cst_130 = arith.constant 0.000000e+00 : f32
    %194 = vector.broadcast %cst_130 : f32 to vector<32x256xf32>
    %195 = arith.select %24, %193, %194 : vector<32x256xi1>, vector<32x256xf32>
    %196 = arith.truncf %195 : vector<32x256xf32> to vector<32x256xbf16>
    %c31_i32_131 = arith.constant 31 : i32
    %197 = tpu.dynamic_rotate %192 by %c31_i32_131 dim 0 : vector<32x256xf32>, i32 -> vector<32x256xf32>
    %cst_132 = arith.constant 0.000000e+00 : f32
    %198 = vector.broadcast %cst_132 : f32 to vector<32x256xf32>
    %199 = arith.select %28, %197, %198 : vector<32x256xi1>, vector<32x256xf32>
    %200 = arith.truncf %199 : vector<32x256xf32> to vector<32x256xbf16>
    %201 = arith.truncf %192 : vector<32x256xf32> to vector<32x256xbf16>
    %c0_133 = arith.constant 0 : index
    %c0_134 = arith.constant 0 : index
    %c0_135 = arith.constant 0 : index
    %202 = vector.load %arg14[%c0_133, %c0_134, %c0_135] : memref<3x256x256xbf16, #tpu.memory_space<vmem>>, vector<1x256x256xbf16>
    %203 = vector.shape_cast %202 : vector<1x256x256xbf16> to vector<256x256xbf16>
    %cst_136 = arith.constant dense<0.000000e+00> : vector<32x256xf32>
    %204 = tpu.matmul %196, %203, %cst_136 {dimension_numbers = #tpu.dot_dimension_numbers<[1], [0], [0], [1], [0, 0, 1, 1], [], []>} : vector<32x256xbf16>, vector<256x256xbf16>, vector<32x256xf32> -> vector<32x256xf32>
    %c1_137 = arith.constant 1 : index
    %c0_138 = arith.constant 0 : index
    %c0_139 = arith.constant 0 : index
    %205 = vector.load %arg14[%c1_137, %c0_138, %c0_139] : memref<3x256x256xbf16, #tpu.memory_space<vmem>>, vector<1x256x256xbf16>
    %206 = vector.shape_cast %205 : vector<1x256x256xbf16> to vector<256x256xbf16>
    %cst_140 = arith.constant dense<0.000000e+00> : vector<32x256xf32>
    %207 = tpu.matmul %201, %206, %cst_140 {dimension_numbers = #tpu.dot_dimension_numbers<[1], [0], [0], [1], [0, 0, 1, 1], [], []>} : vector<32x256xbf16>, vector<256x256xbf16>, vector<32x256xf32> -> vector<32x256xf32>
    %208 = arith.addf %204, %207 : vector<32x256xf32>
    %c2_141 = arith.constant 2 : index
    %c0_142 = arith.constant 0 : index
    %c0_143 = arith.constant 0 : index
    %209 = vector.load %arg14[%c2_141, %c0_142, %c0_143] : memref<3x256x256xbf16, #tpu.memory_space<vmem>>, vector<1x256x256xbf16>
    %210 = vector.shape_cast %209 : vector<1x256x256xbf16> to vector<256x256xbf16>
    %cst_144 = arith.constant dense<0.000000e+00> : vector<32x256xf32>
    %211 = tpu.matmul %200, %210, %cst_144 {dimension_numbers = #tpu.dot_dimension_numbers<[1], [0], [0], [1], [0, 0, 1, 1], [], []>} : vector<32x256xbf16>, vector<256x256xbf16>, vector<32x256xf32> -> vector<32x256xf32>
    %212 = arith.addf %208, %211 : vector<32x256xf32>
    %c0_145 = arith.constant 0 : index
    %c0_146 = arith.constant 0 : index
    %213 = vector.load %arg15[%c0_145, %c0_146] : memref<1x256xf32, #tpu.memory_space<vmem>>, vector<1x256xf32>
    %214 = vector.broadcast %213 : vector<1x256xf32> to vector<32x256xf32>
    %215 = arith.addf %212, %214 : vector<32x256xf32>
    %cst_147 = arith.constant 0.000000e+00 : f32
    %216 = vector.broadcast %cst_147 : f32 to vector<32x256xf32>
    %217 = arith.maximumf %215, %216 : vector<32x256xf32>
    %c0_148 = arith.constant 0 : index
    %c0_149 = arith.constant 0 : index
    %218 = vector.load %arg23[%c0_148, %c0_149] : memref<32x256xf32, #tpu.memory_space<vmem>>, vector<32x256xf32>
    tpu.vector_store %arg23[%c0_148, %c0_149], %217 {strides = array<i32>} : memref<32x256xf32, #tpu.memory_space<vmem>>, vector<32x256xf32>,
    %c0_150 = arith.constant 0 : index
    %c0_151 = arith.constant 0 : index
    %219 = vector.load %arg23[%c0_150, %c0_151] : memref<32x256xf32, #tpu.memory_space<vmem>>, vector<32x256xf32>
    %c1_i32_152 = arith.constant 1 : i32
    %220 = tpu.dynamic_rotate %219 by %c1_i32_152 dim 0 : vector<32x256xf32>, i32 -> vector<32x256xf32>
    %cst_153 = arith.constant 0.000000e+00 : f32
    %221 = vector.broadcast %cst_153 : f32 to vector<32x256xf32>
    %222 = arith.select %24, %220, %221 : vector<32x256xi1>, vector<32x256xf32>
    %223 = arith.truncf %222 : vector<32x256xf32> to vector<32x256xbf16>
    %c31_i32_154 = arith.constant 31 : i32
    %224 = tpu.dynamic_rotate %219 by %c31_i32_154 dim 0 : vector<32x256xf32>, i32 -> vector<32x256xf32>
    %cst_155 = arith.constant 0.000000e+00 : f32
    %225 = vector.broadcast %cst_155 : f32 to vector<32x256xf32>
    %226 = arith.select %28, %224, %225 : vector<32x256xi1>, vector<32x256xf32>
    %227 = arith.truncf %226 : vector<32x256xf32> to vector<32x256xbf16>
    %228 = arith.truncf %219 : vector<32x256xf32> to vector<32x256xbf16>
    %c0_156 = arith.constant 0 : index
    %c0_157 = arith.constant 0 : index
    %c0_158 = arith.constant 0 : index
    %229 = vector.load %arg16[%c0_156, %c0_157, %c0_158] : memref<3x256x256xbf16, #tpu.memory_space<vmem>>, vector<1x256x256xbf16>
    %230 = vector.shape_cast %229 : vector<1x256x256xbf16> to vector<256x256xbf16>
    %cst_159 = arith.constant dense<0.000000e+00> : vector<32x256xf32>
    %231 = tpu.matmul %223, %230, %cst_159 {dimension_numbers = #tpu.dot_dimension_numbers<[1], [0], [0], [1], [0, 0, 1, 1], [], []>} : vector<32x256xbf16>, vector<256x256xbf16>, vector<32x256xf32> -> vector<32x256xf32>
    %c1_160 = arith.constant 1 : index
    %c0_161 = arith.constant 0 : index
    %c0_162 = arith.constant 0 : index
    %232 = vector.load %arg16[%c1_160, %c0_161, %c0_162] : memref<3x256x256xbf16, #tpu.memory_space<vmem>>, vector<1x256x256xbf16>
    %233 = vector.shape_cast %232 : vector<1x256x256xbf16> to vector<256x256xbf16>
    %cst_163 = arith.constant dense<0.000000e+00> : vector<32x256xf32>
    %234 = tpu.matmul %228, %233, %cst_163 {dimension_numbers = #tpu.dot_dimension_numbers<[1], [0], [0], [1], [0, 0, 1, 1], [], []>} : vector<32x256xbf16>, vector<256x256xbf16>, vector<32x256xf32> -> vector<32x256xf32>
    %235 = arith.addf %231, %234 : vector<32x256xf32>
    %c2_164 = arith.constant 2 : index
    %c0_165 = arith.constant 0 : index
    %c0_166 = arith.constant 0 : index
    %236 = vector.load %arg16[%c2_164, %c0_165, %c0_166] : memref<3x256x256xbf16, #tpu.memory_space<vmem>>, vector<1x256x256xbf16>
    %237 = vector.shape_cast %236 : vector<1x256x256xbf16> to vector<256x256xbf16>
    %cst_167 = arith.constant dense<0.000000e+00> : vector<32x256xf32>
    %238 = tpu.matmul %227, %237, %cst_167 {dimension_numbers = #tpu.dot_dimension_numbers<[1], [0], [0], [1], [0, 0, 1, 1], [], []>} : vector<32x256xbf16>, vector<256x256xbf16>, vector<32x256xf32> -> vector<32x256xf32>
    %239 = arith.addf %235, %238 : vector<32x256xf32>
    %c0_168 = arith.constant 0 : index
    %c0_169 = arith.constant 0 : index
    %240 = vector.load %arg17[%c0_168, %c0_169] : memref<1x256xf32, #tpu.memory_space<vmem>>, vector<1x256xf32>
    %241 = vector.broadcast %240 : vector<1x256xf32> to vector<32x256xf32>
    %242 = arith.addf %239, %241 : vector<32x256xf32>
    %cst_170 = arith.constant 0.000000e+00 : f32
    %243 = vector.broadcast %cst_170 : f32 to vector<32x256xf32>
    %244 = arith.maximumf %242, %243 : vector<32x256xf32>
    %c0_171 = arith.constant 0 : index
    %c0_172 = arith.constant 0 : index
    %245 = vector.load %arg23[%c0_171, %c0_172] : memref<32x256xf32, #tpu.memory_space<vmem>>, vector<32x256xf32>
    tpu.vector_store %arg23[%c0_171, %c0_172], %244 {strides = array<i32>} : memref<32x256xf32, #tpu.memory_space<vmem>>, vector<32x256xf32>,
    %c0_173 = arith.constant 0 : index
    %c0_174 = arith.constant 0 : index
    %246 = vector.load %arg23[%c0_173, %c0_174] : memref<32x256xf32, #tpu.memory_space<vmem>>, vector<32x256xf32>
    %c1_i32_175 = arith.constant 1 : i32
    %247 = tpu.dynamic_rotate %246 by %c1_i32_175 dim 0 : vector<32x256xf32>, i32 -> vector<32x256xf32>
    %cst_176 = arith.constant 0.000000e+00 : f32
    %248 = vector.broadcast %cst_176 : f32 to vector<32x256xf32>
    %249 = arith.select %24, %247, %248 : vector<32x256xi1>, vector<32x256xf32>
    %250 = arith.truncf %249 : vector<32x256xf32> to vector<32x256xbf16>
    %c31_i32_177 = arith.constant 31 : i32
    %251 = tpu.dynamic_rotate %246 by %c31_i32_177 dim 0 : vector<32x256xf32>, i32 -> vector<32x256xf32>
    %cst_178 = arith.constant 0.000000e+00 : f32
    %252 = vector.broadcast %cst_178 : f32 to vector<32x256xf32>
    %253 = arith.select %28, %251, %252 : vector<32x256xi1>, vector<32x256xf32>
    %254 = arith.truncf %253 : vector<32x256xf32> to vector<32x256xbf16>
    %255 = arith.truncf %246 : vector<32x256xf32> to vector<32x256xbf16>
    %c0_179 = arith.constant 0 : index
    %c0_180 = arith.constant 0 : index
    %c0_181 = arith.constant 0 : index
    %256 = vector.load %arg18[%c0_179, %c0_180, %c0_181] : memref<3x256x128xbf16, #tpu.memory_space<vmem>>, vector<1x256x128xbf16>
    %257 = vector.shape_cast %256 : vector<1x256x128xbf16> to vector<256x128xbf16>
    %cst_182 = arith.constant dense<0.000000e+00> : vector<32x128xf32>
    %258 = tpu.matmul %250, %257, %cst_182 {dimension_numbers = #tpu.dot_dimension_numbers<[1], [0], [0], [1], [0, 0, 1, 1], [], []>} : vector<32x256xbf16>, vector<256x128xbf16>, vector<32x128xf32> -> vector<32x128xf32>
    %c1_183 = arith.constant 1 : index
    %c0_184 = arith.constant 0 : index
    %c0_185 = arith.constant 0 : index
    %259 = vector.load %arg18[%c1_183, %c0_184, %c0_185] : memref<3x256x128xbf16, #tpu.memory_space<vmem>>, vector<1x256x128xbf16>
    %260 = vector.shape_cast %259 : vector<1x256x128xbf16> to vector<256x128xbf16>
    %cst_186 = arith.constant dense<0.000000e+00> : vector<32x128xf32>
    %261 = tpu.matmul %255, %260, %cst_186 {dimension_numbers = #tpu.dot_dimension_numbers<[1], [0], [0], [1], [0, 0, 1, 1], [], []>} : vector<32x256xbf16>, vector<256x128xbf16>, vector<32x128xf32> -> vector<32x128xf32>
    %262 = arith.addf %258, %261 : vector<32x128xf32>
    %c2_187 = arith.constant 2 : index
    %c0_188 = arith.constant 0 : index
    %c0_189 = arith.constant 0 : index
    %263 = vector.load %arg18[%c2_187, %c0_188, %c0_189] : memref<3x256x128xbf16, #tpu.memory_space<vmem>>, vector<1x256x128xbf16>
    %264 = vector.shape_cast %263 : vector<1x256x128xbf16> to vector<256x128xbf16>
    %cst_190 = arith.constant dense<0.000000e+00> : vector<32x128xf32>
    %265 = tpu.matmul %254, %264, %cst_190 {dimension_numbers = #tpu.dot_dimension_numbers<[1], [0], [0], [1], [0, 0, 1, 1], [], []>} : vector<32x256xbf16>, vector<256x128xbf16>, vector<32x128xf32> -> vector<32x128xf32>
    %266 = arith.addf %262, %265 : vector<32x128xf32>
    %c0_191 = arith.constant 0 : index
    %c0_192 = arith.constant 0 : index
    %267 = vector.load %arg19[%c0_191, %c0_192] : memref<1x128xf32, #tpu.memory_space<vmem>>, vector<1x128xf32>
    %268 = vector.broadcast %267 : vector<1x128xf32> to vector<32x128xf32>
    %269 = arith.addf %266, %268 : vector<32x128xf32>
    %cst_193 = arith.constant 0.000000e+00 : f32
    %270 = vector.broadcast %cst_193 : f32 to vector<32x128xf32>
    %271 = arith.maximumf %269, %270 : vector<32x128xf32>
    %c0_194 = arith.constant 0 : index
    %c0_195 = arith.constant 0 : index
    %272 = vector.load %arg23[%c0_194, %c0_195] : memref<32x256xf32, #tpu.memory_space<vmem>>, vector<32x128xf32>
    tpu.vector_store %arg23[%c0_194, %c0_195], %271 {strides = array<i32>} : memref<32x256xf32, #tpu.memory_space<vmem>>, vector<32x128xf32>,
    %c0_196 = arith.constant 0 : index
    %c0_197 = arith.constant 0 : index
    %273 = vector.load %arg23[%c0_196, %c0_197] : memref<32x256xf32, #tpu.memory_space<vmem>>, vector<32x128xf32>
    %c1_i32_198 = arith.constant 1 : i32
    %274 = tpu.dynamic_rotate %273 by %c1_i32_198 dim 0 : vector<32x128xf32>, i32 -> vector<32x128xf32>
    %cst_199 = arith.constant 0.000000e+00 : f32
    %275 = vector.broadcast %cst_199 : f32 to vector<32x128xf32>
    %276 = arith.select %22, %274, %275 : vector<32x128xi1>, vector<32x128xf32>
    %277 = arith.truncf %276 : vector<32x128xf32> to vector<32x128xbf16>
    %c31_i32_200 = arith.constant 31 : i32
    %278 = tpu.dynamic_rotate %273 by %c31_i32_200 dim 0 : vector<32x128xf32>, i32 -> vector<32x128xf32>
    %cst_201 = arith.constant 0.000000e+00 : f32
    %279 = vector.broadcast %cst_201 : f32 to vector<32x128xf32>
    %280 = arith.select %26, %278, %279 : vector<32x128xi1>, vector<32x128xf32>
    %281 = arith.truncf %280 : vector<32x128xf32> to vector<32x128xbf16>
    %282 = arith.truncf %273 : vector<32x128xf32> to vector<32x128xbf16>
    %c0_202 = arith.constant 0 : index
    %c0_203 = arith.constant 0 : index
    %c0_204 = arith.constant 0 : index
    %283 = vector.load %arg20[%c0_202, %c0_203, %c0_204] : memref<3x128x128xbf16, #tpu.memory_space<vmem>>, vector<1x128x128xbf16>
    %284 = vector.shape_cast %283 : vector<1x128x128xbf16> to vector<128x128xbf16>
    %cst_205 = arith.constant dense<0.000000e+00> : vector<32x128xf32>
    %285 = tpu.matmul %277, %284, %cst_205 {dimension_numbers = #tpu.dot_dimension_numbers<[1], [0], [0], [1], [0, 0, 1, 1], [], []>} : vector<32x128xbf16>, vector<128x128xbf16>, vector<32x128xf32> -> vector<32x128xf32>
    %c1_206 = arith.constant 1 : index
    %c0_207 = arith.constant 0 : index
    %c0_208 = arith.constant 0 : index
    %286 = vector.load %arg20[%c1_206, %c0_207, %c0_208] : memref<3x128x128xbf16, #tpu.memory_space<vmem>>, vector<1x128x128xbf16>
    %287 = vector.shape_cast %286 : vector<1x128x128xbf16> to vector<128x128xbf16>
    %cst_209 = arith.constant dense<0.000000e+00> : vector<32x128xf32>
    %288 = tpu.matmul %282, %287, %cst_209 {dimension_numbers = #tpu.dot_dimension_numbers<[1], [0], [0], [1], [0, 0, 1, 1], [], []>} : vector<32x128xbf16>, vector<128x128xbf16>, vector<32x128xf32> -> vector<32x128xf32>
    %289 = arith.addf %285, %288 : vector<32x128xf32>
    %c2_210 = arith.constant 2 : index
    %c0_211 = arith.constant 0 : index
    %c0_212 = arith.constant 0 : index
    %290 = vector.load %arg20[%c2_210, %c0_211, %c0_212] : memref<3x128x128xbf16, #tpu.memory_space<vmem>>, vector<1x128x128xbf16>
    %291 = vector.shape_cast %290 : vector<1x128x128xbf16> to vector<128x128xbf16>
    %cst_213 = arith.constant dense<0.000000e+00> : vector<32x128xf32>
    %292 = tpu.matmul %281, %291, %cst_213 {dimension_numbers = #tpu.dot_dimension_numbers<[1], [0], [0], [1], [0, 0, 1, 1], [], []>} : vector<32x128xbf16>, vector<128x128xbf16>, vector<32x128xf32> -> vector<32x128xf32>
    %293 = arith.addf %289, %292 : vector<32x128xf32>
    %c0_214 = arith.constant 0 : index
    %c0_215 = arith.constant 0 : index
    %294 = vector.load %arg21[%c0_214, %c0_215] : memref<1x128xf32, #tpu.memory_space<vmem>>, vector<1x128xf32>
    %295 = vector.broadcast %294 : vector<1x128xf32> to vector<32x128xf32>
    %296 = arith.addf %293, %295 : vector<32x128xf32>
    %c0_216 = arith.constant 0 : index
    %c0_217 = arith.constant 0 : index
    %297 = vector.load %arg22[%c0_216, %c0_217] : memref<32x128xf32, #tpu.memory_space<vmem>>, vector<32x128xf32>
    tpu.vector_store %arg22[%c0_216, %c0_217], %296 {strides = array<i32>} : memref<32x128xf32, #tpu.memory_space<vmem>>, vector<32x128xf32>,
    return
  }
  func.func @transform_0(%arg0: i32) -> (i32, i32) {
    %c0_i32 = arith.constant 0 : i32
    %c0_i32_0 = arith.constant 0 : i32
    return %arg0, %c0_i32 : i32, i32
  }
  func.func @transform_1(%arg0: i32) -> (i32, i32) {
    %c0_i32 = arith.constant 0 : i32
    %c0_i32_0 = arith.constant 0 : i32
    %c0_i32_1 = arith.constant 0 : i32
    return %c0_i32, %c0_i32_0 : i32, i32
  }
  func.func @transform_2(%arg0: i32) -> (i32, i32) {
    %c0_i32 = arith.constant 0 : i32
    %c0_i32_0 = arith.constant 0 : i32
    %c0_i32_1 = arith.constant 0 : i32
    return %c0_i32, %c0_i32_0 : i32, i32
  }
  func.func @transform_3(%arg0: i32) -> (i32, i32, i32) {
    %c0_i32 = arith.constant 0 : i32
    %c0_i32_0 = arith.constant 0 : i32
    %c0_i32_1 = arith.constant 0 : i32
    %c0_i32_2 = arith.constant 0 : i32
    return %c0_i32, %c0_i32_0, %c0_i32_1 : i32, i32, i32
  }
  func.func @transform_4(%arg0: i32) -> (i32, i32) {
    %c0_i32 = arith.constant 0 : i32
    %c0_i32_0 = arith.constant 0 : i32
    %c0_i32_1 = arith.constant 0 : i32
    return %c0_i32, %c0_i32_0 : i32, i32
  }
  func.func @transform_5(%arg0: i32) -> (i32, i32, i32) {
    %c0_i32 = arith.constant 0 : i32
    %c0_i32_0 = arith.constant 0 : i32
    %c0_i32_1 = arith.constant 0 : i32
    %c0_i32_2 = arith.constant 0 : i32
    return %c0_i32, %c0_i32_0, %c0_i32_1 : i32, i32, i32
  }
  func.func @transform_6(%arg0: i32) -> (i32, i32) {
    %c0_i32 = arith.constant 0 : i32
    %c0_i32_0 = arith.constant 0 : i32
    %c0_i32_1 = arith.constant 0 : i32
    return %c0_i32, %c0_i32_0 : i32, i32
  }
  func.func @transform_7(%arg0: i32) -> (i32, i32, i32) {
    %c0_i32 = arith.constant 0 : i32
    %c0_i32_0 = arith.constant 0 : i32
    %c0_i32_1 = arith.constant 0 : i32
    %c0_i32_2 = arith.constant 0 : i32
    return %c0_i32, %c0_i32_0, %c0_i32_1 : i32, i32, i32
  }
  func.func @transform_8(%arg0: i32) -> (i32, i32) {
    %c0_i32 = arith.constant 0 : i32
    %c0_i32_0 = arith.constant 0 : i32
    %c0_i32_1 = arith.constant 0 : i32
    return %c0_i32, %c0_i32_0 : i32, i32
  }
  func.func @transform_9(%arg0: i32) -> (i32, i32, i32) {
    %c0_i32 = arith.constant 0 : i32
    %c0_i32_0 = arith.constant 0 : i32
    %c0_i32_1 = arith.constant 0 : i32
    %c0_i32_2 = arith.constant 0 : i32
    return %c0_i32, %c0_i32_0, %c0_i32_1 : i32, i32, i32
  }
  func.func @transform_10(%arg0: i32) -> (i32, i32) {
    %c0_i32 = arith.constant 0 : i32
    %c0_i32_0 = arith.constant 0 : i32
    %c0_i32_1 = arith.constant 0 : i32
    return %c0_i32, %c0_i32_0 : i32, i32
  }
  func.func @transform_11(%arg0: i32) -> (i32, i32, i32) {
    %c0_i32 = arith.constant 0 : i32
    %c0_i32_0 = arith.constant 0 : i32
    %c0_i32_1 = arith.constant 0 : i32
    %c0_i32_2 = arith.constant 0 : i32
    return %c0_i32, %c0_i32_0, %c0_i32_1 : i32, i32, i32
  }
  func.func @transform_12(%arg0: i32) -> (i32, i32) {
    %c0_i32 = arith.constant 0 : i32
    %c0_i32_0 = arith.constant 0 : i32
    %c0_i32_1 = arith.constant 0 : i32
    return %c0_i32, %c0_i32_0 : i32, i32
  }
  func.func @transform_13(%arg0: i32) -> (i32, i32, i32) {
    %c0_i32 = arith.constant 0 : i32
    %c0_i32_0 = arith.constant 0 : i32
    %c0_i32_1 = arith.constant 0 : i32
    %c0_i32_2 = arith.constant 0 : i32
    return %c0_i32, %c0_i32_0, %c0_i32_1 : i32, i32, i32
  }
  func.func @transform_14(%arg0: i32) -> (i32, i32) {
    %c0_i32 = arith.constant 0 : i32
    %c0_i32_0 = arith.constant 0 : i32
    %c0_i32_1 = arith.constant 0 : i32
    return %c0_i32, %c0_i32_0 : i32, i32
  }
  func.func @transform_15(%arg0: i32) -> (i32, i32, i32) {
    %c0_i32 = arith.constant 0 : i32
    %c0_i32_0 = arith.constant 0 : i32
    %c0_i32_1 = arith.constant 0 : i32
    %c0_i32_2 = arith.constant 0 : i32
    return %c0_i32, %c0_i32_0, %c0_i32_1 : i32, i32, i32
  }
  func.func @transform_16(%arg0: i32) -> (i32, i32) {
    %c0_i32 = arith.constant 0 : i32
    %c0_i32_0 = arith.constant 0 : i32
    %c0_i32_1 = arith.constant 0 : i32
    return %c0_i32, %c0_i32_0 : i32, i32
  }
  func.func @transform_17(%arg0: i32) -> (i32, i32, i32) {
    %c0_i32 = arith.constant 0 : i32
    %c0_i32_0 = arith.constant 0 : i32
    %c0_i32_1 = arith.constant 0 : i32
    %c0_i32_2 = arith.constant 0 : i32
    return %c0_i32, %c0_i32_0, %c0_i32_1 : i32, i32, i32
  }
  func.func @transform_18(%arg0: i32) -> (i32, i32) {
    %c0_i32 = arith.constant 0 : i32
    %c0_i32_0 = arith.constant 0 : i32
    %c0_i32_1 = arith.constant 0 : i32
    return %c0_i32, %c0_i32_0 : i32, i32
  }
  func.func @transform_19(%arg0: i32) -> (i32, i32, i32) {
    %c0_i32 = arith.constant 0 : i32
    %c0_i32_0 = arith.constant 0 : i32
    %c0_i32_1 = arith.constant 0 : i32
    %c0_i32_2 = arith.constant 0 : i32
    return %c0_i32, %c0_i32_0, %c0_i32_1 : i32, i32, i32
  }
  func.func @transform_20(%arg0: i32) -> (i32, i32) {
    %c0_i32 = arith.constant 0 : i32
    %c0_i32_0 = arith.constant 0 : i32
    %c0_i32_1 = arith.constant 0 : i32
    return %c0_i32, %c0_i32_0 : i32, i32
  }
  func.func @transform_21(%arg0: i32) -> (i32, i32) {
    %c0_i32 = arith.constant 0 : i32
    %c0_i32_0 = arith.constant 0 : i32
    return %arg0, %c0_i32 : i32, i32
  }
}

</mosaic_0001>

<llo_original>
// kernel: deconvnet_forward.1
$region0: #{deconvnet_forward.1}
  #allocation0 [shape = 'u32[]', space=smem, size = 0x4, offset = 0x4, fixed_abs, tag = 'smem constant byte address 0x4 - core index']
  #allocation1 [shape = 'u32[144,128]{1,0:T(1,128)}', space=vmem, size = 0x12000, scoped, tag = 'internal scratch']
  #allocation2 [shape = 'f32[32,256]{1,0:T(8,128)}', space=vmem, size = 0x8000, scoped, tag = 'scratch operand']
  %s0 = inlined_call_operand.vmem [shape: f32[64,1], index: 0, kind: input, shape index: {}]
  %s1 = inlined_call_operand.vmem [shape: f32[3,128], index: 1, kind: input, shape index: {}]
  %s2 = inlined_call_operand.vmem [shape: f32[1,128], index: 2, kind: input, shape index: {}]
  %s3 = inlined_call_operand.hbm [shape: bf16[3,128,128], index: 3, kind: input, shape index: {}]
  %s4 = inlined_call_operand.vmem [shape: f32[1,128], index: 4, kind: input, shape index: {}]
  %s5 = inlined_call_operand.hbm [shape: bf16[3,128,128], index: 5, kind: input, shape index: {}]
  %s6 = inlined_call_operand.vmem [shape: f32[1,128], index: 6, kind: input, shape index: {}]
  %s7 = inlined_call_operand.hbm [shape: bf16[3,128,256], index: 7, kind: input, shape index: {}]
  %s8 = inlined_call_operand.vmem [shape: f32[1,256], index: 8, kind: input, shape index: {}]
  %s9 = inlined_call_operand.hbm [shape: bf16[3,256,256], index: 9, kind: input, shape index: {}]
  %s10 = inlined_call_operand.vmem [shape: f32[1,256], index: 10, kind: input, shape index: {}]
  %s11 = inlined_call_operand.hbm [shape: bf16[3,256,256], index: 11, kind: input, shape index: {}]
  %s12 = inlined_call_operand.vmem [shape: f32[1,256], index: 12, kind: input, shape index: {}]
  %s13 = inlined_call_operand.hbm [shape: bf16[3,256,256], index: 13, kind: input, shape index: {}]
  %s14 = inlined_call_operand.vmem [shape: f32[1,256], index: 14, kind: input, shape index: {}]
  %s15 = inlined_call_operand.hbm [shape: bf16[3,256,256], index: 15, kind: input, shape index: {}]
  %s16 = inlined_call_operand.vmem [shape: f32[1,256], index: 16, kind: input, shape index: {}]
  %s17 = inlined_call_operand.hbm [shape: bf16[3,256,128], index: 17, kind: input, shape index: {}]
  %s18 = inlined_call_operand.vmem [shape: f32[1,128], index: 18, kind: input, shape index: {}]
  %s19 = inlined_call_operand.hbm [shape: bf16[3,128,128], index: 19, kind: input, shape index: {}]
  %s20 = inlined_call_operand.vmem [shape: f32[1,128], index: 20, kind: input, shape index: {}]
  %s21 = inlined_call_operand.vmem [shape: f32[64,128], index: 21, kind: output, shape index: {}]
  %s22 = sld [smem:[#allocation0]]
  $region153: #{deconvnet_forward.1} parent=0
    _
  %s24 = ssub.s32 1, %s22
  %s25 = scalar_select 0, %s24, %s22
  $region1: #{deconvnet_forward.1} parent=0
    #allocation3 [shape = 'u8[98304]{0}', space=vmem, size = 0x18000, scoped, tag = 'input window, operand 3, single buffered']
    #allocation4 [shape = 's32[2]{0}', space=sflag, size = 0x8, scoped, tag = 'scoped memory for deconvnet_forward.1']
    #allocation5 [shape = 'u8[98304]{0}', space=vmem, size = 0x18000, scoped, tag = 'input window, operand 5, single buffered']
    #allocation6 [shape = 's32[1]{0}', space=sflag, size = 0x4, scoped, tag = 'scoped memory for deconvnet_forward.1']
    #allocation7 [shape = 'u8[196608]{0}', space=vmem, size = 0x30000, scoped, tag = 'input window, operand 7, single buffered']
    #allocation8 [shape = 'u8[393216]{0}', space=vmem, size = 0x60000, scoped, tag = 'input window, operand 9, single buffered']
    #allocation9 [shape = 's32[1]{0}', space=sflag, size = 0x4, scoped, tag = 'scoped memory for deconvnet_forward.1']
    #allocation10 [shape = 'u8[393216]{0}', space=vmem, size = 0x60000, scoped, tag = 'input window, operand 11, single buffered']
    #allocation11 [shape = 'u8[393216]{0}', space=vmem, size = 0x60000, scoped, tag = 'input window, operand 13, single buffered']
    #allocation12 [shape = 's32[1]{0}', space=sflag, size = 0x4, scoped, tag = 'scoped memory for deconvnet_forward.1']
    #allocation13 [shape = 'u8[393216]{0}', space=vmem, size = 0x60000, scoped, tag = 'input window, operand 15, single buffered']
    #allocation14 [shape = 'u8[196608]{0}', space=vmem, size = 0x30000, scoped, tag = 'input window, operand 17, single buffered']
    #allocation15 [shape = 's32[1]{0}', space=sflag, size = 0x4, scoped, tag = 'scoped memory for deconvnet_forward.1']
    #allocation16 [shape = 'u8[98304]{0}', space=vmem, size = 0x18000, scoped, tag = 'input window, operand 19, single buffered']
    %26 = vsyncpa [#allocation4], 0
    %27 = vsyncpa [#allocation6], 0
    %28 = vsyncpa [#allocation9], 0
    %29 = vsyncpa [#allocation12], 0
    %30 = vsyncpa [#allocation15], 0
    loop: start=0, step=1, limit=4
    $region2: #{deconvnet_forward.1} parent=1 // loop_pre_header
      _
    $region3: #{deconvnet_forward.1} parent=1 // loop_header
      %s32 = sphi 0, %s36
      %p33 = scmp.ge.s32.totalorder %s32, 4
      %s42 = sphi 0, %s44
      %s45 = sphi 0, %s42
      %s46 = sphi 0, %s45
      %s62 = sphi 0, %s46
      %s66 = sphi 0, %s66
      %s68 = sphi 0, %s66
      %s69 = sphi 0, %s68
      %s83 = sphi 0, %s69
      %s87 = sphi 0, %s87
      %s89 = sphi 0, %s87
      %s90 = sphi 0, %s89
      %s104 = sphi 0, %s90
      %s108 = sphi 0, %s108
      %s110 = sphi 0, %s108
      %s111 = sphi 0, %s110
      %s125 = sphi 0, %s111
      %s129 = sphi 0, %s129
      %s131 = sphi 0, %s129
      %s132 = sphi 0, %s131
      %s146 = sphi 0, %s132
      %s150 = sphi 0, %s150
      %s152 = sphi 0, %s150
      %s153 = sphi 0, %s152
      %s167 = sphi 0, %s153
      %s171 = sphi 0, %s171
      %s173 = sphi 0, %s171
      %s174 = sphi 0, %s173
      %s188 = sphi 0, %s174
      %s192 = sphi 0, %s192
      %s194 = sphi 0, %s192
      %s195 = sphi 0, %s194
      %s209 = sphi 0, %s195
      %s213 = sphi 0, %s213
      %s215 = sphi 0, %s213
      %s216 = sphi 0, %s215
      %s230 = sphi 0, %s216
      %s234 = sphi 0, %s234
      %s236 = sphi 0, %s234
      %s237 = sphi 0, %s236
      %s251 = sphi 0, %s237
      %s255 = sphi 0, %s255
      %s257 = sphi 0, %s255
      %s258 = sphi 0, %s257
      %s272 = sphi 0, %s258
      %s276 = sphi 0, %s276
      %s278 = sphi 0, %s276
      %s279 = sphi 0, %s278
      %s293 = sphi 0, %s279
      %s297 = sphi 0, %s297
      %s299 = sphi 0, %s297
      %s300 = sphi 0, %s299
      %s314 = sphi 0, %s300
      %s318 = sphi 0, %s318
      %s320 = sphi 0, %s318
      %s321 = sphi 0, %s320
      %s335 = sphi 0, %s321
      %s339 = sphi 0, %s339
      %s341 = sphi 0, %s339
      %s342 = sphi 0, %s341
      %s356 = sphi 0, %s342
      %s360 = sphi 0, %s360
      %s362 = sphi 0, %s360
      %s363 = sphi 0, %s362
      %s377 = sphi 0, %s363
      %s381 = sphi 0, %s381
      %s383 = sphi 0, %s381
      %s384 = sphi 0, %s383
      %s398 = sphi 0, %s384
      %s402 = sphi 0, %s402
      %s404 = sphi 0, %s402
      %s405 = sphi 0, %s404
      %s419 = sphi 0, %s405
      %s423 = sphi 0, %s423
      %s425 = sphi 0, %s423
      %s426 = sphi 0, %s425
      %s440 = sphi 0, %s426
      %s444 = sphi 0, %s444
      %s446 = sphi 0, %s444
      %s447 = sphi 0, %s446
      %s461 = sphi 0, %s447
      %s465 = sphi 0, %s465
      %s467 = sphi 0, %s465
      %s468 = sphi 0, %s467
      %s482 = sphi 0, %s468
      %s488 = sphi 0, %s490
      %s491 = sphi 0, %s488
      %s492 = sphi 0, %s491
      %s508 = sphi 0, %s492
    $region4: #{deconvnet_forward.1} parent=1 // loop_header_branch
      %35 = sbr.rel (%p33) target = $region8
    $region5: #{deconvnet_forward.1} parent=1 // loop_body
      %s37 = ssub.s32 %s32, 1
      %s38 = ssub.s32 %s32, 2
      %s39 = sadd.s32 %s32, 1
      %s40 = ssub.s32 %s32, %s39
      %p41 = scmp.eq.s32.totalorder %s40, 0
      %s43 = sadd.s32 %s42, 1
      %s44 = scalar_select %p41, %s42, %s43
      %p47 = pneg %p41
      %p48 = scmp.eq.s32.totalorder %s32, 1
      %p49 = por %p47, %p48
      %p50 = scmp.ne.s32.totalorder %s42, %s45
      %p51 = scmp.eq.s32.totalorder %s32, 0
      %p52 = por %p50, %p51
      %p53 = scmp.ne.s32.totalorder %s42, %s45
      %p54 = scmp.eq.s32.totalorder %s37, 1
      %p55 = por %p53, %p54
      %p56 = scmp.ne.s32.totalorder %s45, %s46
      %p57 = scmp.eq.s32.totalorder %s37, 0
      %p58 = por %p56, %p57
      %p59 = scmp.ne.s32.totalorder %s45, %s46
      %p60 = scmp.eq.s32.totalorder %s38, 1
      %p61 = por %p59, %p60
      %p63 = scmp.ne.s32.totalorder %s46, %s62
      %p64 = scmp.eq.s32.totalorder %s38, 0
      %p65 = por %p63, %p64
      %s67 = sadd.s32 %s66, 1
      %p70 = scmp.eq.s32.totalorder %s32, 1
      %p71 = scmp.ne.s32.totalorder %s66, %s68
      %p72 = scmp.eq.s32.totalorder %s32, 0
      %p73 = por %p71, %p72
      %p74 = scmp.ne.s32.totalorder %s66, %s68
      %p75 = scmp.eq.s32.totalorder %s37, 1
      %p76 = por %p74, %p75
      %p77 = scmp.ne.s32.totalorder %s68, %s69
      %p78 = scmp.eq.s32.totalorder %s37, 0
      %p79 = por %p77, %p78
      %p80 = scmp.ne.s32.totalorder %s68, %s69
      %p81 = scmp.eq.s32.totalorder %s38, 1
      %p82 = por %p80, %p81
      %p84 = scmp.ne.s32.totalorder %s69, %s83
      %p85 = scmp.eq.s32.totalorder %s38, 0
      %p86 = por %p84, %p85
      %s88 = sadd.s32 %s87, 1
      %p91 = scmp.eq.s32.totalorder %s32, 1
      %p92 = scmp.ne.s32.totalorder %s87, %s89
      %p93 = scmp.eq.s32.totalorder %s32, 0
      %p94 = por %p92, %p93
      %p95 = scmp.ne.s32.totalorder %s87, %s89
      %p96 = scmp.eq.s32.totalorder %s37, 1
      %p97 = por %p95, %p96
      %p98 = scmp.ne.s32.totalorder %s89, %s90
      %p99 = scmp.eq.s32.totalorder %s37, 0
      %p100 = por %p98, %p99
      %p101 = scmp.ne.s32.totalorder %s89, %s90
      %p102 = scmp.eq.s32.totalorder %s38, 1
      %p103 = por %p101, %p102
      %p105 = scmp.ne.s32.totalorder %s90, %s104
      %p106 = scmp.eq.s32.totalorder %s38, 0
      %p107 = por %p105, %p106
      %s109 = sadd.s32 %s108, 1
      %p112 = scmp.eq.s32.totalorder %s32, 1
      %p113 = scmp.ne.s32.totalorder %s108, %s110
      %p114 = scmp.eq.s32.totalorder %s32, 0
      %p115 = por %p113, %p114
      %p116 = scmp.ne.s32.totalorder %s108, %s110
      %p117 = scmp.eq.s32.totalorder %s37, 1
      %p118 = por %p116, %p117
      %p119 = scmp.ne.s32.totalorder %s110, %s111
      %p120 = scmp.eq.s32.totalorder %s37, 0
      %p121 = por %p119, %p120
      %p122 = scmp.ne.s32.totalorder %s110, %s111
      %p123 = scmp.eq.s32.totalorder %s38, 1
      %p124 = por %p122, %p123
      %p126 = scmp.ne.s32.totalorder %s111, %s125
      %p127 = scmp.eq.s32.totalorder %s38, 0
      %p128 = por %p126, %p127
      %s130 = sadd.s32 %s129, 1
      %p133 = scmp.eq.s32.totalorder %s32, 1
      %p134 = scmp.ne.s32.totalorder %s129, %s131
      %p135 = scmp.eq.s32.totalorder %s32, 0
      %p136 = por %p134, %p135
      %p137 = scmp.ne.s32.totalorder %s129, %s131
      %p138 = scmp.eq.s32.totalorder %s37, 1
      %p139 = por %p137, %p138
      %p140 = scmp.ne.s32.totalorder %s131, %s132
      %p141 = scmp.eq.s32.totalorder %s37, 0
      %p142 = por %p140, %p141
      %p143 = scmp.ne.s32.totalorder %s131, %s132
      %p144 = scmp.eq.s32.totalorder %s38, 1
      %p145 = por %p143, %p144
      %p147 = scmp.ne.s32.totalorder %s132, %s146
      %p148 = scmp.eq.s32.totalorder %s38, 0
      %p149 = por %p147, %p148
      %s151 = sadd.s32 %s150, 1
      %p154 = scmp.eq.s32.totalorder %s32, 1
      %p155 = scmp.ne.s32.totalorder %s150, %s152
      %p156 = scmp.eq.s32.totalorder %s32, 0
      %p157 = por %p155, %p156
      %p158 = scmp.ne.s32.totalorder %s150, %s152
      %p159 = scmp.eq.s32.totalorder %s37, 1
      %p160 = por %p158, %p159
      %p161 = scmp.ne.s32.totalorder %s152, %s153
      %p162 = scmp.eq.s32.totalorder %s37, 0
      %p163 = por %p161, %p162
      %p164 = scmp.ne.s32.totalorder %s152, %s153
      %p165 = scmp.eq.s32.totalorder %s38, 1
      %p166 = por %p164, %p165
      %p168 = scmp.ne.s32.totalorder %s153, %s167
      %p169 = scmp.eq.s32.totalorder %s38, 0
      %p170 = por %p168, %p169
      %s172 = sadd.s32 %s171, 1
      %p175 = scmp.eq.s32.totalorder %s32, 1
      %p176 = scmp.ne.s32.totalorder %s171, %s173
      %p177 = scmp.eq.s32.totalorder %s32, 0
      %p178 = por %p176, %p177
      %p179 = scmp.ne.s32.totalorder %s171, %s173
      %p180 = scmp.eq.s32.totalorder %s37, 1
      %p181 = por %p179, %p180
      %p182 = scmp.ne.s32.totalorder %s173, %s174
      %p183 = scmp.eq.s32.totalorder %s37, 0
      %p184 = por %p182, %p183
      %p185 = scmp.ne.s32.totalorder %s173, %s174
      %p186 = scmp.eq.s32.totalorder %s38, 1
      %p187 = por %p185, %p186
      %p189 = scmp.ne.s32.totalorder %s174, %s188
      %p190 = scmp.eq.s32.totalorder %s38, 0
      %p191 = por %p189, %p190
      %s193 = sadd.s32 %s192, 1
      %p196 = scmp.eq.s32.totalorder %s32, 1
      %p197 = scmp.ne.s32.totalorder %s192, %s194
      %p198 = scmp.eq.s32.totalorder %s32, 0
      %p199 = por %p197, %p198
      %p200 = scmp.ne.s32.totalorder %s192, %s194
      %p201 = scmp.eq.s32.totalorder %s37, 1
      %p202 = por %p200, %p201
      %p203 = scmp.ne.s32.totalorder %s194, %s195
      %p204 = scmp.eq.s32.totalorder %s37, 0
      %p205 = por %p203, %p204
      %p206 = scmp.ne.s32.totalorder %s194, %s195
      %p207 = scmp.eq.s32.totalorder %s38, 1
      %p208 = por %p206, %p207
      %p210 = scmp.ne.s32.totalorder %s195, %s209
      %p211 = scmp.eq.s32.totalorder %s38, 0
      %p212 = por %p210, %p211
      %s214 = sadd.s32 %s213, 1
      %p217 = scmp.eq.s32.totalorder %s32, 1
      %p218 = scmp.ne.s32.totalorder %s213, %s215
      %p219 = scmp.eq.s32.totalorder %s32, 0
      %p220 = por %p218, %p219
      %p221 = scmp.ne.s32.totalorder %s213, %s215
      %p222 = scmp.eq.s32.totalorder %s37, 1
      %p223 = por %p221, %p222
      %p224 = scmp.ne.s32.totalorder %s215, %s216
      %p225 = scmp.eq.s32.totalorder %s37, 0
      %p226 = por %p224, %p225
      %p227 = scmp.ne.s32.totalorder %s215, %s216
      %p228 = scmp.eq.s32.totalorder %s38, 1
      %p229 = por %p227, %p228
      %p231 = scmp.ne.s32.totalorder %s216, %s230
      %p232 = scmp.eq.s32.totalorder %s38, 0
      %p233 = por %p231, %p232
      %s235 = sadd.s32 %s234, 1
      %p238 = scmp.eq.s32.totalorder %s32, 1
      %p239 = scmp.ne.s32.totalorder %s234, %s236
      %p240 = scmp.eq.s32.totalorder %s32, 0
      %p241 = por %p239, %p240
      %p242 = scmp.ne.s32.totalorder %s234, %s236
      %p243 = scmp.eq.s32.totalorder %s37, 1
      %p244 = por %p242, %p243
      %p245 = scmp.ne.s32.totalorder %s236, %s237
      %p246 = scmp.eq.s32.totalorder %s37, 0
      %p247 = por %p245, %p246
      %p248 = scmp.ne.s32.totalorder %s236, %s237
      %p249 = scmp.eq.s32.totalorder %s38, 1
      %p250 = por %p248, %p249
      %p252 = scmp.ne.s32.totalorder %s237, %s251
      %p253 = scmp.eq.s32.totalorder %s38, 0
      %p254 = por %p252, %p253
      %s256 = sadd.s32 %s255, 1
      %p259 = scmp.eq.s32.totalorder %s32, 1
      %p260 = scmp.ne.s32.totalorder %s255, %s257
      %p261 = scmp.eq.s32.totalorder %s32, 0
      %p262 = por %p260, %p261
      %p263 = scmp.ne.s32.totalorder %s255, %s257
      %p264 = scmp.eq.s32.totalorder %s37, 1
      %p265 = por %p263, %p264
      %p266 = scmp.ne.s32.totalorder %s257, %s258
      %p267 = scmp.eq.s32.totalorder %s37, 0
      %p268 = por %p266, %p267
      %p269 = scmp.ne.s32.totalorder %s257, %s258
      %p270 = scmp.eq.s32.totalorder %s38, 1
      %p271 = por %p269, %p270
      %p273 = scmp.ne.s32.totalorder %s258, %s272
      %p274 = scmp.eq.s32.totalorder %s38, 0
      %p275 = por %p273, %p274
      %s277 = sadd.s32 %s276, 1
      %p280 = scmp.eq.s32.totalorder %s32, 1
      %p281 = scmp.ne.s32.totalorder %s276, %s278
      %p282 = scmp.eq.s32.totalorder %s32, 0
      %p283 = por %p281, %p282
      %p284 = scmp.ne.s32.totalorder %s276, %s278
      %p285 = scmp.eq.s32.totalorder %s37, 1
      %p286 = por %p284, %p285
      %p287 = scmp.ne.s32.totalorder %s278, %s279
      %p288 = scmp.eq.s32.totalorder %s37, 0
      %p289 = por %p287, %p288
      %p290 = scmp.ne.s32.totalorder %s278, %s279
      %p291 = scmp.eq.s32.totalorder %s38, 1
      %p292 = por %p290, %p291
      %p294 = scmp.ne.s32.totalorder %s279, %s293
      %p295 = scmp.eq.s32.totalorder %s38, 0
      %p296 = por %p294, %p295
      %s298 = sadd.s32 %s297, 1
      %p301 = scmp.eq.s32.totalorder %s32, 1
      %p302 = scmp.ne.s32.totalorder %s297, %s299
      %p303 = scmp.eq.s32.totalorder %s32, 0
      %p304 = por %p302, %p303
      %p305 = scmp.ne.s32.totalorder %s297, %s299
      %p306 = scmp.eq.s32.totalorder %s37, 1
      %p307 = por %p305, %p306
      %p308 = scmp.ne.s32.totalorder %s299, %s300
      %p309 = scmp.eq.s32.totalorder %s37, 0
      %p310 = por %p308, %p309
      %p311 = scmp.ne.s32.totalorder %s299, %s300
      %p312 = scmp.eq.s32.totalorder %s38, 1
      %p313 = por %p311, %p312
      %p315 = scmp.ne.s32.totalorder %s300, %s314
      %p316 = scmp.eq.s32.totalorder %s38, 0
      %p317 = por %p315, %p316
      %s319 = sadd.s32 %s318, 1
      %p322 = scmp.eq.s32.totalorder %s32, 1
      %p323 = scmp.ne.s32.totalorder %s318, %s320
      %p324 = scmp.eq.s32.totalorder %s32, 0
      %p325 = por %p323, %p324
      %p326 = scmp.ne.s32.totalorder %s318, %s320
      %p327 = scmp.eq.s32.totalorder %s37, 1
      %p328 = por %p326, %p327
      %p329 = scmp.ne.s32.totalorder %s320, %s321
      %p330 = scmp.eq.s32.totalorder %s37, 0
      %p331 = por %p329, %p330
      %p332 = scmp.ne.s32.totalorder %s320, %s321
      %p333 = scmp.eq.s32.totalorder %s38, 1
      %p334 = por %p332, %p333
      %p336 = scmp.ne.s32.totalorder %s321, %s335
      %p337 = scmp.eq.s32.totalorder %s38, 0
      %p338 = por %p336, %p337
      %s340 = sadd.s32 %s339, 1
      %p343 = scmp.eq.s32.totalorder %s32, 1
      %p344 = scmp.ne.s32.totalorder %s339, %s341
      %p345 = scmp.eq.s32.totalorder %s32, 0
      %p346 = por %p344, %p345
      %p347 = scmp.ne.s32.totalorder %s339, %s341
      %p348 = scmp.eq.s32.totalorder %s37, 1
      %p349 = por %p347, %p348
      %p350 = scmp.ne.s32.totalorder %s341, %s342
      %p351 = scmp.eq.s32.totalorder %s37, 0
      %p352 = por %p350, %p351
      %p353 = scmp.ne.s32.totalorder %s341, %s342
      %p354 = scmp.eq.s32.totalorder %s38, 1
      %p355 = por %p353, %p354
      %p357 = scmp.ne.s32.totalorder %s342, %s356
      %p358 = scmp.eq.s32.totalorder %s38, 0
      %p359 = por %p357, %p358
      %s361 = sadd.s32 %s360, 1
      %p364 = scmp.eq.s32.totalorder %s32, 1
      %p365 = scmp.ne.s32.totalorder %s360, %s362
      %p366 = scmp.eq.s32.totalorder %s32, 0
      %p367 = por %p365, %p366
      %p368 = scmp.ne.s32.totalorder %s360, %s362
      %p369 = scmp.eq.s32.totalorder %s37, 1
      %p370 = por %p368, %p369
      %p371 = scmp.ne.s32.totalorder %s362, %s363
      %p372 = scmp.eq.s32.totalorder %s37, 0
      %p373 = por %p371, %p372
      %p374 = scmp.ne.s32.totalorder %s362, %s363
      %p375 = scmp.eq.s32.totalorder %s38, 1
      %p376 = por %p374, %p375
      %p378 = scmp.ne.s32.totalorder %s363, %s377
      %p379 = scmp.eq.s32.totalorder %s38, 0
      %p380 = por %p378, %p379
      %s382 = sadd.s32 %s381, 1
      %p385 = scmp.eq.s32.totalorder %s32, 1
      %p386 = scmp.ne.s32.totalorder %s381, %s383
      %p387 = scmp.eq.s32.totalorder %s32, 0
      %p388 = por %p386, %p387
      %p389 = scmp.ne.s32.totalorder %s381, %s383
      %p390 = scmp.eq.s32.totalorder %s37, 1
      %p391 = por %p389, %p390
      %p392 = scmp.ne.s32.totalorder %s383, %s384
      %p393 = scmp.eq.s32.totalorder %s37, 0
      %p394 = por %p392, %p393
      %p395 = scmp.ne.s32.totalorder %s383, %s384
      %p396 = scmp.eq.s32.totalorder %s38, 1
      %p397 = por %p395, %p396
      %p399 = scmp.ne.s32.totalorder %s384, %s398
      %p400 = scmp.eq.s32.totalorder %s38, 0
      %p401 = por %p399, %p400
      %s403 = sadd.s32 %s402, 1
      %p406 = scmp.eq.s32.totalorder %s32, 1
      %p407 = scmp.ne.s32.totalorder %s402, %s404
      %p408 = scmp.eq.s32.totalorder %s32, 0
      %p409 = por %p407, %p408
      %p410 = scmp.ne.s32.totalorder %s402, %s404
      %p411 = scmp.eq.s32.totalorder %s37, 1
      %p412 = por %p410, %p411
      %p413 = scmp.ne.s32.totalorder %s404, %s405
      %p414 = scmp.eq.s32.totalorder %s37, 0
      %p415 = por %p413, %p414
      %p416 = scmp.ne.s32.totalorder %s404, %s405
      %p417 = scmp.eq.s32.totalorder %s38, 1
      %p418 = por %p416, %p417
      %p420 = scmp.ne.s32.totalorder %s405, %s419
      %p421 = scmp.eq.s32.totalorder %s38, 0
      %p422 = por %p420, %p421
      %s424 = sadd.s32 %s423, 1
      %p427 = scmp.eq.s32.totalorder %s32, 1
      %p428 = scmp.ne.s32.totalorder %s423, %s425
      %p429 = scmp.eq.s32.totalorder %s32, 0
      %p430 = por %p428, %p429
      %p431 = scmp.ne.s32.totalorder %s423, %s425
      %p432 = scmp.eq.s32.totalorder %s37, 1
      %p433 = por %p431, %p432
      %p434 = scmp.ne.s32.totalorder %s425, %s426
      %p435 = scmp.eq.s32.totalorder %s37, 0
      %p436 = por %p434, %p435
      %p437 = scmp.ne.s32.totalorder %s425, %s426
      %p438 = scmp.eq.s32.totalorder %s38, 1
      %p439 = por %p437, %p438
      %p441 = scmp.ne.s32.totalorder %s426, %s440
      %p442 = scmp.eq.s32.totalorder %s38, 0
      %p443 = por %p441, %p442
      %s445 = sadd.s32 %s444, 1
      %p448 = scmp.eq.s32.totalorder %s32, 1
      %p449 = scmp.ne.s32.totalorder %s444, %s446
      %p450 = scmp.eq.s32.totalorder %s32, 0
      %p451 = por %p449, %p450
      %p452 = scmp.ne.s32.totalorder %s444, %s446
      %p453 = scmp.eq.s32.totalorder %s37, 1
      %p454 = por %p452, %p453
      %p455 = scmp.ne.s32.totalorder %s446, %s447
      %p456 = scmp.eq.s32.totalorder %s37, 0
      %p457 = por %p455, %p456
      %p458 = scmp.ne.s32.totalorder %s446, %s447
      %p459 = scmp.eq.s32.totalorder %s38, 1
      %p460 = por %p458, %p459
      %p462 = scmp.ne.s32.totalorder %s447, %s461
      %p463 = scmp.eq.s32.totalorder %s38, 0
      %p464 = por %p462, %p463
      %s466 = sadd.s32 %s465, 1
      %p469 = scmp.eq.s32.totalorder %s32, 1
      %p470 = scmp.ne.s32.totalorder %s465, %s467
      %p471 = scmp.eq.s32.totalorder %s32, 0
      %p472 = por %p470, %p471
      %p473 = scmp.ne.s32.totalorder %s465, %s467
      %p474 = scmp.eq.s32.totalorder %s37, 1
      %p475 = por %p473, %p474
      %p476 = scmp.ne.s32.totalorder %s467, %s468
      %p477 = scmp.eq.s32.totalorder %s37, 0
      %p478 = por %p476, %p477
      %p479 = scmp.ne.s32.totalorder %s467, %s468
      %p480 = scmp.eq.s32.totalorder %s38, 1
      %p481 = por %p479, %p480
      %p483 = scmp.ne.s32.totalorder %s468, %s482
      %p484 = scmp.eq.s32.totalorder %s38, 0
      %p485 = por %p483, %p484
      %s486 = ssub.s32 %s32, %s39
      %p487 = scmp.eq.s32.totalorder %s486, 0
      %s489 = sadd.s32 %s488, 1
      %s490 = scalar_select %p487, %s488, %s489
      %p493 = pneg %p487
      %p494 = scmp.eq.s32.totalorder %s32, 1
      %p495 = por %p493, %p494
      %p496 = scmp.ne.s32.totalorder %s488, %s491
      %p497 = scmp.eq.s32.totalorder %s32, 0
      %p498 = por %p496, %p497
      %p499 = scmp.ne.s32.totalorder %s488, %s491
      %p500 = scmp.eq.s32.totalorder %s37, 1
      %p501 = por %p499, %p500
      %p502 = scmp.ne.s32.totalorder %s491, %s492
      %p503 = scmp.eq.s32.totalorder %s37, 0
      %p504 = por %p502, %p503
      %p505 = scmp.ne.s32.totalorder %s491, %s492
      %p506 = scmp.eq.s32.totalorder %s38, 1
      %p507 = por %p505, %p506
      %p509 = scmp.ne.s32.totalorder %s492, %s508
      %p510 = scmp.eq.s32.totalorder %s38, 0
      %p511 = por %p509, %p510
      %p512 = scmp.le.s32.totalorder 1, %s32
      %p513 = scmp.lt.s32.totalorder %s32, 3
      %p514 = pnand %p512, %p513
      %p515 = pneg %p514
      // Predicated region
      $region9: #{deconvnet_forward.1} parent=5 // pred_check
        _
      $region10: #{deconvnet_forward.1} parent=5 // pred_check_branch
        %517 = sbr.rel (%p514) target = $region12
      $region11: #{deconvnet_forward.1} parent=5 // pred_region
        %s518 = ssub.s32 %s32, 1
        // Predicated region
        $region13: #{deconvnet_forward.1} parent=11 // pred_check
          %p519 = pneg %p79
        $region14: #{deconvnet_forward.1} parent=11 // pred_check_branch
          %521 = sbr.rel (%p519) target = $region16
        $region15: #{deconvnet_forward.1} parent=11 // pred_region
          _
        $region16: #{deconvnet_forward.1} parent=11 // pred_fallthru
          _
        // Predicated region
        $region17: #{deconvnet_forward.1} parent=11 // pred_check
          %p522 = pneg %p100
        $region18: #{deconvnet_forward.1} parent=11 // pred_check_branch
          %524 = sbr.rel (%p522) target = $region20
        $region19: #{deconvnet_forward.1} parent=11 // pred_region
          _
        $region20: #{deconvnet_forward.1} parent=11 // pred_fallthru
          _
        // Predicated region
        $region21: #{deconvnet_forward.1} parent=11 // pred_check
          %p525 = pneg %p121
        $region22: #{deconvnet_forward.1} parent=11 // pred_check_branch
          %527 = sbr.rel (%p525) target = $region24
        $region23: #{deconvnet_forward.1} parent=11 // pred_region
          %s529 = ssub.s32 3072, 3072
          %530 = vsyncadd [#allocation4], %s529
          %s531 = sshll.u32 [#allocation3], 4
          %s532 = int_to_ptr.vmem [resolvable:$true] %s531
          %537 = dma.hbm_to_vmem [thread:$0]  %s3, 3072, %s532, [#allocation4], 64, 64, 4
        $region24: #{deconvnet_forward.1} parent=11 // pred_fallthru
          _
        // Predicated region
        $region25: #{deconvnet_forward.1} parent=11 // pred_check
          %p538 = pneg %p142
        $region26: #{deconvnet_forward.1} parent=11 // pred_check_branch
          %540 = sbr.rel (%p538) target = $region28
        $region27: #{deconvnet_forward.1} parent=11 // pred_region
          _
        $region28: #{deconvnet_forward.1} parent=11 // pred_fallthru
          _
        // Predicated region
        $region29: #{deconvnet_forward.1} parent=11 // pred_check
          %p541 = pneg %p163
        $region30: #{deconvnet_forward.1} parent=11 // pred_check_branch
          %543 = sbr.rel (%p541) target = $region32
        $region31: #{deconvnet_forward.1} parent=11 // pred_region
          %s545 = ssub.s32 3072, 3072
          %546 = vsyncadd [#allocation6], %s545
          %s547 = sshll.u32 [#allocation5], 4
          %s548 = int_to_ptr.vmem [resolvable:$true] %s547
          %553 = dma.hbm_to_vmem [thread:$0]  %s5, 3072, %s548, [#allocation6], 64, 64, 4
        $region32: #{deconvnet_forward.1} parent=11 // pred_fallthru
          _
        // Predicated region
        $region33: #{deconvnet_forward.1} parent=11 // pred_check
          %p554 = pneg %p184
        $region34: #{deconvnet_forward.1} parent=11 // pred_check_branch
          %556 = sbr.rel (%p554) target = $region36
        $region35: #{deconvnet_forward.1} parent=11 // pred_region
          _
        $region36: #{deconvnet_forward.1} parent=11 // pred_fallthru
          _
        // Predicated region
        $region37: #{deconvnet_forward.1} parent=11 // pred_check
          %p557 = pneg %p205
        $region38: #{deconvnet_forward.1} parent=11 // pred_check_branch
          %559 = sbr.rel (%p557) target = $region40
        $region39: #{deconvnet_forward.1} parent=11 // pred_region
          %s561 = ssub.s32 6144, 6144
          %562 = vsyncadd [#allocation6], %s561
          %s563 = sshll.u32 [#allocation7], 4
          %s564 = int_to_ptr.vmem [resolvable:$true] %s563
          %569 = dma.hbm_to_vmem [thread:$0]  %s7, 6144, %s564, [#allocation6], 128, 128, 8
        $region40: #{deconvnet_forward.1} parent=11 // pred_fallthru
          _
        // Predicated region
        $region41: #{deconvnet_forward.1} parent=11 // pred_check
          %p570 = pneg %p226
        $region42: #{deconvnet_forward.1} parent=11 // pred_check_branch
          %572 = sbr.rel (%p570) target = $region44
        $region43: #{deconvnet_forward.1} parent=11 // pred_region
          _
        $region44: #{deconvnet_forward.1} parent=11 // pred_fallthru
          _
        // Predicated region
        $region45: #{deconvnet_forward.1} parent=11 // pred_check
          %p573 = pneg %p247
        $region46: #{deconvnet_forward.1} parent=11 // pred_check_branch
          %575 = sbr.rel (%p573) target = $region48
        $region47: #{deconvnet_forward.1} parent=11 // pred_region
          %s577 = ssub.s32 12288, 12288
          %578 = vsyncadd [#allocation9], %s577
          %s579 = sshll.u32 [#allocation8], 4
          %s580 = int_to_ptr.vmem [resolvable:$true] %s579
          %585 = dma.hbm_to_vmem [thread:$0]  %s9, 12288, %s580, [#allocation9], 128, 128, 8
        $region48: #{deconvnet_forward.1} parent=11 // pred_fallthru
          _
        // Predicated region
        $region49: #{deconvnet_forward.1} parent=11 // pred_check
          %p586 = pneg %p268
        $region50: #{deconvnet_forward.1} parent=11 // pred_check_branch
          %588 = sbr.rel (%p586) target = $region52
        $region51: #{deconvnet_forward.1} parent=11 // pred_region
          _
        $region52: #{deconvnet_forward.1} parent=11 // pred_fallthru
          _
        // Predicated region
        $region53: #{deconvnet_forward.1} parent=11 // pred_check
          %p589 = pneg %p289
        $region54: #{deconvnet_forward.1} parent=11 // pred_check_branch
          %591 = sbr.rel (%p589) target = $region56
        $region55: #{deconvnet_forward.1} parent=11 // pred_region
          %s593 = ssub.s32 12288, 12288
          %594 = vsyncadd [#allocation9], %s593
          %s595 = sshll.u32 [#allocation10], 4
          %s596 = int_to_ptr.vmem [resolvable:$true] %s595
          %601 = dma.hbm_to_vmem [thread:$0]  %s11, 12288, %s596, [#allocation9], 128, 128, 8
        $region56: #{deconvnet_forward.1} parent=11 // pred_fallthru
          _
        // Predicated region
        $region57: #{deconvnet_forward.1} parent=11 // pred_check
          %p602 = pneg %p310
        $region58: #{deconvnet_forward.1} parent=11 // pred_check_branch
          %604 = sbr.rel (%p602) target = $region60
        $region59: #{deconvnet_forward.1} parent=11 // pred_region
          _
        $region60: #{deconvnet_forward.1} parent=11 // pred_fallthru
          _
        // Predicated region
        $region61: #{deconvnet_forward.1} parent=11 // pred_check
          %p605 = pneg %p331
        $region62: #{deconvnet_forward.1} parent=11 // pred_check_branch
          %607 = sbr.rel (%p605) target = $region64
        $region63: #{deconvnet_forward.1} parent=11 // pred_region
          %s609 = ssub.s32 12288, 12288
          %610 = vsyncadd [#allocation12], %s609
          %s611 = sshll.u32 [#allocation11], 4
          %s612 = int_to_ptr.vmem [resolvable:$true] %s611
          %617 = dma.hbm_to_vmem [thread:$0]  %s13, 12288, %s612, [#allocation12], 128, 128, 8
        $region64: #{deconvnet_forward.1} parent=11 // pred_fallthru
          _
        // Predicated region
        $region65: #{deconvnet_forward.1} parent=11 // pred_check
          %p618 = pneg %p352
        $region66: #{deconvnet_forward.1} parent=11 // pred_check_branch
          %620 = sbr.rel (%p618) target = $region68
        $region67: #{deconvnet_forward.1} parent=11 // pred_region
          _
        $region68: #{deconvnet_forward.1} parent=11 // pred_fallthru
          _
        // Predicated region
        $region69: #{deconvnet_forward.1} parent=11 // pred_check
          %p621 = pneg %p373
        $region70: #{deconvnet_forward.1} parent=11 // pred_check_branch
          %623 = sbr.rel (%p621) target = $region72
        $region71: #{deconvnet_forward.1} parent=11 // pred_region
          %s625 = ssub.s32 12288, 12288
          %626 = vsyncadd [#allocation12], %s625
          %s627 = sshll.u32 [#allocation13], 4
          %s628 = int_to_ptr.vmem [resolvable:$true] %s627
          %633 = dma.hbm_to_vmem [thread:$0]  %s15, 12288, %s628, [#allocation12], 128, 128, 8
        $region72: #{deconvnet_forward.1} parent=11 // pred_fallthru
          _
        // Predicated region
        $region73: #{deconvnet_forward.1} parent=11 // pred_check
          %p634 = pneg %p394
        $region74: #{deconvnet_forward.1} parent=11 // pred_check_branch
          %636 = sbr.rel (%p634) target = $region76
        $region75: #{deconvnet_forward.1} parent=11 // pred_region
          _
        $region76: #{deconvnet_forward.1} parent=11 // pred_fallthru
          _
        // Predicated region
        $region77: #{deconvnet_forward.1} parent=11 // pred_check
          %p637 = pneg %p415
        $region78: #{deconvnet_forward.1} parent=11 // pred_check_branch
          %639 = sbr.rel (%p637) target = $region80
        $region79: #{deconvnet_forward.1} parent=11 // pred_region
          %s641 = ssub.s32 6144, 6144
          %642 = vsyncadd [#allocation15], %s641
          %s643 = sshll.u32 [#allocation14], 4
          %s644 = int_to_ptr.vmem [resolvable:$true] %s643
          %649 = dma.hbm_to_vmem [thread:$0]  %s17, 6144, %s644, [#allocation15], 64, 64, 4
        $region80: #{deconvnet_forward.1} parent=11 // pred_fallthru
          _
        // Predicated region
        $region81: #{deconvnet_forward.1} parent=11 // pred_check
          %p650 = pneg %p436
        $region82: #{deconvnet_forward.1} parent=11 // pred_check_branch
          %652 = sbr.rel (%p650) target = $region84
        $region83: #{deconvnet_forward.1} parent=11 // pred_region
          _
        $region84: #{deconvnet_forward.1} parent=11 // pred_fallthru
          _
        // Predicated region
        $region85: #{deconvnet_forward.1} parent=11 // pred_check
          %p653 = pneg %p457
        $region86: #{deconvnet_forward.1} parent=11 // pred_check_branch
          %655 = sbr.rel (%p653) target = $region88
        $region87: #{deconvnet_forward.1} parent=11 // pred_region
          %s657 = ssub.s32 3072, 3072
          %658 = vsyncadd [#allocation15], %s657
          %s659 = sshll.u32 [#allocation16], 4
          %s660 = int_to_ptr.vmem [resolvable:$true] %s659
          %665 = dma.hbm_to_vmem [thread:$0]  %s19, 3072, %s660, [#allocation15], 64, 64, 4
        $region88: #{deconvnet_forward.1} parent=11 // pred_fallthru
          _
        // Predicated region
        $region89: #{deconvnet_forward.1} parent=11 // pred_check
          %p666 = pneg %p478
        $region90: #{deconvnet_forward.1} parent=11 // pred_check_branch
          %668 = sbr.rel (%p666) target = $region92
        $region91: #{deconvnet_forward.1} parent=11 // pred_region
          _
        $region92: #{deconvnet_forward.1} parent=11 // pred_fallthru
          _
      $region12: #{deconvnet_forward.1} parent=5 // pred_fallthru
        _
      %p669 = scmp.lt.s32.totalorder %s32, 2
      // Predicated region
      $region93: #{deconvnet_forward.1} parent=5 // pred_check
        %p670 = pneg %p669
      $region94: #{deconvnet_forward.1} parent=5 // pred_check_branch
        %672 = sbr.rel (%p670) target = $region96
      $region95: #{deconvnet_forward.1} parent=5 // pred_region
        // Predicated region
        $region97: #{deconvnet_forward.1} parent=95 // pred_check
          %p673 = pneg %p52
        $region98: #{deconvnet_forward.1} parent=95 // pred_check_branch
          %675 = sbr.rel (%p673) target = $region100
        $region99: #{deconvnet_forward.1} parent=95 // pred_region
          %s676 = smul.u32 4, %s32
          %p677 = scmp.lt.s32.totalorder %s676, 7
          %s678 = scalar_select %p677, %s676, 7
          %s679 = smul.addr %s678, 8
          %s680 = scalar_lea.vmem %s0, %s679
          %s681 = smul.u32 4, %s32
        $region100: #{deconvnet_forward.1} parent=95 // pred_fallthru
          _
      $region96: #{deconvnet_forward.1} parent=5 // pred_fallthru
        _
      %p682 = scmp.le.s32.totalorder 1, %s32
      %p683 = scmp.lt.s32.totalorder %s32, 3
      %p684 = pnand %p682, %p683
      %p685 = pneg %p684
      // Predicated region
      $region101: #{deconvnet_forward.1} parent=5 // pred_check
        _
      $region102: #{deconvnet_forward.1} parent=5 // pred_check_branch
        %687 = sbr.rel (%p684) target = $region104
      $region103: #{deconvnet_forward.1} parent=5 // pred_region
        %s688 = ssub.s32 %s32, 1
        // Predicated region
        $region105: #{deconvnet_forward.1} parent=103 // pred_check
          %p689 = pneg %p121
        $region106: #{deconvnet_forward.1} parent=103 // pred_check_branch
          %691 = sbr.rel (%p689) target = $region108
        $region107: #{deconvnet_forward.1} parent=103 // pred_region
          %692 = dma.done [#allocation4], 3072
        $region108: #{deconvnet_forward.1} parent=103 // pred_fallthru
          _
        // Predicated region
        $region109: #{deconvnet_forward.1} parent=103 // pred_check
          %p693 = pneg %p163
        $region110: #{deconvnet_forward.1} parent=103 // pred_check_branch
          %695 = sbr.rel (%p693) target = $region112
        $region111: #{deconvnet_forward.1} parent=103 // pred_region
          %696 = dma.done [#allocation6], 3072
        $region112: #{deconvnet_forward.1} parent=103 // pred_fallthru
          _
        // Predicated region
        $region113: #{deconvnet_forward.1} parent=103 // pred_check
          %p697 = pneg %p205
        $region114: #{deconvnet_forward.1} parent=103 // pred_check_branch
          %699 = sbr.rel (%p697) target = $region116
        $region115: #{deconvnet_forward.1} parent=103 // pred_region
          %700 = dma.done [#allocation6], 6144
        $region116: #{deconvnet_forward.1} parent=103 // pred_fallthru
          _
        // Predicated region
        $region117: #{deconvnet_forward.1} parent=103 // pred_check
          %p701 = pneg %p247
        $region118: #{deconvnet_forward.1} parent=103 // pred_check_branch
          %703 = sbr.rel (%p701) target = $region120
        $region119: #{deconvnet_forward.1} parent=103 // pred_region
          %704 = dma.done [#allocation9], 12288
        $region120: #{deconvnet_forward.1} parent=103 // pred_fallthru
          _
        // Predicated region
        $region121: #{deconvnet_forward.1} parent=103 // pred_check
          %p705 = pneg %p289
        $region122: #{deconvnet_forward.1} parent=103 // pred_check_branch
          %707 = sbr.rel (%p705) target = $region124
        $region123: #{deconvnet_forward.1} parent=103 // pred_region
          %708 = dma.done [#allocation9], 12288
        $region124: #{deconvnet_forward.1} parent=103 // pred_fallthru
          _
        // Predicated region
        $region125: #{deconvnet_forward.1} parent=103 // pred_check
          %p709 = pneg %p331
        $region126: #{deconvnet_forward.1} parent=103 // pred_check_branch
          %711 = sbr.rel (%p709) target = $region128
        $region127: #{deconvnet_forward.1} parent=103 // pred_region
          %712 = dma.done [#allocation12], 12288
        $region128: #{deconvnet_forward.1} parent=103 // pred_fallthru
          _
        // Predicated region
        $region129: #{deconvnet_forward.1} parent=103 // pred_check
          %p713 = pneg %p373
        $region130: #{deconvnet_forward.1} parent=103 // pred_check_branch
          %715 = sbr.rel (%p713) target = $region132
        $region131: #{deconvnet_forward.1} parent=103 // pred_region
          %716 = dma.done [#allocation12], 12288
        $region132: #{deconvnet_forward.1} parent=103 // pred_fallthru
          _
        // Predicated region
        $region133: #{deconvnet_forward.1} parent=103 // pred_check
          %p717 = pneg %p415
        $region134: #{deconvnet_forward.1} parent=103 // pred_check_branch
          %719 = sbr.rel (%p717) target = $region136
        $region135: #{deconvnet_forward.1} parent=103 // pred_region
          %720 = dma.done [#allocation15], 6144
        $region136: #{deconvnet_forward.1} parent=103 // pred_fallthru
          _
        // Predicated region
        $region137: #{deconvnet_forward.1} parent=103 // pred_check
          %p721 = pneg %p457
        $region138: #{deconvnet_forward.1} parent=103 // pred_check_branch
          %723 = sbr.rel (%p721) target = $region140
        $region139: #{deconvnet_forward.1} parent=103 // pred_region
          %724 = dma.done [#allocation15], 3072
        $region140: #{deconvnet_forward.1} parent=103 // pred_fallthru
          _
        %s725 = smul.u32 4, %s37
        %p726 = scmp.lt.s32.totalorder %s725, 7
        %s727 = scalar_select %p726, %s725, 7
        %s728 = smul.addr %s727, 8
        %s729 = scalar_lea.vmem %s0, %s728
        %p730 = pneg %p58
        %p731 = pneg %p55
        %p732 = pneg %p79
        %p733 = pneg %p76
        %p734 = pneg %p100
        %p735 = pneg %p97
        %p736 = pneg %p121
        %p737 = pneg %p118
        %p738 = pneg %p142
        %p739 = pneg %p139
        %p740 = pneg %p163
        %p741 = pneg %p160
        %p742 = pneg %p184
        %p743 = pneg %p181
        %p744 = pneg %p205
        %p745 = pneg %p202
        %p746 = pneg %p226
        %p747 = pneg %p223
        %p748 = pneg %p247
        %p749 = pneg %p244
        %p750 = pneg %p268
        %p751 = pneg %p265
        %p752 = pneg %p289
        %p753 = pneg %p286
        %p754 = pneg %p310
        %p755 = pneg %p307
        %p756 = pneg %p331
        %p757 = pneg %p328
        %p758 = pneg %p352
        %p759 = pneg %p349
        %p760 = pneg %p373
        %p761 = pneg %p370
        %p762 = pneg %p394
        %p763 = pneg %p391
        %p764 = pneg %p415
        %p765 = pneg %p412
        %p766 = pneg %p436
        %p767 = pneg %p433
        %p768 = pneg %p457
        %p769 = pneg %p454
        %p770 = pneg %p478
        %p771 = pneg %p475
        %p772 = pneg %p504
        %p773 = pneg %p501
        %s774 = smul.u32 4, %s37
        %p775 = scmp.lt.s32.totalorder %s774, 7
        %s776 = scalar_select %p775, %s774, 7
        %s777 = smul.addr %s776, 8
        %s778 = scalar_lea.vmem %s21, %s777
        %s779 = smul.u32 4, %s37
        %p780 = scmp.lt.s32.totalorder %s779, 7
        %s781 = scalar_select %p780, %s779, 7
        %s782 = smul.addr %s781, 8
        %s783 = scalar_lea.vmem %s0, %s782
        %s784 = smul.u32 4, %s37
        %s785 = smul.u32 4, %s37
        %p786 = scmp.lt.s32.totalorder %s785, 7
        %s787 = scalar_select %p786, %s785, 7
        %s788 = smul.addr %s787, 8
        %s789 = scalar_lea.vmem %s21, %s788
        %s790 = smul.u32 4, %s37
        %v792 = vlaneseq
        %v793 = vshrl.u32 %v792, 7
        %v794 = vadd.s32 %v793, 8
        %v795 = vadd.s32 %v793, 16
        %v796 = vadd.s32 %v793, 24
        %vm797 = vcmp.lt.s32.totalorder %v793, 0
        %v798 = vsub.s32 0, %v793
        %v799 = vsel %vm797, %v798, %v793
        %v800 = vshrl.u32 %v799, 4
        %v801 = vand.u32 %v799, 15
        %v802 = vsub.s32 0, %v801
        %v803 = vsel %vm797, %v802, %v801
        %vm804 = vcmp.lt.s32.totalorder %v794, 0
        %v805 = vsub.s32 0, %v794
        %v806 = vsel %vm804, %v805, %v794
        %v807 = vshrl.u32 %v806, 4
        %v808 = vand.u32 %v806, 15
        %v809 = vsub.s32 0, %v808
        %v810 = vsel %vm804, %v809, %v808
        %vm811 = vcmp.lt.s32.totalorder %v795, 0
        %v812 = vsub.s32 0, %v795
        %v813 = vsel %vm811, %v812, %v795
        %v814 = vshrl.u32 %v813, 4
        %v815 = vand.u32 %v813, 15
        %v816 = vsub.s32 0, %v815
        %v817 = vsel %vm811, %v816, %v815
        %vm818 = vcmp.lt.s32.totalorder %v796, 0
        %v819 = vsub.s32 0, %v796
        %v820 = vsel %vm818, %v819, %v796
        %v821 = vshrl.u32 %v820, 4
        %v822 = vand.u32 %v820, 15
        %v823 = vsub.s32 0, %v822
        %v824 = vsel %vm818, %v823, %v822
        %vm825 = vcmp.ne.s32.totalorder %v803, 0
        %vm826 = vcmp.ne.s32.totalorder %v810, 0
        %vm827 = vcmp.ne.s32.totalorder %v817, 0
        %vm828 = vcmp.ne.s32.totalorder %v824, 0
        %vm829 = vcmp.lt.s32.totalorder %v803, 0
        %vm830 = vcmp.lt.s32.totalorder %v810, 0
        %vm831 = vcmp.lt.s32.totalorder %v817, 0
        %vm832 = vcmp.lt.s32.totalorder %v824, 0
        %vm833 = vmand %vm829, %vm825
        %vm834 = vmand %vm830, %vm826
        %vm835 = vmand %vm831, %vm827
        %vm836 = vmand %vm832, %vm828
        %v837 = vadd.s32 %v803, 16
        %v838 = vadd.s32 %v810, 16
        %v839 = vadd.s32 %v817, 16
        %v840 = vadd.s32 %v824, 16
        %v841 = vsel %vm833, %v837, %v803
        %v842 = vsel %vm834, %v838, %v810
        %v843 = vsel %vm835, %v839, %v817
        %v844 = vsel %vm836, %v840, %v824
        %vm845 = vcmp.ne.s32.totalorder %v841, 0
        %vm846 = vcmp.ne.s32.totalorder %v842, 0
        %vm847 = vcmp.ne.s32.totalorder %v843, 0
        %vm848 = vcmp.ne.s32.totalorder %v844, 0
        %vm849 = vcmp.ne.s32.totalorder %v841, 15
        %vm850 = vcmp.ne.s32.totalorder %v842, 15
        %vm851 = vcmp.ne.s32.totalorder %v843, 15
        %vm852 = vcmp.ne.s32.totalorder %v844, 15
        %v853 = vsel %vm845, 1, 0
        %v854 = vsel %vm846, 1, 0
        %v855 = vsel %vm847, 1, 0
        %v856 = vsel %vm848, 1, 0
        %vm857 = vcmp.eq.s32.totalorder %v853, 1
        %vm858 = vcmp.eq.s32.totalorder %v854, 1
        %vm859 = vcmp.eq.s32.totalorder %v855, 1
        %vm860 = vcmp.eq.s32.totalorder %v856, 1
        %v861 = vsel %vm849, 1, 0
        %v862 = vsel %vm850, 1, 0
        %v863 = vsel %vm851, 1, 0
        %v864 = vsel %vm852, 1, 0
        %vm865 = vcmp.eq.s32.totalorder %v861, 1
        %vm866 = vcmp.eq.s32.totalorder %v862, 1
        %vm867 = vcmp.eq.s32.totalorder %v863, 1
        %vm868 = vcmp.eq.s32.totalorder %v864, 1
        %v869 = vld [vmem:[%s783] sm:$0xff]
        %v870 = vld [vmem:[%s783 + $0x8] sm:$0xff]
        %v871 = vld [vmem:[%s783 + $0x10] sm:$0xff]
        %v872 = vld [vmem:[%s783 + $0x18] sm:$0xff]
        %v873 = vld [vmem:[%s1] sm:$0x7]
        %875 = vset.pattern.permute.xlu0 0
        %876 = vperm.xlu0 %875, %v869
        %v877 = vpop.permute.xlu0 %876
        %880 = vset.pattern.permute.xlu0 0
        %881 = vperm.xlu0 %880, %v870
        %v882 = vpop.permute.xlu0 %881
        %885 = vset.pattern.permute.xlu0 0
        %886 = vperm.xlu0 %885, %v871
        %v887 = vpop.permute.xlu0 %886
        %890 = vset.pattern.permute.xlu0 0
        %891 = vperm.xlu0 %890, %v872
        %v892 = vpop.permute.xlu0 %891
        %v894 = vlaneseq
        %v895 = vshrl.u32 %v894, 7
        %v896 = vsub.s32 0, %v895
        %v897 = vrot.slane %v873, %v896
        %v898 = vmul.f32 %v877, %v897
        %v899 = vmul.f32 %v882, %v897
        %v900 = vmul.f32 %v887, %v897
        %v901 = vmul.f32 %v892, %v897
        %v902 = vrot.slane %v898, 7
        %v903 = vrot.slane %v899, 7
        %v904 = vrot.slane %v900, 7
        %v905 = vrot.slane %v901, 7
        %vm906 = vcmp.lt.s32.totalorder %v793, 1
        %v907 = vsel %vm906, %v904, %v905
        %v908 = vsel %vm906, %v903, %v904
        %v909 = vsel %vm906, %v902, %v903
        %v910 = vsel %vm906, %v905, %v902
        %v911 = vsel %vm857, %v910, 0.0
        %v912 = vsel %vm858, %v909, 0.0
        %v913 = vsel %vm859, %v908, 0.0
        %v914 = vsel %vm860, %v907, 0.0
        %v915 = vlaneseq
        %v916 = vshrl.u32 %v915, 7
        %v917 = vsub.s32 1, %v916
        %v918 = vrot.slane %v873, %v917
        %v919 = vmul.f32 %v877, %v918
        %v920 = vmul.f32 %v882, %v918
        %v921 = vmul.f32 %v887, %v918
        %v922 = vmul.f32 %v892, %v918
        %v923 = vadd.f32 %v911, %v919
        %v924 = vadd.f32 %v912, %v920
        %v925 = vadd.f32 %v913, %v921
        %v926 = vadd.f32 %v914, %v922
        %v927 = vlaneseq
        %v928 = vshrl.u32 %v927, 7
        %v929 = vsub.s32 2, %v928
        %v930 = vrot.slane %v873, %v929
        %v931 = vmul.f32 %v877, %v930
        %v932 = vmul.f32 %v882, %v930
        %v933 = vmul.f32 %v887, %v930
        %v934 = vmul.f32 %v892, %v930
        %v935 = vrot.slane %v931, 1
        %v936 = vrot.slane %v932, 1
        %v937 = vrot.slane %v933, 1
        %v938 = vrot.slane %v934, 1
        %vm939 = vcmp.lt.s32.totalorder %v793, 7
        %v940 = vsel %vm939, %v937, %v938
        %v941 = vsel %vm939, %v936, %v937
        %v942 = vsel %vm939, %v935, %v936
        %v943 = vsel %vm939, %v938, %v935
        %v944 = vsel %vm865, %v942, 0.0
        %v945 = vsel %vm866, %v941, 0.0
        %v946 = vsel %vm867, %v940, 0.0
        %v947 = vsel %vm868, %v943, 0.0
        %v948 = vadd.f32 %v923, %v944
        %v949 = vadd.f32 %v924, %v945
        %v950 = vadd.f32 %v925, %v946
        %v951 = vadd.f32 %v926, %v947
        %v952 = vld [vmem:[%s2] sm:$0x1]
        %v954 = vlaneseq
        %v955 = vshrl.u32 %v954, 7
        %v956 = vsub.s32 0, %v955
        %v957 = vrot.slane %v952, %v956
        %v959 = vadd.f32 %v948, %v957
        %v960 = vadd.f32 %v949, %v957
        %v961 = vadd.f32 %v950, %v957
        %v962 = vadd.f32 %v951, %v957
        %v963 = vmax.f32 %v959, 0.0
        %v964 = vmax.f32 %v960, 0.0
        %v965 = vmax.f32 %v961, 0.0
        %v966 = vmax.f32 %v962, 0.0
        %967 = vst [vmem:[#allocation2] sm:$0xff] %v963
        %968 = vst [vmem:[#allocation2 + $0x10] sm:$0xff] %v964
        %969 = vst [vmem:[#allocation2 + $0x20] sm:$0xff] %v965
        %970 = vst [vmem:[#allocation2 + $0x30] sm:$0xff] %v966
        %v971 = vld [vmem:[#allocation2] sm:$0xff]
        %v972 = vld [vmem:[#allocation2 + $0x10] sm:$0xff]
        %v973 = vld [vmem:[#allocation2 + $0x20] sm:$0xff]
        %v974 = vld [vmem:[#allocation2 + $0x30] sm:$0xff]
        %v975 = vrot.slane %v971, 7
        %v976 = vrot.slane %v972, 7
        %v977 = vrot.slane %v973, 7
        %v978 = vrot.slane %v974, 7
        %v979 = vsel %vm906, %v977, %v978
        %v980 = vsel %vm906, %v976, %v977
        %v981 = vsel %vm906, %v975, %v976
        %v982 = vsel %vm906, %v978, %v975
        %v983 = vsel %vm857, %v982, 0.0
        %v984 = vsel %vm858, %v981, 0.0
        %v985 = vsel %vm859, %v980, 0.0
        %v986 = vsel %vm860, %v979, 0.0
        %v987 = vpack.c.bf16 %v984, %v983
        %v988 = vpack.c.bf16 %v986, %v985
        %v989 = vrot.slane %v971, 1
        %v990 = vrot.slane %v972, 1
        %v991 = vrot.slane %v973, 1
        %v992 = vrot.slane %v974, 1
        %v993 = vsel %vm939, %v991, %v992
        %v994 = vsel %vm939, %v990, %v991
        %v995 = vsel %vm939, %v989, %v990
        %v996 = vsel %vm939, %v992, %v989
        %v997 = vsel %vm865, %v995, 0.0
        %v998 = vsel %vm866, %v994, 0.0
        %v999 = vsel %vm867, %v993, 0.0
        %v1000 = vsel %vm868, %v996, 0.0
        %v1001 = vpack.c.bf16 %v998, %v997
        %v1002 = vpack.c.bf16 %v1000, %v999
        %v1003 = vpack.c.bf16 %v972, %v971
        %v1004 = vpack.c.bf16 %v974, %v973
        %v1005 = vld [vmem:[#allocation3] sm:$0xf]
        %v1006 = vld [vmem:[#allocation3 + $0x4] sm:$0xf]
        %v1007 = vld [vmem:[#allocation3 + $0x8] sm:$0xf]
        %v1008 = vld [vmem:[#allocation3 + $0xc] sm:$0xf]
        %v1009 = vld [vmem:[#allocation3 + $0x10] sm:$0xf]
        %v1010 = vld [vmem:[#allocation3 + $0x14] sm:$0xf]
        %v1011 = vld [vmem:[#allocation3 + $0x18] sm:$0xf]
        %v1012 = vld [vmem:[#allocation3 + $0x1c] sm:$0xf]
        %v1013 = vld [vmem:[#allocation3 + $0x20] sm:$0xf]
        %v1014 = vld [vmem:[#allocation3 + $0x24] sm:$0xf]
        %v1015 = vld [vmem:[#allocation3 + $0x28] sm:$0xf]
        %v1016 = vld [vmem:[#allocation3 + $0x2c] sm:$0xf]
        %v1017 = vld [vmem:[#allocation3 + $0x30] sm:$0xf]
        %v1018 = vld [vmem:[#allocation3 + $0x34] sm:$0xf]
        %v1019 = vld [vmem:[#allocation3 + $0x38] sm:$0xf]
        %v1020 = vld [vmem:[#allocation3 + $0x3c] sm:$0xf]
        %s1021 = scalar_lea.vmem [#allocation3], 64
        %v1022 = vld [vmem:[%s1021] sm:$0xf]
        %v1023 = vld [vmem:[%s1021 + $0x4] sm:$0xf]
        %v1024 = vld [vmem:[%s1021 + $0x8] sm:$0xf]
        %v1025 = vld [vmem:[%s1021 + $0xc] sm:$0xf]
        %v1026 = vld [vmem:[%s1021 + $0x10] sm:$0xf]
        %v1027 = vld [vmem:[%s1021 + $0x14] sm:$0xf]
        %v1028 = vld [vmem:[%s1021 + $0x18] sm:$0xf]
        %v1029 = vld [vmem:[%s1021 + $0x1c] sm:$0xf]
        %v1030 = vld [vmem:[%s1021 + $0x20] sm:$0xf]
        %v1031 = vld [vmem:[%s1021 + $0x24] sm:$0xf]
        %v1032 = vld [vmem:[%s1021 + $0x28] sm:$0xf]
        %v1033 = vld [vmem:[%s1021 + $0x2c] sm:$0xf]
        %v1034 = vld [vmem:[%s1021 + $0x30] sm:$0xf]
        %v1035 = vld [vmem:[%s1021 + $0x34] sm:$0xf]
        %v1036 = vld [vmem:[%s1021 + $0x38] sm:$0xf]
        %v1037 = vld [vmem:[%s1021 + $0x3c] sm:$0xf]
        %v1054 = vunpack.c.l.b16 %v1022
        %v1055 = vunpack.c.l.b16 %v1023
        %v1056 = vunpack.c.l.b16 %v1024
        %v1057 = vunpack.c.l.b16 %v1025
        %v1058 = vunpack.c.l.b16 %v1026
        %v1059 = vunpack.c.l.b16 %v1027
        %v1060 = vunpack.c.l.b16 %v1028
        %v1061 = vunpack.c.l.b16 %v1029
        %v1062 = vunpack.c.l.b16 %v1030
        %v1063 = vunpack.c.l.b16 %v1031
        %v1064 = vunpack.c.l.b16 %v1032
        %v1065 = vunpack.c.l.b16 %v1033
        %v1066 = vunpack.c.l.b16 %v1034
        %v1067 = vunpack.c.l.b16 %v1035
        %v1068 = vunpack.c.l.b16 %v1036
        %v1069 = vunpack.c.l.b16 %v1037
        %v1070 = vpack.c.b16 %v1055, %v1054
        %v1071 = vpack.c.b16 %v1057, %v1056
        %v1072 = vpack.c.b16 %v1059, %v1058
        %v1073 = vpack.c.b16 %v1061, %v1060
        %v1074 = vpack.c.b16 %v1063, %v1062
        %v1075 = vpack.c.b16 %v1065, %v1064
        %v1076 = vpack.c.b16 %v1067, %v1066
        %v1077 = vpack.c.b16 %v1069, %v1068
        %1086 = vmatprep.subr.bf16.mxu0 0
        %1087 = vmatpush1.bf16.msra.mxu0 %v1070
        %1088 = vmatprep.subr.bf16.mxu0 0
        %1089 = vmatpush1.bf16.msra.mxu0 %v1071
        %1090 = vmatprep.subr.bf16.mxu0 0
        %1091 = vmatpush1.bf16.msra.mxu0 %v1072
        %1092 = vmatprep.subr.bf16.mxu0 0
        %1093 = vmatpush1.bf16.msra.mxu0 %v1073
        %1094 = vmatprep.subr.bf16.mxu0 0
        %1095 = vmatpush1.bf16.msra.mxu0 %v1074
        %1096 = vmatprep.subr.bf16.mxu0 0
        %1097 = vmatpush1.bf16.msra.mxu0 %v1075
        %1098 = vmatprep.subr.bf16.mxu0 0
        %1099 = vmatpush1.bf16.msra.mxu0 %v1076
        %1100 = vmatprep.subr.bf16.mxu0 0
        %1101 = vmatpush1.bf16.msra.mxu0 %v1077
        %1102 = vmatprep.subr.bf16.mxu0 0
        %1103 = vmatpush1.bf16.msra.mxu0 0
        %1104 = vmatprep.subr.bf16.mxu0 0
        %1105 = vmatpush1.bf16.msra.mxu0 0
        %1106 = vmatprep.subr.bf16.mxu0 0
        %1107 = vmatpush1.bf16.msra.mxu0 0
        %1108 = vmatprep.subr.bf16.mxu0 0
        %1109 = vmatpush1.bf16.msra.mxu0 0
        %1110 = vmatprep.subr.bf16.mxu0 0
        %1111 = vmatpush1.bf16.msra.mxu0 0
        %1112 = vmatprep.subr.bf16.mxu0 0
        %1113 = vmatpush1.bf16.msra.mxu0 0
        %1114 = vmatprep.subr.bf16.mxu0 0
        %1115 = vmatpush1.bf16.msra.mxu0 0
        %1116 = vmatprep.subr.bf16.mxu0 0
        %1117 = vmatpush1.bf16.msra.mxu0 0
        %1118 = vmatprep.mubr.bf16.mxu0 0
        %1119 = vmatmul.mubr.bf16.gmra.mrb[0].mxu0 %v1003
        %v1120 = vpop.f32.mrb[0].mxu0
        %v1121 = vadd.f32 0.0, %v1120
        %v1122 = vpop.f32.mrb[0].mxu0
        %v1123 = vpop.f32.mrb[0].mxu0
        %v1124 = vadd.f32 0.0, %v1123
        %v1125 = vpop.f32.mrb[0].mxu0
        %1126 = vmatprep.mubr.bf16.mxu0 0
        %1127 = vmatmul.mubr.bf16.gmra.mrb[0].mxu0 %v1004
        %v1128 = vpop.f32.mrb[0].mxu0
        %v1129 = vadd.f32 0.0, %v1128
        %v1130 = vpop.f32.mrb[0].mxu0
        %v1131 = vpop.f32.mrb[0].mxu0
        %v1132 = vadd.f32 0.0, %v1131
        %v1133 = vpop.f32.mrb[0].mxu0
        %1134 = vdwg.mxu0
        %v1151 = vunpack.c.l.b16 %v1005
        %v1152 = vunpack.c.l.b16 %v1006
        %v1153 = vunpack.c.l.b16 %v1007
        %v1154 = vunpack.c.l.b16 %v1008
        %v1155 = vunpack.c.l.b16 %v1009
        %v1156 = vunpack.c.l.b16 %v1010
        %v1157 = vunpack.c.l.b16 %v1011
        %v1158 = vunpack.c.l.b16 %v1012
        %v1159 = vunpack.c.l.b16 %v1013
        %v1160 = vunpack.c.l.b16 %v1014
        %v1161 = vunpack.c.l.b16 %v1015
        %v1162 = vunpack.c.l.b16 %v1016
        %v1163 = vunpack.c.l.b16 %v1017
        %v1164 = vunpack.c.l.b16 %v1018
        %v1165 = vunpack.c.l.b16 %v1019
        %v1166 = vunpack.c.l.b16 %v1020
        %v1167 = vpack.c.b16 %v1152, %v1151
        %v1168 = vpack.c.b16 %v1154, %v1153
        %v1169 = vpack.c.b16 %v1156, %v1155
        %v1170 = vpack.c.b16 %v1158, %v1157
        %v1171 = vpack.c.b16 %v1160, %v1159
        %v1172 = vpack.c.b16 %v1162, %v1161
        %v1173 = vpack.c.b16 %v1164, %v1163
        %v1174 = vpack.c.b16 %v1166, %v1165
        %1183 = vmatprep.subr.bf16.mxu0 0
        %1184 = vmatpush1.bf16.msra.mxu0 %v1167
        %1185 = vmatprep.subr.bf16.mxu0 0
        %1186 = vmatpush1.bf16.msra.mxu0 %v1168
        %1187 = vmatprep.subr.bf16.mxu0 0
        %1188 = vmatpush1.bf16.msra.mxu0 %v1169
        %1189 = vmatprep.subr.bf16.mxu0 0
        %1190 = vmatpush1.bf16.msra.mxu0 %v1170
        %1191 = vmatprep.subr.bf16.mxu0 0
        %1192 = vmatpush1.bf16.msra.mxu0 %v1171
        %1193 = vmatprep.subr.bf16.mxu0 0
        %1194 = vmatpush1.bf16.msra.mxu0 %v1172
        %1195 = vmatprep.subr.bf16.mxu0 0
        %1196 = vmatpush1.bf16.msra.mxu0 %v1173
        %1197 = vmatprep.subr.bf16.mxu0 0
        %1198 = vmatpush1.bf16.msra.mxu0 %v1174
        %1199 = vmatprep.subr.bf16.mxu0 0
        %1200 = vmatpush1.bf16.msra.mxu0 0
        %1201 = vmatprep.subr.bf16.mxu0 0
        %1202 = vmatpush1.bf16.msra.mxu0 0
        %1203 = vmatprep.subr.bf16.mxu0 0
        %1204 = vmatpush1.bf16.msra.mxu0 0
        %1205 = vmatprep.subr.bf16.mxu0 0
        %1206 = vmatpush1.bf16.msra.mxu0 0
        %1207 = vmatprep.subr.bf16.mxu0 0
        %1208 = vmatpush1.bf16.msra.mxu0 0
        %1209 = vmatprep.subr.bf16.mxu0 0
        %1210 = vmatpush1.bf16.msra.mxu0 0
        %1211 = vmatprep.subr.bf16.mxu0 0
        %1212 = vmatpush1.bf16.msra.mxu0 0
        %1213 = vmatprep.subr.bf16.mxu0 0
        %1214 = vmatpush1.bf16.msra.mxu0 0
        %1215 = vmatprep.mubr.bf16.mxu0 0
        %1216 = vmatmul.mubr.bf16.gmra.mrb[0].mxu0 %v987
        %v1217 = vpop.f32.mrb[0].mxu0
        %v1218 = vadd.f32 %v1121, %v1217
        %v1219 = vpop.f32.mrb[0].mxu0
        %v1220 = vpop.f32.mrb[0].mxu0
        %v1221 = vadd.f32 %v1124, %v1220
        %v1222 = vpop.f32.mrb[0].mxu0
        %1223 = vmatprep.mubr.bf16.mxu0 0
        %1224 = vmatmul.mubr.bf16.gmra.mrb[0].mxu0 %v988
        %v1225 = vpop.f32.mrb[0].mxu0
        %v1226 = vadd.f32 %v1129, %v1225
        %v1227 = vpop.f32.mrb[0].mxu0
        %v1228 = vpop.f32.mrb[0].mxu0
        %v1229 = vadd.f32 %v1132, %v1228
        %v1230 = vpop.f32.mrb[0].mxu0
        %1231 = vdwg.mxu0
        %s1232 = scalar_lea.vmem [#allocation3], 128
        %v1233 = vld [vmem:[%s1232] sm:$0xf]
        %v1234 = vld [vmem:[%s1232 + $0x4] sm:$0xf]
        %v1235 = vld [vmem:[%s1232 + $0x8] sm:$0xf]
        %v1236 = vld [vmem:[%s1232 + $0xc] sm:$0xf]
        %v1237 = vld [vmem:[%s1232 + $0x10] sm:$0xf]
        %v1238 = vld [vmem:[%s1232 + $0x14] sm:$0xf]
        %v1239 = vld [vmem:[%s1232 + $0x18] sm:$0xf]
        %v1240 = vld [vmem:[%s1232 + $0x1c] sm:$0xf]
        %v1241 = vld [vmem:[%s1232 + $0x20] sm:$0xf]
        %v1242 = vld [vmem:[%s1232 + $0x24] sm:$0xf]
        %v1243 = vld [vmem:[%s1232 + $0x28] sm:$0xf]
        %v1244 = vld [vmem:[%s1232 + $0x2c] sm:$0xf]
        %v1245 = vld [vmem:[%s1232 + $0x30] sm:$0xf]
        %v1246 = vld [vmem:[%s1232 + $0x34] sm:$0xf]
        %v1247 = vld [vmem:[%s1232 + $0x38] sm:$0xf]
        %v1248 = vld [vmem:[%s1232 + $0x3c] sm:$0xf]
        %v1265 = vunpack.c.l.b16 %v1233
        %v1266 = vunpack.c.l.b16 %v1234
        %v1267 = vunpack.c.l.b16 %v1235
        %v1268 = vunpack.c.l.b16 %v1236
        %v1269 = vunpack.c.l.b16 %v1237
        %v1270 = vunpack.c.l.b16 %v1238
        %v1271 = vunpack.c.l.b16 %v1239
        %v1272 = vunpack.c.l.b16 %v1240
        %v1273 = vunpack.c.l.b16 %v1241
        %v1274 = vunpack.c.l.b16 %v1242
        %v1275 = vunpack.c.l.b16 %v1243
        %v1276 = vunpack.c.l.b16 %v1244
        %v1277 = vunpack.c.l.b16 %v1245
        %v1278 = vunpack.c.l.b16 %v1246
        %v1279 = vunpack.c.l.b16 %v1247
        %v1280 = vunpack.c.l.b16 %v1248
        %v1281 = vpack.c.b16 %v1266, %v1265
        %v1282 = vpack.c.b16 %v1268, %v1267
        %v1283 = vpack.c.b16 %v1270, %v1269
        %v1284 = vpack.c.b16 %v1272, %v1271
        %v1285 = vpack.c.b16 %v1274, %v1273
        %v1286 = vpack.c.b16 %v1276, %v1275
        %v1287 = vpack.c.b16 %v1278, %v1277
        %v1288 = vpack.c.b16 %v1280, %v1279
        %1297 = vmatprep.subr.bf16.mxu0 0
        %1298 = vmatpush1.bf16.msra.mxu0 %v1281
        %1299 = vmatprep.subr.bf16.mxu0 0
        %1300 = vmatpush1.bf16.msra.mxu0 %v1282
        %1301 = vmatprep.subr.bf16.mxu0 0
        %1302 = vmatpush1.bf16.msra.mxu0 %v1283
        %1303 = vmatprep.subr.bf16.mxu0 0
        %1304 = vmatpush1.bf16.msra.mxu0 %v1284
        %1305 = vmatprep.subr.bf16.mxu0 0
        %1306 = vmatpush1.bf16.msra.mxu0 %v1285
        %1307 = vmatprep.subr.bf16.mxu0 0
        %1308 = vmatpush1.bf16.msra.mxu0 %v1286
        %1309 = vmatprep.subr.bf16.mxu0 0
        %1310 = vmatpush1.bf16.msra.mxu0 %v1287
        %1311 = vmatprep.subr.bf16.mxu0 0
        %1312 = vmatpush1.bf16.msra.mxu0 %v1288
        %1313 = vmatprep.subr.bf16.mxu0 0
        %1314 = vmatpush1.bf16.msra.mxu0 0
        %1315 = vmatprep.subr.bf16.mxu0 0
        %1316 = vmatpush1.bf16.msra.mxu0 0
        %1317 = vmatprep.subr.bf16.mxu0 0
        %1318 = vmatpush1.bf16.msra.mxu0 0
        %1319 = vmatprep.subr.bf16.mxu0 0
        %1320 = vmatpush1.bf16.msra.mxu0 0
        %1321 = vmatprep.subr.bf16.mxu0 0
        %1322 = vmatpush1.bf16.msra.mxu0 0
        %1323 = vmatprep.subr.bf16.mxu0 0
        %1324 = vmatpush1.bf16.msra.mxu0 0
        %1325 = vmatprep.subr.bf16.mxu0 0
        %1326 = vmatpush1.bf16.msra.mxu0 0
        %1327 = vmatprep.subr.bf16.mxu0 0
        %1328 = vmatpush1.bf16.msra.mxu0 0
        %1329 = vmatprep.mubr.bf16.mxu0 0
        %1330 = vmatmul.mubr.bf16.gmra.mrb[0].mxu0 %v1001
        %v1331 = vpop.f32.mrb[0].mxu0
        %v1332 = vadd.f32 0.0, %v1331
        %v1333 = vpop.f32.mrb[0].mxu0
        %v1334 = vpop.f32.mrb[0].mxu0
        %v1335 = vadd.f32 0.0, %v1334
        %v1336 = vpop.f32.mrb[0].mxu0
        %1337 = vmatprep.mubr.bf16.mxu0 0
        %1338 = vmatmul.mubr.bf16.gmra.mrb[0].mxu0 %v1002
        %v1339 = vpop.f32.mrb[0].mxu0
        %v1340 = vadd.f32 0.0, %v1339
        %v1341 = vpop.f32.mrb[0].mxu0
        %v1342 = vpop.f32.mrb[0].mxu0
        %v1343 = vadd.f32 0.0, %v1342
        %v1344 = vpop.f32.mrb[0].mxu0
        %1345 = vdwg.mxu0
        %v1346 = vadd.f32 %v1218, %v1332
        %v1347 = vadd.f32 %v1221, %v1335
        %v1348 = vadd.f32 %v1226, %v1340
        %v1349 = vadd.f32 %v1229, %v1343
        %v1350 = vld [vmem:[%s4] sm:$0x1]
        %v1352 = vlaneseq
        %v1353 = vshrl.u32 %v1352, 7
        %v1354 = vsub.s32 0, %v1353
        %v1355 = vrot.slane %v1350, %v1354
        %v1357 = vadd.f32 %v1346, %v1355
        %v1358 = vadd.f32 %v1347, %v1355
        %v1359 = vadd.f32 %v1348, %v1355
        %v1360 = vadd.f32 %v1349, %v1355
        %v1361 = vmax.f32 %v1357, 0.0
        %v1362 = vmax.f32 %v1358, 0.0
        %v1363 = vmax.f32 %v1359, 0.0
        %v1364 = vmax.f32 %v1360, 0.0
        %1365 = vst [vmem:[#allocation2] sm:$0xff] %v1361
        %1366 = vst [vmem:[#allocation2 + $0x10] sm:$0xff] %v1362
        %1367 = vst [vmem:[#allocation2 + $0x20] sm:$0xff] %v1363
        %1368 = vst [vmem:[#allocation2 + $0x30] sm:$0xff] %v1364
        %v1369 = vld [vmem:[#allocation2] sm:$0xff]
        %v1370 = vld [vmem:[#allocation2 + $0x10] sm:$0xff]
        %v1371 = vld [vmem:[#allocation2 + $0x20] sm:$0xff]
        %v1372 = vld [vmem:[#allocation2 + $0x30] sm:$0xff]
        %v1373 = vrot.slane %v1369, 7
        %v1374 = vrot.slane %v1370, 7
        %v1375 = vrot.slane %v1371, 7
        %v1376 = vrot.slane %v1372, 7
        %v1377 = vsel %vm906, %v1375, %v1376
        %v1378 = vsel %vm906, %v1374, %v1375
        %v1379 = vsel %vm906, %v1373, %v1374
        %v1380 = vsel %vm906, %v1376, %v1373
        %v1381 = vsel %vm857, %v1380, 0.0
        %v1382 = vsel %vm858, %v1379, 0.0
        %v1383 = vsel %vm859, %v1378, 0.0
        %v1384 = vsel %vm860, %v1377, 0.0
        %v1385 = vpack.c.bf16 %v1382, %v1381
        %v1386 = vpack.c.bf16 %v1384, %v1383
        %v1387 = vrot.slane %v1369, 1
        %v1388 = vrot.slane %v1370, 1
        %v1389 = vrot.slane %v1371, 1
        %v1390 = vrot.slane %v1372, 1
        %v1391 = vsel %vm939, %v1389, %v1390
        %v1392 = vsel %vm939, %v1388, %v1389
        %v1393 = vsel %vm939, %v1387, %v1388
        %v1394 = vsel %vm939, %v1390, %v1387
        %v1395 = vsel %vm865, %v1393, 0.0
        %v1396 = vsel %vm866, %v1392, 0.0
        %v1397 = vsel %vm867, %v1391, 0.0
        %v1398 = vsel %vm868, %v1394, 0.0
        %v1399 = vpack.c.bf16 %v1396, %v1395
        %v1400 = vpack.c.bf16 %v1398, %v1397
        %v1401 = vpack.c.bf16 %v1370, %v1369
        %v1402 = vpack.c.bf16 %v1372, %v1371
        %v1403 = vld [vmem:[#allocation5] sm:$0xf]
        %v1404 = vld [vmem:[#allocation5 + $0x4] sm:$0xf]
        %v1405 = vld [vmem:[#allocation5 + $0x8] sm:$0xf]
        %v1406 = vld [vmem:[#allocation5 + $0xc] sm:$0xf]
        %v1407 = vld [vmem:[#allocation5 + $0x10] sm:$0xf]
        %v1408 = vld [vmem:[#allocation5 + $0x14] sm:$0xf]
        %v1409 = vld [vmem:[#allocation5 + $0x18] sm:$0xf]
        %v1410 = vld [vmem:[#allocation5 + $0x1c] sm:$0xf]
        %v1411 = vld [vmem:[#allocation5 + $0x20] sm:$0xf]
        %v1412 = vld [vmem:[#allocation5 + $0x24] sm:$0xf]
        %v1413 = vld [vmem:[#allocation5 + $0x28] sm:$0xf]
        %v1414 = vld [vmem:[#allocation5 + $0x2c] sm:$0xf]
        %v1415 = vld [vmem:[#allocation5 + $0x30] sm:$0xf]
        %v1416 = vld [vmem:[#allocation5 + $0x34] sm:$0xf]
        %v1417 = vld [vmem:[#allocation5 + $0x38] sm:$0xf]
        %v1418 = vld [vmem:[#allocation5 + $0x3c] sm:$0xf]
        %s1419 = scalar_lea.vmem [#allocation5], 64
        %v1420 = vld [vmem:[%s1419] sm:$0xf]
        %v1421 = vld [vmem:[%s1419 + $0x4] sm:$0xf]
        %v1422 = vld [vmem:[%s1419 + $0x8] sm:$0xf]
        %v1423 = vld [vmem:[%s1419 + $0xc] sm:$0xf]
        %v1424 = vld [vmem:[%s1419 + $0x10] sm:$0xf]
        %v1425 = vld [vmem:[%s1419 + $0x14] sm:$0xf]
        %v1426 = vld [vmem:[%s1419 + $0x18] sm:$0xf]
        %v1427 = vld [vmem:[%s1419 + $0x1c] sm:$0xf]
        %v1428 = vld [vmem:[%s1419 + $0x20] sm:$0xf]
        %v1429 = vld [vmem:[%s1419 + $0x24] sm:$0xf]
        %v1430 = vld [vmem:[%s1419 + $0x28] sm:$0xf]
        %v1431 = vld [vmem:[%s1419 + $0x2c] sm:$0xf]
        %v1432 = vld [vmem:[%s1419 + $0x30] sm:$0xf]
        %v1433 = vld [vmem:[%s1419 + $0x34] sm:$0xf]
        %v1434 = vld [vmem:[%s1419 + $0x38] sm:$0xf]
        %v1435 = vld [vmem:[%s1419 + $0x3c] sm:$0xf]
        %v1452 = vunpack.c.l.b16 %v1420
        %v1453 = vunpack.c.l.b16 %v1421
        %v1454 = vunpack.c.l.b16 %v1422
        %v1455 = vunpack.c.l.b16 %v1423
        %v1456 = vunpack.c.l.b16 %v1424
        %v1457 = vunpack.c.l.b16 %v1425
        %v1458 = vunpack.c.l.b16 %v1426
        %v1459 = vunpack.c.l.b16 %v1427
        %v1460 = vunpack.c.l.b16 %v1428
        %v1461 = vunpack.c.l.b16 %v1429
        %v1462 = vunpack.c.l.b16 %v1430
        %v1463 = vunpack.c.l.b16 %v1431
        %v1464 = vunpack.c.l.b16 %v1432
        %v1465 = vunpack.c.l.b16 %v1433
        %v1466 = vunpack.c.l.b16 %v1434
        %v1467 = vunpack.c.l.b16 %v1435
        %v1468 = vpack.c.b16 %v1453, %v1452
        %v1469 = vpack.c.b16 %v1455, %v1454
        %v1470 = vpack.c.b16 %v1457, %v1456
        %v1471 = vpack.c.b16 %v1459, %v1458
        %v1472 = vpack.c.b16 %v1461, %v1460
        %v1473 = vpack.c.b16 %v1463, %v1462
        %v1474 = vpack.c.b16 %v1465, %v1464
        %v1475 = vpack.c.b16 %v1467, %v1466
        %1484 = vmatprep.subr.bf16.mxu0 0
        %1485 = vmatpush1.bf16.msra.mxu0 %v1468
        %1486 = vmatprep.subr.bf16.mxu0 0
        %1487 = vmatpush1.bf16.msra.mxu0 %v1469
        %1488 = vmatprep.subr.bf16.mxu0 0
        %1489 = vmatpush1.bf16.msra.mxu0 %v1470
        %1490 = vmatprep.subr.bf16.mxu0 0
        %1491 = vmatpush1.bf16.msra.mxu0 %v1471
        %1492 = vmatprep.subr.bf16.mxu0 0
        %1493 = vmatpush1.bf16.msra.mxu0 %v1472
        %1494 = vmatprep.subr.bf16.mxu0 0
        %1495 = vmatpush1.bf16.msra.mxu0 %v1473
        %1496 = vmatprep.subr.bf16.mxu0 0
        %1497 = vmatpush1.bf16.msra.mxu0 %v1474
        %1498 = vmatprep.subr.bf16.mxu0 0
        %1499 = vmatpush1.bf16.msra.mxu0 %v1475
        %1500 = vmatprep.subr.bf16.mxu0 0
        %1501 = vmatpush1.bf16.msra.mxu0 0
        %1502 = vmatprep.subr.bf16.mxu0 0
        %1503 = vmatpush1.bf16.msra.mxu0 0
        %1504 = vmatprep.subr.bf16.mxu0 0
        %1505 = vmatpush1.bf16.msra.mxu0 0
        %1506 = vmatprep.subr.bf16.mxu0 0
        %1507 = vmatpush1.bf16.msra.mxu0 0
        %1508 = vmatprep.subr.bf16.mxu0 0
        %1509 = vmatpush1.bf16.msra.mxu0 0
        %1510 = vmatprep.subr.bf16.mxu0 0
        %1511 = vmatpush1.bf16.msra.mxu0 0
        %1512 = vmatprep.subr.bf16.mxu0 0
        %1513 = vmatpush1.bf16.msra.mxu0 0
        %1514 = vmatprep.subr.bf16.mxu0 0
        %1515 = vmatpush1.bf16.msra.mxu0 0
        %1516 = vmatprep.mubr.bf16.mxu0 0
        %1517 = vmatmul.mubr.bf16.gmra.mrb[0].mxu0 %v1401
        %v1518 = vpop.f32.mrb[0].mxu0
        %v1519 = vadd.f32 0.0, %v1518
        %v1520 = vpop.f32.mrb[0].mxu0
        %v1521 = vpop.f32.mrb[0].mxu0
        %v1522 = vadd.f32 0.0, %v1521
        %v1523 = vpop.f32.mrb[0].mxu0
        %1524 = vmatprep.mubr.bf16.mxu0 0
        %1525 = vmatmul.mubr.bf16.gmra.mrb[0].mxu0 %v1402
        %v1526 = vpop.f32.mrb[0].mxu0
        %v1527 = vadd.f32 0.0, %v1526
        %v1528 = vpop.f32.mrb[0].mxu0
        %v1529 = vpop.f32.mrb[0].mxu0
        %v1530 = vadd.f32 0.0, %v1529
        %v1531 = vpop.f32.mrb[0].mxu0
        %1532 = vdwg.mxu0
        %v1549 = vunpack.c.l.b16 %v1403
        %v1550 = vunpack.c.l.b16 %v1404
        %v1551 = vunpack.c.l.b16 %v1405
        %v1552 = vunpack.c.l.b16 %v1406
        %v1553 = vunpack.c.l.b16 %v1407
        %v1554 = vunpack.c.l.b16 %v1408
        %v1555 = vunpack.c.l.b16 %v1409
        %v1556 = vunpack.c.l.b16 %v1410
        %v1557 = vunpack.c.l.b16 %v1411
        %v1558 = vunpack.c.l.b16 %v1412
        %v1559 = vunpack.c.l.b16 %v1413
        %v1560 = vunpack.c.l.b16 %v1414
        %v1561 = vunpack.c.l.b16 %v1415
        %v1562 = vunpack.c.l.b16 %v1416
        %v1563 = vunpack.c.l.b16 %v1417
        %v1564 = vunpack.c.l.b16 %v1418
        %v1565 = vpack.c.b16 %v1550, %v1549
        %v1566 = vpack.c.b16 %v1552, %v1551
        %v1567 = vpack.c.b16 %v1554, %v1553
        %v1568 = vpack.c.b16 %v1556, %v1555
        %v1569 = vpack.c.b16 %v1558, %v1557
        %v1570 = vpack.c.b16 %v1560, %v1559
        %v1571 = vpack.c.b16 %v1562, %v1561
        %v1572 = vpack.c.b16 %v1564, %v1563
        %1581 = vmatprep.subr.bf16.mxu0 0
        %1582 = vmatpush1.bf16.msra.mxu0 %v1565
        %1583 = vmatprep.subr.bf16.mxu0 0
        %1584 = vmatpush1.bf16.msra.mxu0 %v1566
        %1585 = vmatprep.subr.bf16.mxu0 0
        %1586 = vmatpush1.bf16.msra.mxu0 %v1567
        %1587 = vmatprep.subr.bf16.mxu0 0
        %1588 = vmatpush1.bf16.msra.mxu0 %v1568
        %1589 = vmatprep.subr.bf16.mxu0 0
        %1590 = vmatpush1.bf16.msra.mxu0 %v1569
        %1591 = vmatprep.subr.bf16.mxu0 0
        %1592 = vmatpush1.bf16.msra.mxu0 %v1570
        %1593 = vmatprep.subr.bf16.mxu0 0
        %1594 = vmatpush1.bf16.msra.mxu0 %v1571
        %1595 = vmatprep.subr.bf16.mxu0 0
        %1596 = vmatpush1.bf16.msra.mxu0 %v1572
        %1597 = vmatprep.subr.bf16.mxu0 0
        %1598 = vmatpush1.bf16.msra.mxu0 0
        %1599 = vmatprep.subr.bf16.mxu0 0
        %1600 = vmatpush1.bf16.msra.mxu0 0
        %1601 = vmatprep.subr.bf16.mxu0 0
        %1602 = vmatpush1.bf16.msra.mxu0 0
        %1603 = vmatprep.subr.bf16.mxu0 0
        %1604 = vmatpush1.bf16.msra.mxu0 0
        %1605 = vmatprep.subr.bf16.mxu0 0
        %1606 = vmatpush1.bf16.msra.mxu0 0
        %1607 = vmatprep.subr.bf16.mxu0 0
        %1608 = vmatpush1.bf16.msra.mxu0 0
        %1609 = vmatprep.subr.bf16.mxu0 0
        %1610 = vmatpush1.bf16.msra.mxu0 0
        %1611 = vmatprep.subr.bf16.mxu0 0
        %1612 = vmatpush1.bf16.msra.mxu0 0
        %1613 = vmatprep.mubr.bf16.mxu0 0
        %1614 = vmatmul.mubr.bf16.gmra.mrb[0].mxu0 %v1385
        %v1615 = vpop.f32.mrb[0].mxu0
        %v1616 = vadd.f32 %v1519, %v1615
        %v1617 = vpop.f32.mrb[0].mxu0
        %v1618 = vpop.f32.mrb[0].mxu0
        %v1619 = vadd.f32 %v1522, %v1618
        %v1620 = vpop.f32.mrb[0].mxu0
        %1621 = vmatprep.mubr.bf16.mxu0 0
        %1622 = vmatmul.mubr.bf16.gmra.mrb[0].mxu0 %v1386
        %v1623 = vpop.f32.mrb[0].mxu0
        %v1624 = vadd.f32 %v1527, %v1623
        %v1625 = vpop.f32.mrb[0].mxu0
        %v1626 = vpop.f32.mrb[0].mxu0
        %v1627 = vadd.f32 %v1530, %v1626
        %v1628 = vpop.f32.mrb[0].mxu0
        %1629 = vdwg.mxu0
        %s1630 = scalar_lea.vmem [#allocation5], 128
        %v1631 = vld [vmem:[%s1630] sm:$0xf]
        %v1632 = vld [vmem:[%s1630 + $0x4] sm:$0xf]
        %v1633 = vld [vmem:[%s1630 + $0x8] sm:$0xf]
        %v1634 = vld [vmem:[%s1630 + $0xc] sm:$0xf]
        %v1635 = vld [vmem:[%s1630 + $0x10] sm:$0xf]
        %v1636 = vld [vmem:[%s1630 + $0x14] sm:$0xf]
        %v1637 = vld [vmem:[%s1630 + $0x18] sm:$0xf]
        %v1638 = vld [vmem:[%s1630 + $0x1c] sm:$0xf]
        %v1639 = vld [vmem:[%s1630 + $0x20] sm:$0xf]
        %v1640 = vld [vmem:[%s1630 + $0x24] sm:$0xf]
        %v1641 = vld [vmem:[%s1630 + $0x28] sm:$0xf]
        %v1642 = vld [vmem:[%s1630 + $0x2c] sm:$0xf]
        %v1643 = vld [vmem:[%s1630 + $0x30] sm:$0xf]
        %v1644 = vld [vmem:[%s1630 + $0x34] sm:$0xf]
        %v1645 = vld [vmem:[%s1630 + $0x38] sm:$0xf]
        %v1646 = vld [vmem:[%s1630 + $0x3c] sm:$0xf]
        %v1663 = vunpack.c.l.b16 %v1631
        %v1664 = vunpack.c.l.b16 %v1632
        %v1665 = vunpack.c.l.b16 %v1633
        %v1666 = vunpack.c.l.b16 %v1634
        %v1667 = vunpack.c.l.b16 %v1635
        %v1668 = vunpack.c.l.b16 %v1636
        %v1669 = vunpack.c.l.b16 %v1637
        %v1670 = vunpack.c.l.b16 %v1638
        %v1671 = vunpack.c.l.b16 %v1639
        %v1672 = vunpack.c.l.b16 %v1640
        %v1673 = vunpack.c.l.b16 %v1641
        %v1674 = vunpack.c.l.b16 %v1642
        %v1675 = vunpack.c.l.b16 %v1643
        %v1676 = vunpack.c.l.b16 %v1644
        %v1677 = vunpack.c.l.b16 %v1645
        %v1678 = vunpack.c.l.b16 %v1646
        %v1679 = vpack.c.b16 %v1664, %v1663
        %v1680 = vpack.c.b16 %v1666, %v1665
        %v1681 = vpack.c.b16 %v1668, %v1667
        %v1682 = vpack.c.b16 %v1670, %v1669
        %v1683 = vpack.c.b16 %v1672, %v1671
        %v1684 = vpack.c.b16 %v1674, %v1673
        %v1685 = vpack.c.b16 %v1676, %v1675
        %v1686 = vpack.c.b16 %v1678, %v1677
        %1695 = vmatprep.subr.bf16.mxu0 0
        %1696 = vmatpush1.bf16.msra.mxu0 %v1679
        %1697 = vmatprep.subr.bf16.mxu0 0
        %1698 = vmatpush1.bf16.msra.mxu0 %v1680
        %1699 = vmatprep.subr.bf16.mxu0 0
        %1700 = vmatpush1.bf16.msra.mxu0 %v1681
        %1701 = vmatprep.subr.bf16.mxu0 0
        %1702 = vmatpush1.bf16.msra.mxu0 %v1682
        %1703 = vmatprep.subr.bf16.mxu0 0
        %1704 = vmatpush1.bf16.msra.mxu0 %v1683
        %1705 = vmatprep.subr.bf16.mxu0 0
        %1706 = vmatpush1.bf16.msra.mxu0 %v1684
        %1707 = vmatprep.subr.bf16.mxu0 0
        %1708 = vmatpush1.bf16.msra.mxu0 %v1685
        %1709 = vmatprep.subr.bf16.mxu0 0
        %1710 = vmatpush1.bf16.msra.mxu0 %v1686
        %1711 = vmatprep.subr.bf16.mxu0 0
        %1712 = vmatpush1.bf16.msra.mxu0 0
        %1713 = vmatprep.subr.bf16.mxu0 0
        %1714 = vmatpush1.bf16.msra.mxu0 0
        %1715 = vmatprep.subr.bf16.mxu0 0
        %1716 = vmatpush1.bf16.msra.mxu0 0
        %1717 = vmatprep.subr.bf16.mxu0 0
        %1718 = vmatpush1.bf16.msra.mxu0 0
        %1719 = vmatprep.subr.bf16.mxu0 0
        %1720 = vmatpush1.bf16.msra.mxu0 0
        %1721 = vmatprep.subr.bf16.mxu0 0
        %1722 = vmatpush1.bf16.msra.mxu0 0
        %1723 = vmatprep.subr.bf16.mxu0 0
        %1724 = vmatpush1.bf16.msra.mxu0 0
        %1725 = vmatprep.subr.bf16.mxu0 0
        %1726 = vmatpush1.bf16.msra.mxu0 0
        %1727 = vmatprep.mubr.bf16.mxu0 0
        %1728 = vmatmul.mubr.bf16.gmra.mrb[0].mxu0 %v1399
        %v1729 = vpop.f32.mrb[0].mxu0
        %v1730 = vadd.f32 0.0, %v1729
        %v1731 = vpop.f32.mrb[0].mxu0
        %v1732 = vpop.f32.mrb[0].mxu0
        %v1733 = vadd.f32 0.0, %v1732
        %v1734 = vpop.f32.mrb[0].mxu0
        %1735 = vmatprep.mubr.bf16.mxu0 0
        %1736 = vmatmul.mubr.bf16.gmra.mrb[0].mxu0 %v1400
        %v1737 = vpop.f32.mrb[0].mxu0
        %v1738 = vadd.f32 0.0, %v1737
        %v1739 = vpop.f32.mrb[0].mxu0
        %v1740 = vpop.f32.mrb[0].mxu0
        %v1741 = vadd.f32 0.0, %v1740
        %v1742 = vpop.f32.mrb[0].mxu0
        %1743 = vdwg.mxu0
        %v1744 = vadd.f32 %v1616, %v1730
        %v1745 = vadd.f32 %v1619, %v1733
        %v1746 = vadd.f32 %v1624, %v1738
        %v1747 = vadd.f32 %v1627, %v1741
        %v1748 = vld [vmem:[%s6] sm:$0x1]
        %v1750 = vlaneseq
        %v1751 = vshrl.u32 %v1750, 7
        %v1752 = vsub.s32 0, %v1751
        %v1753 = vrot.slane %v1748, %v1752
        %v1755 = vadd.f32 %v1744, %v1753
        %v1756 = vadd.f32 %v1745, %v1753
        %v1757 = vadd.f32 %v1746, %v1753
        %v1758 = vadd.f32 %v1747, %v1753
        %v1759 = vmax.f32 %v1755, 0.0
        %v1760 = vmax.f32 %v1756, 0.0
        %v1761 = vmax.f32 %v1757, 0.0
        %v1762 = vmax.f32 %v1758, 0.0
        %1763 = vst [vmem:[#allocation2] sm:$0xff] %v1759
        %1764 = vst [vmem:[#allocation2 + $0x10] sm:$0xff] %v1760
        %1765 = vst [vmem:[#allocation2 + $0x20] sm:$0xff] %v1761
        %1766 = vst [vmem:[#allocation2 + $0x30] sm:$0xff] %v1762
        %v1767 = vld [vmem:[#allocation2] sm:$0xff]
        %v1768 = vld [vmem:[#allocation2 + $0x10] sm:$0xff]
        %v1769 = vld [vmem:[#allocation2 + $0x20] sm:$0xff]
        %v1770 = vld [vmem:[#allocation2 + $0x30] sm:$0xff]
        %v1771 = vrot.slane %v1767, 7
        %v1772 = vrot.slane %v1768, 7
        %v1773 = vrot.slane %v1769, 7
        %v1774 = vrot.slane %v1770, 7
        %v1775 = vsel %vm906, %v1773, %v1774
        %v1776 = vsel %vm906, %v1772, %v1773
        %v1777 = vsel %vm906, %v1771, %v1772
        %v1778 = vsel %vm906, %v1774, %v1771
        %v1779 = vsel %vm857, %v1778, 0.0
        %v1780 = vsel %vm858, %v1777, 0.0
        %v1781 = vsel %vm859, %v1776, 0.0
        %v1782 = vsel %vm860, %v1775, 0.0
        %v1783 = vpack.c.bf16 %v1780, %v1779
        %v1784 = vpack.c.bf16 %v1782, %v1781
        %v1785 = vrot.slane %v1767, 1
        %v1786 = vrot.slane %v1768, 1
        %v1787 = vrot.slane %v1769, 1
        %v1788 = vrot.slane %v1770, 1
        %v1789 = vsel %vm939, %v1787, %v1788
        %v1790 = vsel %vm939, %v1786, %v1787
        %v1791 = vsel %vm939, %v1785, %v1786
        %v1792 = vsel %vm939, %v1788, %v1785
        %v1793 = vsel %vm865, %v1791, 0.0
        %v1794 = vsel %vm866, %v1790, 0.0
        %v1795 = vsel %vm867, %v1789, 0.0
        %v1796 = vsel %vm868, %v1792, 0.0
        %v1797 = vpack.c.bf16 %v1794, %v1793
        %v1798 = vpack.c.bf16 %v1796, %v1795
        %v1799 = vpack.c.bf16 %v1768, %v1767
        %v1800 = vpack.c.bf16 %v1770, %v1769
        %v1801 = vld [vmem:[#allocation7] sm:$0xff]
        %v1802 = vld [vmem:[#allocation7 + $0x8] sm:$0xff]
        %v1803 = vld [vmem:[#allocation7 + $0x10] sm:$0xff]
        %v1804 = vld [vmem:[#allocation7 + $0x18] sm:$0xff]
        %v1805 = vld [vmem:[#allocation7 + $0x20] sm:$0xff]
        %v1806 = vld [vmem:[#allocation7 + $0x28] sm:$0xff]
        %v1807 = vld [vmem:[#allocation7 + $0x30] sm:$0xff]
        %v1808 = vld [vmem:[#allocation7 + $0x38] sm:$0xff]
        %v1809 = vld [vmem:[#allocation7 + $0x40] sm:$0xff]
        %v1810 = vld [vmem:[#allocation7 + $0x48] sm:$0xff]
        %v1811 = vld [vmem:[#allocation7 + $0x50] sm:$0xff]
        %v1812 = vld [vmem:[#allocation7 + $0x58] sm:$0xff]
        %v1813 = vld [vmem:[#allocation7 + $0x60] sm:$0xff]
        %v1814 = vld [vmem:[#allocation7 + $0x68] sm:$0xff]
        %v1815 = vld [vmem:[#allocation7 + $0x70] sm:$0xff]
        %v1816 = vld [vmem:[#allocation7 + $0x78] sm:$0xff]
        %s1817 = scalar_lea.vmem [#allocation7], 128
        %v1818 = vld [vmem:[%s1817] sm:$0xff]
        %v1819 = vld [vmem:[%s1817 + $0x8] sm:$0xff]
        %v1820 = vld [vmem:[%s1817 + $0x10] sm:$0xff]
        %v1821 = vld [vmem:[%s1817 + $0x18] sm:$0xff]
        %v1822 = vld [vmem:[%s1817 + $0x20] sm:$0xff]
        %v1823 = vld [vmem:[%s1817 + $0x28] sm:$0xff]
        %v1824 = vld [vmem:[%s1817 + $0x30] sm:$0xff]
        %v1825 = vld [vmem:[%s1817 + $0x38] sm:$0xff]
        %v1826 = vld [vmem:[%s1817 + $0x40] sm:$0xff]
        %v1827 = vld [vmem:[%s1817 + $0x48] sm:$0xff]
        %v1828 = vld [vmem:[%s1817 + $0x50] sm:$0xff]
        %v1829 = vld [vmem:[%s1817 + $0x58] sm:$0xff]
        %v1830 = vld [vmem:[%s1817 + $0x60] sm:$0xff]
        %v1831 = vld [vmem:[%s1817 + $0x68] sm:$0xff]
        %v1832 = vld [vmem:[%s1817 + $0x70] sm:$0xff]
        %v1833 = vld [vmem:[%s1817 + $0x78] sm:$0xff]
        %v1850 = vunpack.c.l.b16 %v1818
        %v1851 = vunpack.c.h.b16 %v1818
        %v1852 = vunpack.c.l.b16 %v1819
        %v1853 = vunpack.c.h.b16 %v1819
        %v1854 = vunpack.c.l.b16 %v1820
        %v1855 = vunpack.c.h.b16 %v1820
        %v1856 = vunpack.c.l.b16 %v1821
        %v1857 = vunpack.c.h.b16 %v1821
        %v1858 = vunpack.c.l.b16 %v1822
        %v1859 = vunpack.c.h.b16 %v1822
        %v1860 = vunpack.c.l.b16 %v1823
        %v1861 = vunpack.c.h.b16 %v1823
        %v1862 = vunpack.c.l.b16 %v1824
        %v1863 = vunpack.c.h.b16 %v1824
        %v1864 = vunpack.c.l.b16 %v1825
        %v1865 = vunpack.c.h.b16 %v1825
        %v1866 = vunpack.c.l.b16 %v1826
        %v1867 = vunpack.c.h.b16 %v1826
        %v1868 = vunpack.c.l.b16 %v1827
        %v1869 = vunpack.c.h.b16 %v1827
        %v1870 = vunpack.c.l.b16 %v1828
        %v1871 = vunpack.c.h.b16 %v1828
        %v1872 = vunpack.c.l.b16 %v1829
        %v1873 = vunpack.c.h.b16 %v1829
        %v1874 = vunpack.c.l.b16 %v1830
        %v1875 = vunpack.c.h.b16 %v1830
        %v1876 = vunpack.c.l.b16 %v1831
        %v1877 = vunpack.c.h.b16 %v1831
        %v1878 = vunpack.c.l.b16 %v1832
        %v1879 = vunpack.c.h.b16 %v1832
        %v1880 = vunpack.c.l.b16 %v1833
        %v1881 = vunpack.c.h.b16 %v1833
        %v1882 = vpack.c.b16 %v1852, %v1850
        %v1883 = vpack.c.b16 %v1853, %v1851
        %v1884 = vpack.c.b16 %v1856, %v1854
        %v1885 = vpack.c.b16 %v1857, %v1855
        %v1886 = vpack.c.b16 %v1860, %v1858
        %v1887 = vpack.c.b16 %v1861, %v1859
        %v1888 = vpack.c.b16 %v1864, %v1862
        %v1889 = vpack.c.b16 %v1865, %v1863
        %v1890 = vpack.c.b16 %v1868, %v1866
        %v1891 = vpack.c.b16 %v1869, %v1867
        %v1892 = vpack.c.b16 %v1872, %v1870
        %v1893 = vpack.c.b16 %v1873, %v1871
        %v1894 = vpack.c.b16 %v1876, %v1874
        %v1895 = vpack.c.b16 %v1877, %v1875
        %v1896 = vpack.c.b16 %v1880, %v1878
        %v1897 = vpack.c.b16 %v1881, %v1879
        %1914 = vmatprep.subr.bf16.mxu0 %v1883
        %1915 = vmatpush1.bf16.msra.mxu0 %v1882
        %1916 = vmatprep.subr.bf16.mxu0 %v1885
        %1917 = vmatpush1.bf16.msra.mxu0 %v1884
        %1918 = vmatprep.subr.bf16.mxu0 %v1887
        %1919 = vmatpush1.bf16.msra.mxu0 %v1886
        %1920 = vmatprep.subr.bf16.mxu0 %v1889
        %1921 = vmatpush1.bf16.msra.mxu0 %v1888
        %1922 = vmatprep.subr.bf16.mxu0 %v1891
        %1923 = vmatpush1.bf16.msra.mxu0 %v1890
        %1924 = vmatprep.subr.bf16.mxu0 %v1893
        %1925 = vmatpush1.bf16.msra.mxu0 %v1892
        %1926 = vmatprep.subr.bf16.mxu0 %v1895
        %1927 = vmatpush1.bf16.msra.mxu0 %v1894
        %1928 = vmatprep.subr.bf16.mxu0 %v1897
        %1929 = vmatpush1.bf16.msra.mxu0 %v1896
        %1930 = vmatprep.subr.bf16.mxu0 0
        %1931 = vmatpush1.bf16.msra.mxu0 0
        %1932 = vmatprep.subr.bf16.mxu0 0
        %1933 = vmatpush1.bf16.msra.mxu0 0
        %1934 = vmatprep.subr.bf16.mxu0 0
        %1935 = vmatpush1.bf16.msra.mxu0 0
        %1936 = vmatprep.subr.bf16.mxu0 0
        %1937 = vmatpush1.bf16.msra.mxu0 0
        %1938 = vmatprep.subr.bf16.mxu0 0
        %1939 = vmatpush1.bf16.msra.mxu0 0
        %1940 = vmatprep.subr.bf16.mxu0 0
        %1941 = vmatpush1.bf16.msra.mxu0 0
        %1942 = vmatprep.subr.bf16.mxu0 0
        %1943 = vmatpush1.bf16.msra.mxu0 0
        %1944 = vmatprep.subr.bf16.mxu0 0
        %1945 = vmatpush1.bf16.msra.mxu0 0
        %1946 = vmatprep.mubr.bf16.mxu0 0
        %1947 = vmatmul.mubr.bf16.gmra.mrb[0].mxu0 %v1799
        %v1948 = vpop.f32.mrb[0].mxu0
        %v1949 = vadd.f32 0.0, %v1948
        %v1950 = vpop.f32.mrb[0].mxu0
        %v1951 = vadd.f32 0.0, %v1950
        %v1952 = vpop.f32.mrb[0].mxu0
        %v1953 = vadd.f32 0.0, %v1952
        %v1954 = vpop.f32.mrb[0].mxu0
        %v1955 = vadd.f32 0.0, %v1954
        %1956 = vmatprep.mubr.bf16.mxu0 0
        %1957 = vmatmul.mubr.bf16.gmra.mrb[0].mxu0 %v1800
        %v1958 = vpop.f32.mrb[0].mxu0
        %v1959 = vadd.f32 0.0, %v1958
        %v1960 = vpop.f32.mrb[0].mxu0
        %v1961 = vadd.f32 0.0, %v1960
        %v1962 = vpop.f32.mrb[0].mxu0
        %v1963 = vadd.f32 0.0, %v1962
        %v1964 = vpop.f32.mrb[0].mxu0
        %v1965 = vadd.f32 0.0, %v1964
        %1966 = vdwg.mxu0
        %v1983 = vunpack.c.l.b16 %v1801
        %v1984 = vunpack.c.h.b16 %v1801
        %v1985 = vunpack.c.l.b16 %v1802
        %v1986 = vunpack.c.h.b16 %v1802
        %v1987 = vunpack.c.l.b16 %v1803
        %v1988 = vunpack.c.h.b16 %v1803
        %v1989 = vunpack.c.l.b16 %v1804
        %v1990 = vunpack.c.h.b16 %v1804
        %v1991 = vunpack.c.l.b16 %v1805
        %v1992 = vunpack.c.h.b16 %v1805
        %v1993 = vunpack.c.l.b16 %v1806
        %v1994 = vunpack.c.h.b16 %v1806
        %v1995 = vunpack.c.l.b16 %v1807
        %v1996 = vunpack.c.h.b16 %v1807
        %v1997 = vunpack.c.l.b16 %v1808
        %v1998 = vunpack.c.h.b16 %v1808
        %v1999 = vunpack.c.l.b16 %v1809
        %v2000 = vunpack.c.h.b16 %v1809
        %v2001 = vunpack.c.l.b16 %v1810
        %v2002 = vunpack.c.h.b16 %v1810
        %v2003 = vunpack.c.l.b16 %v1811
        %v2004 = vunpack.c.h.b16 %v1811
        %v2005 = vunpack.c.l.b16 %v1812
        %v2006 = vunpack.c.h.b16 %v1812
        %v2007 = vunpack.c.l.b16 %v1813
        %v2008 = vunpack.c.h.b16 %v1813
        %v2009 = vunpack.c.l.b16 %v1814
        %v2010 = vunpack.c.h.b16 %v1814
        %v2011 = vunpack.c.l.b16 %v1815
        %v2012 = vunpack.c.h.b16 %v1815
        %v2013 = vunpack.c.l.b16 %v1816
        %v2014 = vunpack.c.h.b16 %v1816
        %v2015 = vpack.c.b16 %v1985, %v1983
        %v2016 = vpack.c.b16 %v1986, %v1984
        %v2017 = vpack.c.b16 %v1989, %v1987
        %v2018 = vpack.c.b16 %v1990, %v1988
        %v2019 = vpack.c.b16 %v1993, %v1991
        %v2020 = vpack.c.b16 %v1994, %v1992
        %v2021 = vpack.c.b16 %v1997, %v1995
        %v2022 = vpack.c.b16 %v1998, %v1996
        %v2023 = vpack.c.b16 %v2001, %v1999
        %v2024 = vpack.c.b16 %v2002, %v2000
        %v2025 = vpack.c.b16 %v2005, %v2003
        %v2026 = vpack.c.b16 %v2006, %v2004
        %v2027 = vpack.c.b16 %v2009, %v2007
        %v2028 = vpack.c.b16 %v2010, %v2008
        %v2029 = vpack.c.b16 %v2013, %v2011
        %v2030 = vpack.c.b16 %v2014, %v2012
        %2047 = vmatprep.subr.bf16.mxu0 %v2016
        %2048 = vmatpush1.bf16.msra.mxu0 %v2015
        %2049 = vmatprep.subr.bf16.mxu0 %v2018
        %2050 = vmatpush1.bf16.msra.mxu0 %v2017
        %2051 = vmatprep.subr.bf16.mxu0 %v2020
        %2052 = vmatpush1.bf16.msra.mxu0 %v2019
        %2053 = vmatprep.subr.bf16.mxu0 %v2022
        %2054 = vmatpush1.bf16.msra.mxu0 %v2021
        %2055 = vmatprep.subr.bf16.mxu0 %v2024
        %2056 = vmatpush1.bf16.msra.mxu0 %v2023
        %2057 = vmatprep.subr.bf16.mxu0 %v2026
        %2058 = vmatpush1.bf16.msra.mxu0 %v2025
        %2059 = vmatprep.subr.bf16.mxu0 %v2028
        %2060 = vmatpush1.bf16.msra.mxu0 %v2027
        %2061 = vmatprep.subr.bf16.mxu0 %v2030
        %2062 = vmatpush1.bf16.msra.mxu0 %v2029
        %2063 = vmatprep.subr.bf16.mxu0 0
        %2064 = vmatpush1.bf16.msra.mxu0 0
        %2065 = vmatprep.subr.bf16.mxu0 0
        %2066 = vmatpush1.bf16.msra.mxu0 0
        %2067 = vmatprep.subr.bf16.mxu0 0
        %2068 = vmatpush1.bf16.msra.mxu0 0
        %2069 = vmatprep.subr.bf16.mxu0 0
        %2070 = vmatpush1.bf16.msra.mxu0 0
        %2071 = vmatprep.subr.bf16.mxu0 0
        %2072 = vmatpush1.bf16.msra.mxu0 0
        %2073 = vmatprep.subr.bf16.mxu0 0
        %2074 = vmatpush1.bf16.msra.mxu0 0
        %2075 = vmatprep.subr.bf16.mxu0 0
        %2076 = vmatpush1.bf16.msra.mxu0 0
        %2077 = vmatprep.subr.bf16.mxu0 0
        %2078 = vmatpush1.bf16.msra.mxu0 0
        %2079 = vmatprep.mubr.bf16.mxu0 0
        %2080 = vmatmul.mubr.bf16.gmra.mrb[0].mxu0 %v1783
        %v2081 = vpop.f32.mrb[0].mxu0
        %v2082 = vadd.f32 %v1949, %v2081
        %v2083 = vpop.f32.mrb[0].mxu0
        %v2084 = vadd.f32 %v1951, %v2083
        %v2085 = vpop.f32.mrb[0].mxu0
        %v2086 = vadd.f32 %v1953, %v2085
        %v2087 = vpop.f32.mrb[0].mxu0
        %v2088 = vadd.f32 %v1955, %v2087
        %2089 = vmatprep.mubr.bf16.mxu0 0
        %2090 = vmatmul.mubr.bf16.gmra.mrb[0].mxu0 %v1784
        %v2091 = vpop.f32.mrb[0].mxu0
        %v2092 = vadd.f32 %v1959, %v2091
        %v2093 = vpop.f32.mrb[0].mxu0
        %v2094 = vadd.f32 %v1961, %v2093
        %v2095 = vpop.f32.mrb[0].mxu0
        %v2096 = vadd.f32 %v1963, %v2095
        %v2097 = vpop.f32.mrb[0].mxu0
        %v2098 = vadd.f32 %v1965, %v2097
        %2099 = vdwg.mxu0
        %s2100 = scalar_lea.vmem [#allocation7], 256
        %v2101 = vld [vmem:[%s2100] sm:$0xff]
        %v2102 = vld [vmem:[%s2100 + $0x8] sm:$0xff]
        %v2103 = vld [vmem:[%s2100 + $0x10] sm:$0xff]
        %v2104 = vld [vmem:[%s2100 + $0x18] sm:$0xff]
        %v2105 = vld [vmem:[%s2100 + $0x20] sm:$0xff]
        %v2106 = vld [vmem:[%s2100 + $0x28] sm:$0xff]
        %v2107 = vld [vmem:[%s2100 + $0x30] sm:$0xff]
        %v2108 = vld [vmem:[%s2100 + $0x38] sm:$0xff]
        %v2109 = vld [vmem:[%s2100 + $0x40] sm:$0xff]
        %v2110 = vld [vmem:[%s2100 + $0x48] sm:$0xff]
        %v2111 = vld [vmem:[%s2100 + $0x50] sm:$0xff]
        %v2112 = vld [vmem:[%s2100 + $0x58] sm:$0xff]
        %v2113 = vld [vmem:[%s2100 + $0x60] sm:$0xff]
        %v2114 = vld [vmem:[%s2100 + $0x68] sm:$0xff]
        %v2115 = vld [vmem:[%s2100 + $0x70] sm:$0xff]
        %v2116 = vld [vmem:[%s2100 + $0x78] sm:$0xff]
        %v2133 = vunpack.c.l.b16 %v2101
        %v2134 = vunpack.c.h.b16 %v2101
        %v2135 = vunpack.c.l.b16 %v2102
        %v2136 = vunpack.c.h.b16 %v2102
        %v2137 = vunpack.c.l.b16 %v2103
        %v2138 = vunpack.c.h.b16 %v2103
        %v2139 = vunpack.c.l.b16 %v2104
        %v2140 = vunpack.c.h.b16 %v2104
        %v2141 = vunpack.c.l.b16 %v2105
        %v2142 = vunpack.c.h.b16 %v2105
        %v2143 = vunpack.c.l.b16 %v2106
        %v2144 = vunpack.c.h.b16 %v2106
        %v2145 = vunpack.c.l.b16 %v2107
        %v2146 = vunpack.c.h.b16 %v2107
        %v2147 = vunpack.c.l.b16 %v2108
        %v2148 = vunpack.c.h.b16 %v2108
        %v2149 = vunpack.c.l.b16 %v2109
        %v2150 = vunpack.c.h.b16 %v2109
        %v2151 = vunpack.c.l.b16 %v2110
        %v2152 = vunpack.c.h.b16 %v2110
        %v2153 = vunpack.c.l.b16 %v2111
        %v2154 = vunpack.c.h.b16 %v2111
        %v2155 = vunpack.c.l.b16 %v2112
        %v2156 = vunpack.c.h.b16 %v2112
        %v2157 = vunpack.c.l.b16 %v2113
        %v2158 = vunpack.c.h.b16 %v2113
        %v2159 = vunpack.c.l.b16 %v2114
        %v2160 = vunpack.c.h.b16 %v2114
        %v2161 = vunpack.c.l.b16 %v2115
        %v2162 = vunpack.c.h.b16 %v2115
        %v2163 = vunpack.c.l.b16 %v2116
        %v2164 = vunpack.c.h.b16 %v2116
        %v2165 = vpack.c.b16 %v2135, %v2133
        %v2166 = vpack.c.b16 %v2136, %v2134
        %v2167 = vpack.c.b16 %v2139, %v2137
        %v2168 = vpack.c.b16 %v2140, %v2138
        %v2169 = vpack.c.b16 %v2143, %v2141
        %v2170 = vpack.c.b16 %v2144, %v2142
        %v2171 = vpack.c.b16 %v2147, %v2145
        %v2172 = vpack.c.b16 %v2148, %v2146
        %v2173 = vpack.c.b16 %v2151, %v2149
        %v2174 = vpack.c.b16 %v2152, %v2150
        %v2175 = vpack.c.b16 %v2155, %v2153
        %v2176 = vpack.c.b16 %v2156, %v2154
        %v2177 = vpack.c.b16 %v2159, %v2157
        %v2178 = vpack.c.b16 %v2160, %v2158
        %v2179 = vpack.c.b16 %v2163, %v2161
        %v2180 = vpack.c.b16 %v2164, %v2162
        %2197 = vmatprep.subr.bf16.mxu0 %v2166
        %2198 = vmatpush1.bf16.msra.mxu0 %v2165
        %2199 = vmatprep.subr.bf16.mxu0 %v2168
        %2200 = vmatpush1.bf16.msra.mxu0 %v2167
        %2201 = vmatprep.subr.bf16.mxu0 %v2170
        %2202 = vmatpush1.bf16.msra.mxu0 %v2169
        %2203 = vmatprep.subr.bf16.mxu0 %v2172
        %2204 = vmatpush1.bf16.msra.mxu0 %v2171
        %2205 = vmatprep.subr.bf16.mxu0 %v2174
        %2206 = vmatpush1.bf16.msra.mxu0 %v2173
        %2207 = vmatprep.subr.bf16.mxu0 %v2176
        %2208 = vmatpush1.bf16.msra.mxu0 %v2175
        %2209 = vmatprep.subr.bf16.mxu0 %v2178
        %2210 = vmatpush1.bf16.msra.mxu0 %v2177
        %2211 = vmatprep.subr.bf16.mxu0 %v2180
        %2212 = vmatpush1.bf16.msra.mxu0 %v2179
        %2213 = vmatprep.subr.bf16.mxu0 0
        %2214 = vmatpush1.bf16.msra.mxu0 0
        %2215 = vmatprep.subr.bf16.mxu0 0
        %2216 = vmatpush1.bf16.msra.mxu0 0
        %2217 = vmatprep.subr.bf16.mxu0 0
        %2218 = vmatpush1.bf16.msra.mxu0 0
        %2219 = vmatprep.subr.bf16.mxu0 0
        %2220 = vmatpush1.bf16.msra.mxu0 0
        %2221 = vmatprep.subr.bf16.mxu0 0
        %2222 = vmatpush1.bf16.msra.mxu0 0
        %2223 = vmatprep.subr.bf16.mxu0 0
        %2224 = vmatpush1.bf16.msra.mxu0 0
        %2225 = vmatprep.subr.bf16.mxu0 0
        %2226 = vmatpush1.bf16.msra.mxu0 0
        %2227 = vmatprep.subr.bf16.mxu0 0
        %2228 = vmatpush1.bf16.msra.mxu0 0
        %2229 = vmatprep.mubr.bf16.mxu0 0
        %2230 = vmatmul.mubr.bf16.gmra.mrb[0].mxu0 %v1797
        %v2231 = vpop.f32.mrb[0].mxu0
        %v2232 = vadd.f32 0.0, %v2231
        %v2233 = vpop.f32.mrb[0].mxu0
        %v2234 = vadd.f32 0.0, %v2233
        %v2235 = vpop.f32.mrb[0].mxu0
        %v2236 = vadd.f32 0.0, %v2235
        %v2237 = vpop.f32.mrb[0].mxu0
        %v2238 = vadd.f32 0.0, %v2237
        %2239 = vmatprep.mubr.bf16.mxu0 0
        %2240 = vmatmul.mubr.bf16.gmra.mrb[0].mxu0 %v1798
        %v2241 = vpop.f32.mrb[0].mxu0
        %v2242 = vadd.f32 0.0, %v2241
        %v2243 = vpop.f32.mrb[0].mxu0
        %v2244 = vadd.f32 0.0, %v2243
        %v2245 = vpop.f32.mrb[0].mxu0
        %v2246 = vadd.f32 0.0, %v2245
        %v2247 = vpop.f32.mrb[0].mxu0
        %v2248 = vadd.f32 0.0, %v2247
        %2249 = vdwg.mxu0
        %v2250 = vadd.f32 %v2082, %v2232
        %v2251 = vadd.f32 %v2084, %v2234
        %v2252 = vadd.f32 %v2086, %v2236
        %v2253 = vadd.f32 %v2088, %v2238
        %v2254 = vadd.f32 %v2092, %v2242
        %v2255 = vadd.f32 %v2094, %v2244
        %v2256 = vadd.f32 %v2096, %v2246
        %v2257 = vadd.f32 %v2098, %v2248
        %v2258 = vld [vmem:[%s8] sm:$0x3]
        %v2260 = vlaneseq
        %v2261 = vshrl.u32 %v2260, 7
        %v2262 = vsub.s32 0, %v2261
        %v2263 = vrot.slane %v2258, %v2262
        %v2264 = vlaneseq
        %v2265 = vshrl.u32 %v2264, 7
        %v2266 = vsub.s32 1, %v2265
        %v2267 = vrot.slane %v2258, %v2266
        %v2270 = vadd.f32 %v2250, %v2263
        %v2271 = vadd.f32 %v2251, %v2267
        %v2272 = vadd.f32 %v2252, %v2263
        %v2273 = vadd.f32 %v2253, %v2267
        %v2274 = vadd.f32 %v2254, %v2263
        %v2275 = vadd.f32 %v2255, %v2267
        %v2276 = vadd.f32 %v2256, %v2263
        %v2277 = vadd.f32 %v2257, %v2267
        %v2278 = vmax.f32 %v2270, 0.0
        %v2279 = vmax.f32 %v2271, 0.0
        %v2280 = vmax.f32 %v2272, 0.0
        %v2281 = vmax.f32 %v2273, 0.0
        %v2282 = vmax.f32 %v2274, 0.0
        %v2283 = vmax.f32 %v2275, 0.0
        %v2284 = vmax.f32 %v2276, 0.0
        %v2285 = vmax.f32 %v2277, 0.0
        %2286 = vst [vmem:[#allocation2] sm:$0xff] %v2278
        %2287 = vst [vmem:[#allocation2 + $0x8] sm:$0xff] %v2279
        %2288 = vst [vmem:[#allocation2 + $0x10] sm:$0xff] %v2280
        %2289 = vst [vmem:[#allocation2 + $0x18] sm:$0xff] %v2281
        %2290 = vst [vmem:[#allocation2 + $0x20] sm:$0xff] %v2282
        %2291 = vst [vmem:[#allocation2 + $0x28] sm:$0xff] %v2283
        %2292 = vst [vmem:[#allocation2 + $0x30] sm:$0xff] %v2284
        %2293 = vst [vmem:[#allocation2 + $0x38] sm:$0xff] %v2285
        %v2294 = vld [vmem:[#allocation2] sm:$0xff]
        %v2295 = vld [vmem:[#allocation2 + $0x8] sm:$0xff]
        %v2296 = vld [vmem:[#allocation2 + $0x10] sm:$0xff]
        %v2297 = vld [vmem:[#allocation2 + $0x18] sm:$0xff]
        %v2298 = vld [vmem:[#allocation2 + $0x20] sm:$0xff]
        %v2299 = vld [vmem:[#allocation2 + $0x28] sm:$0xff]
        %v2300 = vld [vmem:[#allocation2 + $0x30] sm:$0xff]
        %v2301 = vld [vmem:[#allocation2 + $0x38] sm:$0xff]
        %v2302 = vrot.slane %v2294, 7
        %v2303 = vrot.slane %v2295, 7
        %v2304 = vrot.slane %v2296, 7
        %v2305 = vrot.slane %v2297, 7
        %v2306 = vrot.slane %v2298, 7
        %v2307 = vrot.slane %v2299, 7
        %v2308 = vrot.slane %v2300, 7
        %v2309 = vrot.slane %v2301, 7
        %v2310 = vsel %vm906, %v2306, %v2308
        %v2311 = vsel %vm906, %v2307, %v2309
        %v2312 = vsel %vm906, %v2304, %v2306
        %v2313 = vsel %vm906, %v2305, %v2307
        %v2314 = vsel %vm906, %v2302, %v2304
        %v2315 = vsel %vm906, %v2303, %v2305
        %v2316 = vsel %vm906, %v2308, %v2302
        %v2317 = vsel %vm906, %v2309, %v2303
        %v2318 = vsel %vm857, %v2316, 0.0
        %v2319 = vsel %vm857, %v2317, 0.0
        %v2320 = vsel %vm858, %v2314, 0.0
        %v2321 = vsel %vm858, %v2315, 0.0
        %v2322 = vsel %vm859, %v2312, 0.0
        %v2323 = vsel %vm859, %v2313, 0.0
        %v2324 = vsel %vm860, %v2310, 0.0
        %v2325 = vsel %vm860, %v2311, 0.0
        %v2326 = vpack.c.bf16 %v2320, %v2318
        %v2327 = vpack.c.bf16 %v2321, %v2319
        %v2328 = vpack.c.bf16 %v2324, %v2322
        %v2329 = vpack.c.bf16 %v2325, %v2323
        %v2330 = vrot.slane %v2294, 1
        %v2331 = vrot.slane %v2295, 1
        %v2332 = vrot.slane %v2296, 1
        %v2333 = vrot.slane %v2297, 1
        %v2334 = vrot.slane %v2298, 1
        %v2335 = vrot.slane %v2299, 1
        %v2336 = vrot.slane %v2300, 1
        %v2337 = vrot.slane %v2301, 1
        %v2338 = vsel %vm939, %v2334, %v2336
        %v2339 = vsel %vm939, %v2335, %v2337
        %v2340 = vsel %vm939, %v2332, %v2334
        %v2341 = vsel %vm939, %v2333, %v2335
        %v2342 = vsel %vm939, %v2330, %v2332
        %v2343 = vsel %vm939, %v2331, %v2333
        %v2344 = vsel %vm939, %v2336, %v2330
        %v2345 = vsel %vm939, %v2337, %v2331
        %v2346 = vsel %vm865, %v2342, 0.0
        %v2347 = vsel %vm865, %v2343, 0.0
        %v2348 = vsel %vm866, %v2340, 0.0
        %v2349 = vsel %vm866, %v2341, 0.0
        %v2350 = vsel %vm867, %v2338, 0.0
        %v2351 = vsel %vm867, %v2339, 0.0
        %v2352 = vsel %vm868, %v2344, 0.0
        %v2353 = vsel %vm868, %v2345, 0.0
        %v2354 = vpack.c.bf16 %v2348, %v2346
        %v2355 = vpack.c.bf16 %v2349, %v2347
        %v2356 = vpack.c.bf16 %v2352, %v2350
        %v2357 = vpack.c.bf16 %v2353, %v2351
        %v2358 = vpack.c.bf16 %v2296, %v2294
        %v2359 = vpack.c.bf16 %v2297, %v2295
        %v2360 = vpack.c.bf16 %v2300, %v2298
        %v2361 = vpack.c.bf16 %v2301, %v2299
        %v2362 = vld [vmem:[#allocation8] sm:$0xff]
        %v2363 = vld [vmem:[#allocation8 + $0x8] sm:$0xff]
        %v2364 = vld [vmem:[#allocation8 + $0x10] sm:$0xff]
        %v2365 = vld [vmem:[#allocation8 + $0x18] sm:$0xff]
        %v2366 = vld [vmem:[#allocation8 + $0x20] sm:$0xff]
        %v2367 = vld [vmem:[#allocation8 + $0x28] sm:$0xff]
        %v2368 = vld [vmem:[#allocation8 + $0x30] sm:$0xff]
        %v2369 = vld [vmem:[#allocation8 + $0x38] sm:$0xff]
        %v2370 = vld [vmem:[#allocation8 + $0x40] sm:$0xff]
        %v2371 = vld [vmem:[#allocation8 + $0x48] sm:$0xff]
        %v2372 = vld [vmem:[#allocation8 + $0x50] sm:$0xff]
        %v2373 = vld [vmem:[#allocation8 + $0x58] sm:$0xff]
        %v2374 = vld [vmem:[#allocation8 + $0x60] sm:$0xff]
        %v2375 = vld [vmem:[#allocation8 + $0x68] sm:$0xff]
        %v2376 = vld [vmem:[#allocation8 + $0x70] sm:$0xff]
        %v2377 = vld [vmem:[#allocation8 + $0x78] sm:$0xff]
        %v2378 = vld [vmem:[#allocation8 + $0x80] sm:$0xff]
        %v2379 = vld [vmem:[#allocation8 + $0x88] sm:$0xff]
        %v2380 = vld [vmem:[#allocation8 + $0x90] sm:$0xff]
        %v2381 = vld [vmem:[#allocation8 + $0x98] sm:$0xff]
        %v2382 = vld [vmem:[#allocation8 + $0xa0] sm:$0xff]
        %v2383 = vld [vmem:[#allocation8 + $0xa8] sm:$0xff]
        %v2384 = vld [vmem:[#allocation8 + $0xb0] sm:$0xff]
        %v2385 = vld [vmem:[#allocation8 + $0xb8] sm:$0xff]
        %v2386 = vld [vmem:[#allocation8 + $0xc0] sm:$0xff]
        %v2387 = vld [vmem:[#allocation8 + $0xc8] sm:$0xff]
        %v2388 = vld [vmem:[#allocation8 + $0xd0] sm:$0xff]
        %v2389 = vld [vmem:[#allocation8 + $0xd8] sm:$0xff]
        %v2390 = vld [vmem:[#allocation8 + $0xe0] sm:$0xff]
        %v2391 = vld [vmem:[#allocation8 + $0xe8] sm:$0xff]
        %v2392 = vld [vmem:[#allocation8 + $0xf0] sm:$0xff]
        %v2393 = vld [vmem:[#allocation8 + $0xf8] sm:$0xff]
        %s2394 = scalar_lea.vmem [#allocation8], 256
        %v2395 = vld [vmem:[%s2394] sm:$0xff]
        %v2396 = vld [vmem:[%s2394 + $0x8] sm:$0xff]
        %v2397 = vld [vmem:[%s2394 + $0x10] sm:$0xff]
        %v2398 = vld [vmem:[%s2394 + $0x18] sm:$0xff]
        %v2399 = vld [vmem:[%s2394 + $0x20] sm:$0xff]
        %v2400 = vld [vmem:[%s2394 + $0x28] sm:$0xff]
        %v2401 = vld [vmem:[%s2394 + $0x30] sm:$0xff]
        %v2402 = vld [vmem:[%s2394 + $0x38] sm:$0xff]
        %v2403 = vld [vmem:[%s2394 + $0x40] sm:$0xff]
        %v2404 = vld [vmem:[%s2394 + $0x48] sm:$0xff]
        %v2405 = vld [vmem:[%s2394 + $0x50] sm:$0xff]
        %v2406 = vld [vmem:[%s2394 + $0x58] sm:$0xff]
        %v2407 = vld [vmem:[%s2394 + $0x60] sm:$0xff]
        %v2408 = vld [vmem:[%s2394 + $0x68] sm:$0xff]
        %v2409 = vld [vmem:[%s2394 + $0x70] sm:$0xff]
        %v2410 = vld [vmem:[%s2394 + $0x78] sm:$0xff]
        %v2411 = vld [vmem:[%s2394 + $0x80] sm:$0xff]
        %v2412 = vld [vmem:[%s2394 + $0x88] sm:$0xff]
        %v2413 = vld [vmem:[%s2394 + $0x90] sm:$0xff]
        %v2414 = vld [vmem:[%s2394 + $0x98] sm:$0xff]
        %v2415 = vld [vmem:[%s2394 + $0xa0] sm:$0xff]
        %v2416 = vld [vmem:[%s2394 + $0xa8] sm:$0xff]
        %v2417 = vld [vmem:[%s2394 + $0xb0] sm:$0xff]
        %v2418 = vld [vmem:[%s2394 + $0xb8] sm:$0xff]
        %v2419 = vld [vmem:[%s2394 + $0xc0] sm:$0xff]
        %v2420 = vld [vmem:[%s2394 + $0xc8] sm:$0xff]
        %v2421 = vld [vmem:[%s2394 + $0xd0] sm:$0xff]
        %v2422 = vld [vmem:[%s2394 + $0xd8] sm:$0xff]
        %v2423 = vld [vmem:[%s2394 + $0xe0] sm:$0xff]
        %v2424 = vld [vmem:[%s2394 + $0xe8] sm:$0xff]
        %v2425 = vld [vmem:[%s2394 + $0xf0] sm:$0xff]
        %v2426 = vld [vmem:[%s2394 + $0xf8] sm:$0xff]
        %v2459 = vunpack.c.l.b16 %v2395
        %v2460 = vunpack.c.h.b16 %v2395
        %v2461 = vunpack.c.l.b16 %v2396
        %v2462 = vunpack.c.h.b16 %v2396
        %v2463 = vunpack.c.l.b16 %v2397
        %v2464 = vunpack.c.h.b16 %v2397
        %v2465 = vunpack.c.l.b16 %v2398
        %v2466 = vunpack.c.h.b16 %v2398
        %v2467 = vunpack.c.l.b16 %v2399
        %v2468 = vunpack.c.h.b16 %v2399
        %v2469 = vunpack.c.l.b16 %v2400
        %v2470 = vunpack.c.h.b16 %v2400
        %v2471 = vunpack.c.l.b16 %v2401
        %v2472 = vunpack.c.h.b16 %v2401
        %v2473 = vunpack.c.l.b16 %v2402
        %v2474 = vunpack.c.h.b16 %v2402
        %v2475 = vunpack.c.l.b16 %v2403
        %v2476 = vunpack.c.h.b16 %v2403
        %v2477 = vunpack.c.l.b16 %v2404
        %v2478 = vunpack.c.h.b16 %v2404
        %v2479 = vunpack.c.l.b16 %v2405
        %v2480 = vunpack.c.h.b16 %v2405
        %v2481 = vunpack.c.l.b16 %v2406
        %v2482 = vunpack.c.h.b16 %v2406
        %v2483 = vunpack.c.l.b16 %v2407
        %v2484 = vunpack.c.h.b16 %v2407
        %v2485 = vunpack.c.l.b16 %v2408
        %v2486 = vunpack.c.h.b16 %v2408
        %v2487 = vunpack.c.l.b16 %v2409
        %v2488 = vunpack.c.h.b16 %v2409
        %v2489 = vunpack.c.l.b16 %v2410
        %v2490 = vunpack.c.h.b16 %v2410
        %v2491 = vunpack.c.l.b16 %v2411
        %v2492 = vunpack.c.h.b16 %v2411
        %v2493 = vunpack.c.l.b16 %v2412
        %v2494 = vunpack.c.h.b16 %v2412
        %v2495 = vunpack.c.l.b16 %v2413
        %v2496 = vunpack.c.h.b16 %v2413
        %v2497 = vunpack.c.l.b16 %v2414
        %v2498 = vunpack.c.h.b16 %v2414
        %v2499 = vunpack.c.l.b16 %v2415
        %v2500 = vunpack.c.h.b16 %v2415
        %v2501 = vunpack.c.l.b16 %v2416
        %v2502 = vunpack.c.h.b16 %v2416
        %v2503 = vunpack.c.l.b16 %v2417
        %v2504 = vunpack.c.h.b16 %v2417
        %v2505 = vunpack.c.l.b16 %v2418
        %v2506 = vunpack.c.h.b16 %v2418
        %v2507 = vunpack.c.l.b16 %v2419
        %v2508 = vunpack.c.h.b16 %v2419
        %v2509 = vunpack.c.l.b16 %v2420
        %v2510 = vunpack.c.h.b16 %v2420
        %v2511 = vunpack.c.l.b16 %v2421
        %v2512 = vunpack.c.h.b16 %v2421
        %v2513 = vunpack.c.l.b16 %v2422
        %v2514 = vunpack.c.h.b16 %v2422
        %v2515 = vunpack.c.l.b16 %v2423
        %v2516 = vunpack.c.h.b16 %v2423
        %v2517 = vunpack.c.l.b16 %v2424
        %v2518 = vunpack.c.h.b16 %v2424
        %v2519 = vunpack.c.l.b16 %v2425
        %v2520 = vunpack.c.h.b16 %v2425
        %v2521 = vunpack.c.l.b16 %v2426
        %v2522 = vunpack.c.h.b16 %v2426
        %v2523 = vpack.c.b16 %v2461, %v2459
        %v2524 = vpack.c.b16 %v2462, %v2460
        %v2525 = vpack.c.b16 %v2465, %v2463
        %v2526 = vpack.c.b16 %v2466, %v2464
        %v2527 = vpack.c.b16 %v2469, %v2467
        %v2528 = vpack.c.b16 %v2470, %v2468
        %v2529 = vpack.c.b16 %v2473, %v2471
        %v2530 = vpack.c.b16 %v2474, %v2472
        %v2531 = vpack.c.b16 %v2477, %v2475
        %v2532 = vpack.c.b16 %v2478, %v2476
        %v2533 = vpack.c.b16 %v2481, %v2479
        %v2534 = vpack.c.b16 %v2482, %v2480
        %v2535 = vpack.c.b16 %v2485, %v2483
        %v2536 = vpack.c.b16 %v2486, %v2484
        %v2537 = vpack.c.b16 %v2489, %v2487
        %v2538 = vpack.c.b16 %v2490, %v2488
        %v2539 = vpack.c.b16 %v2493, %v2491
        %v2540 = vpack.c.b16 %v2494, %v2492
        %v2541 = vpack.c.b16 %v2497, %v2495
        %v2542 = vpack.c.b16 %v2498, %v2496
        %v2543 = vpack.c.b16 %v2501, %v2499
        %v2544 = vpack.c.b16 %v2502, %v2500
        %v2545 = vpack.c.b16 %v2505, %v2503
        %v2546 = vpack.c.b16 %v2506, %v2504
        %v2547 = vpack.c.b16 %v2509, %v2507
        %v2548 = vpack.c.b16 %v2510, %v2508
        %v2549 = vpack.c.b16 %v2513, %v2511
        %v2550 = vpack.c.b16 %v2514, %v2512
        %v2551 = vpack.c.b16 %v2517, %v2515
        %v2552 = vpack.c.b16 %v2518, %v2516
        %v2553 = vpack.c.b16 %v2521, %v2519
        %v2554 = vpack.c.b16 %v2522, %v2520
        %2587 = vmatprep.subr.bf16.mxu0 %v2524
        %2588 = vmatpush1.bf16.msra.mxu0 %v2523
        %2589 = vmatprep.subr.bf16.mxu0 %v2526
        %2590 = vmatpush1.bf16.msra.mxu0 %v2525
        %2591 = vmatprep.subr.bf16.mxu0 %v2528
        %2592 = vmatpush1.bf16.msra.mxu0 %v2527
        %2593 = vmatprep.subr.bf16.mxu0 %v2530
        %2594 = vmatpush1.bf16.msra.mxu0 %v2529
        %2595 = vmatprep.subr.bf16.mxu0 %v2532
        %2596 = vmatpush1.bf16.msra.mxu0 %v2531
        %2597 = vmatprep.subr.bf16.mxu0 %v2534
        %2598 = vmatpush1.bf16.msra.mxu0 %v2533
        %2599 = vmatprep.subr.bf16.mxu0 %v2536
        %2600 = vmatpush1.bf16.msra.mxu0 %v2535
        %2601 = vmatprep.subr.bf16.mxu0 %v2538
        %2602 = vmatpush1.bf16.msra.mxu0 %v2537
        %2603 = vmatprep.subr.bf16.mxu0 %v2540
        %2604 = vmatpush1.bf16.msra.mxu0 %v2539
        %2605 = vmatprep.subr.bf16.mxu0 %v2542
        %2606 = vmatpush1.bf16.msra.mxu0 %v2541
        %2607 = vmatprep.subr.bf16.mxu0 %v2544
        %2608 = vmatpush1.bf16.msra.mxu0 %v2543
        %2609 = vmatprep.subr.bf16.mxu0 %v2546
        %2610 = vmatpush1.bf16.msra.mxu0 %v2545
        %2611 = vmatprep.subr.bf16.mxu0 %v2548
        %2612 = vmatpush1.bf16.msra.mxu0 %v2547
        %2613 = vmatprep.subr.bf16.mxu0 %v2550
        %2614 = vmatpush1.bf16.msra.mxu0 %v2549
        %2615 = vmatprep.subr.bf16.mxu0 %v2552
        %2616 = vmatpush1.bf16.msra.mxu0 %v2551
        %2617 = vmatprep.subr.bf16.mxu0 %v2554
        %2618 = vmatpush1.bf16.msra.mxu0 %v2553
        %2619 = vmatprep.mubr.bf16.mxu0 %v2359
        %2620 = vmatmul.mubr.bf16.gmra.mrb[0].mxu0 %v2358
        %v2621 = vpop.f32.mrb[0].mxu0
        %v2622 = vadd.f32 0.0, %v2621
        %v2623 = vpop.f32.mrb[0].mxu0
        %v2624 = vadd.f32 0.0, %v2623
        %v2625 = vpop.f32.mrb[0].mxu0
        %v2626 = vadd.f32 0.0, %v2625
        %v2627 = vpop.f32.mrb[0].mxu0
        %v2628 = vadd.f32 0.0, %v2627
        %2629 = vmatprep.mubr.bf16.mxu0 %v2361
        %2630 = vmatmul.mubr.bf16.gmra.mrb[0].mxu0 %v2360
        %v2631 = vpop.f32.mrb[0].mxu0
        %v2632 = vadd.f32 0.0, %v2631
        %v2633 = vpop.f32.mrb[0].mxu0
        %v2634 = vadd.f32 0.0, %v2633
        %v2635 = vpop.f32.mrb[0].mxu0
        %v2636 = vadd.f32 0.0, %v2635
        %v2637 = vpop.f32.mrb[0].mxu0
        %v2638 = vadd.f32 0.0, %v2637
        %2639 = vdwg.mxu0
        %v2672 = vunpack.c.l.b16 %v2362
        %v2673 = vunpack.c.h.b16 %v2362
        %v2674 = vunpack.c.l.b16 %v2363
        %v2675 = vunpack.c.h.b16 %v2363
        %v2676 = vunpack.c.l.b16 %v2364
        %v2677 = vunpack.c.h.b16 %v2364
        %v2678 = vunpack.c.l.b16 %v2365
        %v2679 = vunpack.c.h.b16 %v2365
        %v2680 = vunpack.c.l.b16 %v2366
        %v2681 = vunpack.c.h.b16 %v2366
        %v2682 = vunpack.c.l.b16 %v2367
        %v2683 = vunpack.c.h.b16 %v2367
        %v2684 = vunpack.c.l.b16 %v2368
        %v2685 = vunpack.c.h.b16 %v2368
        %v2686 = vunpack.c.l.b16 %v2369
        %v2687 = vunpack.c.h.b16 %v2369
        %v2688 = vunpack.c.l.b16 %v2370
        %v2689 = vunpack.c.h.b16 %v2370
        %v2690 = vunpack.c.l.b16 %v2371
        %v2691 = vunpack.c.h.b16 %v2371
        %v2692 = vunpack.c.l.b16 %v2372
        %v2693 = vunpack.c.h.b16 %v2372
        %v2694 = vunpack.c.l.b16 %v2373
        %v2695 = vunpack.c.h.b16 %v2373
        %v2696 = vunpack.c.l.b16 %v2374
        %v2697 = vunpack.c.h.b16 %v2374
        %v2698 = vunpack.c.l.b16 %v2375
        %v2699 = vunpack.c.h.b16 %v2375
        %v2700 = vunpack.c.l.b16 %v2376
        %v2701 = vunpack.c.h.b16 %v2376
        %v2702 = vunpack.c.l.b16 %v2377
        %v2703 = vunpack.c.h.b16 %v2377
        %v2704 = vunpack.c.l.b16 %v2378
        %v2705 = vunpack.c.h.b16 %v2378
        %v2706 = vunpack.c.l.b16 %v2379
        %v2707 = vunpack.c.h.b16 %v2379
        %v2708 = vunpack.c.l.b16 %v2380
        %v2709 = vunpack.c.h.b16 %v2380
        %v2710 = vunpack.c.l.b16 %v2381
        %v2711 = vunpack.c.h.b16 %v2381
        %v2712 = vunpack.c.l.b16 %v2382
        %v2713 = vunpack.c.h.b16 %v2382
        %v2714 = vunpack.c.l.b16 %v2383
        %v2715 = vunpack.c.h.b16 %v2383
        %v2716 = vunpack.c.l.b16 %v2384
        %v2717 = vunpack.c.h.b16 %v2384
        %v2718 = vunpack.c.l.b16 %v2385
        %v2719 = vunpack.c.h.b16 %v2385
        %v2720 = vunpack.c.l.b16 %v2386
        %v2721 = vunpack.c.h.b16 %v2386
        %v2722 = vunpack.c.l.b16 %v2387
        %v2723 = vunpack.c.h.b16 %v2387
        %v2724 = vunpack.c.l.b16 %v2388
        %v2725 = vunpack.c.h.b16 %v2388
        %v2726 = vunpack.c.l.b16 %v2389
        %v2727 = vunpack.c.h.b16 %v2389
        %v2728 = vunpack.c.l.b16 %v2390
        %v2729 = vunpack.c.h.b16 %v2390
        %v2730 = vunpack.c.l.b16 %v2391
        %v2731 = vunpack.c.h.b16 %v2391
        %v2732 = vunpack.c.l.b16 %v2392
        %v2733 = vunpack.c.h.b16 %v2392
        %v2734 = vunpack.c.l.b16 %v2393
        %v2735 = vunpack.c.h.b16 %v2393
        %v2736 = vpack.c.b16 %v2674, %v2672
        %v2737 = vpack.c.b16 %v2675, %v2673
        %v2738 = vpack.c.b16 %v2678, %v2676
        %v2739 = vpack.c.b16 %v2679, %v2677
        %v2740 = vpack.c.b16 %v2682, %v2680
        %v2741 = vpack.c.b16 %v2683, %v2681
        %v2742 = vpack.c.b16 %v2686, %v2684
        %v2743 = vpack.c.b16 %v2687, %v2685
        %v2744 = vpack.c.b16 %v2690, %v2688
        %v2745 = vpack.c.b16 %v2691, %v2689
        %v2746 = vpack.c.b16 %v2694, %v2692
        %v2747 = vpack.c.b16 %v2695, %v2693
        %v2748 = vpack.c.b16 %v2698, %v2696
        %v2749 = vpack.c.b16 %v2699, %v2697
        %v2750 = vpack.c.b16 %v2702, %v2700
        %v2751 = vpack.c.b16 %v2703, %v2701
        %v2752 = vpack.c.b16 %v2706, %v2704
        %v2753 = vpack.c.b16 %v2707, %v2705
        %v2754 = vpack.c.b16 %v2710, %v2708
        %v2755 = vpack.c.b16 %v2711, %v2709
        %v2756 = vpack.c.b16 %v2714, %v2712
        %v2757 = vpack.c.b16 %v2715, %v2713
        %v2758 = vpack.c.b16 %v2718, %v2716
        %v2759 = vpack.c.b16 %v2719, %v2717
        %v2760 = vpack.c.b16 %v2722, %v2720
        %v2761 = vpack.c.b16 %v2723, %v2721
        %v2762 = vpack.c.b16 %v2726, %v2724
        %v2763 = vpack.c.b16 %v2727, %v2725
        %v2764 = vpack.c.b16 %v2730, %v2728
        %v2765 = vpack.c.b16 %v2731, %v2729
        %v2766 = vpack.c.b16 %v2734, %v2732
        %v2767 = vpack.c.b16 %v2735, %v2733
        %2800 = vmatprep.subr.bf16.mxu0 %v2737
        %2801 = vmatpush1.bf16.msra.mxu0 %v2736
        %2802 = vmatprep.subr.bf16.mxu0 %v2739
        %2803 = vmatpush1.bf16.msra.mxu0 %v2738
        %2804 = vmatprep.subr.bf16.mxu0 %v2741
        %2805 = vmatpush1.bf16.msra.mxu0 %v2740
        %2806 = vmatprep.subr.bf16.mxu0 %v2743
        %2807 = vmatpush1.bf16.msra.mxu0 %v2742
        %2808 = vmatprep.subr.bf16.mxu0 %v2745
        %2809 = vmatpush1.bf16.msra.mxu0 %v2744
        %2810 = vmatprep.subr.bf16.mxu0 %v2747
        %2811 = vmatpush1.bf16.msra.mxu0 %v2746
        %2812 = vmatprep.subr.bf16.mxu0 %v2749
        %2813 = vmatpush1.bf16.msra.mxu0 %v2748
        %2814 = vmatprep.subr.bf16.mxu0 %v2751
        %2815 = vmatpush1.bf16.msra.mxu0 %v2750
        %2816 = vmatprep.subr.bf16.mxu0 %v2753
        %2817 = vmatpush1.bf16.msra.mxu0 %v2752
        %2818 = vmatprep.subr.bf16.mxu0 %v2755
        %2819 = vmatpush1.bf16.msra.mxu0 %v2754
        %2820 = vmatprep.subr.bf16.mxu0 %v2757
        %2821 = vmatpush1.bf16.msra.mxu0 %v2756
        %2822 = vmatprep.subr.bf16.mxu0 %v2759
        %2823 = vmatpush1.bf16.msra.mxu0 %v2758
        %2824 = vmatprep.subr.bf16.mxu0 %v2761
        %2825 = vmatpush1.bf16.msra.mxu0 %v2760
        %2826 = vmatprep.subr.bf16.mxu0 %v2763
        %2827 = vmatpush1.bf16.msra.mxu0 %v2762
        %2828 = vmatprep.subr.bf16.mxu0 %v2765
        %2829 = vmatpush1.bf16.msra.mxu0 %v2764
        %2830 = vmatprep.subr.bf16.mxu0 %v2767
        %2831 = vmatpush1.bf16.msra.mxu0 %v2766
        %2832 = vmatprep.mubr.bf16.mxu0 %v2327
        %2833 = vmatmul.mubr.bf16.gmra.mrb[0].mxu0 %v2326
        %v2834 = vpop.f32.mrb[0].mxu0
        %v2835 = vadd.f32 %v2622, %v2834
        %v2836 = vpop.f32.mrb[0].mxu0
        %v2837 = vadd.f32 %v2624, %v2836
        %v2838 = vpop.f32.mrb[0].mxu0
        %v2839 = vadd.f32 %v2626, %v2838
        %v2840 = vpop.f32.mrb[0].mxu0
        %v2841 = vadd.f32 %v2628, %v2840
        %2842 = vmatprep.mubr.bf16.mxu0 %v2329
        %2843 = vmatmul.mubr.bf16.gmra.mrb[0].mxu0 %v2328
        %v2844 = vpop.f32.mrb[0].mxu0
        %v2845 = vadd.f32 %v2632, %v2844
        %v2846 = vpop.f32.mrb[0].mxu0
        %v2847 = vadd.f32 %v2634, %v2846
        %v2848 = vpop.f32.mrb[0].mxu0
        %v2849 = vadd.f32 %v2636, %v2848
        %v2850 = vpop.f32.mrb[0].mxu0
        %v2851 = vadd.f32 %v2638, %v2850
        %2852 = vdwg.mxu0
        %s2853 = scalar_lea.vmem [#allocation8], 512
        %v2854 = vld [vmem:[%s2853] sm:$0xff]
        %v2855 = vld [vmem:[%s2853 + $0x8] sm:$0xff]
        %v2856 = vld [vmem:[%s2853 + $0x10] sm:$0xff]
        %v2857 = vld [vmem:[%s2853 + $0x18] sm:$0xff]
        %v2858 = vld [vmem:[%s2853 + $0x20] sm:$0xff]
        %v2859 = vld [vmem:[%s2853 + $0x28] sm:$0xff]
        %v2860 = vld [vmem:[%s2853 + $0x30] sm:$0xff]
        %v2861 = vld [vmem:[%s2853 + $0x38] sm:$0xff]
        %v2862 = vld [vmem:[%s2853 + $0x40] sm:$0xff]
        %v2863 = vld [vmem:[%s2853 + $0x48] sm:$0xff]
        %v2864 = vld [vmem:[%s2853 + $0x50] sm:$0xff]
        %v2865 = vld [vmem:[%s2853 + $0x58] sm:$0xff]
        %v2866 = vld [vmem:[%s2853 + $0x60] sm:$0xff]
        %v2867 = vld [vmem:[%s2853 + $0x68] sm:$0xff]
        %v2868 = vld [vmem:[%s2853 + $0x70] sm:$0xff]
        %v2869 = vld [vmem:[%s2853 + $0x78] sm:$0xff]
        %v2870 = vld [vmem:[%s2853 + $0x80] sm:$0xff]
        %v2871 = vld [vmem:[%s2853 + $0x88] sm:$0xff]
        %v2872 = vld [vmem:[%s2853 + $0x90] sm:$0xff]
        %v2873 = vld [vmem:[%s2853 + $0x98] sm:$0xff]
        %v2874 = vld [vmem:[%s2853 + $0xa0] sm:$0xff]
        %v2875 = vld [vmem:[%s2853 + $0xa8] sm:$0xff]
        %v2876 = vld [vmem:[%s2853 + $0xb0] sm:$0xff]
        %v2877 = vld [vmem:[%s2853 + $0xb8] sm:$0xff]
        %v2878 = vld [vmem:[%s2853 + $0xc0] sm:$0xff]
        %v2879 = vld [vmem:[%s2853 + $0xc8] sm:$0xff]
        %v2880 = vld [vmem:[%s2853 + $0xd0] sm:$0xff]
        %v2881 = vld [vmem:[%s2853 + $0xd8] sm:$0xff]
        %v2882 = vld [vmem:[%s2853 + $0xe0] sm:$0xff]
        %v2883 = vld [vmem:[%s2853 + $0xe8] sm:$0xff]
        %v2884 = vld [vmem:[%s2853 + $0xf0] sm:$0xff]
        %v2885 = vld [vmem:[%s2853 + $0xf8] sm:$0xff]
        %v2918 = vunpack.c.l.b16 %v2854
        %v2919 = vunpack.c.h.b16 %v2854
        %v2920 = vunpack.c.l.b16 %v2855
        %v2921 = vunpack.c.h.b16 %v2855
        %v2922 = vunpack.c.l.b16 %v2856
        %v2923 = vunpack.c.h.b16 %v2856
        %v2924 = vunpack.c.l.b16 %v2857
        %v2925 = vunpack.c.h.b16 %v2857
        %v2926 = vunpack.c.l.b16 %v2858
        %v2927 = vunpack.c.h.b16 %v2858
        %v2928 = vunpack.c.l.b16 %v2859
        %v2929 = vunpack.c.h.b16 %v2859
        %v2930 = vunpack.c.l.b16 %v2860
        %v2931 = vunpack.c.h.b16 %v2860
        %v2932 = vunpack.c.l.b16 %v2861
        %v2933 = vunpack.c.h.b16 %v2861
        %v2934 = vunpack.c.l.b16 %v2862
        %v2935 = vunpack.c.h.b16 %v2862
        %v2936 = vunpack.c.l.b16 %v2863
        %v2937 = vunpack.c.h.b16 %v2863
        %v2938 = vunpack.c.l.b16 %v2864
        %v2939 = vunpack.c.h.b16 %v2864
        %v2940 = vunpack.c.l.b16 %v2865
        %v2941 = vunpack.c.h.b16 %v2865
        %v2942 = vunpack.c.l.b16 %v2866
        %v2943 = vunpack.c.h.b16 %v2866
        %v2944 = vunpack.c.l.b16 %v2867
        %v2945 = vunpack.c.h.b16 %v2867
        %v2946 = vunpack.c.l.b16 %v2868
        %v2947 = vunpack.c.h.b16 %v2868
        %v2948 = vunpack.c.l.b16 %v2869
        %v2949 = vunpack.c.h.b16 %v2869
        %v2950 = vunpack.c.l.b16 %v2870
        %v2951 = vunpack.c.h.b16 %v2870
        %v2952 = vunpack.c.l.b16 %v2871
        %v2953 = vunpack.c.h.b16 %v2871
        %v2954 = vunpack.c.l.b16 %v2872
        %v2955 = vunpack.c.h.b16 %v2872
        %v2956 = vunpack.c.l.b16 %v2873
        %v2957 = vunpack.c.h.b16 %v2873
        %v2958 = vunpack.c.l.b16 %v2874
        %v2959 = vunpack.c.h.b16 %v2874
        %v2960 = vunpack.c.l.b16 %v2875
        %v2961 = vunpack.c.h.b16 %v2875
        %v2962 = vunpack.c.l.b16 %v2876
        %v2963 = vunpack.c.h.b16 %v2876
        %v2964 = vunpack.c.l.b16 %v2877
        %v2965 = vunpack.c.h.b16 %v2877
        %v2966 = vunpack.c.l.b16 %v2878
        %v2967 = vunpack.c.h.b16 %v2878
        %v2968 = vunpack.c.l.b16 %v2879
        %v2969 = vunpack.c.h.b16 %v2879
        %v2970 = vunpack.c.l.b16 %v2880
        %v2971 = vunpack.c.h.b16 %v2880
        %v2972 = vunpack.c.l.b16 %v2881
        %v2973 = vunpack.c.h.b16 %v2881
        %v2974 = vunpack.c.l.b16 %v2882
        %v2975 = vunpack.c.h.b16 %v2882
        %v2976 = vunpack.c.l.b16 %v2883
        %v2977 = vunpack.c.h.b16 %v2883
        %v2978 = vunpack.c.l.b16 %v2884
        %v2979 = vunpack.c.h.b16 %v2884
        %v2980 = vunpack.c.l.b16 %v2885
        %v2981 = vunpack.c.h.b16 %v2885
        %v2982 = vpack.c.b16 %v2920, %v2918
        %v2983 = vpack.c.b16 %v2921, %v2919
        %v2984 = vpack.c.b16 %v2924, %v2922
        %v2985 = vpack.c.b16 %v2925, %v2923
        %v2986 = vpack.c.b16 %v2928, %v2926
        %v2987 = vpack.c.b16 %v2929, %v2927
        %v2988 = vpack.c.b16 %v2932, %v2930
        %v2989 = vpack.c.b16 %v2933, %v2931
        %v2990 = vpack.c.b16 %v2936, %v2934
        %v2991 = vpack.c.b16 %v2937, %v2935
        %v2992 = vpack.c.b16 %v2940, %v2938
        %v2993 = vpack.c.b16 %v2941, %v2939
        %v2994 = vpack.c.b16 %v2944, %v2942
        %v2995 = vpack.c.b16 %v2945, %v2943
        %v2996 = vpack.c.b16 %v2948, %v2946
        %v2997 = vpack.c.b16 %v2949, %v2947
        %v2998 = vpack.c.b16 %v2952, %v2950
        %v2999 = vpack.c.b16 %v2953, %v2951
        %v3000 = vpack.c.b16 %v2956, %v2954
        %v3001 = vpack.c.b16 %v2957, %v2955
        %v3002 = vpack.c.b16 %v2960, %v2958
        %v3003 = vpack.c.b16 %v2961, %v2959
        %v3004 = vpack.c.b16 %v2964, %v2962
        %v3005 = vpack.c.b16 %v2965, %v2963
        %v3006 = vpack.c.b16 %v2968, %v2966
        %v3007 = vpack.c.b16 %v2969, %v2967
        %v3008 = vpack.c.b16 %v2972, %v2970
        %v3009 = vpack.c.b16 %v2973, %v2971
        %v3010 = vpack.c.b16 %v2976, %v2974
        %v3011 = vpack.c.b16 %v2977, %v2975
        %v3012 = vpack.c.b16 %v2980, %v2978
        %v3013 = vpack.c.b16 %v2981, %v2979
        %3046 = vmatprep.subr.bf16.mxu0 %v2983
        %3047 = vmatpush1.bf16.msra.mxu0 %v2982
        %3048 = vmatprep.subr.bf16.mxu0 %v2985
        %3049 = vmatpush1.bf16.msra.mxu0 %v2984
        %3050 = vmatprep.subr.bf16.mxu0 %v2987
        %3051 = vmatpush1.bf16.msra.mxu0 %v2986
        %3052 = vmatprep.subr.bf16.mxu0 %v2989
        %3053 = vmatpush1.bf16.msra.mxu0 %v2988
        %3054 = vmatprep.subr.bf16.mxu0 %v2991
        %3055 = vmatpush1.bf16.msra.mxu0 %v2990
        %3056 = vmatprep.subr.bf16.mxu0 %v2993
        %3057 = vmatpush1.bf16.msra.mxu0 %v2992
        %3058 = vmatprep.subr.bf16.mxu0 %v2995
        %3059 = vmatpush1.bf16.msra.mxu0 %v2994
        %3060 = vmatprep.subr.bf16.mxu0 %v2997
        %3061 = vmatpush1.bf16.msra.mxu0 %v2996
        %3062 = vmatprep.subr.bf16.mxu0 %v2999
        %3063 = vmatpush1.bf16.msra.mxu0 %v2998
        %3064 = vmatprep.subr.bf16.mxu0 %v3001
        %3065 = vmatpush1.bf16.msra.mxu0 %v3000
        %3066 = vmatprep.subr.bf16.mxu0 %v3003
        %3067 = vmatpush1.bf16.msra.mxu0 %v3002
        %3068 = vmatprep.subr.bf16.mxu0 %v3005
        %3069 = vmatpush1.bf16.msra.mxu0 %v3004
        %3070 = vmatprep.subr.bf16.mxu0 %v3007
        %3071 = vmatpush1.bf16.msra.mxu0 %v3006
        %3072 = vmatprep.subr.bf16.mxu0 %v3009
        %3073 = vmatpush1.bf16.msra.mxu0 %v3008
        %3074 = vmatprep.subr.bf16.mxu0 %v3011
        %3075 = vmatpush1.bf16.msra.mxu0 %v3010
        %3076 = vmatprep.subr.bf16.mxu0 %v3013
        %3077 = vmatpush1.bf16.msra.mxu0 %v3012
        %3078 = vmatprep.mubr.bf16.mxu0 %v2355
        %3079 = vmatmul.mubr.bf16.gmra.mrb[0].mxu0 %v2354
        %v3080 = vpop.f32.mrb[0].mxu0
        %v3081 = vadd.f32 0.0, %v3080
        %v3082 = vpop.f32.mrb[0].mxu0
        %v3083 = vadd.f32 0.0, %v3082
        %v3084 = vpop.f32.mrb[0].mxu0
        %v3085 = vadd.f32 0.0, %v3084
        %v3086 = vpop.f32.mrb[0].mxu0
        %v3087 = vadd.f32 0.0, %v3086
        %3088 = vmatprep.mubr.bf16.mxu0 %v2357
        %3089 = vmatmul.mubr.bf16.gmra.mrb[0].mxu0 %v2356
        %v3090 = vpop.f32.mrb[0].mxu0
        %v3091 = vadd.f32 0.0, %v3090
        %v3092 = vpop.f32.mrb[0].mxu0
        %v3093 = vadd.f32 0.0, %v3092
        %v3094 = vpop.f32.mrb[0].mxu0
        %v3095 = vadd.f32 0.0, %v3094
        %v3096 = vpop.f32.mrb[0].mxu0
        %v3097 = vadd.f32 0.0, %v3096
        %3098 = vdwg.mxu0
        %v3099 = vadd.f32 %v2835, %v3081
        %v3100 = vadd.f32 %v2837, %v3083
        %v3101 = vadd.f32 %v2839, %v3085
        %v3102 = vadd.f32 %v2841, %v3087
        %v3103 = vadd.f32 %v2845, %v3091
        %v3104 = vadd.f32 %v2847, %v3093
        %v3105 = vadd.f32 %v2849, %v3095
        %v3106 = vadd.f32 %v2851, %v3097
        %v3107 = vld [vmem:[%s10] sm:$0x3]
        %v3109 = vlaneseq
        %v3110 = vshrl.u32 %v3109, 7
        %v3111 = vsub.s32 0, %v3110
        %v3112 = vrot.slane %v3107, %v3111
        %v3113 = vlaneseq
        %v3114 = vshrl.u32 %v3113, 7
        %v3115 = vsub.s32 1, %v3114
        %v3116 = vrot.slane %v3107, %v3115
        %v3119 = vadd.f32 %v3099, %v3112
        %v3120 = vadd.f32 %v3100, %v3116
        %v3121 = vadd.f32 %v3101, %v3112
        %v3122 = vadd.f32 %v3102, %v3116
        %v3123 = vadd.f32 %v3103, %v3112
        %v3124 = vadd.f32 %v3104, %v3116
        %v3125 = vadd.f32 %v3105, %v3112
        %v3126 = vadd.f32 %v3106, %v3116
        %v3127 = vmax.f32 %v3119, 0.0
        %v3128 = vmax.f32 %v3120, 0.0
        %v3129 = vmax.f32 %v3121, 0.0
        %v3130 = vmax.f32 %v3122, 0.0
        %v3131 = vmax.f32 %v3123, 0.0
        %v3132 = vmax.f32 %v3124, 0.0
        %v3133 = vmax.f32 %v3125, 0.0
        %v3134 = vmax.f32 %v3126, 0.0
        %3135 = vst [vmem:[#allocation2] sm:$0xff] %v3127
        %3136 = vst [vmem:[#allocation2 + $0x8] sm:$0xff] %v3128
        %3137 = vst [vmem:[#allocation2 + $0x10] sm:$0xff] %v3129
        %3138 = vst [vmem:[#allocation2 + $0x18] sm:$0xff] %v3130
        %3139 = vst [vmem:[#allocation2 + $0x20] sm:$0xff] %v3131
        %3140 = vst [vmem:[#allocation2 + $0x28] sm:$0xff] %v3132
        %3141 = vst [vmem:[#allocation2 + $0x30] sm:$0xff] %v3133
        %3142 = vst [vmem:[#allocation2 + $0x38] sm:$0xff] %v3134
        %v3143 = vld [vmem:[#allocation2] sm:$0xff]
        %v3144 = vld [vmem:[#allocation2 + $0x8] sm:$0xff]
        %v3145 = vld [vmem:[#allocation2 + $0x10] sm:$0xff]
        %v3146 = vld [vmem:[#allocation2 + $0x18] sm:$0xff]
        %v3147 = vld [vmem:[#allocation2 + $0x20] sm:$0xff]
        %v3148 = vld [vmem:[#allocation2 + $0x28] sm:$0xff]
        %v3149 = vld [vmem:[#allocation2 + $0x30] sm:$0xff]
        %v3150 = vld [vmem:[#allocation2 + $0x38] sm:$0xff]
        %v3151 = vrot.slane %v3143, 7
        %v3152 = vrot.slane %v3144, 7
        %v3153 = vrot.slane %v3145, 7
        %v3154 = vrot.slane %v3146, 7
        %v3155 = vrot.slane %v3147, 7
        %v3156 = vrot.slane %v3148, 7
        %v3157 = vrot.slane %v3149, 7
        %v3158 = vrot.slane %v3150, 7
        %v3159 = vsel %vm906, %v3155, %v3157
        %v3160 = vsel %vm906, %v3156, %v3158
        %v3161 = vsel %vm906, %v3153, %v3155
        %v3162 = vsel %vm906, %v3154, %v3156
        %v3163 = vsel %vm906, %v3151, %v3153
        %v3164 = vsel %vm906, %v3152, %v3154
        %v3165 = vsel %vm906, %v3157, %v3151
        %v3166 = vsel %vm906, %v3158, %v3152
        %v3167 = vsel %vm857, %v3165, 0.0
        %v3168 = vsel %vm857, %v3166, 0.0
        %v3169 = vsel %vm858, %v3163, 0.0
        %v3170 = vsel %vm858, %v3164, 0.0
        %v3171 = vsel %vm859, %v3161, 0.0
        %v3172 = vsel %vm859, %v3162, 0.0
        %v3173 = vsel %vm860, %v3159, 0.0
        %v3174 = vsel %vm860, %v3160, 0.0
        %v3175 = vpack.c.bf16 %v3169, %v3167
        %v3176 = vpack.c.bf16 %v3170, %v3168
        %v3177 = vpack.c.bf16 %v3173, %v3171
        %v3178 = vpack.c.bf16 %v3174, %v3172
        %v3179 = vrot.slane %v3143, 1
        %v3180 = vrot.slane %v3144, 1
        %v3181 = vrot.slane %v3145, 1
        %v3182 = vrot.slane %v3146, 1
        %v3183 = vrot.slane %v3147, 1
        %v3184 = vrot.slane %v3148, 1
        %v3185 = vrot.slane %v3149, 1
        %v3186 = vrot.slane %v3150, 1
        %v3187 = vsel %vm939, %v3183, %v3185
        %v3188 = vsel %vm939, %v3184, %v3186
        %v3189 = vsel %vm939, %v3181, %v3183
        %v3190 = vsel %vm939, %v3182, %v3184
        %v3191 = vsel %vm939, %v3179, %v3181
        %v3192 = vsel %vm939, %v3180, %v3182
        %v3193 = vsel %vm939, %v3185, %v3179
        %v3194 = vsel %vm939, %v3186, %v3180
        %v3195 = vsel %vm865, %v3191, 0.0
        %v3196 = vsel %vm865, %v3192, 0.0
        %v3197 = vsel %vm866, %v3189, 0.0
        %v3198 = vsel %vm866, %v3190, 0.0
        %v3199 = vsel %vm867, %v3187, 0.0
        %v3200 = vsel %vm867, %v3188, 0.0
        %v3201 = vsel %vm868, %v3193, 0.0
        %v3202 = vsel %vm868, %v3194, 0.0
        %v3203 = vpack.c.bf16 %v3197, %v3195
        %v3204 = vpack.c.bf16 %v3198, %v3196
        %v3205 = vpack.c.bf16 %v3201, %v3199
        %v3206 = vpack.c.bf16 %v3202, %v3200
        %v3207 = vpack.c.bf16 %v3145, %v3143
        %v3208 = vpack.c.bf16 %v3146, %v3144
        %v3209 = vpack.c.bf16 %v3149, %v3147
        %v3210 = vpack.c.bf16 %v3150, %v3148
        %v3211 = vld [vmem:[#allocation10] sm:$0xff]
        %v3212 = vld [vmem:[#allocation10 + $0x8] sm:$0xff]
        %v3213 = vld [vmem:[#allocation10 + $0x10] sm:$0xff]
        %v3214 = vld [vmem:[#allocation10 + $0x18] sm:$0xff]
        %v3215 = vld [vmem:[#allocation10 + $0x20] sm:$0xff]
        %v3216 = vld [vmem:[#allocation10 + $0x28] sm:$0xff]
        %v3217 = vld [vmem:[#allocation10 + $0x30] sm:$0xff]
        %v3218 = vld [vmem:[#allocation10 + $0x38] sm:$0xff]
        %v3219 = vld [vmem:[#allocation10 + $0x40] sm:$0xff]
        %v3220 = vld [vmem:[#allocation10 + $0x48] sm:$0xff]
        %v3221 = vld [vmem:[#allocation10 + $0x50] sm:$0xff]
        %v3222 = vld [vmem:[#allocation10 + $0x58] sm:$0xff]
        %v3223 = vld [vmem:[#allocation10 + $0x60] sm:$0xff]
        %v3224 = vld [vmem:[#allocation10 + $0x68] sm:$0xff]
        %v3225 = vld [vmem:[#allocation10 + $0x70] sm:$0xff]
        %v3226 = vld [vmem:[#allocation10 + $0x78] sm:$0xff]
        %v3227 = vld [vmem:[#allocation10 + $0x80] sm:$0xff]
        %v3228 = vld [vmem:[#allocation10 + $0x88] sm:$0xff]
        %v3229 = vld [vmem:[#allocation10 + $0x90] sm:$0xff]
        %v3230 = vld [vmem:[#allocation10 + $0x98] sm:$0xff]
        %v3231 = vld [vmem:[#allocation10 + $0xa0] sm:$0xff]
        %v3232 = vld [vmem:[#allocation10 + $0xa8] sm:$0xff]
        %v3233 = vld [vmem:[#allocation10 + $0xb0] sm:$0xff]
        %v3234 = vld [vmem:[#allocation10 + $0xb8] sm:$0xff]
        %v3235 = vld [vmem:[#allocation10 + $0xc0] sm:$0xff]
        %v3236 = vld [vmem:[#allocation10 + $0xc8] sm:$0xff]
        %v3237 = vld [vmem:[#allocation10 + $0xd0] sm:$0xff]
        %v3238 = vld [vmem:[#allocation10 + $0xd8] sm:$0xff]
        %v3239 = vld [vmem:[#allocation10 + $0xe0] sm:$0xff]
        %v3240 = vld [vmem:[#allocation10 + $0xe8] sm:$0xff]
        %v3241 = vld [vmem:[#allocation10 + $0xf0] sm:$0xff]
        %v3242 = vld [vmem:[#allocation10 + $0xf8] sm:$0xff]
        %s3243 = scalar_lea.vmem [#allocation10], 256
        %v3244 = vld [vmem:[%s3243] sm:$0xff]
        %v3245 = vld [vmem:[%s3243 + $0x8] sm:$0xff]
        %v3246 = vld [vmem:[%s3243 + $0x10] sm:$0xff]
        %v3247 = vld [vmem:[%s3243 + $0x18] sm:$0xff]
        %v3248 = vld [vmem:[%s3243 + $0x20] sm:$0xff]
        %v3249 = vld [vmem:[%s3243 + $0x28] sm:$0xff]
        %v3250 = vld [vmem:[%s3243 + $0x30] sm:$0xff]
        %v3251 = vld [vmem:[%s3243 + $0x38] sm:$0xff]
        %v3252 = vld [vmem:[%s3243 + $0x40] sm:$0xff]
        %v3253 = vld [vmem:[%s3243 + $0x48] sm:$0xff]
        %v3254 = vld [vmem:[%s3243 + $0x50] sm:$0xff]
        %v3255 = vld [vmem:[%s3243 + $0x58] sm:$0xff]
        %v3256 = vld [vmem:[%s3243 + $0x60] sm:$0xff]
        %v3257 = vld [vmem:[%s3243 + $0x68] sm:$0xff]
        %v3258 = vld [vmem:[%s3243 + $0x70] sm:$0xff]
        %v3259 = vld [vmem:[%s3243 + $0x78] sm:$0xff]
        %v3260 = vld [vmem:[%s3243 + $0x80] sm:$0xff]
        %v3261 = vld [vmem:[%s3243 + $0x88] sm:$0xff]
        %v3262 = vld [vmem:[%s3243 + $0x90] sm:$0xff]
        %v3263 = vld [vmem:[%s3243 + $0x98] sm:$0xff]
        %v3264 = vld [vmem:[%s3243 + $0xa0] sm:$0xff]
        %v3265 = vld [vmem:[%s3243 + $0xa8] sm:$0xff]
        %v3266 = vld [vmem:[%s3243 + $0xb0] sm:$0xff]
        %v3267 = vld [vmem:[%s3243 + $0xb8] sm:$0xff]
        %v3268 = vld [vmem:[%s3243 + $0xc0] sm:$0xff]
        %v3269 = vld [vmem:[%s3243 + $0xc8] sm:$0xff]
        %v3270 = vld [vmem:[%s3243 + $0xd0] sm:$0xff]
        %v3271 = vld [vmem:[%s3243 + $0xd8] sm:$0xff]
        %v3272 = vld [vmem:[%s3243 + $0xe0] sm:$0xff]
        %v3273 = vld [vmem:[%s3243 + $0xe8] sm:$0xff]
        %v3274 = vld [vmem:[%s3243 + $0xf0] sm:$0xff]
        %v3275 = vld [vmem:[%s3243 + $0xf8] sm:$0xff]
        %v3308 = vunpack.c.l.b16 %v3244
        %v3309 = vunpack.c.h.b16 %v3244
        %v3310 = vunpack.c.l.b16 %v3245
        %v3311 = vunpack.c.h.b16 %v3245
        %v3312 = vunpack.c.l.b16 %v3246
        %v3313 = vunpack.c.h.b16 %v3246
        %v3314 = vunpack.c.l.b16 %v3247
        %v3315 = vunpack.c.h.b16 %v3247
        %v3316 = vunpack.c.l.b16 %v3248
        %v3317 = vunpack.c.h.b16 %v3248
        %v3318 = vunpack.c.l.b16 %v3249
        %v3319 = vunpack.c.h.b16 %v3249
        %v3320 = vunpack.c.l.b16 %v3250
        %v3321 = vunpack.c.h.b16 %v3250
        %v3322 = vunpack.c.l.b16 %v3251
        %v3323 = vunpack.c.h.b16 %v3251
        %v3324 = vunpack.c.l.b16 %v3252
        %v3325 = vunpack.c.h.b16 %v3252
        %v3326 = vunpack.c.l.b16 %v3253
        %v3327 = vunpack.c.h.b16 %v3253
        %v3328 = vunpack.c.l.b16 %v3254
        %v3329 = vunpack.c.h.b16 %v3254
        %v3330 = vunpack.c.l.b16 %v3255
        %v3331 = vunpack.c.h.b16 %v3255
        %v3332 = vunpack.c.l.b16 %v3256
        %v3333 = vunpack.c.h.b16 %v3256
        %v3334 = vunpack.c.l.b16 %v3257
        %v3335 = vunpack.c.h.b16 %v3257
        %v3336 = vunpack.c.l.b16 %v3258
        %v3337 = vunpack.c.h.b16 %v3258
        %v3338 = vunpack.c.l.b16 %v3259
        %v3339 = vunpack.c.h.b16 %v3259
        %v3340 = vunpack.c.l.b16 %v3260
        %v3341 = vunpack.c.h.b16 %v3260
        %v3342 = vunpack.c.l.b16 %v3261
        %v3343 = vunpack.c.h.b16 %v3261
        %v3344 = vunpack.c.l.b16 %v3262
        %v3345 = vunpack.c.h.b16 %v3262
        %v3346 = vunpack.c.l.b16 %v3263
        %v3347 = vunpack.c.h.b16 %v3263
        %v3348 = vunpack.c.l.b16 %v3264
        %v3349 = vunpack.c.h.b16 %v3264
        %v3350 = vunpack.c.l.b16 %v3265
        %v3351 = vunpack.c.h.b16 %v3265
        %v3352 = vunpack.c.l.b16 %v3266
        %v3353 = vunpack.c.h.b16 %v3266
        %v3354 = vunpack.c.l.b16 %v3267
        %v3355 = vunpack.c.h.b16 %v3267
        %v3356 = vunpack.c.l.b16 %v3268
        %v3357 = vunpack.c.h.b16 %v3268
        %v3358 = vunpack.c.l.b16 %v3269
        %v3359 = vunpack.c.h.b16 %v3269
        %v3360 = vunpack.c.l.b16 %v3270
        %v3361 = vunpack.c.h.b16 %v3270
        %v3362 = vunpack.c.l.b16 %v3271
        %v3363 = vunpack.c.h.b16 %v3271
        %v3364 = vunpack.c.l.b16 %v3272
        %v3365 = vunpack.c.h.b16 %v3272
        %v3366 = vunpack.c.l.b16 %v3273
        %v3367 = vunpack.c.h.b16 %v3273
        %v3368 = vunpack.c.l.b16 %v3274
        %v3369 = vunpack.c.h.b16 %v3274
        %v3370 = vunpack.c.l.b16 %v3275
        %v3371 = vunpack.c.h.b16 %v3275
        %v3372 = vpack.c.b16 %v3310, %v3308
        %v3373 = vpack.c.b16 %v3311, %v3309
        %v3374 = vpack.c.b16 %v3314, %v3312
        %v3375 = vpack.c.b16 %v3315, %v3313
        %v3376 = vpack.c.b16 %v3318, %v3316
        %v3377 = vpack.c.b16 %v3319, %v3317
        %v3378 = vpack.c.b16 %v3322, %v3320
        %v3379 = vpack.c.b16 %v3323, %v3321
        %v3380 = vpack.c.b16 %v3326, %v3324
        %v3381 = vpack.c.b16 %v3327, %v3325
        %v3382 = vpack.c.b16 %v3330, %v3328
        %v3383 = vpack.c.b16 %v3331, %v3329
        %v3384 = vpack.c.b16 %v3334, %v3332
        %v3385 = vpack.c.b16 %v3335, %v3333
        %v3386 = vpack.c.b16 %v3338, %v3336
        %v3387 = vpack.c.b16 %v3339, %v3337
        %v3388 = vpack.c.b16 %v3342, %v3340
        %v3389 = vpack.c.b16 %v3343, %v3341
        %v3390 = vpack.c.b16 %v3346, %v3344
        %v3391 = vpack.c.b16 %v3347, %v3345
        %v3392 = vpack.c.b16 %v3350, %v3348
        %v3393 = vpack.c.b16 %v3351, %v3349
        %v3394 = vpack.c.b16 %v3354, %v3352
        %v3395 = vpack.c.b16 %v3355, %v3353
        %v3396 = vpack.c.b16 %v3358, %v3356
        %v3397 = vpack.c.b16 %v3359, %v3357
        %v3398 = vpack.c.b16 %v3362, %v3360
        %v3399 = vpack.c.b16 %v3363, %v3361
        %v3400 = vpack.c.b16 %v3366, %v3364
        %v3401 = vpack.c.b16 %v3367, %v3365
        %v3402 = vpack.c.b16 %v3370, %v3368
        %v3403 = vpack.c.b16 %v3371, %v3369
        %3436 = vmatprep.subr.bf16.mxu0 %v3373
        %3437 = vmatpush1.bf16.msra.mxu0 %v3372
        %3438 = vmatprep.subr.bf16.mxu0 %v3375
        %3439 = vmatpush1.bf16.msra.mxu0 %v3374
        %3440 = vmatprep.subr.bf16.mxu0 %v3377
        %3441 = vmatpush1.bf16.msra.mxu0 %v3376
        %3442 = vmatprep.subr.bf16.mxu0 %v3379
        %3443 = vmatpush1.bf16.msra.mxu0 %v3378
        %3444 = vmatprep.subr.bf16.mxu0 %v3381
        %3445 = vmatpush1.bf16.msra.mxu0 %v3380
        %3446 = vmatprep.subr.bf16.mxu0 %v3383
        %3447 = vmatpush1.bf16.msra.mxu0 %v3382
        %3448 = vmatprep.subr.bf16.mxu0 %v3385
        %3449 = vmatpush1.bf16.msra.mxu0 %v3384
        %3450 = vmatprep.subr.bf16.mxu0 %v3387
        %3451 = vmatpush1.bf16.msra.mxu0 %v3386
        %3452 = vmatprep.subr.bf16.mxu0 %v3389
        %3453 = vmatpush1.bf16.msra.mxu0 %v3388
        %3454 = vmatprep.subr.bf16.mxu0 %v3391
        %3455 = vmatpush1.bf16.msra.mxu0 %v3390
        %3456 = vmatprep.subr.bf16.mxu0 %v3393
        %3457 = vmatpush1.bf16.msra.mxu0 %v3392
        %3458 = vmatprep.subr.bf16.mxu0 %v3395
        %3459 = vmatpush1.bf16.msra.mxu0 %v3394
        %3460 = vmatprep.subr.bf16.mxu0 %v3397
        %3461 = vmatpush1.bf16.msra.mxu0 %v3396
        %3462 = vmatprep.subr.bf16.mxu0 %v3399
        %3463 = vmatpush1.bf16.msra.mxu0 %v3398
        %3464 = vmatprep.subr.bf16.mxu0 %v3401
        %3465 = vmatpush1.bf16.msra.mxu0 %v3400
        %3466 = vmatprep.subr.bf16.mxu0 %v3403
        %3467 = vmatpush1.bf16.msra.mxu0 %v3402
        %3468 = vmatprep.mubr.bf16.mxu0 %v3208
        %3469 = vmatmul.mubr.bf16.gmra.mrb[0].mxu0 %v3207
        %v3470 = vpop.f32.mrb[0].mxu0
        %v3471 = vadd.f32 0.0, %v3470
        %v3472 = vpop.f32.mrb[0].mxu0
        %v3473 = vadd.f32 0.0, %v3472
        %v3474 = vpop.f32.mrb[0].mxu0
        %v3475 = vadd.f32 0.0, %v3474
        %v3476 = vpop.f32.mrb[0].mxu0
        %v3477 = vadd.f32 0.0, %v3476
        %3478 = vmatprep.mubr.bf16.mxu0 %v3210
        %3479 = vmatmul.mubr.bf16.gmra.mrb[0].mxu0 %v3209
        %v3480 = vpop.f32.mrb[0].mxu0
        %v3481 = vadd.f32 0.0, %v3480
        %v3482 = vpop.f32.mrb[0].mxu0
        %v3483 = vadd.f32 0.0, %v3482
        %v3484 = vpop.f32.mrb[0].mxu0
        %v3485 = vadd.f32 0.0, %v3484
        %v3486 = vpop.f32.mrb[0].mxu0
        %v3487 = vadd.f32 0.0, %v3486
        %3488 = vdwg.mxu0
        %v3521 = vunpack.c.l.b16 %v3211
        %v3522 = vunpack.c.h.b16 %v3211
        %v3523 = vunpack.c.l.b16 %v3212
        %v3524 = vunpack.c.h.b16 %v3212
        %v3525 = vunpack.c.l.b16 %v3213
        %v3526 = vunpack.c.h.b16 %v3213
        %v3527 = vunpack.c.l.b16 %v3214
        %v3528 = vunpack.c.h.b16 %v3214
        %v3529 = vunpack.c.l.b16 %v3215
        %v3530 = vunpack.c.h.b16 %v3215
        %v3531 = vunpack.c.l.b16 %v3216
        %v3532 = vunpack.c.h.b16 %v3216
        %v3533 = vunpack.c.l.b16 %v3217
        %v3534 = vunpack.c.h.b16 %v3217
        %v3535 = vunpack.c.l.b16 %v3218
        %v3536 = vunpack.c.h.b16 %v3218
        %v3537 = vunpack.c.l.b16 %v3219
        %v3538 = vunpack.c.h.b16 %v3219
        %v3539 = vunpack.c.l.b16 %v3220
        %v3540 = vunpack.c.h.b16 %v3220
        %v3541 = vunpack.c.l.b16 %v3221
        %v3542 = vunpack.c.h.b16 %v3221
        %v3543 = vunpack.c.l.b16 %v3222
        %v3544 = vunpack.c.h.b16 %v3222
        %v3545 = vunpack.c.l.b16 %v3223
        %v3546 = vunpack.c.h.b16 %v3223
        %v3547 = vunpack.c.l.b16 %v3224
        %v3548 = vunpack.c.h.b16 %v3224
        %v3549 = vunpack.c.l.b16 %v3225
        %v3550 = vunpack.c.h.b16 %v3225
        %v3551 = vunpack.c.l.b16 %v3226
        %v3552 = vunpack.c.h.b16 %v3226
        %v3553 = vunpack.c.l.b16 %v3227
        %v3554 = vunpack.c.h.b16 %v3227
        %v3555 = vunpack.c.l.b16 %v3228
        %v3556 = vunpack.c.h.b16 %v3228
        %v3557 = vunpack.c.l.b16 %v3229
        %v3558 = vunpack.c.h.b16 %v3229
        %v3559 = vunpack.c.l.b16 %v3230
        %v3560 = vunpack.c.h.b16 %v3230
        %v3561 = vunpack.c.l.b16 %v3231
        %v3562 = vunpack.c.h.b16 %v3231
        %v3563 = vunpack.c.l.b16 %v3232
        %v3564 = vunpack.c.h.b16 %v3232
        %v3565 = vunpack.c.l.b16 %v3233
        %v3566 = vunpack.c.h.b16 %v3233
        %v3567 = vunpack.c.l.b16 %v3234
        %v3568 = vunpack.c.h.b16 %v3234
        %v3569 = vunpack.c.l.b16 %v3235
        %v3570 = vunpack.c.h.b16 %v3235
        %v3571 = vunpack.c.l.b16 %v3236
        %v3572 = vunpack.c.h.b16 %v3236
        %v3573 = vunpack.c.l.b16 %v3237
        %v3574 = vunpack.c.h.b16 %v3237
        %v3575 = vunpack.c.l.b16 %v3238
        %v3576 = vunpack.c.h.b16 %v3238
        %v3577 = vunpack.c.l.b16 %v3239
        %v3578 = vunpack.c.h.b16 %v3239
        %v3579 = vunpack.c.l.b16 %v3240
        %v3580 = vunpack.c.h.b16 %v3240
        %v3581 = vunpack.c.l.b16 %v3241
        %v3582 = vunpack.c.h.b16 %v3241
        %v3583 = vunpack.c.l.b16 %v3242
        %v3584 = vunpack.c.h.b16 %v3242
        %v3585 = vpack.c.b16 %v3523, %v3521
        %v3586 = vpack.c.b16 %v3524, %v3522
        %v3587 = vpack.c.b16 %v3527, %v3525
        %v3588 = vpack.c.b16 %v3528, %v3526
        %v3589 = vpack.c.b16 %v3531, %v3529
        %v3590 = vpack.c.b16 %v3532, %v3530
        %v3591 = vpack.c.b16 %v3535, %v3533
        %v3592 = vpack.c.b16 %v3536, %v3534
        %v3593 = vpack.c.b16 %v3539, %v3537
        %v3594 = vpack.c.b16 %v3540, %v3538
        %v3595 = vpack.c.b16 %v3543, %v3541
        %v3596 = vpack.c.b16 %v3544, %v3542
        %v3597 = vpack.c.b16 %v3547, %v3545
        %v3598 = vpack.c.b16 %v3548, %v3546
        %v3599 = vpack.c.b16 %v3551, %v3549
        %v3600 = vpack.c.b16 %v3552, %v3550
        %v3601 = vpack.c.b16 %v3555, %v3553
        %v3602 = vpack.c.b16 %v3556, %v3554
        %v3603 = vpack.c.b16 %v3559, %v3557
        %v3604 = vpack.c.b16 %v3560, %v3558
        %v3605 = vpack.c.b16 %v3563, %v3561
        %v3606 = vpack.c.b16 %v3564, %v3562
        %v3607 = vpack.c.b16 %v3567, %v3565
        %v3608 = vpack.c.b16 %v3568, %v3566
        %v3609 = vpack.c.b16 %v3571, %v3569
        %v3610 = vpack.c.b16 %v3572, %v3570
        %v3611 = vpack.c.b16 %v3575, %v3573
        %v3612 = vpack.c.b16 %v3576, %v3574
        %v3613 = vpack.c.b16 %v3579, %v3577
        %v3614 = vpack.c.b16 %v3580, %v3578
        %v3615 = vpack.c.b16 %v3583, %v3581
        %v3616 = vpack.c.b16 %v3584, %v3582
        %3649 = vmatprep.subr.bf16.mxu0 %v3586
        %3650 = vmatpush1.bf16.msra.mxu0 %v3585
        %3651 = vmatprep.subr.bf16.mxu0 %v3588
        %3652 = vmatpush1.bf16.msra.mxu0 %v3587
        %3653 = vmatprep.subr.bf16.mxu0 %v3590
        %3654 = vmatpush1.bf16.msra.mxu0 %v3589
        %3655 = vmatprep.subr.bf16.mxu0 %v3592
        %3656 = vmatpush1.bf16.msra.mxu0 %v3591
        %3657 = vmatprep.subr.bf16.mxu0 %v3594
        %3658 = vmatpush1.bf16.msra.mxu0 %v3593
        %3659 = vmatprep.subr.bf16.mxu0 %v3596
        %3660 = vmatpush1.bf16.msra.mxu0 %v3595
        %3661 = vmatprep.subr.bf16.mxu0 %v3598
        %3662 = vmatpush1.bf16.msra.mxu0 %v3597
        %3663 = vmatprep.subr.bf16.mxu0 %v3600
        %3664 = vmatpush1.bf16.msra.mxu0 %v3599
        %3665 = vmatprep.subr.bf16.mxu0 %v3602
        %3666 = vmatpush1.bf16.msra.mxu0 %v3601
        %3667 = vmatprep.subr.bf16.mxu0 %v3604
        %3668 = vmatpush1.bf16.msra.mxu0 %v3603
        %3669 = vmatprep.subr.bf16.mxu0 %v3606
        %3670 = vmatpush1.bf16.msra.mxu0 %v3605
        %3671 = vmatprep.subr.bf16.mxu0 %v3608
        %3672 = vmatpush1.bf16.msra.mxu0 %v3607
        %3673 = vmatprep.subr.bf16.mxu0 %v3610
        %3674 = vmatpush1.bf16.msra.mxu0 %v3609
        %3675 = vmatprep.subr.bf16.mxu0 %v3612
        %3676 = vmatpush1.bf16.msra.mxu0 %v3611
        %3677 = vmatprep.subr.bf16.mxu0 %v3614
        %3678 = vmatpush1.bf16.msra.mxu0 %v3613
        %3679 = vmatprep.subr.bf16.mxu0 %v3616
        %3680 = vmatpush1.bf16.msra.mxu0 %v3615
        %3681 = vmatprep.mubr.bf16.mxu0 %v3176
        %3682 = vmatmul.mubr.bf16.gmra.mrb[0].mxu0 %v3175
        %v3683 = vpop.f32.mrb[0].mxu0
        %v3684 = vadd.f32 %v3471, %v3683
        %v3685 = vpop.f32.mrb[0].mxu0
        %v3686 = vadd.f32 %v3473, %v3685
        %v3687 = vpop.f32.mrb[0].mxu0
        %v3688 = vadd.f32 %v3475, %v3687
        %v3689 = vpop.f32.mrb[0].mxu0
        %v3690 = vadd.f32 %v3477, %v3689
        %3691 = vmatprep.mubr.bf16.mxu0 %v3178
        %3692 = vmatmul.mubr.bf16.gmra.mrb[0].mxu0 %v3177
        %v3693 = vpop.f32.mrb[0].mxu0
        %v3694 = vadd.f32 %v3481, %v3693
        %v3695 = vpop.f32.mrb[0].mxu0
        %v3696 = vadd.f32 %v3483, %v3695
        %v3697 = vpop.f32.mrb[0].mxu0
        %v3698 = vadd.f32 %v3485, %v3697
        %v3699 = vpop.f32.mrb[0].mxu0
        %v3700 = vadd.f32 %v3487, %v3699
        %3701 = vdwg.mxu0
        %s3702 = scalar_lea.vmem [#allocation10], 512
        %v3703 = vld [vmem:[%s3702] sm:$0xff]
        %v3704 = vld [vmem:[%s3702 + $0x8] sm:$0xff]
        %v3705 = vld [vmem:[%s3702 + $0x10] sm:$0xff]
        %v3706 = vld [vmem:[%s3702 + $0x18] sm:$0xff]
        %v3707 = vld [vmem:[%s3702 + $0x20] sm:$0xff]
        %v3708 = vld [vmem:[%s3702 + $0x28] sm:$0xff]
        %v3709 = vld [vmem:[%s3702 + $0x30] sm:$0xff]
        %v3710 = vld [vmem:[%s3702 + $0x38] sm:$0xff]
        %v3711 = vld [vmem:[%s3702 + $0x40] sm:$0xff]
        %v3712 = vld [vmem:[%s3702 + $0x48] sm:$0xff]
        %v3713 = vld [vmem:[%s3702 + $0x50] sm:$0xff]
        %v3714 = vld [vmem:[%s3702 + $0x58] sm:$0xff]
        %v3715 = vld [vmem:[%s3702 + $0x60] sm:$0xff]
        %v3716 = vld [vmem:[%s3702 + $0x68] sm:$0xff]
        %v3717 = vld [vmem:[%s3702 + $0x70] sm:$0xff]
        %v3718 = vld [vmem:[%s3702 + $0x78] sm:$0xff]
        %v3719 = vld [vmem:[%s3702 + $0x80] sm:$0xff]
        %v3720 = vld [vmem:[%s3702 + $0x88] sm:$0xff]
        %v3721 = vld [vmem:[%s3702 + $0x90] sm:$0xff]
        %v3722 = vld [vmem:[%s3702 + $0x98] sm:$0xff]
        %v3723 = vld [vmem:[%s3702 + $0xa0] sm:$0xff]
        %v3724 = vld [vmem:[%s3702 + $0xa8] sm:$0xff]
        %v3725 = vld [vmem:[%s3702 + $0xb0] sm:$0xff]
        %v3726 = vld [vmem:[%s3702 + $0xb8] sm:$0xff]
        %v3727 = vld [vmem:[%s3702 + $0xc0] sm:$0xff]
        %v3728 = vld [vmem:[%s3702 + $0xc8] sm:$0xff]
        %v3729 = vld [vmem:[%s3702 + $0xd0] sm:$0xff]
        %v3730 = vld [vmem:[%s3702 + $0xd8] sm:$0xff]
        %v3731 = vld [vmem:[%s3702 + $0xe0] sm:$0xff]
        %v3732 = vld [vmem:[%s3702 + $0xe8] sm:$0xff]
        %v3733 = vld [vmem:[%s3702 + $0xf0] sm:$0xff]
        %v3734 = vld [vmem:[%s3702 + $0xf8] sm:$0xff]
        %v3767 = vunpack.c.l.b16 %v3703
        %v3768 = vunpack.c.h.b16 %v3703
        %v3769 = vunpack.c.l.b16 %v3704
        %v3770 = vunpack.c.h.b16 %v3704
        %v3771 = vunpack.c.l.b16 %v3705
        %v3772 = vunpack.c.h.b16 %v3705
        %v3773 = vunpack.c.l.b16 %v3706
        %v3774 = vunpack.c.h.b16 %v3706
        %v3775 = vunpack.c.l.b16 %v3707
        %v3776 = vunpack.c.h.b16 %v3707
        %v3777 = vunpack.c.l.b16 %v3708
        %v3778 = vunpack.c.h.b16 %v3708
        %v3779 = vunpack.c.l.b16 %v3709
        %v3780 = vunpack.c.h.b16 %v3709
        %v3781 = vunpack.c.l.b16 %v3710
        %v3782 = vunpack.c.h.b16 %v3710
        %v3783 = vunpack.c.l.b16 %v3711
        %v3784 = vunpack.c.h.b16 %v3711
        %v3785 = vunpack.c.l.b16 %v3712
        %v3786 = vunpack.c.h.b16 %v3712
        %v3787 = vunpack.c.l.b16 %v3713
        %v3788 = vunpack.c.h.b16 %v3713
        %v3789 = vunpack.c.l.b16 %v3714
        %v3790 = vunpack.c.h.b16 %v3714
        %v3791 = vunpack.c.l.b16 %v3715
        %v3792 = vunpack.c.h.b16 %v3715
        %v3793 = vunpack.c.l.b16 %v3716
        %v3794 = vunpack.c.h.b16 %v3716
        %v3795 = vunpack.c.l.b16 %v3717
        %v3796 = vunpack.c.h.b16 %v3717
        %v3797 = vunpack.c.l.b16 %v3718
        %v3798 = vunpack.c.h.b16 %v3718
        %v3799 = vunpack.c.l.b16 %v3719
        %v3800 = vunpack.c.h.b16 %v3719
        %v3801 = vunpack.c.l.b16 %v3720
        %v3802 = vunpack.c.h.b16 %v3720
        %v3803 = vunpack.c.l.b16 %v3721
        %v3804 = vunpack.c.h.b16 %v3721
        %v3805 = vunpack.c.l.b16 %v3722
        %v3806 = vunpack.c.h.b16 %v3722
        %v3807 = vunpack.c.l.b16 %v3723
        %v3808 = vunpack.c.h.b16 %v3723
        %v3809 = vunpack.c.l.b16 %v3724
        %v3810 = vunpack.c.h.b16 %v3724
        %v3811 = vunpack.c.l.b16 %v3725
        %v3812 = vunpack.c.h.b16 %v3725
        %v3813 = vunpack.c.l.b16 %v3726
        %v3814 = vunpack.c.h.b16 %v3726
        %v3815 = vunpack.c.l.b16 %v3727
        %v3816 = vunpack.c.h.b16 %v3727
        %v3817 = vunpack.c.l.b16 %v3728
        %v3818 = vunpack.c.h.b16 %v3728
        %v3819 = vunpack.c.l.b16 %v3729
        %v3820 = vunpack.c.h.b16 %v3729
        %v3821 = vunpack.c.l.b16 %v3730
        %v3822 = vunpack.c.h.b16 %v3730
        %v3823 = vunpack.c.l.b16 %v3731
        %v3824 = vunpack.c.h.b16 %v3731
        %v3825 = vunpack.c.l.b16 %v3732
        %v3826 = vunpack.c.h.b16 %v3732
        %v3827 = vunpack.c.l.b16 %v3733
        %v3828 = vunpack.c.h.b16 %v3733
        %v3829 = vunpack.c.l.b16 %v3734
        %v3830 = vunpack.c.h.b16 %v3734
        %v3831 = vpack.c.b16 %v3769, %v3767
        %v3832 = vpack.c.b16 %v3770, %v3768
        %v3833 = vpack.c.b16 %v3773, %v3771
        %v3834 = vpack.c.b16 %v3774, %v3772
        %v3835 = vpack.c.b16 %v3777, %v3775
        %v3836 = vpack.c.b16 %v3778, %v3776
        %v3837 = vpack.c.b16 %v3781, %v3779
        %v3838 = vpack.c.b16 %v3782, %v3780
        %v3839 = vpack.c.b16 %v3785, %v3783
        %v3840 = vpack.c.b16 %v3786, %v3784
        %v3841 = vpack.c.b16 %v3789, %v3787
        %v3842 = vpack.c.b16 %v3790, %v3788
        %v3843 = vpack.c.b16 %v3793, %v3791
        %v3844 = vpack.c.b16 %v3794, %v3792
        %v3845 = vpack.c.b16 %v3797, %v3795
        %v3846 = vpack.c.b16 %v3798, %v3796
        %v3847 = vpack.c.b16 %v3801, %v3799
        %v3848 = vpack.c.b16 %v3802, %v3800
        %v3849 = vpack.c.b16 %v3805, %v3803
        %v3850 = vpack.c.b16 %v3806, %v3804
        %v3851 = vpack.c.b16 %v3809, %v3807
        %v3852 = vpack.c.b16 %v3810, %v3808
        %v3853 = vpack.c.b16 %v3813, %v3811
        %v3854 = vpack.c.b16 %v3814, %v3812
        %v3855 = vpack.c.b16 %v3817, %v3815
        %v3856 = vpack.c.b16 %v3818, %v3816
        %v3857 = vpack.c.b16 %v3821, %v3819
        %v3858 = vpack.c.b16 %v3822, %v3820
        %v3859 = vpack.c.b16 %v3825, %v3823
        %v3860 = vpack.c.b16 %v3826, %v3824
        %v3861 = vpack.c.b16 %v3829, %v3827
        %v3862 = vpack.c.b16 %v3830, %v3828
        %3895 = vmatprep.subr.bf16.mxu0 %v3832
        %3896 = vmatpush1.bf16.msra.mxu0 %v3831
        %3897 = vmatprep.subr.bf16.mxu0 %v3834
        %3898 = vmatpush1.bf16.msra.mxu0 %v3833
        %3899 = vmatprep.subr.bf16.mxu0 %v3836
        %3900 = vmatpush1.bf16.msra.mxu0 %v3835
        %3901 = vmatprep.subr.bf16.mxu0 %v3838
        %3902 = vmatpush1.bf16.msra.mxu0 %v3837
        %3903 = vmatprep.subr.bf16.mxu0 %v3840
        %3904 = vmatpush1.bf16.msra.mxu0 %v3839
        %3905 = vmatprep.subr.bf16.mxu0 %v3842
        %3906 = vmatpush1.bf16.msra.mxu0 %v3841
        %3907 = vmatprep.subr.bf16.mxu0 %v3844
        %3908 = vmatpush1.bf16.msra.mxu0 %v3843
        %3909 = vmatprep.subr.bf16.mxu0 %v3846
        %3910 = vmatpush1.bf16.msra.mxu0 %v3845
        %3911 = vmatprep.subr.bf16.mxu0 %v3848
        %3912 = vmatpush1.bf16.msra.mxu0 %v3847
        %3913 = vmatprep.subr.bf16.mxu0 %v3850
        %3914 = vmatpush1.bf16.msra.mxu0 %v3849
        %3915 = vmatprep.subr.bf16.mxu0 %v3852
        %3916 = vmatpush1.bf16.msra.mxu0 %v3851
        %3917 = vmatprep.subr.bf16.mxu0 %v3854
        %3918 = vmatpush1.bf16.msra.mxu0 %v3853
        %3919 = vmatprep.subr.bf16.mxu0 %v3856
        %3920 = vmatpush1.bf16.msra.mxu0 %v3855
        %3921 = vmatprep.subr.bf16.mxu0 %v3858
        %3922 = vmatpush1.bf16.msra.mxu0 %v3857
        %3923 = vmatprep.subr.bf16.mxu0 %v3860
        %3924 = vmatpush1.bf16.msra.mxu0 %v3859
        %3925 = vmatprep.subr.bf16.mxu0 %v3862
        %3926 = vmatpush1.bf16.msra.mxu0 %v3861
        %3927 = vmatprep.mubr.bf16.mxu0 %v3204
        %3928 = vmatmul.mubr.bf16.gmra.mrb[0].mxu0 %v3203
        %v3929 = vpop.f32.mrb[0].mxu0
        %v3930 = vadd.f32 0.0, %v3929
        %v3931 = vpop.f32.mrb[0].mxu0
        %v3932 = vadd.f32 0.0, %v3931
        %v3933 = vpop.f32.mrb[0].mxu0
        %v3934 = vadd.f32 0.0, %v3933
        %v3935 = vpop.f32.mrb[0].mxu0
        %v3936 = vadd.f32 0.0, %v3935
        %3937 = vmatprep.mubr.bf16.mxu0 %v3206
        %3938 = vmatmul.mubr.bf16.gmra.mrb[0].mxu0 %v3205
        %v3939 = vpop.f32.mrb[0].mxu0
        %v3940 = vadd.f32 0.0, %v3939
        %v3941 = vpop.f32.mrb[0].mxu0
        %v3942 = vadd.f32 0.0, %v3941
        %v3943 = vpop.f32.mrb[0].mxu0
        %v3944 = vadd.f32 0.0, %v3943
        %v3945 = vpop.f32.mrb[0].mxu0
        %v3946 = vadd.f32 0.0, %v3945
        %3947 = vdwg.mxu0
        %v3948 = vadd.f32 %v3684, %v3930
        %v3949 = vadd.f32 %v3686, %v3932
        %v3950 = vadd.f32 %v3688, %v3934
        %v3951 = vadd.f32 %v3690, %v3936
        %v3952 = vadd.f32 %v3694, %v3940
        %v3953 = vadd.f32 %v3696, %v3942
        %v3954 = vadd.f32 %v3698, %v3944
        %v3955 = vadd.f32 %v3700, %v3946
        %v3956 = vld [vmem:[%s12] sm:$0x3]
        %v3958 = vlaneseq
        %v3959 = vshrl.u32 %v3958, 7
        %v3960 = vsub.s32 0, %v3959
        %v3961 = vrot.slane %v3956, %v3960
        %v3962 = vlaneseq
        %v3963 = vshrl.u32 %v3962, 7
        %v3964 = vsub.s32 1, %v3963
        %v3965 = vrot.slane %v3956, %v3964
        %v3968 = vadd.f32 %v3948, %v3961
        %v3969 = vadd.f32 %v3949, %v3965
        %v3970 = vadd.f32 %v3950, %v3961
        %v3971 = vadd.f32 %v3951, %v3965
        %v3972 = vadd.f32 %v3952, %v3961
        %v3973 = vadd.f32 %v3953, %v3965
        %v3974 = vadd.f32 %v3954, %v3961
        %v3975 = vadd.f32 %v3955, %v3965
        %v3976 = vmax.f32 %v3968, 0.0
        %v3977 = vmax.f32 %v3969, 0.0
        %v3978 = vmax.f32 %v3970, 0.0
        %v3979 = vmax.f32 %v3971, 0.0
        %v3980 = vmax.f32 %v3972, 0.0
        %v3981 = vmax.f32 %v3973, 0.0
        %v3982 = vmax.f32 %v3974, 0.0
        %v3983 = vmax.f32 %v3975, 0.0
        %3984 = vst [vmem:[#allocation2] sm:$0xff] %v3976
        %3985 = vst [vmem:[#allocation2 + $0x8] sm:$0xff] %v3977
        %3986 = vst [vmem:[#allocation2 + $0x10] sm:$0xff] %v3978
        %3987 = vst [vmem:[#allocation2 + $0x18] sm:$0xff] %v3979
        %3988 = vst [vmem:[#allocation2 + $0x20] sm:$0xff] %v3980
        %3989 = vst [vmem:[#allocation2 + $0x28] sm:$0xff] %v3981
        %3990 = vst [vmem:[#allocation2 + $0x30] sm:$0xff] %v3982
        %3991 = vst [vmem:[#allocation2 + $0x38] sm:$0xff] %v3983
        %v3992 = vld [vmem:[#allocation2] sm:$0xff]
        %v3993 = vld [vmem:[#allocation2 + $0x8] sm:$0xff]
        %v3994 = vld [vmem:[#allocation2 + $0x10] sm:$0xff]
        %v3995 = vld [vmem:[#allocation2 + $0x18] sm:$0xff]
        %v3996 = vld [vmem:[#allocation2 + $0x20] sm:$0xff]
        %v3997 = vld [vmem:[#allocation2 + $0x28] sm:$0xff]
        %v3998 = vld [vmem:[#allocation2 + $0x30] sm:$0xff]
        %v3999 = vld [vmem:[#allocation2 + $0x38] sm:$0xff]
        %v4000 = vrot.slane %v3992, 7
        %v4001 = vrot.slane %v3993, 7
        %v4002 = vrot.slane %v3994, 7
        %v4003 = vrot.slane %v3995, 7
        %v4004 = vrot.slane %v3996, 7
        %v4005 = vrot.slane %v3997, 7
        %v4006 = vrot.slane %v3998, 7
        %v4007 = vrot.slane %v3999, 7
        %v4008 = vsel %vm906, %v4004, %v4006
        %v4009 = vsel %vm906, %v4005, %v4007
        %v4010 = vsel %vm906, %v4002, %v4004
        %v4011 = vsel %vm906, %v4003, %v4005
        %v4012 = vsel %vm906, %v4000, %v4002
        %v4013 = vsel %vm906, %v4001, %v4003
        %v4014 = vsel %vm906, %v4006, %v4000
        %v4015 = vsel %vm906, %v4007, %v4001
        %v4016 = vsel %vm857, %v4014, 0.0
        %v4017 = vsel %vm857, %v4015, 0.0
        %v4018 = vsel %vm858, %v4012, 0.0
        %v4019 = vsel %vm858, %v4013, 0.0
        %v4020 = vsel %vm859, %v4010, 0.0
        %v4021 = vsel %vm859, %v4011, 0.0
        %v4022 = vsel %vm860, %v4008, 0.0
        %v4023 = vsel %vm860, %v4009, 0.0
        %v4024 = vpack.c.bf16 %v4018, %v4016
        %v4025 = vpack.c.bf16 %v4019, %v4017
        %v4026 = vpack.c.bf16 %v4022, %v4020
        %v4027 = vpack.c.bf16 %v4023, %v4021
        %v4028 = vrot.slane %v3992, 1
        %v4029 = vrot.slane %v3993, 1
        %v4030 = vrot.slane %v3994, 1
        %v4031 = vrot.slane %v3995, 1
        %v4032 = vrot.slane %v3996, 1
        %v4033 = vrot.slane %v3997, 1
        %v4034 = vrot.slane %v3998, 1
        %v4035 = vrot.slane %v3999, 1
        %v4036 = vsel %vm939, %v4032, %v4034
        %v4037 = vsel %vm939, %v4033, %v4035
        %v4038 = vsel %vm939, %v4030, %v4032
        %v4039 = vsel %vm939, %v4031, %v4033
        %v4040 = vsel %vm939, %v4028, %v4030
        %v4041 = vsel %vm939, %v4029, %v4031
        %v4042 = vsel %vm939, %v4034, %v4028
        %v4043 = vsel %vm939, %v4035, %v4029
        %v4044 = vsel %vm865, %v4040, 0.0
        %v4045 = vsel %vm865, %v4041, 0.0
        %v4046 = vsel %vm866, %v4038, 0.0
        %v4047 = vsel %vm866, %v4039, 0.0
        %v4048 = vsel %vm867, %v4036, 0.0
        %v4049 = vsel %vm867, %v4037, 0.0
        %v4050 = vsel %vm868, %v4042, 0.0
        %v4051 = vsel %vm868, %v4043, 0.0
        %v4052 = vpack.c.bf16 %v4046, %v4044
        %v4053 = vpack.c.bf16 %v4047, %v4045
        %v4054 = vpack.c.bf16 %v4050, %v4048
        %v4055 = vpack.c.bf16 %v4051, %v4049
        %v4056 = vpack.c.bf16 %v3994, %v3992
        %v4057 = vpack.c.bf16 %v3995, %v3993
        %v4058 = vpack.c.bf16 %v3998, %v3996
        %v4059 = vpack.c.bf16 %v3999, %v3997
        %v4060 = vld [vmem:[#allocation11] sm:$0xff]
        %v4061 = vld [vmem:[#allocation11 + $0x8] sm:$0xff]
        %v4062 = vld [vmem:[#allocation11 + $0x10] sm:$0xff]
        %v4063 = vld [vmem:[#allocation11 + $0x18] sm:$0xff]
        %v4064 = vld [vmem:[#allocation11 + $0x20] sm:$0xff]
        %v4065 = vld [vmem:[#allocation11 + $0x28] sm:$0xff]
        %v4066 = vld [vmem:[#allocation11 + $0x30] sm:$0xff]
        %v4067 = vld [vmem:[#allocation11 + $0x38] sm:$0xff]
        %v4068 = vld [vmem:[#allocation11 + $0x40] sm:$0xff]
        %v4069 = vld [vmem:[#allocation11 + $0x48] sm:$0xff]
        %v4070 = vld [vmem:[#allocation11 + $0x50] sm:$0xff]
        %v4071 = vld [vmem:[#allocation11 + $0x58] sm:$0xff]
        %v4072 = vld [vmem:[#allocation11 + $0x60] sm:$0xff]
        %v4073 = vld [vmem:[#allocation11 + $0x68] sm:$0xff]
        %v4074 = vld [vmem:[#allocation11 + $0x70] sm:$0xff]
        %v4075 = vld [vmem:[#allocation11 + $0x78] sm:$0xff]
        %v4076 = vld [vmem:[#allocation11 + $0x80] sm:$0xff]
        %v4077 = vld [vmem:[#allocation11 + $0x88] sm:$0xff]
        %v4078 = vld [vmem:[#allocation11 + $0x90] sm:$0xff]
        %v4079 = vld [vmem:[#allocation11 + $0x98] sm:$0xff]
        %v4080 = vld [vmem:[#allocation11 + $0xa0] sm:$0xff]
        %v4081 = vld [vmem:[#allocation11 + $0xa8] sm:$0xff]
        %v4082 = vld [vmem:[#allocation11 + $0xb0] sm:$0xff]
        %v4083 = vld [vmem:[#allocation11 + $0xb8] sm:$0xff]
        %v4084 = vld [vmem:[#allocation11 + $0xc0] sm:$0xff]
        %v4085 = vld [vmem:[#allocation11 + $0xc8] sm:$0xff]
        %v4086 = vld [vmem:[#allocation11 + $0xd0] sm:$0xff]
        %v4087 = vld [vmem:[#allocation11 + $0xd8] sm:$0xff]
        %v4088 = vld [vmem:[#allocation11 + $0xe0] sm:$0xff]
        %v4089 = vld [vmem:[#allocation11 + $0xe8] sm:$0xff]
        %v4090 = vld [vmem:[#allocation11 + $0xf0] sm:$0xff]
        %v4091 = vld [vmem:[#allocation11 + $0xf8] sm:$0xff]
        %s4092 = scalar_lea.vmem [#allocation11], 256
        %v4093 = vld [vmem:[%s4092] sm:$0xff]
        %v4094 = vld [vmem:[%s4092 + $0x8] sm:$0xff]
        %v4095 = vld [vmem:[%s4092 + $0x10] sm:$0xff]
        %v4096 = vld [vmem:[%s4092 + $0x18] sm:$0xff]
        %v4097 = vld [vmem:[%s4092 + $0x20] sm:$0xff]
        %v4098 = vld [vmem:[%s4092 + $0x28] sm:$0xff]
        %v4099 = vld [vmem:[%s4092 + $0x30] sm:$0xff]
        %v4100 = vld [vmem:[%s4092 + $0x38] sm:$0xff]
        %v4101 = vld [vmem:[%s4092 + $0x40] sm:$0xff]
        %v4102 = vld [vmem:[%s4092 + $0x48] sm:$0xff]
        %v4103 = vld [vmem:[%s4092 + $0x50] sm:$0xff]
        %v4104 = vld [vmem:[%s4092 + $0x58] sm:$0xff]
        %v4105 = vld [vmem:[%s4092 + $0x60] sm:$0xff]
        %v4106 = vld [vmem:[%s4092 + $0x68] sm:$0xff]
        %v4107 = vld [vmem:[%s4092 + $0x70] sm:$0xff]
        %v4108 = vld [vmem:[%s4092 + $0x78] sm:$0xff]
        %v4109 = vld [vmem:[%s4092 + $0x80] sm:$0xff]
        %v4110 = vld [vmem:[%s4092 + $0x88] sm:$0xff]
        %v4111 = vld [vmem:[%s4092 + $0x90] sm:$0xff]
        %v4112 = vld [vmem:[%s4092 + $0x98] sm:$0xff]
        %v4113 = vld [vmem:[%s4092 + $0xa0] sm:$0xff]
        %v4114 = vld [vmem:[%s4092 + $0xa8] sm:$0xff]
        %v4115 = vld [vmem:[%s4092 + $0xb0] sm:$0xff]
        %v4116 = vld [vmem:[%s4092 + $0xb8] sm:$0xff]
        %v4117 = vld [vmem:[%s4092 + $0xc0] sm:$0xff]
        %v4118 = vld [vmem:[%s4092 + $0xc8] sm:$0xff]
        %v4119 = vld [vmem:[%s4092 + $0xd0] sm:$0xff]
        %v4120 = vld [vmem:[%s4092 + $0xd8] sm:$0xff]
        %v4121 = vld [vmem:[%s4092 + $0xe0] sm:$0xff]
        %v4122 = vld [vmem:[%s4092 + $0xe8] sm:$0xff]
        %v4123 = vld [vmem:[%s4092 + $0xf0] sm:$0xff]
        %v4124 = vld [vmem:[%s4092 + $0xf8] sm:$0xff]
        %v4157 = vunpack.c.l.b16 %v4093
        %v4158 = vunpack.c.h.b16 %v4093
        %v4159 = vunpack.c.l.b16 %v4094
        %v4160 = vunpack.c.h.b16 %v4094
        %v4161 = vunpack.c.l.b16 %v4095
        %v4162 = vunpack.c.h.b16 %v4095
        %v4163 = vunpack.c.l.b16 %v4096
        %v4164 = vunpack.c.h.b16 %v4096
        %v4165 = vunpack.c.l.b16 %v4097
        %v4166 = vunpack.c.h.b16 %v4097
        %v4167 = vunpack.c.l.b16 %v4098
        %v4168 = vunpack.c.h.b16 %v4098
        %v4169 = vunpack.c.l.b16 %v4099
        %v4170 = vunpack.c.h.b16 %v4099
        %v4171 = vunpack.c.l.b16 %v4100
        %v4172 = vunpack.c.h.b16 %v4100
        %v4173 = vunpack.c.l.b16 %v4101
        %v4174 = vunpack.c.h.b16 %v4101
        %v4175 = vunpack.c.l.b16 %v4102
        %v4176 = vunpack.c.h.b16 %v4102
        %v4177 = vunpack.c.l.b16 %v4103
        %v4178 = vunpack.c.h.b16 %v4103
        %v4179 = vunpack.c.l.b16 %v4104
        %v4180 = vunpack.c.h.b16 %v4104
        %v4181 = vunpack.c.l.b16 %v4105
        %v4182 = vunpack.c.h.b16 %v4105
        %v4183 = vunpack.c.l.b16 %v4106
        %v4184 = vunpack.c.h.b16 %v4106
        %v4185 = vunpack.c.l.b16 %v4107
        %v4186 = vunpack.c.h.b16 %v4107
        %v4187 = vunpack.c.l.b16 %v4108
        %v4188 = vunpack.c.h.b16 %v4108
        %v4189 = vunpack.c.l.b16 %v4109
        %v4190 = vunpack.c.h.b16 %v4109
        %v4191 = vunpack.c.l.b16 %v4110
        %v4192 = vunpack.c.h.b16 %v4110
        %v4193 = vunpack.c.l.b16 %v4111
        %v4194 = vunpack.c.h.b16 %v4111
        %v4195 = vunpack.c.l.b16 %v4112
        %v4196 = vunpack.c.h.b16 %v4112
        %v4197 = vunpack.c.l.b16 %v4113
        %v4198 = vunpack.c.h.b16 %v4113
        %v4199 = vunpack.c.l.b16 %v4114
        %v4200 = vunpack.c.h.b16 %v4114
        %v4201 = vunpack.c.l.b16 %v4115
        %v4202 = vunpack.c.h.b16 %v4115
        %v4203 = vunpack.c.l.b16 %v4116
        %v4204 = vunpack.c.h.b16 %v4116
        %v4205 = vunpack.c.l.b16 %v4117
        %v4206 = vunpack.c.h.b16 %v4117
        %v4207 = vunpack.c.l.b16 %v4118
        %v4208 = vunpack.c.h.b16 %v4118
        %v4209 = vunpack.c.l.b16 %v4119
        %v4210 = vunpack.c.h.b16 %v4119
        %v4211 = vunpack.c.l.b16 %v4120
        %v4212 = vunpack.c.h.b16 %v4120
        %v4213 = vunpack.c.l.b16 %v4121
        %v4214 = vunpack.c.h.b16 %v4121
        %v4215 = vunpack.c.l.b16 %v4122
        %v4216 = vunpack.c.h.b16 %v4122
        %v4217 = vunpack.c.l.b16 %v4123
        %v4218 = vunpack.c.h.b16 %v4123
        %v4219 = vunpack.c.l.b16 %v4124
        %v4220 = vunpack.c.h.b16 %v4124
        %v4221 = vpack.c.b16 %v4159, %v4157
        %v4222 = vpack.c.b16 %v4160, %v4158
        %v4223 = vpack.c.b16 %v4163, %v4161
        %v4224 = vpack.c.b16 %v4164, %v4162
        %v4225 = vpack.c.b16 %v4167, %v4165
        %v4226 = vpack.c.b16 %v4168, %v4166
        %v4227 = vpack.c.b16 %v4171, %v4169
        %v4228 = vpack.c.b16 %v4172, %v4170
        %v4229 = vpack.c.b16 %v4175, %v4173
        %v4230 = vpack.c.b16 %v4176, %v4174
        %v4231 = vpack.c.b16 %v4179, %v4177
        %v4232 = vpack.c.b16 %v4180, %v4178
        %v4233 = vpack.c.b16 %v4183, %v4181
        %v4234 = vpack.c.b16 %v4184, %v4182
        %v4235 = vpack.c.b16 %v4187, %v4185
        %v4236 = vpack.c.b16 %v4188, %v4186
        %v4237 = vpack.c.b16 %v4191, %v4189
        %v4238 = vpack.c.b16 %v4192, %v4190
        %v4239 = vpack.c.b16 %v4195, %v4193
        %v4240 = vpack.c.b16 %v4196, %v4194
        %v4241 = vpack.c.b16 %v4199, %v4197
        %v4242 = vpack.c.b16 %v4200, %v4198
        %v4243 = vpack.c.b16 %v4203, %v4201
        %v4244 = vpack.c.b16 %v4204, %v4202
        %v4245 = vpack.c.b16 %v4207, %v4205
        %v4246 = vpack.c.b16 %v4208, %v4206
        %v4247 = vpack.c.b16 %v4211, %v4209
        %v4248 = vpack.c.b16 %v4212, %v4210
        %v4249 = vpack.c.b16 %v4215, %v4213
        %v4250 = vpack.c.b16 %v4216, %v4214
        %v4251 = vpack.c.b16 %v4219, %v4217
        %v4252 = vpack.c.b16 %v4220, %v4218
        %4285 = vmatprep.subr.bf16.mxu0 %v4222
        %4286 = vmatpush1.bf16.msra.mxu0 %v4221
        %4287 = vmatprep.subr.bf16.mxu0 %v4224
        %4288 = vmatpush1.bf16.msra.mxu0 %v4223
        %4289 = vmatprep.subr.bf16.mxu0 %v4226
        %4290 = vmatpush1.bf16.msra.mxu0 %v4225
        %4291 = vmatprep.subr.bf16.mxu0 %v4228
        %4292 = vmatpush1.bf16.msra.mxu0 %v4227
        %4293 = vmatprep.subr.bf16.mxu0 %v4230
        %4294 = vmatpush1.bf16.msra.mxu0 %v4229
        %4295 = vmatprep.subr.bf16.mxu0 %v4232
        %4296 = vmatpush1.bf16.msra.mxu0 %v4231
        %4297 = vmatprep.subr.bf16.mxu0 %v4234
        %4298 = vmatpush1.bf16.msra.mxu0 %v4233
        %4299 = vmatprep.subr.bf16.mxu0 %v4236
        %4300 = vmatpush1.bf16.msra.mxu0 %v4235
        %4301 = vmatprep.subr.bf16.mxu0 %v4238
        %4302 = vmatpush1.bf16.msra.mxu0 %v4237
        %4303 = vmatprep.subr.bf16.mxu0 %v4240
        %4304 = vmatpush1.bf16.msra.mxu0 %v4239
        %4305 = vmatprep.subr.bf16.mxu0 %v4242
        %4306 = vmatpush1.bf16.msra.mxu0 %v4241
        %4307 = vmatprep.subr.bf16.mxu0 %v4244
        %4308 = vmatpush1.bf16.msra.mxu0 %v4243
        %4309 = vmatprep.subr.bf16.mxu0 %v4246
        %4310 = vmatpush1.bf16.msra.mxu0 %v4245
        %4311 = vmatprep.subr.bf16.mxu0 %v4248
        %4312 = vmatpush1.bf16.msra.mxu0 %v4247
        %4313 = vmatprep.subr.bf16.mxu0 %v4250
        %4314 = vmatpush1.bf16.msra.mxu0 %v4249
        %4315 = vmatprep.subr.bf16.mxu0 %v4252
        %4316 = vmatpush1.bf16.msra.mxu0 %v4251
        %4317 = vmatprep.mubr.bf16.mxu0 %v4057
        %4318 = vmatmul.mubr.bf16.gmra.mrb[0].mxu0 %v4056
        %v4319 = vpop.f32.mrb[0].mxu0
        %v4320 = vadd.f32 0.0, %v4319
        %v4321 = vpop.f32.mrb[0].mxu0
        %v4322 = vadd.f32 0.0, %v4321
        %v4323 = vpop.f32.mrb[0].mxu0
        %v4324 = vadd.f32 0.0, %v4323
        %v4325 = vpop.f32.mrb[0].mxu0
        %v4326 = vadd.f32 0.0, %v4325
        %4327 = vmatprep.mubr.bf16.mxu0 %v4059
        %4328 = vmatmul.mubr.bf16.gmra.mrb[0].mxu0 %v4058
        %v4329 = vpop.f32.mrb[0].mxu0
        %v4330 = vadd.f32 0.0, %v4329
        %v4331 = vpop.f32.mrb[0].mxu0
        %v4332 = vadd.f32 0.0, %v4331
        %v4333 = vpop.f32.mrb[0].mxu0
        %v4334 = vadd.f32 0.0, %v4333
        %v4335 = vpop.f32.mrb[0].mxu0
        %v4336 = vadd.f32 0.0, %v4335
        %4337 = vdwg.mxu0
        %v4370 = vunpack.c.l.b16 %v4060
        %v4371 = vunpack.c.h.b16 %v4060
        %v4372 = vunpack.c.l.b16 %v4061
        %v4373 = vunpack.c.h.b16 %v4061
        %v4374 = vunpack.c.l.b16 %v4062
        %v4375 = vunpack.c.h.b16 %v4062
        %v4376 = vunpack.c.l.b16 %v4063
        %v4377 = vunpack.c.h.b16 %v4063
        %v4378 = vunpack.c.l.b16 %v4064
        %v4379 = vunpack.c.h.b16 %v4064
        %v4380 = vunpack.c.l.b16 %v4065
        %v4381 = vunpack.c.h.b16 %v4065
        %v4382 = vunpack.c.l.b16 %v4066
        %v4383 = vunpack.c.h.b16 %v4066
        %v4384 = vunpack.c.l.b16 %v4067
        %v4385 = vunpack.c.h.b16 %v4067
        %v4386 = vunpack.c.l.b16 %v4068
        %v4387 = vunpack.c.h.b16 %v4068
        %v4388 = vunpack.c.l.b16 %v4069
        %v4389 = vunpack.c.h.b16 %v4069
        %v4390 = vunpack.c.l.b16 %v4070
        %v4391 = vunpack.c.h.b16 %v4070
        %v4392 = vunpack.c.l.b16 %v4071
        %v4393 = vunpack.c.h.b16 %v4071
        %v4394 = vunpack.c.l.b16 %v4072
        %v4395 = vunpack.c.h.b16 %v4072
        %v4396 = vunpack.c.l.b16 %v4073
        %v4397 = vunpack.c.h.b16 %v4073
        %v4398 = vunpack.c.l.b16 %v4074
        %v4399 = vunpack.c.h.b16 %v4074
        %v4400 = vunpack.c.l.b16 %v4075
        %v4401 = vunpack.c.h.b16 %v4075
        %v4402 = vunpack.c.l.b16 %v4076
        %v4403 = vunpack.c.h.b16 %v4076
        %v4404 = vunpack.c.l.b16 %v4077
        %v4405 = vunpack.c.h.b16 %v4077
        %v4406 = vunpack.c.l.b16 %v4078
        %v4407 = vunpack.c.h.b16 %v4078
        %v4408 = vunpack.c.l.b16 %v4079
        %v4409 = vunpack.c.h.b16 %v4079
        %v4410 = vunpack.c.l.b16 %v4080
        %v4411 = vunpack.c.h.b16 %v4080
        %v4412 = vunpack.c.l.b16 %v4081
        %v4413 = vunpack.c.h.b16 %v4081
        %v4414 = vunpack.c.l.b16 %v4082
        %v4415 = vunpack.c.h.b16 %v4082
        %v4416 = vunpack.c.l.b16 %v4083
        %v4417 = vunpack.c.h.b16 %v4083
        %v4418 = vunpack.c.l.b16 %v4084
        %v4419 = vunpack.c.h.b16 %v4084
        %v4420 = vunpack.c.l.b16 %v4085
        %v4421 = vunpack.c.h.b16 %v4085
        %v4422 = vunpack.c.l.b16 %v4086
        %v4423 = vunpack.c.h.b16 %v4086
        %v4424 = vunpack.c.l.b16 %v4087
        %v4425 = vunpack.c.h.b16 %v4087
        %v4426 = vunpack.c.l.b16 %v4088
        %v4427 = vunpack.c.h.b16 %v4088
        %v4428 = vunpack.c.l.b16 %v4089
        %v4429 = vunpack.c.h.b16 %v4089
        %v4430 = vunpack.c.l.b16 %v4090
        %v4431 = vunpack.c.h.b16 %v4090
        %v4432 = vunpack.c.l.b16 %v4091
        %v4433 = vunpack.c.h.b16 %v4091
        %v4434 = vpack.c.b16 %v4372, %v4370
        %v4435 = vpack.c.b16 %v4373, %v4371
        %v4436 = vpack.c.b16 %v4376, %v4374
        %v4437 = vpack.c.b16 %v4377, %v4375
        %v4438 = vpack.c.b16 %v4380, %v4378
        %v4439 = vpack.c.b16 %v4381, %v4379
        %v4440 = vpack.c.b16 %v4384, %v4382
        %v4441 = vpack.c.b16 %v4385, %v4383
        %v4442 = vpack.c.b16 %v4388, %v4386
        %v4443 = vpack.c.b16 %v4389, %v4387
        %v4444 = vpack.c.b16 %v4392, %v4390
        %v4445 = vpack.c.b16 %v4393, %v4391
        %v4446 = vpack.c.b16 %v4396, %v4394
        %v4447 = vpack.c.b16 %v4397, %v4395
        %v4448 = vpack.c.b16 %v4400, %v4398
        %v4449 = vpack.c.b16 %v4401, %v4399
        %v4450 = vpack.c.b16 %v4404, %v4402
        %v4451 = vpack.c.b16 %v4405, %v4403
        %v4452 = vpack.c.b16 %v4408, %v4406
        %v4453 = vpack.c.b16 %v4409, %v4407
        %v4454 = vpack.c.b16 %v4412, %v4410
        %v4455 = vpack.c.b16 %v4413, %v4411
        %v4456 = vpack.c.b16 %v4416, %v4414
        %v4457 = vpack.c.b16 %v4417, %v4415
        %v4458 = vpack.c.b16 %v4420, %v4418
        %v4459 = vpack.c.b16 %v4421, %v4419
        %v4460 = vpack.c.b16 %v4424, %v4422
        %v4461 = vpack.c.b16 %v4425, %v4423
        %v4462 = vpack.c.b16 %v4428, %v4426
        %v4463 = vpack.c.b16 %v4429, %v4427
        %v4464 = vpack.c.b16 %v4432, %v4430
        %v4465 = vpack.c.b16 %v4433, %v4431
        %4498 = vmatprep.subr.bf16.mxu0 %v4435
        %4499 = vmatpush1.bf16.msra.mxu0 %v4434
        %4500 = vmatprep.subr.bf16.mxu0 %v4437
        %4501 = vmatpush1.bf16.msra.mxu0 %v4436
        %4502 = vmatprep.subr.bf16.mxu0 %v4439
        %4503 = vmatpush1.bf16.msra.mxu0 %v4438
        %4504 = vmatprep.subr.bf16.mxu0 %v4441
        %4505 = vmatpush1.bf16.msra.mxu0 %v4440
        %4506 = vmatprep.subr.bf16.mxu0 %v4443
        %4507 = vmatpush1.bf16.msra.mxu0 %v4442
        %4508 = vmatprep.subr.bf16.mxu0 %v4445
        %4509 = vmatpush1.bf16.msra.mxu0 %v4444
        %4510 = vmatprep.subr.bf16.mxu0 %v4447
        %4511 = vmatpush1.bf16.msra.mxu0 %v4446
        %4512 = vmatprep.subr.bf16.mxu0 %v4449
        %4513 = vmatpush1.bf16.msra.mxu0 %v4448
        %4514 = vmatprep.subr.bf16.mxu0 %v4451
        %4515 = vmatpush1.bf16.msra.mxu0 %v4450
        %4516 = vmatprep.subr.bf16.mxu0 %v4453
        %4517 = vmatpush1.bf16.msra.mxu0 %v4452
        %4518 = vmatprep.subr.bf16.mxu0 %v4455
        %4519 = vmatpush1.bf16.msra.mxu0 %v4454
        %4520 = vmatprep.subr.bf16.mxu0 %v4457
        %4521 = vmatpush1.bf16.msra.mxu0 %v4456
        %4522 = vmatprep.subr.bf16.mxu0 %v4459
        %4523 = vmatpush1.bf16.msra.mxu0 %v4458
        %4524 = vmatprep.subr.bf16.mxu0 %v4461
        %4525 = vmatpush1.bf16.msra.mxu0 %v4460
        %4526 = vmatprep.subr.bf16.mxu0 %v4463
        %4527 = vmatpush1.bf16.msra.mxu0 %v4462
        %4528 = vmatprep.subr.bf16.mxu0 %v4465
        %4529 = vmatpush1.bf16.msra.mxu0 %v4464
        %4530 = vmatprep.mubr.bf16.mxu0 %v4025
        %4531 = vmatmul.mubr.bf16.gmra.mrb[0].mxu0 %v4024
        %v4532 = vpop.f32.mrb[0].mxu0
        %v4533 = vadd.f32 %v4320, %v4532
        %v4534 = vpop.f32.mrb[0].mxu0
        %v4535 = vadd.f32 %v4322, %v4534
        %v4536 = vpop.f32.mrb[0].mxu0
        %v4537 = vadd.f32 %v4324, %v4536
        %v4538 = vpop.f32.mrb[0].mxu0
        %v4539 = vadd.f32 %v4326, %v4538
        %4540 = vmatprep.mubr.bf16.mxu0 %v4027
        %4541 = vmatmul.mubr.bf16.gmra.mrb[0].mxu0 %v4026
        %v4542 = vpop.f32.mrb[0].mxu0
        %v4543 = vadd.f32 %v4330, %v4542
        %v4544 = vpop.f32.mrb[0].mxu0
        %v4545 = vadd.f32 %v4332, %v4544
        %v4546 = vpop.f32.mrb[0].mxu0
        %v4547 = vadd.f32 %v4334, %v4546
        %v4548 = vpop.f32.mrb[0].mxu0
        %v4549 = vadd.f32 %v4336, %v4548
        %4550 = vdwg.mxu0
        %s4551 = scalar_lea.vmem [#allocation11], 512
        %v4552 = vld [vmem:[%s4551] sm:$0xff]
        %v4553 = vld [vmem:[%s4551 + $0x8] sm:$0xff]
        %v4554 = vld [vmem:[%s4551 + $0x10] sm:$0xff]
        %v4555 = vld [vmem:[%s4551 + $0x18] sm:$0xff]
        %v4556 = vld [vmem:[%s4551 + $0x20] sm:$0xff]
        %v4557 = vld [vmem:[%s4551 + $0x28] sm:$0xff]
        %v4558 = vld [vmem:[%s4551 + $0x30] sm:$0xff]
        %v4559 = vld [vmem:[%s4551 + $0x38] sm:$0xff]
        %v4560 = vld [vmem:[%s4551 + $0x40] sm:$0xff]
        %v4561 = vld [vmem:[%s4551 + $0x48] sm:$0xff]
        %v4562 = vld [vmem:[%s4551 + $0x50] sm:$0xff]
        %v4563 = vld [vmem:[%s4551 + $0x58] sm:$0xff]
        %v4564 = vld [vmem:[%s4551 + $0x60] sm:$0xff]
        %v4565 = vld [vmem:[%s4551 + $0x68] sm:$0xff]
        %v4566 = vld [vmem:[%s4551 + $0x70] sm:$0xff]
        %v4567 = vld [vmem:[%s4551 + $0x78] sm:$0xff]
        %v4568 = vld [vmem:[%s4551 + $0x80] sm:$0xff]
        %v4569 = vld [vmem:[%s4551 + $0x88] sm:$0xff]
        %v4570 = vld [vmem:[%s4551 + $0x90] sm:$0xff]
        %v4571 = vld [vmem:[%s4551 + $0x98] sm:$0xff]
        %v4572 = vld [vmem:[%s4551 + $0xa0] sm:$0xff]
        %v4573 = vld [vmem:[%s4551 + $0xa8] sm:$0xff]
        %v4574 = vld [vmem:[%s4551 + $0xb0] sm:$0xff]
        %v4575 = vld [vmem:[%s4551 + $0xb8] sm:$0xff]
        %v4576 = vld [vmem:[%s4551 + $0xc0] sm:$0xff]
        %v4577 = vld [vmem:[%s4551 + $0xc8] sm:$0xff]
        %v4578 = vld [vmem:[%s4551 + $0xd0] sm:$0xff]
        %v4579 = vld [vmem:[%s4551 + $0xd8] sm:$0xff]
        %v4580 = vld [vmem:[%s4551 + $0xe0] sm:$0xff]
        %v4581 = vld [vmem:[%s4551 + $0xe8] sm:$0xff]
        %v4582 = vld [vmem:[%s4551 + $0xf0] sm:$0xff]
        %v4583 = vld [vmem:[%s4551 + $0xf8] sm:$0xff]
        %v4616 = vunpack.c.l.b16 %v4552
        %v4617 = vunpack.c.h.b16 %v4552
        %v4618 = vunpack.c.l.b16 %v4553
        %v4619 = vunpack.c.h.b16 %v4553
        %v4620 = vunpack.c.l.b16 %v4554
        %v4621 = vunpack.c.h.b16 %v4554
        %v4622 = vunpack.c.l.b16 %v4555
        %v4623 = vunpack.c.h.b16 %v4555
        %v4624 = vunpack.c.l.b16 %v4556
        %v4625 = vunpack.c.h.b16 %v4556
        %v4626 = vunpack.c.l.b16 %v4557
        %v4627 = vunpack.c.h.b16 %v4557
        %v4628 = vunpack.c.l.b16 %v4558
        %v4629 = vunpack.c.h.b16 %v4558
        %v4630 = vunpack.c.l.b16 %v4559
        %v4631 = vunpack.c.h.b16 %v4559
        %v4632 = vunpack.c.l.b16 %v4560
        %v4633 = vunpack.c.h.b16 %v4560
        %v4634 = vunpack.c.l.b16 %v4561
        %v4635 = vunpack.c.h.b16 %v4561
        %v4636 = vunpack.c.l.b16 %v4562
        %v4637 = vunpack.c.h.b16 %v4562
        %v4638 = vunpack.c.l.b16 %v4563
        %v4639 = vunpack.c.h.b16 %v4563
        %v4640 = vunpack.c.l.b16 %v4564
        %v4641 = vunpack.c.h.b16 %v4564
        %v4642 = vunpack.c.l.b16 %v4565
        %v4643 = vunpack.c.h.b16 %v4565
        %v4644 = vunpack.c.l.b16 %v4566
        %v4645 = vunpack.c.h.b16 %v4566
        %v4646 = vunpack.c.l.b16 %v4567
        %v4647 = vunpack.c.h.b16 %v4567
        %v4648 = vunpack.c.l.b16 %v4568
        %v4649 = vunpack.c.h.b16 %v4568
        %v4650 = vunpack.c.l.b16 %v4569
        %v4651 = vunpack.c.h.b16 %v4569
        %v4652 = vunpack.c.l.b16 %v4570
        %v4653 = vunpack.c.h.b16 %v4570
        %v4654 = vunpack.c.l.b16 %v4571
        %v4655 = vunpack.c.h.b16 %v4571
        %v4656 = vunpack.c.l.b16 %v4572
        %v4657 = vunpack.c.h.b16 %v4572
        %v4658 = vunpack.c.l.b16 %v4573
        %v4659 = vunpack.c.h.b16 %v4573
        %v4660 = vunpack.c.l.b16 %v4574
        %v4661 = vunpack.c.h.b16 %v4574
        %v4662 = vunpack.c.l.b16 %v4575
        %v4663 = vunpack.c.h.b16 %v4575
        %v4664 = vunpack.c.l.b16 %v4576
        %v4665 = vunpack.c.h.b16 %v4576
        %v4666 = vunpack.c.l.b16 %v4577
        %v4667 = vunpack.c.h.b16 %v4577
        %v4668 = vunpack.c.l.b16 %v4578
        %v4669 = vunpack.c.h.b16 %v4578
        %v4670 = vunpack.c.l.b16 %v4579
        %v4671 = vunpack.c.h.b16 %v4579
        %v4672 = vunpack.c.l.b16 %v4580
        %v4673 = vunpack.c.h.b16 %v4580
        %v4674 = vunpack.c.l.b16 %v4581
        %v4675 = vunpack.c.h.b16 %v4581
        %v4676 = vunpack.c.l.b16 %v4582
        %v4677 = vunpack.c.h.b16 %v4582
        %v4678 = vunpack.c.l.b16 %v4583
        %v4679 = vunpack.c.h.b16 %v4583
        %v4680 = vpack.c.b16 %v4618, %v4616
        %v4681 = vpack.c.b16 %v4619, %v4617
        %v4682 = vpack.c.b16 %v4622, %v4620
        %v4683 = vpack.c.b16 %v4623, %v4621
        %v4684 = vpack.c.b16 %v4626, %v4624
        %v4685 = vpack.c.b16 %v4627, %v4625
        %v4686 = vpack.c.b16 %v4630, %v4628
        %v4687 = vpack.c.b16 %v4631, %v4629
        %v4688 = vpack.c.b16 %v4634, %v4632
        %v4689 = vpack.c.b16 %v4635, %v4633
        %v4690 = vpack.c.b16 %v4638, %v4636
        %v4691 = vpack.c.b16 %v4639, %v4637
        %v4692 = vpack.c.b16 %v4642, %v4640
        %v4693 = vpack.c.b16 %v4643, %v4641
        %v4694 = vpack.c.b16 %v4646, %v4644
        %v4695 = vpack.c.b16 %v4647, %v4645
        %v4696 = vpack.c.b16 %v4650, %v4648
        %v4697 = vpack.c.b16 %v4651, %v4649
        %v4698 = vpack.c.b16 %v4654, %v4652
        %v4699 = vpack.c.b16 %v4655, %v4653
        %v4700 = vpack.c.b16 %v4658, %v4656
        %v4701 = vpack.c.b16 %v4659, %v4657
        %v4702 = vpack.c.b16 %v4662, %v4660
        %v4703 = vpack.c.b16 %v4663, %v4661
        %v4704 = vpack.c.b16 %v4666, %v4664
        %v4705 = vpack.c.b16 %v4667, %v4665
        %v4706 = vpack.c.b16 %v4670, %v4668
        %v4707 = vpack.c.b16 %v4671, %v4669
        %v4708 = vpack.c.b16 %v4674, %v4672
        %v4709 = vpack.c.b16 %v4675, %v4673
        %v4710 = vpack.c.b16 %v4678, %v4676
        %v4711 = vpack.c.b16 %v4679, %v4677
        %4744 = vmatprep.subr.bf16.mxu0 %v4681
        %4745 = vmatpush1.bf16.msra.mxu0 %v4680
        %4746 = vmatprep.subr.bf16.mxu0 %v4683
        %4747 = vmatpush1.bf16.msra.mxu0 %v4682
        %4748 = vmatprep.subr.bf16.mxu0 %v4685
        %4749 = vmatpush1.bf16.msra.mxu0 %v4684
        %4750 = vmatprep.subr.bf16.mxu0 %v4687
        %4751 = vmatpush1.bf16.msra.mxu0 %v4686
        %4752 = vmatprep.subr.bf16.mxu0 %v4689
        %4753 = vmatpush1.bf16.msra.mxu0 %v4688
        %4754 = vmatprep.subr.bf16.mxu0 %v4691
        %4755 = vmatpush1.bf16.msra.mxu0 %v4690
        %4756 = vmatprep.subr.bf16.mxu0 %v4693
        %4757 = vmatpush1.bf16.msra.mxu0 %v4692
        %4758 = vmatprep.subr.bf16.mxu0 %v4695
        %4759 = vmatpush1.bf16.msra.mxu0 %v4694
        %4760 = vmatprep.subr.bf16.mxu0 %v4697
        %4761 = vmatpush1.bf16.msra.mxu0 %v4696
        %4762 = vmatprep.subr.bf16.mxu0 %v4699
        %4763 = vmatpush1.bf16.msra.mxu0 %v4698
        %4764 = vmatprep.subr.bf16.mxu0 %v4701
        %4765 = vmatpush1.bf16.msra.mxu0 %v4700
        %4766 = vmatprep.subr.bf16.mxu0 %v4703
        %4767 = vmatpush1.bf16.msra.mxu0 %v4702
        %4768 = vmatprep.subr.bf16.mxu0 %v4705
        %4769 = vmatpush1.bf16.msra.mxu0 %v4704
        %4770 = vmatprep.subr.bf16.mxu0 %v4707
        %4771 = vmatpush1.bf16.msra.mxu0 %v4706
        %4772 = vmatprep.subr.bf16.mxu0 %v4709
        %4773 = vmatpush1.bf16.msra.mxu0 %v4708
        %4774 = vmatprep.subr.bf16.mxu0 %v4711
        %4775 = vmatpush1.bf16.msra.mxu0 %v4710
        %4776 = vmatprep.mubr.bf16.mxu0 %v4053
        %4777 = vmatmul.mubr.bf16.gmra.mrb[0].mxu0 %v4052
        %v4778 = vpop.f32.mrb[0].mxu0
        %v4779 = vadd.f32 0.0, %v4778
        %v4780 = vpop.f32.mrb[0].mxu0
        %v4781 = vadd.f32 0.0, %v4780
        %v4782 = vpop.f32.mrb[0].mxu0
        %v4783 = vadd.f32 0.0, %v4782
        %v4784 = vpop.f32.mrb[0].mxu0
        %v4785 = vadd.f32 0.0, %v4784
        %4786 = vmatprep.mubr.bf16.mxu0 %v4055
        %4787 = vmatmul.mubr.bf16.gmra.mrb[0].mxu0 %v4054
        %v4788 = vpop.f32.mrb[0].mxu0
        %v4789 = vadd.f32 0.0, %v4788
        %v4790 = vpop.f32.mrb[0].mxu0
        %v4791 = vadd.f32 0.0, %v4790
        %v4792 = vpop.f32.mrb[0].mxu0
        %v4793 = vadd.f32 0.0, %v4792
        %v4794 = vpop.f32.mrb[0].mxu0
        %v4795 = vadd.f32 0.0, %v4794
        %4796 = vdwg.mxu0
        %v4797 = vadd.f32 %v4533, %v4779
        %v4798 = vadd.f32 %v4535, %v4781
        %v4799 = vadd.f32 %v4537, %v4783
        %v4800 = vadd.f32 %v4539, %v4785
        %v4801 = vadd.f32 %v4543, %v4789
        %v4802 = vadd.f32 %v4545, %v4791
        %v4803 = vadd.f32 %v4547, %v4793
        %v4804 = vadd.f32 %v4549, %v4795
        %v4805 = vld [vmem:[%s14] sm:$0x3]
        %v4807 = vlaneseq
        %v4808 = vshrl.u32 %v4807, 7
        %v4809 = vsub.s32 0, %v4808
        %v4810 = vrot.slane %v4805, %v4809
        %v4811 = vlaneseq
        %v4812 = vshrl.u32 %v4811, 7
        %v4813 = vsub.s32 1, %v4812
        %v4814 = vrot.slane %v4805, %v4813
        %v4817 = vadd.f32 %v4797, %v4810
        %v4818 = vadd.f32 %v4798, %v4814
        %v4819 = vadd.f32 %v4799, %v4810
        %v4820 = vadd.f32 %v4800, %v4814
        %v4821 = vadd.f32 %v4801, %v4810
        %v4822 = vadd.f32 %v4802, %v4814
        %v4823 = vadd.f32 %v4803, %v4810
        %v4824 = vadd.f32 %v4804, %v4814
        %v4825 = vmax.f32 %v4817, 0.0
        %v4826 = vmax.f32 %v4818, 0.0
        %v4827 = vmax.f32 %v4819, 0.0
        %v4828 = vmax.f32 %v4820, 0.0
        %v4829 = vmax.f32 %v4821, 0.0
        %v4830 = vmax.f32 %v4822, 0.0
        %v4831 = vmax.f32 %v4823, 0.0
        %v4832 = vmax.f32 %v4824, 0.0
        %4833 = vst [vmem:[#allocation2] sm:$0xff] %v4825
        %4834 = vst [vmem:[#allocation2 + $0x8] sm:$0xff] %v4826
        %4835 = vst [vmem:[#allocation2 + $0x10] sm:$0xff] %v4827
        %4836 = vst [vmem:[#allocation2 + $0x18] sm:$0xff] %v4828
        %4837 = vst [vmem:[#allocation2 + $0x20] sm:$0xff] %v4829
        %4838 = vst [vmem:[#allocation2 + $0x28] sm:$0xff] %v4830
        %4839 = vst [vmem:[#allocation2 + $0x30] sm:$0xff] %v4831
        %4840 = vst [vmem:[#allocation2 + $0x38] sm:$0xff] %v4832
        %v4841 = vld [vmem:[#allocation2] sm:$0xff]
        %v4842 = vld [vmem:[#allocation2 + $0x8] sm:$0xff]
        %v4843 = vld [vmem:[#allocation2 + $0x10] sm:$0xff]
        %v4844 = vld [vmem:[#allocation2 + $0x18] sm:$0xff]
        %v4845 = vld [vmem:[#allocation2 + $0x20] sm:$0xff]
        %v4846 = vld [vmem:[#allocation2 + $0x28] sm:$0xff]
        %v4847 = vld [vmem:[#allocation2 + $0x30] sm:$0xff]
        %v4848 = vld [vmem:[#allocation2 + $0x38] sm:$0xff]
        %v4849 = vrot.slane %v4841, 7
        %v4850 = vrot.slane %v4842, 7
        %v4851 = vrot.slane %v4843, 7
        %v4852 = vrot.slane %v4844, 7
        %v4853 = vrot.slane %v4845, 7
        %v4854 = vrot.slane %v4846, 7
        %v4855 = vrot.slane %v4847, 7
        %v4856 = vrot.slane %v4848, 7
        %v4857 = vsel %vm906, %v4853, %v4855
        %v4858 = vsel %vm906, %v4854, %v4856
        %v4859 = vsel %vm906, %v4851, %v4853
        %v4860 = vsel %vm906, %v4852, %v4854
        %v4861 = vsel %vm906, %v4849, %v4851
        %v4862 = vsel %vm906, %v4850, %v4852
        %v4863 = vsel %vm906, %v4855, %v4849
        %v4864 = vsel %vm906, %v4856, %v4850
        %v4865 = vsel %vm857, %v4863, 0.0
        %v4866 = vsel %vm857, %v4864, 0.0
        %v4867 = vsel %vm858, %v4861, 0.0
        %v4868 = vsel %vm858, %v4862, 0.0
        %v4869 = vsel %vm859, %v4859, 0.0
        %v4870 = vsel %vm859, %v4860, 0.0
        %v4871 = vsel %vm860, %v4857, 0.0
        %v4872 = vsel %vm860, %v4858, 0.0
        %v4873 = vpack.c.bf16 %v4867, %v4865
        %v4874 = vpack.c.bf16 %v4868, %v4866
        %v4875 = vpack.c.bf16 %v4871, %v4869
        %v4876 = vpack.c.bf16 %v4872, %v4870
        %v4877 = vrot.slane %v4841, 1
        %v4878 = vrot.slane %v4842, 1
        %v4879 = vrot.slane %v4843, 1
        %v4880 = vrot.slane %v4844, 1
        %v4881 = vrot.slane %v4845, 1
        %v4882 = vrot.slane %v4846, 1
        %v4883 = vrot.slane %v4847, 1
        %v4884 = vrot.slane %v4848, 1
        %v4885 = vsel %vm939, %v4881, %v4883
        %v4886 = vsel %vm939, %v4882, %v4884
        %v4887 = vsel %vm939, %v4879, %v4881
        %v4888 = vsel %vm939, %v4880, %v4882
        %v4889 = vsel %vm939, %v4877, %v4879
        %v4890 = vsel %vm939, %v4878, %v4880
        %v4891 = vsel %vm939, %v4883, %v4877
        %v4892 = vsel %vm939, %v4884, %v4878
        %v4893 = vsel %vm865, %v4889, 0.0
        %v4894 = vsel %vm865, %v4890, 0.0
        %v4895 = vsel %vm866, %v4887, 0.0
        %v4896 = vsel %vm866, %v4888, 0.0
        %v4897 = vsel %vm867, %v4885, 0.0
        %v4898 = vsel %vm867, %v4886, 0.0
        %v4899 = vsel %vm868, %v4891, 0.0
        %v4900 = vsel %vm868, %v4892, 0.0
        %v4901 = vpack.c.bf16 %v4895, %v4893
        %v4902 = vpack.c.bf16 %v4896, %v4894
        %v4903 = vpack.c.bf16 %v4899, %v4897
        %v4904 = vpack.c.bf16 %v4900, %v4898
        %v4905 = vpack.c.bf16 %v4843, %v4841
        %v4906 = vpack.c.bf16 %v4844, %v4842
        %v4907 = vpack.c.bf16 %v4847, %v4845
        %v4908 = vpack.c.bf16 %v4848, %v4846
        %v4909 = vld [vmem:[#allocation13] sm:$0xff]
        %v4910 = vld [vmem:[#allocation13 + $0x8] sm:$0xff]
        %v4911 = vld [vmem:[#allocation13 + $0x10] sm:$0xff]
        %v4912 = vld [vmem:[#allocation13 + $0x18] sm:$0xff]
        %v4913 = vld [vmem:[#allocation13 + $0x20] sm:$0xff]
        %v4914 = vld [vmem:[#allocation13 + $0x28] sm:$0xff]
        %v4915 = vld [vmem:[#allocation13 + $0x30] sm:$0xff]
        %v4916 = vld [vmem:[#allocation13 + $0x38] sm:$0xff]
        %v4917 = vld [vmem:[#allocation13 + $0x40] sm:$0xff]
        %v4918 = vld [vmem:[#allocation13 + $0x48] sm:$0xff]
        %v4919 = vld [vmem:[#allocation13 + $0x50] sm:$0xff]
        %v4920 = vld [vmem:[#allocation13 + $0x58] sm:$0xff]
        %v4921 = vld [vmem:[#allocation13 + $0x60] sm:$0xff]
        %v4922 = vld [vmem:[#allocation13 + $0x68] sm:$0xff]
        %v4923 = vld [vmem:[#allocation13 + $0x70] sm:$0xff]
        %v4924 = vld [vmem:[#allocation13 + $0x78] sm:$0xff]
        %v4925 = vld [vmem:[#allocation13 + $0x80] sm:$0xff]
        %v4926 = vld [vmem:[#allocation13 + $0x88] sm:$0xff]
        %v4927 = vld [vmem:[#allocation13 + $0x90] sm:$0xff]
        %v4928 = vld [vmem:[#allocation13 + $0x98] sm:$0xff]
        %v4929 = vld [vmem:[#allocation13 + $0xa0] sm:$0xff]
        %v4930 = vld [vmem:[#allocation13 + $0xa8] sm:$0xff]
        %v4931 = vld [vmem:[#allocation13 + $0xb0] sm:$0xff]
        %v4932 = vld [vmem:[#allocation13 + $0xb8] sm:$0xff]
        %v4933 = vld [vmem:[#allocation13 + $0xc0] sm:$0xff]
        %v4934 = vld [vmem:[#allocation13 + $0xc8] sm:$0xff]
        %v4935 = vld [vmem:[#allocation13 + $0xd0] sm:$0xff]
        %v4936 = vld [vmem:[#allocation13 + $0xd8] sm:$0xff]
        %v4937 = vld [vmem:[#allocation13 + $0xe0] sm:$0xff]
        %v4938 = vld [vmem:[#allocation13 + $0xe8] sm:$0xff]
        %v4939 = vld [vmem:[#allocation13 + $0xf0] sm:$0xff]
        %v4940 = vld [vmem:[#allocation13 + $0xf8] sm:$0xff]
        %s4941 = scalar_lea.vmem [#allocation13], 256
        %v4942 = vld [vmem:[%s4941] sm:$0xff]
        %v4943 = vld [vmem:[%s4941 + $0x8] sm:$0xff]
        %v4944 = vld [vmem:[%s4941 + $0x10] sm:$0xff]
        %v4945 = vld [vmem:[%s4941 + $0x18] sm:$0xff]
        %v4946 = vld [vmem:[%s4941 + $0x20] sm:$0xff]
        %v4947 = vld [vmem:[%s4941 + $0x28] sm:$0xff]
        %v4948 = vld [vmem:[%s4941 + $0x30] sm:$0xff]
        %v4949 = vld [vmem:[%s4941 + $0x38] sm:$0xff]
        %v4950 = vld [vmem:[%s4941 + $0x40] sm:$0xff]
        %v4951 = vld [vmem:[%s4941 + $0x48] sm:$0xff]
        %v4952 = vld [vmem:[%s4941 + $0x50] sm:$0xff]
        %v4953 = vld [vmem:[%s4941 + $0x58] sm:$0xff]
        %v4954 = vld [vmem:[%s4941 + $0x60] sm:$0xff]
        %v4955 = vld [vmem:[%s4941 + $0x68] sm:$0xff]
        %v4956 = vld [vmem:[%s4941 + $0x70] sm:$0xff]
        %v4957 = vld [vmem:[%s4941 + $0x78] sm:$0xff]
        %v4958 = vld [vmem:[%s4941 + $0x80] sm:$0xff]
        %v4959 = vld [vmem:[%s4941 + $0x88] sm:$0xff]
        %v4960 = vld [vmem:[%s4941 + $0x90] sm:$0xff]
        %v4961 = vld [vmem:[%s4941 + $0x98] sm:$0xff]
        %v4962 = vld [vmem:[%s4941 + $0xa0] sm:$0xff]
        %v4963 = vld [vmem:[%s4941 + $0xa8] sm:$0xff]
        %v4964 = vld [vmem:[%s4941 + $0xb0] sm:$0xff]
        %v4965 = vld [vmem:[%s4941 + $0xb8] sm:$0xff]
        %v4966 = vld [vmem:[%s4941 + $0xc0] sm:$0xff]
        %v4967 = vld [vmem:[%s4941 + $0xc8] sm:$0xff]
        %v4968 = vld [vmem:[%s4941 + $0xd0] sm:$0xff]
        %v4969 = vld [vmem:[%s4941 + $0xd8] sm:$0xff]
        %v4970 = vld [vmem:[%s4941 + $0xe0] sm:$0xff]
        %v4971 = vld [vmem:[%s4941 + $0xe8] sm:$0xff]
        %v4972 = vld [vmem:[%s4941 + $0xf0] sm:$0xff]
        %v4973 = vld [vmem:[%s4941 + $0xf8] sm:$0xff]
        %v5006 = vunpack.c.l.b16 %v4942
        %v5007 = vunpack.c.h.b16 %v4942
        %v5008 = vunpack.c.l.b16 %v4943
        %v5009 = vunpack.c.h.b16 %v4943
        %v5010 = vunpack.c.l.b16 %v4944
        %v5011 = vunpack.c.h.b16 %v4944
        %v5012 = vunpack.c.l.b16 %v4945
        %v5013 = vunpack.c.h.b16 %v4945
        %v5014 = vunpack.c.l.b16 %v4946
        %v5015 = vunpack.c.h.b16 %v4946
        %v5016 = vunpack.c.l.b16 %v4947
        %v5017 = vunpack.c.h.b16 %v4947
        %v5018 = vunpack.c.l.b16 %v4948
        %v5019 = vunpack.c.h.b16 %v4948
        %v5020 = vunpack.c.l.b16 %v4949
        %v5021 = vunpack.c.h.b16 %v4949
        %v5022 = vunpack.c.l.b16 %v4950
        %v5023 = vunpack.c.h.b16 %v4950
        %v5024 = vunpack.c.l.b16 %v4951
        %v5025 = vunpack.c.h.b16 %v4951
        %v5026 = vunpack.c.l.b16 %v4952
        %v5027 = vunpack.c.h.b16 %v4952
        %v5028 = vunpack.c.l.b16 %v4953
        %v5029 = vunpack.c.h.b16 %v4953
        %v5030 = vunpack.c.l.b16 %v4954
        %v5031 = vunpack.c.h.b16 %v4954
        %v5032 = vunpack.c.l.b16 %v4955
        %v5033 = vunpack.c.h.b16 %v4955
        %v5034 = vunpack.c.l.b16 %v4956
        %v5035 = vunpack.c.h.b16 %v4956
        %v5036 = vunpack.c.l.b16 %v4957
        %v5037 = vunpack.c.h.b16 %v4957
        %v5038 = vunpack.c.l.b16 %v4958
        %v5039 = vunpack.c.h.b16 %v4958
        %v5040 = vunpack.c.l.b16 %v4959
        %v5041 = vunpack.c.h.b16 %v4959
        %v5042 = vunpack.c.l.b16 %v4960
        %v5043 = vunpack.c.h.b16 %v4960
        %v5044 = vunpack.c.l.b16 %v4961
        %v5045 = vunpack.c.h.b16 %v4961
        %v5046 = vunpack.c.l.b16 %v4962
        %v5047 = vunpack.c.h.b16 %v4962
        %v5048 = vunpack.c.l.b16 %v4963
        %v5049 = vunpack.c.h.b16 %v4963
        %v5050 = vunpack.c.l.b16 %v4964
        %v5051 = vunpack.c.h.b16 %v4964
        %v5052 = vunpack.c.l.b16 %v4965
        %v5053 = vunpack.c.h.b16 %v4965
        %v5054 = vunpack.c.l.b16 %v4966
        %v5055 = vunpack.c.h.b16 %v4966
        %v5056 = vunpack.c.l.b16 %v4967
        %v5057 = vunpack.c.h.b16 %v4967
        %v5058 = vunpack.c.l.b16 %v4968
        %v5059 = vunpack.c.h.b16 %v4968
        %v5060 = vunpack.c.l.b16 %v4969
        %v5061 = vunpack.c.h.b16 %v4969
        %v5062 = vunpack.c.l.b16 %v4970
        %v5063 = vunpack.c.h.b16 %v4970
        %v5064 = vunpack.c.l.b16 %v4971
        %v5065 = vunpack.c.h.b16 %v4971
        %v5066 = vunpack.c.l.b16 %v4972
        %v5067 = vunpack.c.h.b16 %v4972
        %v5068 = vunpack.c.l.b16 %v4973
        %v5069 = vunpack.c.h.b16 %v4973
        %v5070 = vpack.c.b16 %v5008, %v5006
        %v5071 = vpack.c.b16 %v5009, %v5007
        %v5072 = vpack.c.b16 %v5012, %v5010
        %v5073 = vpack.c.b16 %v5013, %v5011
        %v5074 = vpack.c.b16 %v5016, %v5014
        %v5075 = vpack.c.b16 %v5017, %v5015
        %v5076 = vpack.c.b16 %v5020, %v5018
        %v5077 = vpack.c.b16 %v5021, %v5019
        %v5078 = vpack.c.b16 %v5024, %v5022
        %v5079 = vpack.c.b16 %v5025, %v5023
        %v5080 = vpack.c.b16 %v5028, %v5026
        %v5081 = vpack.c.b16 %v5029, %v5027
        %v5082 = vpack.c.b16 %v5032, %v5030
        %v5083 = vpack.c.b16 %v5033, %v5031
        %v5084 = vpack.c.b16 %v5036, %v5034
        %v5085 = vpack.c.b16 %v5037, %v5035
        %v5086 = vpack.c.b16 %v5040, %v5038
        %v5087 = vpack.c.b16 %v5041, %v5039
        %v5088 = vpack.c.b16 %v5044, %v5042
        %v5089 = vpack.c.b16 %v5045, %v5043
        %v5090 = vpack.c.b16 %v5048, %v5046
        %v5091 = vpack.c.b16 %v5049, %v5047
        %v5092 = vpack.c.b16 %v5052, %v5050
        %v5093 = vpack.c.b16 %v5053, %v5051
        %v5094 = vpack.c.b16 %v5056, %v5054
        %v5095 = vpack.c.b16 %v5057, %v5055
        %v5096 = vpack.c.b16 %v5060, %v5058
        %v5097 = vpack.c.b16 %v5061, %v5059
        %v5098 = vpack.c.b16 %v5064, %v5062
        %v5099 = vpack.c.b16 %v5065, %v5063
        %v5100 = vpack.c.b16 %v5068, %v5066
        %v5101 = vpack.c.b16 %v5069, %v5067
        %5134 = vmatprep.subr.bf16.mxu0 %v5071
        %5135 = vmatpush1.bf16.msra.mxu0 %v5070
        %5136 = vmatprep.subr.bf16.mxu0 %v5073
        %5137 = vmatpush1.bf16.msra.mxu0 %v5072
        %5138 = vmatprep.subr.bf16.mxu0 %v5075
        %5139 = vmatpush1.bf16.msra.mxu0 %v5074
        %5140 = vmatprep.subr.bf16.mxu0 %v5077
        %5141 = vmatpush1.bf16.msra.mxu0 %v5076
        %5142 = vmatprep.subr.bf16.mxu0 %v5079
        %5143 = vmatpush1.bf16.msra.mxu0 %v5078
        %5144 = vmatprep.subr.bf16.mxu0 %v5081
        %5145 = vmatpush1.bf16.msra.mxu0 %v5080
        %5146 = vmatprep.subr.bf16.mxu0 %v5083
        %5147 = vmatpush1.bf16.msra.mxu0 %v5082
        %5148 = vmatprep.subr.bf16.mxu0 %v5085
        %5149 = vmatpush1.bf16.msra.mxu0 %v5084
        %5150 = vmatprep.subr.bf16.mxu0 %v5087
        %5151 = vmatpush1.bf16.msra.mxu0 %v5086
        %5152 = vmatprep.subr.bf16.mxu0 %v5089
        %5153 = vmatpush1.bf16.msra.mxu0 %v5088
        %5154 = vmatprep.subr.bf16.mxu0 %v5091
        %5155 = vmatpush1.bf16.msra.mxu0 %v5090
        %5156 = vmatprep.subr.bf16.mxu0 %v5093
        %5157 = vmatpush1.bf16.msra.mxu0 %v5092
        %5158 = vmatprep.subr.bf16.mxu0 %v5095
        %5159 = vmatpush1.bf16.msra.mxu0 %v5094
        %5160 = vmatprep.subr.bf16.mxu0 %v5097
        %5161 = vmatpush1.bf16.msra.mxu0 %v5096
        %5162 = vmatprep.subr.bf16.mxu0 %v5099
        %5163 = vmatpush1.bf16.msra.mxu0 %v5098
        %5164 = vmatprep.subr.bf16.mxu0 %v5101
        %5165 = vmatpush1.bf16.msra.mxu0 %v5100
        %5166 = vmatprep.mubr.bf16.mxu0 %v4906
        %5167 = vmatmul.mubr.bf16.gmra.mrb[0].mxu0 %v4905
        %v5168 = vpop.f32.mrb[0].mxu0
        %v5169 = vadd.f32 0.0, %v5168
        %v5170 = vpop.f32.mrb[0].mxu0
        %v5171 = vadd.f32 0.0, %v5170
        %v5172 = vpop.f32.mrb[0].mxu0
        %v5173 = vadd.f32 0.0, %v5172
        %v5174 = vpop.f32.mrb[0].mxu0
        %v5175 = vadd.f32 0.0, %v5174
        %5176 = vmatprep.mubr.bf16.mxu0 %v4908
        %5177 = vmatmul.mubr.bf16.gmra.mrb[0].mxu0 %v4907
        %v5178 = vpop.f32.mrb[0].mxu0
        %v5179 = vadd.f32 0.0, %v5178
        %v5180 = vpop.f32.mrb[0].mxu0
        %v5181 = vadd.f32 0.0, %v5180
        %v5182 = vpop.f32.mrb[0].mxu0
        %v5183 = vadd.f32 0.0, %v5182
        %v5184 = vpop.f32.mrb[0].mxu0
        %v5185 = vadd.f32 0.0, %v5184
        %5186 = vdwg.mxu0
        %v5219 = vunpack.c.l.b16 %v4909
        %v5220 = vunpack.c.h.b16 %v4909
        %v5221 = vunpack.c.l.b16 %v4910
        %v5222 = vunpack.c.h.b16 %v4910
        %v5223 = vunpack.c.l.b16 %v4911
        %v5224 = vunpack.c.h.b16 %v4911
        %v5225 = vunpack.c.l.b16 %v4912
        %v5226 = vunpack.c.h.b16 %v4912
        %v5227 = vunpack.c.l.b16 %v4913
        %v5228 = vunpack.c.h.b16 %v4913
        %v5229 = vunpack.c.l.b16 %v4914
        %v5230 = vunpack.c.h.b16 %v4914
        %v5231 = vunpack.c.l.b16 %v4915
        %v5232 = vunpack.c.h.b16 %v4915
        %v5233 = vunpack.c.l.b16 %v4916
        %v5234 = vunpack.c.h.b16 %v4916
        %v5235 = vunpack.c.l.b16 %v4917
        %v5236 = vunpack.c.h.b16 %v4917
        %v5237 = vunpack.c.l.b16 %v4918
        %v5238 = vunpack.c.h.b16 %v4918
        %v5239 = vunpack.c.l.b16 %v4919
        %v5240 = vunpack.c.h.b16 %v4919
        %v5241 = vunpack.c.l.b16 %v4920
        %v5242 = vunpack.c.h.b16 %v4920
        %v5243 = vunpack.c.l.b16 %v4921
        %v5244 = vunpack.c.h.b16 %v4921
        %v5245 = vunpack.c.l.b16 %v4922
        %v5246 = vunpack.c.h.b16 %v4922
        %v5247 = vunpack.c.l.b16 %v4923
        %v5248 = vunpack.c.h.b16 %v4923
        %v5249 = vunpack.c.l.b16 %v4924
        %v5250 = vunpack.c.h.b16 %v4924
        %v5251 = vunpack.c.l.b16 %v4925
        %v5252 = vunpack.c.h.b16 %v4925
        %v5253 = vunpack.c.l.b16 %v4926
        %v5254 = vunpack.c.h.b16 %v4926
        %v5255 = vunpack.c.l.b16 %v4927
        %v5256 = vunpack.c.h.b16 %v4927
        %v5257 = vunpack.c.l.b16 %v4928
        %v5258 = vunpack.c.h.b16 %v4928
        %v5259 = vunpack.c.l.b16 %v4929
        %v5260 = vunpack.c.h.b16 %v4929
        %v5261 = vunpack.c.l.b16 %v4930
        %v5262 = vunpack.c.h.b16 %v4930
        %v5263 = vunpack.c.l.b16 %v4931
        %v5264 = vunpack.c.h.b16 %v4931
        %v5265 = vunpack.c.l.b16 %v4932
        %v5266 = vunpack.c.h.b16 %v4932
        %v5267 = vunpack.c.l.b16 %v4933
        %v5268 = vunpack.c.h.b16 %v4933
        %v5269 = vunpack.c.l.b16 %v4934
        %v5270 = vunpack.c.h.b16 %v4934
        %v5271 = vunpack.c.l.b16 %v4935
        %v5272 = vunpack.c.h.b16 %v4935
        %v5273 = vunpack.c.l.b16 %v4936
        %v5274 = vunpack.c.h.b16 %v4936
        %v5275 = vunpack.c.l.b16 %v4937
        %v5276 = vunpack.c.h.b16 %v4937
        %v5277 = vunpack.c.l.b16 %v4938
        %v5278 = vunpack.c.h.b16 %v4938
        %v5279 = vunpack.c.l.b16 %v4939
        %v5280 = vunpack.c.h.b16 %v4939
        %v5281 = vunpack.c.l.b16 %v4940
        %v5282 = vunpack.c.h.b16 %v4940
        %v5283 = vpack.c.b16 %v5221, %v5219
        %v5284 = vpack.c.b16 %v5222, %v5220
        %v5285 = vpack.c.b16 %v5225, %v5223
        %v5286 = vpack.c.b16 %v5226, %v5224
        %v5287 = vpack.c.b16 %v5229, %v5227
        %v5288 = vpack.c.b16 %v5230, %v5228
        %v5289 = vpack.c.b16 %v5233, %v5231
        %v5290 = vpack.c.b16 %v5234, %v5232
        %v5291 = vpack.c.b16 %v5237, %v5235
        %v5292 = vpack.c.b16 %v5238, %v5236
        %v5293 = vpack.c.b16 %v5241, %v5239
        %v5294 = vpack.c.b16 %v5242, %v5240
        %v5295 = vpack.c.b16 %v5245, %v5243
        %v5296 = vpack.c.b16 %v5246, %v5244
        %v5297 = vpack.c.b16 %v5249, %v5247
        %v5298 = vpack.c.b16 %v5250, %v5248
        %v5299 = vpack.c.b16 %v5253, %v5251
        %v5300 = vpack.c.b16 %v5254, %v5252
        %v5301 = vpack.c.b16 %v5257, %v5255
        %v5302 = vpack.c.b16 %v5258, %v5256
        %v5303 = vpack.c.b16 %v5261, %v5259
        %v5304 = vpack.c.b16 %v5262, %v5260
        %v5305 = vpack.c.b16 %v5265, %v5263
        %v5306 = vpack.c.b16 %v5266, %v5264
        %v5307 = vpack.c.b16 %v5269, %v5267
        %v5308 = vpack.c.b16 %v5270, %v5268
        %v5309 = vpack.c.b16 %v5273, %v5271
        %v5310 = vpack.c.b16 %v5274, %v5272
        %v5311 = vpack.c.b16 %v5277, %v5275
        %v5312 = vpack.c.b16 %v5278, %v5276
        %v5313 = vpack.c.b16 %v5281, %v5279
        %v5314 = vpack.c.b16 %v5282, %v5280
        %5347 = vmatprep.subr.bf16.mxu0 %v5284
        %5348 = vmatpush1.bf16.msra.mxu0 %v5283
        %5349 = vmatprep.subr.bf16.mxu0 %v5286
        %5350 = vmatpush1.bf16.msra.mxu0 %v5285
        %5351 = vmatprep.subr.bf16.mxu0 %v5288
        %5352 = vmatpush1.bf16.msra.mxu0 %v5287
        %5353 = vmatprep.subr.bf16.mxu0 %v5290
        %5354 = vmatpush1.bf16.msra.mxu0 %v5289
        %5355 = vmatprep.subr.bf16.mxu0 %v5292
        %5356 = vmatpush1.bf16.msra.mxu0 %v5291
        %5357 = vmatprep.subr.bf16.mxu0 %v5294
        %5358 = vmatpush1.bf16.msra.mxu0 %v5293
        %5359 = vmatprep.subr.bf16.mxu0 %v5296
        %5360 = vmatpush1.bf16.msra.mxu0 %v5295
        %5361 = vmatprep.subr.bf16.mxu0 %v5298
        %5362 = vmatpush1.bf16.msra.mxu0 %v5297
        %5363 = vmatprep.subr.bf16.mxu0 %v5300
        %5364 = vmatpush1.bf16.msra.mxu0 %v5299
        %5365 = vmatprep.subr.bf16.mxu0 %v5302
        %5366 = vmatpush1.bf16.msra.mxu0 %v5301
        %5367 = vmatprep.subr.bf16.mxu0 %v5304
        %5368 = vmatpush1.bf16.msra.mxu0 %v5303
        %5369 = vmatprep.subr.bf16.mxu0 %v5306
        %5370 = vmatpush1.bf16.msra.mxu0 %v5305
        %5371 = vmatprep.subr.bf16.mxu0 %v5308
        %5372 = vmatpush1.bf16.msra.mxu0 %v5307
        %5373 = vmatprep.subr.bf16.mxu0 %v5310
        %5374 = vmatpush1.bf16.msra.mxu0 %v5309
        %5375 = vmatprep.subr.bf16.mxu0 %v5312
        %5376 = vmatpush1.bf16.msra.mxu0 %v5311
        %5377 = vmatprep.subr.bf16.mxu0 %v5314
        %5378 = vmatpush1.bf16.msra.mxu0 %v5313
        %5379 = vmatprep.mubr.bf16.mxu0 %v4874
        %5380 = vmatmul.mubr.bf16.gmra.mrb[0].mxu0 %v4873
        %v5381 = vpop.f32.mrb[0].mxu0
        %v5382 = vadd.f32 %v5169, %v5381
        %v5383 = vpop.f32.mrb[0].mxu0
        %v5384 = vadd.f32 %v5171, %v5383
        %v5385 = vpop.f32.mrb[0].mxu0
        %v5386 = vadd.f32 %v5173, %v5385
        %v5387 = vpop.f32.mrb[0].mxu0
        %v5388 = vadd.f32 %v5175, %v5387
        %5389 = vmatprep.mubr.bf16.mxu0 %v4876
        %5390 = vmatmul.mubr.bf16.gmra.mrb[0].mxu0 %v4875
        %v5391 = vpop.f32.mrb[0].mxu0
        %v5392 = vadd.f32 %v5179, %v5391
        %v5393 = vpop.f32.mrb[0].mxu0
        %v5394 = vadd.f32 %v5181, %v5393
        %v5395 = vpop.f32.mrb[0].mxu0
        %v5396 = vadd.f32 %v5183, %v5395
        %v5397 = vpop.f32.mrb[0].mxu0
        %v5398 = vadd.f32 %v5185, %v5397
        %5399 = vdwg.mxu0
        %s5400 = scalar_lea.vmem [#allocation13], 512
        %v5401 = vld [vmem:[%s5400] sm:$0xff]
        %v5402 = vld [vmem:[%s5400 + $0x8] sm:$0xff]
        %v5403 = vld [vmem:[%s5400 + $0x10] sm:$0xff]
        %v5404 = vld [vmem:[%s5400 + $0x18] sm:$0xff]
        %v5405 = vld [vmem:[%s5400 + $0x20] sm:$0xff]
        %v5406 = vld [vmem:[%s5400 + $0x28] sm:$0xff]
        %v5407 = vld [vmem:[%s5400 + $0x30] sm:$0xff]
        %v5408 = vld [vmem:[%s5400 + $0x38] sm:$0xff]
        %v5409 = vld [vmem:[%s5400 + $0x40] sm:$0xff]
        %v5410 = vld [vmem:[%s5400 + $0x48] sm:$0xff]
        %v5411 = vld [vmem:[%s5400 + $0x50] sm:$0xff]
        %v5412 = vld [vmem:[%s5400 + $0x58] sm:$0xff]
        %v5413 = vld [vmem:[%s5400 + $0x60] sm:$0xff]
        %v5414 = vld [vmem:[%s5400 + $0x68] sm:$0xff]
        %v5415 = vld [vmem:[%s5400 + $0x70] sm:$0xff]
        %v5416 = vld [vmem:[%s5400 + $0x78] sm:$0xff]
        %v5417 = vld [vmem:[%s5400 + $0x80] sm:$0xff]
        %v5418 = vld [vmem:[%s5400 + $0x88] sm:$0xff]
        %v5419 = vld [vmem:[%s5400 + $0x90] sm:$0xff]
        %v5420 = vld [vmem:[%s5400 + $0x98] sm:$0xff]
        %v5421 = vld [vmem:[%s5400 + $0xa0] sm:$0xff]
        %v5422 = vld [vmem:[%s5400 + $0xa8] sm:$0xff]
        %v5423 = vld [vmem:[%s5400 + $0xb0] sm:$0xff]
        %v5424 = vld [vmem:[%s5400 + $0xb8] sm:$0xff]
        %v5425 = vld [vmem:[%s5400 + $0xc0] sm:$0xff]
        %v5426 = vld [vmem:[%s5400 + $0xc8] sm:$0xff]
        %v5427 = vld [vmem:[%s5400 + $0xd0] sm:$0xff]
        %v5428 = vld [vmem:[%s5400 + $0xd8] sm:$0xff]
        %v5429 = vld [vmem:[%s5400 + $0xe0] sm:$0xff]
        %v5430 = vld [vmem:[%s5400 + $0xe8] sm:$0xff]
        %v5431 = vld [vmem:[%s5400 + $0xf0] sm:$0xff]
        %v5432 = vld [vmem:[%s5400 + $0xf8] sm:$0xff]
        %v5465 = vunpack.c.l.b16 %v5401
        %v5466 = vunpack.c.h.b16 %v5401
        %v5467 = vunpack.c.l.b16 %v5402
        %v5468 = vunpack.c.h.b16 %v5402
        %v5469 = vunpack.c.l.b16 %v5403
        %v5470 = vunpack.c.h.b16 %v5403
        %v5471 = vunpack.c.l.b16 %v5404
        %v5472 = vunpack.c.h.b16 %v5404
        %v5473 = vunpack.c.l.b16 %v5405
        %v5474 = vunpack.c.h.b16 %v5405
        %v5475 = vunpack.c.l.b16 %v5406
        %v5476 = vunpack.c.h.b16 %v5406
        %v5477 = vunpack.c.l.b16 %v5407
        %v5478 = vunpack.c.h.b16 %v5407
        %v5479 = vunpack.c.l.b16 %v5408
        %v5480 = vunpack.c.h.b16 %v5408
        %v5481 = vunpack.c.l.b16 %v5409
        %v5482 = vunpack.c.h.b16 %v5409
        %v5483 = vunpack.c.l.b16 %v5410
        %v5484 = vunpack.c.h.b16 %v5410
        %v5485 = vunpack.c.l.b16 %v5411
        %v5486 = vunpack.c.h.b16 %v5411
        %v5487 = vunpack.c.l.b16 %v5412
        %v5488 = vunpack.c.h.b16 %v5412
        %v5489 = vunpack.c.l.b16 %v5413
        %v5490 = vunpack.c.h.b16 %v5413
        %v5491 = vunpack.c.l.b16 %v5414
        %v5492 = vunpack.c.h.b16 %v5414
        %v5493 = vunpack.c.l.b16 %v5415
        %v5494 = vunpack.c.h.b16 %v5415
        %v5495 = vunpack.c.l.b16 %v5416
        %v5496 = vunpack.c.h.b16 %v5416
        %v5497 = vunpack.c.l.b16 %v5417
        %v5498 = vunpack.c.h.b16 %v5417
        %v5499 = vunpack.c.l.b16 %v5418
        %v5500 = vunpack.c.h.b16 %v5418
        %v5501 = vunpack.c.l.b16 %v5419
        %v5502 = vunpack.c.h.b16 %v5419
        %v5503 = vunpack.c.l.b16 %v5420
        %v5504 = vunpack.c.h.b16 %v5420
        %v5505 = vunpack.c.l.b16 %v5421
        %v5506 = vunpack.c.h.b16 %v5421
        %v5507 = vunpack.c.l.b16 %v5422
        %v5508 = vunpack.c.h.b16 %v5422
        %v5509 = vunpack.c.l.b16 %v5423
        %v5510 = vunpack.c.h.b16 %v5423
        %v5511 = vunpack.c.l.b16 %v5424
        %v5512 = vunpack.c.h.b16 %v5424
        %v5513 = vunpack.c.l.b16 %v5425
        %v5514 = vunpack.c.h.b16 %v5425
        %v5515 = vunpack.c.l.b16 %v5426
        %v5516 = vunpack.c.h.b16 %v5426
        %v5517 = vunpack.c.l.b16 %v5427
        %v5518 = vunpack.c.h.b16 %v5427
        %v5519 = vunpack.c.l.b16 %v5428
        %v5520 = vunpack.c.h.b16 %v5428
        %v5521 = vunpack.c.l.b16 %v5429
        %v5522 = vunpack.c.h.b16 %v5429
        %v5523 = vunpack.c.l.b16 %v5430
        %v5524 = vunpack.c.h.b16 %v5430
        %v5525 = vunpack.c.l.b16 %v5431
        %v5526 = vunpack.c.h.b16 %v5431
        %v5527 = vunpack.c.l.b16 %v5432
        %v5528 = vunpack.c.h.b16 %v5432
        %v5529 = vpack.c.b16 %v5467, %v5465
        %v5530 = vpack.c.b16 %v5468, %v5466
        %v5531 = vpack.c.b16 %v5471, %v5469
        %v5532 = vpack.c.b16 %v5472, %v5470
        %v5533 = vpack.c.b16 %v5475, %v5473
        %v5534 = vpack.c.b16 %v5476, %v5474
        %v5535 = vpack.c.b16 %v5479, %v5477
        %v5536 = vpack.c.b16 %v5480, %v5478
        %v5537 = vpack.c.b16 %v5483, %v5481
        %v5538 = vpack.c.b16 %v5484, %v5482
        %v5539 = vpack.c.b16 %v5487, %v5485
        %v5540 = vpack.c.b16 %v5488, %v5486
        %v5541 = vpack.c.b16 %v5491, %v5489
        %v5542 = vpack.c.b16 %v5492, %v5490
        %v5543 = vpack.c.b16 %v5495, %v5493
        %v5544 = vpack.c.b16 %v5496, %v5494
        %v5545 = vpack.c.b16 %v5499, %v5497
        %v5546 = vpack.c.b16 %v5500, %v5498
        %v5547 = vpack.c.b16 %v5503, %v5501
        %v5548 = vpack.c.b16 %v5504, %v5502
        %v5549 = vpack.c.b16 %v5507, %v5505
        %v5550 = vpack.c.b16 %v5508, %v5506
        %v5551 = vpack.c.b16 %v5511, %v5509
        %v5552 = vpack.c.b16 %v5512, %v5510
        %v5553 = vpack.c.b16 %v5515, %v5513
        %v5554 = vpack.c.b16 %v5516, %v5514
        %v5555 = vpack.c.b16 %v5519, %v5517
        %v5556 = vpack.c.b16 %v5520, %v5518
        %v5557 = vpack.c.b16 %v5523, %v5521
        %v5558 = vpack.c.b16 %v5524, %v5522
        %v5559 = vpack.c.b16 %v5527, %v5525
        %v5560 = vpack.c.b16 %v5528, %v5526
        %5593 = vmatprep.subr.bf16.mxu0 %v5530
        %5594 = vmatpush1.bf16.msra.mxu0 %v5529
        %5595 = vmatprep.subr.bf16.mxu0 %v5532
        %5596 = vmatpush1.bf16.msra.mxu0 %v5531
        %5597 = vmatprep.subr.bf16.mxu0 %v5534
        %5598 = vmatpush1.bf16.msra.mxu0 %v5533
        %5599 = vmatprep.subr.bf16.mxu0 %v5536
        %5600 = vmatpush1.bf16.msra.mxu0 %v5535
        %5601 = vmatprep.subr.bf16.mxu0 %v5538
        %5602 = vmatpush1.bf16.msra.mxu0 %v5537
        %5603 = vmatprep.subr.bf16.mxu0 %v5540
        %5604 = vmatpush1.bf16.msra.mxu0 %v5539
        %5605 = vmatprep.subr.bf16.mxu0 %v5542
        %5606 = vmatpush1.bf16.msra.mxu0 %v5541
        %5607 = vmatprep.subr.bf16.mxu0 %v5544
        %5608 = vmatpush1.bf16.msra.mxu0 %v5543
        %5609 = vmatprep.subr.bf16.mxu0 %v5546
        %5610 = vmatpush1.bf16.msra.mxu0 %v5545
        %5611 = vmatprep.subr.bf16.mxu0 %v5548
        %5612 = vmatpush1.bf16.msra.mxu0 %v5547
        %5613 = vmatprep.subr.bf16.mxu0 %v5550
        %5614 = vmatpush1.bf16.msra.mxu0 %v5549
        %5615 = vmatprep.subr.bf16.mxu0 %v5552
        %5616 = vmatpush1.bf16.msra.mxu0 %v5551
        %5617 = vmatprep.subr.bf16.mxu0 %v5554
        %5618 = vmatpush1.bf16.msra.mxu0 %v5553
        %5619 = vmatprep.subr.bf16.mxu0 %v5556
        %5620 = vmatpush1.bf16.msra.mxu0 %v5555
        %5621 = vmatprep.subr.bf16.mxu0 %v5558
        %5622 = vmatpush1.bf16.msra.mxu0 %v5557
        %5623 = vmatprep.subr.bf16.mxu0 %v5560
        %5624 = vmatpush1.bf16.msra.mxu0 %v5559
        %5625 = vmatprep.mubr.bf16.mxu0 %v4902
        %5626 = vmatmul.mubr.bf16.gmra.mrb[0].mxu0 %v4901
        %v5627 = vpop.f32.mrb[0].mxu0
        %v5628 = vadd.f32 0.0, %v5627
        %v5629 = vpop.f32.mrb[0].mxu0
        %v5630 = vadd.f32 0.0, %v5629
        %v5631 = vpop.f32.mrb[0].mxu0
        %v5632 = vadd.f32 0.0, %v5631
        %v5633 = vpop.f32.mrb[0].mxu0
        %v5634 = vadd.f32 0.0, %v5633
        %5635 = vmatprep.mubr.bf16.mxu0 %v4904
        %5636 = vmatmul.mubr.bf16.gmra.mrb[0].mxu0 %v4903
        %v5637 = vpop.f32.mrb[0].mxu0
        %v5638 = vadd.f32 0.0, %v5637
        %v5639 = vpop.f32.mrb[0].mxu0
        %v5640 = vadd.f32 0.0, %v5639
        %v5641 = vpop.f32.mrb[0].mxu0
        %v5642 = vadd.f32 0.0, %v5641
        %v5643 = vpop.f32.mrb[0].mxu0
        %v5644 = vadd.f32 0.0, %v5643
        %5645 = vdwg.mxu0
        %v5646 = vadd.f32 %v5382, %v5628
        %v5647 = vadd.f32 %v5384, %v5630
        %v5648 = vadd.f32 %v5386, %v5632
        %v5649 = vadd.f32 %v5388, %v5634
        %v5650 = vadd.f32 %v5392, %v5638
        %v5651 = vadd.f32 %v5394, %v5640
        %v5652 = vadd.f32 %v5396, %v5642
        %v5653 = vadd.f32 %v5398, %v5644
        %v5654 = vld [vmem:[%s16] sm:$0x3]
        %v5656 = vlaneseq
        %v5657 = vshrl.u32 %v5656, 7
        %v5658 = vsub.s32 0, %v5657
        %v5659 = vrot.slane %v5654, %v5658
        %v5660 = vlaneseq
        %v5661 = vshrl.u32 %v5660, 7
        %v5662 = vsub.s32 1, %v5661
        %v5663 = vrot.slane %v5654, %v5662
        %v5666 = vadd.f32 %v5646, %v5659
        %v5667 = vadd.f32 %v5647, %v5663
        %v5668 = vadd.f32 %v5648, %v5659
        %v5669 = vadd.f32 %v5649, %v5663
        %v5670 = vadd.f32 %v5650, %v5659
        %v5671 = vadd.f32 %v5651, %v5663
        %v5672 = vadd.f32 %v5652, %v5659
        %v5673 = vadd.f32 %v5653, %v5663
        %v5674 = vmax.f32 %v5666, 0.0
        %v5675 = vmax.f32 %v5667, 0.0
        %v5676 = vmax.f32 %v5668, 0.0
        %v5677 = vmax.f32 %v5669, 0.0
        %v5678 = vmax.f32 %v5670, 0.0
        %v5679 = vmax.f32 %v5671, 0.0
        %v5680 = vmax.f32 %v5672, 0.0
        %v5681 = vmax.f32 %v5673, 0.0
        %5682 = vst [vmem:[#allocation2] sm:$0xff] %v5674
        %5683 = vst [vmem:[#allocation2 + $0x8] sm:$0xff] %v5675
        %5684 = vst [vmem:[#allocation2 + $0x10] sm:$0xff] %v5676
        %5685 = vst [vmem:[#allocation2 + $0x18] sm:$0xff] %v5677
        %5686 = vst [vmem:[#allocation2 + $0x20] sm:$0xff] %v5678
        %5687 = vst [vmem:[#allocation2 + $0x28] sm:$0xff] %v5679
        %5688 = vst [vmem:[#allocation2 + $0x30] sm:$0xff] %v5680
        %5689 = vst [vmem:[#allocation2 + $0x38] sm:$0xff] %v5681
        %v5690 = vld [vmem:[#allocation2] sm:$0xff]
        %v5691 = vld [vmem:[#allocation2 + $0x8] sm:$0xff]
        %v5692 = vld [vmem:[#allocation2 + $0x10] sm:$0xff]
        %v5693 = vld [vmem:[#allocation2 + $0x18] sm:$0xff]
        %v5694 = vld [vmem:[#allocation2 + $0x20] sm:$0xff]
        %v5695 = vld [vmem:[#allocation2 + $0x28] sm:$0xff]
        %v5696 = vld [vmem:[#allocation2 + $0x30] sm:$0xff]
        %v5697 = vld [vmem:[#allocation2 + $0x38] sm:$0xff]
        %v5698 = vrot.slane %v5690, 7
        %v5699 = vrot.slane %v5691, 7
        %v5700 = vrot.slane %v5692, 7
        %v5701 = vrot.slane %v5693, 7
        %v5702 = vrot.slane %v5694, 7
        %v5703 = vrot.slane %v5695, 7
        %v5704 = vrot.slane %v5696, 7
        %v5705 = vrot.slane %v5697, 7
        %v5706 = vsel %vm906, %v5702, %v5704
        %v5707 = vsel %vm906, %v5703, %v5705
        %v5708 = vsel %vm906, %v5700, %v5702
        %v5709 = vsel %vm906, %v5701, %v5703
        %v5710 = vsel %vm906, %v5698, %v5700
        %v5711 = vsel %vm906, %v5699, %v5701
        %v5712 = vsel %vm906, %v5704, %v5698
        %v5713 = vsel %vm906, %v5705, %v5699
        %v5714 = vsel %vm857, %v5712, 0.0
        %v5715 = vsel %vm857, %v5713, 0.0
        %v5716 = vsel %vm858, %v5710, 0.0
        %v5717 = vsel %vm858, %v5711, 0.0
        %v5718 = vsel %vm859, %v5708, 0.0
        %v5719 = vsel %vm859, %v5709, 0.0
        %v5720 = vsel %vm860, %v5706, 0.0
        %v5721 = vsel %vm860, %v5707, 0.0
        %v5722 = vpack.c.bf16 %v5716, %v5714
        %v5723 = vpack.c.bf16 %v5717, %v5715
        %v5724 = vpack.c.bf16 %v5720, %v5718
        %v5725 = vpack.c.bf16 %v5721, %v5719
        %v5726 = vrot.slane %v5690, 1
        %v5727 = vrot.slane %v5691, 1
        %v5728 = vrot.slane %v5692, 1
        %v5729 = vrot.slane %v5693, 1
        %v5730 = vrot.slane %v5694, 1
        %v5731 = vrot.slane %v5695, 1
        %v5732 = vrot.slane %v5696, 1
        %v5733 = vrot.slane %v5697, 1
        %v5734 = vsel %vm939, %v5730, %v5732
        %v5735 = vsel %vm939, %v5731, %v5733
        %v5736 = vsel %vm939, %v5728, %v5730
        %v5737 = vsel %vm939, %v5729, %v5731
        %v5738 = vsel %vm939, %v5726, %v5728
        %v5739 = vsel %vm939, %v5727, %v5729
        %v5740 = vsel %vm939, %v5732, %v5726
        %v5741 = vsel %vm939, %v5733, %v5727
        %v5742 = vsel %vm865, %v5738, 0.0
        %v5743 = vsel %vm865, %v5739, 0.0
        %v5744 = vsel %vm866, %v5736, 0.0
        %v5745 = vsel %vm866, %v5737, 0.0
        %v5746 = vsel %vm867, %v5734, 0.0
        %v5747 = vsel %vm867, %v5735, 0.0
        %v5748 = vsel %vm868, %v5740, 0.0
        %v5749 = vsel %vm868, %v5741, 0.0
        %v5750 = vpack.c.bf16 %v5744, %v5742
        %v5751 = vpack.c.bf16 %v5745, %v5743
        %v5752 = vpack.c.bf16 %v5748, %v5746
        %v5753 = vpack.c.bf16 %v5749, %v5747
        %v5754 = vpack.c.bf16 %v5692, %v5690
        %v5755 = vpack.c.bf16 %v5693, %v5691
        %v5756 = vpack.c.bf16 %v5696, %v5694
        %v5757 = vpack.c.bf16 %v5697, %v5695
        %v5758 = vld [vmem:[#allocation14] sm:$0xf]
        %v5759 = vld [vmem:[#allocation14 + $0x4] sm:$0xf]
        %v5760 = vld [vmem:[#allocation14 + $0x8] sm:$0xf]
        %v5761 = vld [vmem:[#allocation14 + $0xc] sm:$0xf]
        %v5762 = vld [vmem:[#allocation14 + $0x10] sm:$0xf]
        %v5763 = vld [vmem:[#allocation14 + $0x14] sm:$0xf]
        %v5764 = vld [vmem:[#allocation14 + $0x18] sm:$0xf]
        %v5765 = vld [vmem:[#allocation14 + $0x1c] sm:$0xf]
        %v5766 = vld [vmem:[#allocation14 + $0x20] sm:$0xf]
        %v5767 = vld [vmem:[#allocation14 + $0x24] sm:$0xf]
        %v5768 = vld [vmem:[#allocation14 + $0x28] sm:$0xf]
        %v5769 = vld [vmem:[#allocation14 + $0x2c] sm:$0xf]
        %v5770 = vld [vmem:[#allocation14 + $0x30] sm:$0xf]
        %v5771 = vld [vmem:[#allocation14 + $0x34] sm:$0xf]
        %v5772 = vld [vmem:[#allocation14 + $0x38] sm:$0xf]
        %v5773 = vld [vmem:[#allocation14 + $0x3c] sm:$0xf]
        %v5774 = vld [vmem:[#allocation14 + $0x40] sm:$0xf]
        %v5775 = vld [vmem:[#allocation14 + $0x44] sm:$0xf]
        %v5776 = vld [vmem:[#allocation14 + $0x48] sm:$0xf]
        %v5777 = vld [vmem:[#allocation14 + $0x4c] sm:$0xf]
        %v5778 = vld [vmem:[#allocation14 + $0x50] sm:$0xf]
        %v5779 = vld [vmem:[#allocation14 + $0x54] sm:$0xf]
        %v5780 = vld [vmem:[#allocation14 + $0x58] sm:$0xf]
        %v5781 = vld [vmem:[#allocation14 + $0x5c] sm:$0xf]
        %v5782 = vld [vmem:[#allocation14 + $0x60] sm:$0xf]
        %v5783 = vld [vmem:[#allocation14 + $0x64] sm:$0xf]
        %v5784 = vld [vmem:[#allocation14 + $0x68] sm:$0xf]
        %v5785 = vld [vmem:[#allocation14 + $0x6c] sm:$0xf]
        %v5786 = vld [vmem:[#allocation14 + $0x70] sm:$0xf]
        %v5787 = vld [vmem:[#allocation14 + $0x74] sm:$0xf]
        %v5788 = vld [vmem:[#allocation14 + $0x78] sm:$0xf]
        %v5789 = vld [vmem:[#allocation14 + $0x7c] sm:$0xf]
        %s5790 = scalar_lea.vmem [#allocation14], 128
        %v5791 = vld [vmem:[%s5790] sm:$0xf]
        %v5792 = vld [vmem:[%s5790 + $0x4] sm:$0xf]
        %v5793 = vld [vmem:[%s5790 + $0x8] sm:$0xf]
        %v5794 = vld [vmem:[%s5790 + $0xc] sm:$0xf]
        %v5795 = vld [vmem:[%s5790 + $0x10] sm:$0xf]
        %v5796 = vld [vmem:[%s5790 + $0x14] sm:$0xf]
        %v5797 = vld [vmem:[%s5790 + $0x18] sm:$0xf]
        %v5798 = vld [vmem:[%s5790 + $0x1c] sm:$0xf]
        %v5799 = vld [vmem:[%s5790 + $0x20] sm:$0xf]
        %v5800 = vld [vmem:[%s5790 + $0x24] sm:$0xf]
        %v5801 = vld [vmem:[%s5790 + $0x28] sm:$0xf]
        %v5802 = vld [vmem:[%s5790 + $0x2c] sm:$0xf]
        %v5803 = vld [vmem:[%s5790 + $0x30] sm:$0xf]
        %v5804 = vld [vmem:[%s5790 + $0x34] sm:$0xf]
        %v5805 = vld [vmem:[%s5790 + $0x38] sm:$0xf]
        %v5806 = vld [vmem:[%s5790 + $0x3c] sm:$0xf]
        %v5807 = vld [vmem:[%s5790 + $0x40] sm:$0xf]
        %v5808 = vld [vmem:[%s5790 + $0x44] sm:$0xf]
        %v5809 = vld [vmem:[%s5790 + $0x48] sm:$0xf]
        %v5810 = vld [vmem:[%s5790 + $0x4c] sm:$0xf]
        %v5811 = vld [vmem:[%s5790 + $0x50] sm:$0xf]
        %v5812 = vld [vmem:[%s5790 + $0x54] sm:$0xf]
        %v5813 = vld [vmem:[%s5790 + $0x58] sm:$0xf]
        %v5814 = vld [vmem:[%s5790 + $0x5c] sm:$0xf]
        %v5815 = vld [vmem:[%s5790 + $0x60] sm:$0xf]
        %v5816 = vld [vmem:[%s5790 + $0x64] sm:$0xf]
        %v5817 = vld [vmem:[%s5790 + $0x68] sm:$0xf]
        %v5818 = vld [vmem:[%s5790 + $0x6c] sm:$0xf]
        %v5819 = vld [vmem:[%s5790 + $0x70] sm:$0xf]
        %v5820 = vld [vmem:[%s5790 + $0x74] sm:$0xf]
        %v5821 = vld [vmem:[%s5790 + $0x78] sm:$0xf]
        %v5822 = vld [vmem:[%s5790 + $0x7c] sm:$0xf]
        %v5855 = vunpack.c.l.b16 %v5791
        %v5856 = vunpack.c.l.b16 %v5792
        %v5857 = vunpack.c.l.b16 %v5793
        %v5858 = vunpack.c.l.b16 %v5794
        %v5859 = vunpack.c.l.b16 %v5795
        %v5860 = vunpack.c.l.b16 %v5796
        %v5861 = vunpack.c.l.b16 %v5797
        %v5862 = vunpack.c.l.b16 %v5798
        %v5863 = vunpack.c.l.b16 %v5799
        %v5864 = vunpack.c.l.b16 %v5800
        %v5865 = vunpack.c.l.b16 %v5801
        %v5866 = vunpack.c.l.b16 %v5802
        %v5867 = vunpack.c.l.b16 %v5803
        %v5868 = vunpack.c.l.b16 %v5804
        %v5869 = vunpack.c.l.b16 %v5805
        %v5870 = vunpack.c.l.b16 %v5806
        %v5871 = vunpack.c.l.b16 %v5807
        %v5872 = vunpack.c.l.b16 %v5808
        %v5873 = vunpack.c.l.b16 %v5809
        %v5874 = vunpack.c.l.b16 %v5810
        %v5875 = vunpack.c.l.b16 %v5811
        %v5876 = vunpack.c.l.b16 %v5812
        %v5877 = vunpack.c.l.b16 %v5813
        %v5878 = vunpack.c.l.b16 %v5814
        %v5879 = vunpack.c.l.b16 %v5815
        %v5880 = vunpack.c.l.b16 %v5816
        %v5881 = vunpack.c.l.b16 %v5817
        %v5882 = vunpack.c.l.b16 %v5818
        %v5883 = vunpack.c.l.b16 %v5819
        %v5884 = vunpack.c.l.b16 %v5820
        %v5885 = vunpack.c.l.b16 %v5821
        %v5886 = vunpack.c.l.b16 %v5822
        %v5887 = vpack.c.b16 %v5856, %v5855
        %v5888 = vpack.c.b16 %v5858, %v5857
        %v5889 = vpack.c.b16 %v5860, %v5859
        %v5890 = vpack.c.b16 %v5862, %v5861
        %v5891 = vpack.c.b16 %v5864, %v5863
        %v5892 = vpack.c.b16 %v5866, %v5865
        %v5893 = vpack.c.b16 %v5868, %v5867
        %v5894 = vpack.c.b16 %v5870, %v5869
        %v5895 = vpack.c.b16 %v5872, %v5871
        %v5896 = vpack.c.b16 %v5874, %v5873
        %v5897 = vpack.c.b16 %v5876, %v5875
        %v5898 = vpack.c.b16 %v5878, %v5877
        %v5899 = vpack.c.b16 %v5880, %v5879
        %v5900 = vpack.c.b16 %v5882, %v5881
        %v5901 = vpack.c.b16 %v5884, %v5883
        %v5902 = vpack.c.b16 %v5886, %v5885
        %5919 = vmatprep.subr.bf16.mxu0 0
        %5920 = vmatpush1.bf16.msra.mxu0 %v5887
        %5921 = vmatprep.subr.bf16.mxu0 0
        %5922 = vmatpush1.bf16.msra.mxu0 %v5888
        %5923 = vmatprep.subr.bf16.mxu0 0
        %5924 = vmatpush1.bf16.msra.mxu0 %v5889
        %5925 = vmatprep.subr.bf16.mxu0 0
        %5926 = vmatpush1.bf16.msra.mxu0 %v5890
        %5927 = vmatprep.subr.bf16.mxu0 0
        %5928 = vmatpush1.bf16.msra.mxu0 %v5891
        %5929 = vmatprep.subr.bf16.mxu0 0
        %5930 = vmatpush1.bf16.msra.mxu0 %v5892
        %5931 = vmatprep.subr.bf16.mxu0 0
        %5932 = vmatpush1.bf16.msra.mxu0 %v5893
        %5933 = vmatprep.subr.bf16.mxu0 0
        %5934 = vmatpush1.bf16.msra.mxu0 %v5894
        %5935 = vmatprep.subr.bf16.mxu0 0
        %5936 = vmatpush1.bf16.msra.mxu0 %v5895
        %5937 = vmatprep.subr.bf16.mxu0 0
        %5938 = vmatpush1.bf16.msra.mxu0 %v5896
        %5939 = vmatprep.subr.bf16.mxu0 0
        %5940 = vmatpush1.bf16.msra.mxu0 %v5897
        %5941 = vmatprep.subr.bf16.mxu0 0
        %5942 = vmatpush1.bf16.msra.mxu0 %v5898
        %5943 = vmatprep.subr.bf16.mxu0 0
        %5944 = vmatpush1.bf16.msra.mxu0 %v5899
        %5945 = vmatprep.subr.bf16.mxu0 0
        %5946 = vmatpush1.bf16.msra.mxu0 %v5900
        %5947 = vmatprep.subr.bf16.mxu0 0
        %5948 = vmatpush1.bf16.msra.mxu0 %v5901
        %5949 = vmatprep.subr.bf16.mxu0 0
        %5950 = vmatpush1.bf16.msra.mxu0 %v5902
        %5951 = vmatprep.mubr.bf16.mxu0 %v5755
        %5952 = vmatmul.mubr.bf16.gmra.mrb[0].mxu0 %v5754
        %v5953 = vpop.f32.mrb[0].mxu0
        %v5954 = vadd.f32 0.0, %v5953
        %v5955 = vpop.f32.mrb[0].mxu0
        %v5956 = vpop.f32.mrb[0].mxu0
        %v5957 = vadd.f32 0.0, %v5956
        %v5958 = vpop.f32.mrb[0].mxu0
        %5959 = vmatprep.mubr.bf16.mxu0 %v5757
        %5960 = vmatmul.mubr.bf16.gmra.mrb[0].mxu0 %v5756
        %v5961 = vpop.f32.mrb[0].mxu0
        %v5962 = vadd.f32 0.0, %v5961
        %v5963 = vpop.f32.mrb[0].mxu0
        %v5964 = vpop.f32.mrb[0].mxu0
        %v5965 = vadd.f32 0.0, %v5964
        %v5966 = vpop.f32.mrb[0].mxu0
        %5967 = vdwg.mxu0
        %v6000 = vunpack.c.l.b16 %v5758
        %v6001 = vunpack.c.l.b16 %v5759
        %v6002 = vunpack.c.l.b16 %v5760
        %v6003 = vunpack.c.l.b16 %v5761
        %v6004 = vunpack.c.l.b16 %v5762
        %v6005 = vunpack.c.l.b16 %v5763
        %v6006 = vunpack.c.l.b16 %v5764
        %v6007 = vunpack.c.l.b16 %v5765
        %v6008 = vunpack.c.l.b16 %v5766
        %v6009 = vunpack.c.l.b16 %v5767
        %v6010 = vunpack.c.l.b16 %v5768
        %v6011 = vunpack.c.l.b16 %v5769
        %v6012 = vunpack.c.l.b16 %v5770
        %v6013 = vunpack.c.l.b16 %v5771
        %v6014 = vunpack.c.l.b16 %v5772
        %v6015 = vunpack.c.l.b16 %v5773
        %v6016 = vunpack.c.l.b16 %v5774
        %v6017 = vunpack.c.l.b16 %v5775
        %v6018 = vunpack.c.l.b16 %v5776
        %v6019 = vunpack.c.l.b16 %v5777
        %v6020 = vunpack.c.l.b16 %v5778
        %v6021 = vunpack.c.l.b16 %v5779
        %v6022 = vunpack.c.l.b16 %v5780
        %v6023 = vunpack.c.l.b16 %v5781
        %v6024 = vunpack.c.l.b16 %v5782
        %v6025 = vunpack.c.l.b16 %v5783
        %v6026 = vunpack.c.l.b16 %v5784
        %v6027 = vunpack.c.l.b16 %v5785
        %v6028 = vunpack.c.l.b16 %v5786
        %v6029 = vunpack.c.l.b16 %v5787
        %v6030 = vunpack.c.l.b16 %v5788
        %v6031 = vunpack.c.l.b16 %v5789
        %v6032 = vpack.c.b16 %v6001, %v6000
        %v6033 = vpack.c.b16 %v6003, %v6002
        %v6034 = vpack.c.b16 %v6005, %v6004
        %v6035 = vpack.c.b16 %v6007, %v6006
        %v6036 = vpack.c.b16 %v6009, %v6008
        %v6037 = vpack.c.b16 %v6011, %v6010
        %v6038 = vpack.c.b16 %v6013, %v6012
        %v6039 = vpack.c.b16 %v6015, %v6014
        %v6040 = vpack.c.b16 %v6017, %v6016
        %v6041 = vpack.c.b16 %v6019, %v6018
        %v6042 = vpack.c.b16 %v6021, %v6020
        %v6043 = vpack.c.b16 %v6023, %v6022
        %v6044 = vpack.c.b16 %v6025, %v6024
        %v6045 = vpack.c.b16 %v6027, %v6026
        %v6046 = vpack.c.b16 %v6029, %v6028
        %v6047 = vpack.c.b16 %v6031, %v6030
        %6064 = vmatprep.subr.bf16.mxu0 0
        %6065 = vmatpush1.bf16.msra.mxu0 %v6032
        %6066 = vmatprep.subr.bf16.mxu0 0
        %6067 = vmatpush1.bf16.msra.mxu0 %v6033
        %6068 = vmatprep.subr.bf16.mxu0 0
        %6069 = vmatpush1.bf16.msra.mxu0 %v6034
        %6070 = vmatprep.subr.bf16.mxu0 0
        %6071 = vmatpush1.bf16.msra.mxu0 %v6035
        %6072 = vmatprep.subr.bf16.mxu0 0
        %6073 = vmatpush1.bf16.msra.mxu0 %v6036
        %6074 = vmatprep.subr.bf16.mxu0 0
        %6075 = vmatpush1.bf16.msra.mxu0 %v6037
        %6076 = vmatprep.subr.bf16.mxu0 0
        %6077 = vmatpush1.bf16.msra.mxu0 %v6038
        %6078 = vmatprep.subr.bf16.mxu0 0
        %6079 = vmatpush1.bf16.msra.mxu0 %v6039
        %6080 = vmatprep.subr.bf16.mxu0 0
        %6081 = vmatpush1.bf16.msra.mxu0 %v6040
        %6082 = vmatprep.subr.bf16.mxu0 0
        %6083 = vmatpush1.bf16.msra.mxu0 %v6041
        %6084 = vmatprep.subr.bf16.mxu0 0
        %6085 = vmatpush1.bf16.msra.mxu0 %v6042
        %6086 = vmatprep.subr.bf16.mxu0 0
        %6087 = vmatpush1.bf16.msra.mxu0 %v6043
        %6088 = vmatprep.subr.bf16.mxu0 0
        %6089 = vmatpush1.bf16.msra.mxu0 %v6044
        %6090 = vmatprep.subr.bf16.mxu0 0
        %6091 = vmatpush1.bf16.msra.mxu0 %v6045
        %6092 = vmatprep.subr.bf16.mxu0 0
        %6093 = vmatpush1.bf16.msra.mxu0 %v6046
        %6094 = vmatprep.subr.bf16.mxu0 0
        %6095 = vmatpush1.bf16.msra.mxu0 %v6047
        %6096 = vmatprep.mubr.bf16.mxu0 %v5723
        %6097 = vmatmul.mubr.bf16.gmra.mrb[0].mxu0 %v5722
        %v6098 = vpop.f32.mrb[0].mxu0
        %v6099 = vadd.f32 %v5954, %v6098
        %v6100 = vpop.f32.mrb[0].mxu0
        %v6101 = vpop.f32.mrb[0].mxu0
        %v6102 = vadd.f32 %v5957, %v6101
        %v6103 = vpop.f32.mrb[0].mxu0
        %6104 = vmatprep.mubr.bf16.mxu0 %v5725
        %6105 = vmatmul.mubr.bf16.gmra.mrb[0].mxu0 %v5724
        %v6106 = vpop.f32.mrb[0].mxu0
        %v6107 = vadd.f32 %v5962, %v6106
        %v6108 = vpop.f32.mrb[0].mxu0
        %v6109 = vpop.f32.mrb[0].mxu0
        %v6110 = vadd.f32 %v5965, %v6109
        %v6111 = vpop.f32.mrb[0].mxu0
        %6112 = vdwg.mxu0
        %s6113 = scalar_lea.vmem [#allocation14], 256
        %v6114 = vld [vmem:[%s6113] sm:$0xf]
        %v6115 = vld [vmem:[%s6113 + $0x4] sm:$0xf]
        %v6116 = vld [vmem:[%s6113 + $0x8] sm:$0xf]
        %v6117 = vld [vmem:[%s6113 + $0xc] sm:$0xf]
        %v6118 = vld [vmem:[%s6113 + $0x10] sm:$0xf]
        %v6119 = vld [vmem:[%s6113 + $0x14] sm:$0xf]
        %v6120 = vld [vmem:[%s6113 + $0x18] sm:$0xf]
        %v6121 = vld [vmem:[%s6113 + $0x1c] sm:$0xf]
        %v6122 = vld [vmem:[%s6113 + $0x20] sm:$0xf]
        %v6123 = vld [vmem:[%s6113 + $0x24] sm:$0xf]
        %v6124 = vld [vmem:[%s6113 + $0x28] sm:$0xf]
        %v6125 = vld [vmem:[%s6113 + $0x2c] sm:$0xf]
        %v6126 = vld [vmem:[%s6113 + $0x30] sm:$0xf]
        %v6127 = vld [vmem:[%s6113 + $0x34] sm:$0xf]
        %v6128 = vld [vmem:[%s6113 + $0x38] sm:$0xf]
        %v6129 = vld [vmem:[%s6113 + $0x3c] sm:$0xf]
        %v6130 = vld [vmem:[%s6113 + $0x40] sm:$0xf]
        %v6131 = vld [vmem:[%s6113 + $0x44] sm:$0xf]
        %v6132 = vld [vmem:[%s6113 + $0x48] sm:$0xf]
        %v6133 = vld [vmem:[%s6113 + $0x4c] sm:$0xf]
        %v6134 = vld [vmem:[%s6113 + $0x50] sm:$0xf]
        %v6135 = vld [vmem:[%s6113 + $0x54] sm:$0xf]
        %v6136 = vld [vmem:[%s6113 + $0x58] sm:$0xf]
        %v6137 = vld [vmem:[%s6113 + $0x5c] sm:$0xf]
        %v6138 = vld [vmem:[%s6113 + $0x60] sm:$0xf]
        %v6139 = vld [vmem:[%s6113 + $0x64] sm:$0xf]
        %v6140 = vld [vmem:[%s6113 + $0x68] sm:$0xf]
        %v6141 = vld [vmem:[%s6113 + $0x6c] sm:$0xf]
        %v6142 = vld [vmem:[%s6113 + $0x70] sm:$0xf]
        %v6143 = vld [vmem:[%s6113 + $0x74] sm:$0xf]
        %v6144 = vld [vmem:[%s6113 + $0x78] sm:$0xf]
        %v6145 = vld [vmem:[%s6113 + $0x7c] sm:$0xf]
        %v6178 = vunpack.c.l.b16 %v6114
        %v6179 = vunpack.c.l.b16 %v6115
        %v6180 = vunpack.c.l.b16 %v6116
        %v6181 = vunpack.c.l.b16 %v6117
        %v6182 = vunpack.c.l.b16 %v6118
        %v6183 = vunpack.c.l.b16 %v6119
        %v6184 = vunpack.c.l.b16 %v6120
        %v6185 = vunpack.c.l.b16 %v6121
        %v6186 = vunpack.c.l.b16 %v6122
        %v6187 = vunpack.c.l.b16 %v6123
        %v6188 = vunpack.c.l.b16 %v6124
        %v6189 = vunpack.c.l.b16 %v6125
        %v6190 = vunpack.c.l.b16 %v6126
        %v6191 = vunpack.c.l.b16 %v6127
        %v6192 = vunpack.c.l.b16 %v6128
        %v6193 = vunpack.c.l.b16 %v6129
        %v6194 = vunpack.c.l.b16 %v6130
        %v6195 = vunpack.c.l.b16 %v6131
        %v6196 = vunpack.c.l.b16 %v6132
        %v6197 = vunpack.c.l.b16 %v6133
        %v6198 = vunpack.c.l.b16 %v6134
        %v6199 = vunpack.c.l.b16 %v6135
        %v6200 = vunpack.c.l.b16 %v6136
        %v6201 = vunpack.c.l.b16 %v6137
        %v6202 = vunpack.c.l.b16 %v6138
        %v6203 = vunpack.c.l.b16 %v6139
        %v6204 = vunpack.c.l.b16 %v6140
        %v6205 = vunpack.c.l.b16 %v6141
        %v6206 = vunpack.c.l.b16 %v6142
        %v6207 = vunpack.c.l.b16 %v6143
        %v6208 = vunpack.c.l.b16 %v6144
        %v6209 = vunpack.c.l.b16 %v6145
        %v6210 = vpack.c.b16 %v6179, %v6178
        %v6211 = vpack.c.b16 %v6181, %v6180
        %v6212 = vpack.c.b16 %v6183, %v6182
        %v6213 = vpack.c.b16 %v6185, %v6184
        %v6214 = vpack.c.b16 %v6187, %v6186
        %v6215 = vpack.c.b16 %v6189, %v6188
        %v6216 = vpack.c.b16 %v6191, %v6190
        %v6217 = vpack.c.b16 %v6193, %v6192
        %v6218 = vpack.c.b16 %v6195, %v6194
        %v6219 = vpack.c.b16 %v6197, %v6196
        %v6220 = vpack.c.b16 %v6199, %v6198
        %v6221 = vpack.c.b16 %v6201, %v6200
        %v6222 = vpack.c.b16 %v6203, %v6202
        %v6223 = vpack.c.b16 %v6205, %v6204
        %v6224 = vpack.c.b16 %v6207, %v6206
        %v6225 = vpack.c.b16 %v6209, %v6208
        %6242 = vmatprep.subr.bf16.mxu0 0
        %6243 = vmatpush1.bf16.msra.mxu0 %v6210
        %6244 = vmatprep.subr.bf16.mxu0 0
        %6245 = vmatpush1.bf16.msra.mxu0 %v6211
        %6246 = vmatprep.subr.bf16.mxu0 0
        %6247 = vmatpush1.bf16.msra.mxu0 %v6212
        %6248 = vmatprep.subr.bf16.mxu0 0
        %6249 = vmatpush1.bf16.msra.mxu0 %v6213
        %6250 = vmatprep.subr.bf16.mxu0 0
        %6251 = vmatpush1.bf16.msra.mxu0 %v6214
        %6252 = vmatprep.subr.bf16.mxu0 0
        %6253 = vmatpush1.bf16.msra.mxu0 %v6215
        %6254 = vmatprep.subr.bf16.mxu0 0
        %6255 = vmatpush1.bf16.msra.mxu0 %v6216
        %6256 = vmatprep.subr.bf16.mxu0 0
        %6257 = vmatpush1.bf16.msra.mxu0 %v6217
        %6258 = vmatprep.subr.bf16.mxu0 0
        %6259 = vmatpush1.bf16.msra.mxu0 %v6218
        %6260 = vmatprep.subr.bf16.mxu0 0
        %6261 = vmatpush1.bf16.msra.mxu0 %v6219
        %6262 = vmatprep.subr.bf16.mxu0 0
        %6263 = vmatpush1.bf16.msra.mxu0 %v6220
        %6264 = vmatprep.subr.bf16.mxu0 0
        %6265 = vmatpush1.bf16.msra.mxu0 %v6221
        %6266 = vmatprep.subr.bf16.mxu0 0
        %6267 = vmatpush1.bf16.msra.mxu0 %v6222
        %6268 = vmatprep.subr.bf16.mxu0 0
        %6269 = vmatpush1.bf16.msra.mxu0 %v6223
        %6270 = vmatprep.subr.bf16.mxu0 0
        %6271 = vmatpush1.bf16.msra.mxu0 %v6224
        %6272 = vmatprep.subr.bf16.mxu0 0
        %6273 = vmatpush1.bf16.msra.mxu0 %v6225
        %6274 = vmatprep.mubr.bf16.mxu0 %v5751
        %6275 = vmatmul.mubr.bf16.gmra.mrb[0].mxu0 %v5750
        %v6276 = vpop.f32.mrb[0].mxu0
        %v6277 = vadd.f32 0.0, %v6276
        %v6278 = vpop.f32.mrb[0].mxu0
        %v6279 = vpop.f32.mrb[0].mxu0
        %v6280 = vadd.f32 0.0, %v6279
        %v6281 = vpop.f32.mrb[0].mxu0
        %6282 = vmatprep.mubr.bf16.mxu0 %v5753
        %6283 = vmatmul.mubr.bf16.gmra.mrb[0].mxu0 %v5752
        %v6284 = vpop.f32.mrb[0].mxu0
        %v6285 = vadd.f32 0.0, %v6284
        %v6286 = vpop.f32.mrb[0].mxu0
        %v6287 = vpop.f32.mrb[0].mxu0
        %v6288 = vadd.f32 0.0, %v6287
        %v6289 = vpop.f32.mrb[0].mxu0
        %6290 = vdwg.mxu0
        %v6291 = vadd.f32 %v6099, %v6277
        %v6292 = vadd.f32 %v6102, %v6280
        %v6293 = vadd.f32 %v6107, %v6285
        %v6294 = vadd.f32 %v6110, %v6288
        %v6295 = vld [vmem:[%s18] sm:$0x1]
        %v6297 = vlaneseq
        %v6298 = vshrl.u32 %v6297, 7
        %v6299 = vsub.s32 0, %v6298
        %v6300 = vrot.slane %v6295, %v6299
        %v6302 = vadd.f32 %v6291, %v6300
        %v6303 = vadd.f32 %v6292, %v6300
        %v6304 = vadd.f32 %v6293, %v6300
        %v6305 = vadd.f32 %v6294, %v6300
        %v6306 = vmax.f32 %v6302, 0.0
        %v6307 = vmax.f32 %v6303, 0.0
        %v6308 = vmax.f32 %v6304, 0.0
        %v6309 = vmax.f32 %v6305, 0.0
        %6310 = vst [vmem:[#allocation2] sm:$0xff] %v6306
        %6311 = vst [vmem:[#allocation2 + $0x10] sm:$0xff] %v6307
        %6312 = vst [vmem:[#allocation2 + $0x20] sm:$0xff] %v6308
        %6313 = vst [vmem:[#allocation2 + $0x30] sm:$0xff] %v6309
        %v6314 = vld [vmem:[#allocation2] sm:$0xff]
        %v6315 = vld [vmem:[#allocation2 + $0x10] sm:$0xff]
        %v6316 = vld [vmem:[#allocation2 + $0x20] sm:$0xff]
        %v6317 = vld [vmem:[#allocation2 + $0x30] sm:$0xff]
        %v6318 = vrot.slane %v6314, 7
        %v6319 = vrot.slane %v6315, 7
        %v6320 = vrot.slane %v6316, 7
        %v6321 = vrot.slane %v6317, 7
        %v6322 = vsel %vm906, %v6320, %v6321
        %v6323 = vsel %vm906, %v6319, %v6320
        %v6324 = vsel %vm906, %v6318, %v6319
        %v6325 = vsel %vm906, %v6321, %v6318
        %v6326 = vsel %vm857, %v6325, 0.0
        %v6327 = vsel %vm858, %v6324, 0.0
        %v6328 = vsel %vm859, %v6323, 0.0
        %v6329 = vsel %vm860, %v6322, 0.0
        %v6330 = vpack.c.bf16 %v6327, %v6326
        %v6331 = vpack.c.bf16 %v6329, %v6328
        %v6332 = vrot.slane %v6314, 1
        %v6333 = vrot.slane %v6315, 1
        %v6334 = vrot.slane %v6316, 1
        %v6335 = vrot.slane %v6317, 1
        %v6336 = vsel %vm939, %v6334, %v6335
        %v6337 = vsel %vm939, %v6333, %v6334
        %v6338 = vsel %vm939, %v6332, %v6333
        %v6339 = vsel %vm939, %v6335, %v6332
        %v6340 = vsel %vm865, %v6338, 0.0
        %v6341 = vsel %vm866, %v6337, 0.0
        %v6342 = vsel %vm867, %v6336, 0.0
        %v6343 = vsel %vm868, %v6339, 0.0
        %v6344 = vpack.c.bf16 %v6341, %v6340
        %v6345 = vpack.c.bf16 %v6343, %v6342
        %v6346 = vpack.c.bf16 %v6315, %v6314
        %v6347 = vpack.c.bf16 %v6317, %v6316
        %v6348 = vld [vmem:[#allocation16] sm:$0xf]
        %v6349 = vld [vmem:[#allocation16 + $0x4] sm:$0xf]
        %v6350 = vld [vmem:[#allocation16 + $0x8] sm:$0xf]
        %v6351 = vld [vmem:[#allocation16 + $0xc] sm:$0xf]
        %v6352 = vld [vmem:[#allocation16 + $0x10] sm:$0xf]
        %v6353 = vld [vmem:[#allocation16 + $0x14] sm:$0xf]
        %v6354 = vld [vmem:[#allocation16 + $0x18] sm:$0xf]
        %v6355 = vld [vmem:[#allocation16 + $0x1c] sm:$0xf]
        %v6356 = vld [vmem:[#allocation16 + $0x20] sm:$0xf]
        %v6357 = vld [vmem:[#allocation16 + $0x24] sm:$0xf]
        %v6358 = vld [vmem:[#allocation16 + $0x28] sm:$0xf]
        %v6359 = vld [vmem:[#allocation16 + $0x2c] sm:$0xf]
        %v6360 = vld [vmem:[#allocation16 + $0x30] sm:$0xf]
        %v6361 = vld [vmem:[#allocation16 + $0x34] sm:$0xf]
        %v6362 = vld [vmem:[#allocation16 + $0x38] sm:$0xf]
        %v6363 = vld [vmem:[#allocation16 + $0x3c] sm:$0xf]
        %s6364 = scalar_lea.vmem [#allocation16], 64
        %v6365 = vld [vmem:[%s6364] sm:$0xf]
        %v6366 = vld [vmem:[%s6364 + $0x4] sm:$0xf]
        %v6367 = vld [vmem:[%s6364 + $0x8] sm:$0xf]
        %v6368 = vld [vmem:[%s6364 + $0xc] sm:$0xf]
        %v6369 = vld [vmem:[%s6364 + $0x10] sm:$0xf]
        %v6370 = vld [vmem:[%s6364 + $0x14] sm:$0xf]
        %v6371 = vld [vmem:[%s6364 + $0x18] sm:$0xf]
        %v6372 = vld [vmem:[%s6364 + $0x1c] sm:$0xf]
        %v6373 = vld [vmem:[%s6364 + $0x20] sm:$0xf]
        %v6374 = vld [vmem:[%s6364 + $0x24] sm:$0xf]
        %v6375 = vld [vmem:[%s6364 + $0x28] sm:$0xf]
        %v6376 = vld [vmem:[%s6364 + $0x2c] sm:$0xf]
        %v6377 = vld [vmem:[%s6364 + $0x30] sm:$0xf]
        %v6378 = vld [vmem:[%s6364 + $0x34] sm:$0xf]
        %v6379 = vld [vmem:[%s6364 + $0x38] sm:$0xf]
        %v6380 = vld [vmem:[%s6364 + $0x3c] sm:$0xf]
        %v6397 = vunpack.c.l.b16 %v6365
        %v6398 = vunpack.c.l.b16 %v6366
        %v6399 = vunpack.c.l.b16 %v6367
        %v6400 = vunpack.c.l.b16 %v6368
        %v6401 = vunpack.c.l.b16 %v6369
        %v6402 = vunpack.c.l.b16 %v6370
        %v6403 = vunpack.c.l.b16 %v6371
        %v6404 = vunpack.c.l.b16 %v6372
        %v6405 = vunpack.c.l.b16 %v6373
        %v6406 = vunpack.c.l.b16 %v6374
        %v6407 = vunpack.c.l.b16 %v6375
        %v6408 = vunpack.c.l.b16 %v6376
        %v6409 = vunpack.c.l.b16 %v6377
        %v6410 = vunpack.c.l.b16 %v6378
        %v6411 = vunpack.c.l.b16 %v6379
        %v6412 = vunpack.c.l.b16 %v6380
        %v6413 = vpack.c.b16 %v6398, %v6397
        %v6414 = vpack.c.b16 %v6400, %v6399
        %v6415 = vpack.c.b16 %v6402, %v6401
        %v6416 = vpack.c.b16 %v6404, %v6403
        %v6417 = vpack.c.b16 %v6406, %v6405
        %v6418 = vpack.c.b16 %v6408, %v6407
        %v6419 = vpack.c.b16 %v6410, %v6409
        %v6420 = vpack.c.b16 %v6412, %v6411
        %6429 = vmatprep.subr.bf16.mxu0 0
        %6430 = vmatpush1.bf16.msra.mxu0 %v6413
        %6431 = vmatprep.subr.bf16.mxu0 0
        %6432 = vmatpush1.bf16.msra.mxu0 %v6414
        %6433 = vmatprep.subr.bf16.mxu0 0
        %6434 = vmatpush1.bf16.msra.mxu0 %v6415
        %6435 = vmatprep.subr.bf16.mxu0 0
        %6436 = vmatpush1.bf16.msra.mxu0 %v6416
        %6437 = vmatprep.subr.bf16.mxu0 0
        %6438 = vmatpush1.bf16.msra.mxu0 %v6417
        %6439 = vmatprep.subr.bf16.mxu0 0
        %6440 = vmatpush1.bf16.msra.mxu0 %v6418
        %6441 = vmatprep.subr.bf16.mxu0 0
        %6442 = vmatpush1.bf16.msra.mxu0 %v6419
        %6443 = vmatprep.subr.bf16.mxu0 0
        %6444 = vmatpush1.bf16.msra.mxu0 %v6420
        %6445 = vmatprep.subr.bf16.mxu0 0
        %6446 = vmatpush1.bf16.msra.mxu0 0
        %6447 = vmatprep.subr.bf16.mxu0 0
        %6448 = vmatpush1.bf16.msra.mxu0 0
        %6449 = vmatprep.subr.bf16.mxu0 0
        %6450 = vmatpush1.bf16.msra.mxu0 0
        %6451 = vmatprep.subr.bf16.mxu0 0
        %6452 = vmatpush1.bf16.msra.mxu0 0
        %6453 = vmatprep.subr.bf16.mxu0 0
        %6454 = vmatpush1.bf16.msra.mxu0 0
        %6455 = vmatprep.subr.bf16.mxu0 0
        %6456 = vmatpush1.bf16.msra.mxu0 0
        %6457 = vmatprep.subr.bf16.mxu0 0
        %6458 = vmatpush1.bf16.msra.mxu0 0
        %6459 = vmatprep.subr.bf16.mxu0 0
        %6460 = vmatpush1.bf16.msra.mxu0 0
        %6461 = vmatprep.mubr.bf16.mxu0 0
        %6462 = vmatmul.mubr.bf16.gmra.mrb[0].mxu0 %v6346
        %v6463 = vpop.f32.mrb[0].mxu0
        %v6464 = vadd.f32 0.0, %v6463
        %v6465 = vpop.f32.mrb[0].mxu0
        %v6466 = vpop.f32.mrb[0].mxu0
        %v6467 = vadd.f32 0.0, %v6466
        %v6468 = vpop.f32.mrb[0].mxu0
        %6469 = vmatprep.mubr.bf16.mxu0 0
        %6470 = vmatmul.mubr.bf16.gmra.mrb[0].mxu0 %v6347
        %v6471 = vpop.f32.mrb[0].mxu0
        %v6472 = vadd.f32 0.0, %v6471
        %v6473 = vpop.f32.mrb[0].mxu0
        %v6474 = vpop.f32.mrb[0].mxu0
        %v6475 = vadd.f32 0.0, %v6474
        %v6476 = vpop.f32.mrb[0].mxu0
        %6477 = vdwg.mxu0
        %v6494 = vunpack.c.l.b16 %v6348
        %v6495 = vunpack.c.l.b16 %v6349
        %v6496 = vunpack.c.l.b16 %v6350
        %v6497 = vunpack.c.l.b16 %v6351
        %v6498 = vunpack.c.l.b16 %v6352
        %v6499 = vunpack.c.l.b16 %v6353
        %v6500 = vunpack.c.l.b16 %v6354
        %v6501 = vunpack.c.l.b16 %v6355
        %v6502 = vunpack.c.l.b16 %v6356
        %v6503 = vunpack.c.l.b16 %v6357
        %v6504 = vunpack.c.l.b16 %v6358
        %v6505 = vunpack.c.l.b16 %v6359
        %v6506 = vunpack.c.l.b16 %v6360
        %v6507 = vunpack.c.l.b16 %v6361
        %v6508 = vunpack.c.l.b16 %v6362
        %v6509 = vunpack.c.l.b16 %v6363
        %v6510 = vpack.c.b16 %v6495, %v6494
        %v6511 = vpack.c.b16 %v6497, %v6496
        %v6512 = vpack.c.b16 %v6499, %v6498
        %v6513 = vpack.c.b16 %v6501, %v6500
        %v6514 = vpack.c.b16 %v6503, %v6502
        %v6515 = vpack.c.b16 %v6505, %v6504
        %v6516 = vpack.c.b16 %v6507, %v6506
        %v6517 = vpack.c.b16 %v6509, %v6508
        %6526 = vmatprep.subr.bf16.mxu0 0
        %6527 = vmatpush1.bf16.msra.mxu0 %v6510
        %6528 = vmatprep.subr.bf16.mxu0 0
        %6529 = vmatpush1.bf16.msra.mxu0 %v6511
        %6530 = vmatprep.subr.bf16.mxu0 0
        %6531 = vmatpush1.bf16.msra.mxu0 %v6512
        %6532 = vmatprep.subr.bf16.mxu0 0
        %6533 = vmatpush1.bf16.msra.mxu0 %v6513
        %6534 = vmatprep.subr.bf16.mxu0 0
        %6535 = vmatpush1.bf16.msra.mxu0 %v6514
        %6536 = vmatprep.subr.bf16.mxu0 0
        %6537 = vmatpush1.bf16.msra.mxu0 %v6515
        %6538 = vmatprep.subr.bf16.mxu0 0
        %6539 = vmatpush1.bf16.msra.mxu0 %v6516
        %6540 = vmatprep.subr.bf16.mxu0 0
        %6541 = vmatpush1.bf16.msra.mxu0 %v6517
        %6542 = vmatprep.subr.bf16.mxu0 0
        %6543 = vmatpush1.bf16.msra.mxu0 0
        %6544 = vmatprep.subr.bf16.mxu0 0
        %6545 = vmatpush1.bf16.msra.mxu0 0
        %6546 = vmatprep.subr.bf16.mxu0 0
        %6547 = vmatpush1.bf16.msra.mxu0 0
        %6548 = vmatprep.subr.bf16.mxu0 0
        %6549 = vmatpush1.bf16.msra.mxu0 0
        %6550 = vmatprep.subr.bf16.mxu0 0
        %6551 = vmatpush1.bf16.msra.mxu0 0
        %6552 = vmatprep.subr.bf16.mxu0 0
        %6553 = vmatpush1.bf16.msra.mxu0 0
        %6554 = vmatprep.subr.bf16.mxu0 0
        %6555 = vmatpush1.bf16.msra.mxu0 0
        %6556 = vmatprep.subr.bf16.mxu0 0
        %6557 = vmatpush1.bf16.msra.mxu0 0
        %6558 = vmatprep.mubr.bf16.mxu0 0
        %6559 = vmatmul.mubr.bf16.gmra.mrb[0].mxu0 %v6330
        %v6560 = vpop.f32.mrb[0].mxu0
        %v6561 = vadd.f32 %v6464, %v6560
        %v6562 = vpop.f32.mrb[0].mxu0
        %v6563 = vpop.f32.mrb[0].mxu0
        %v6564 = vadd.f32 %v6467, %v6563
        %v6565 = vpop.f32.mrb[0].mxu0
        %6566 = vmatprep.mubr.bf16.mxu0 0
        %6567 = vmatmul.mubr.bf16.gmra.mrb[0].mxu0 %v6331
        %v6568 = vpop.f32.mrb[0].mxu0
        %v6569 = vadd.f32 %v6472, %v6568
        %v6570 = vpop.f32.mrb[0].mxu0
        %v6571 = vpop.f32.mrb[0].mxu0
        %v6572 = vadd.f32 %v6475, %v6571
        %v6573 = vpop.f32.mrb[0].mxu0
        %6574 = vdwg.mxu0
        %s6575 = scalar_lea.vmem [#allocation16], 128
        %v6576 = vld [vmem:[%s6575] sm:$0xf]
        %v6577 = vld [vmem:[%s6575 + $0x4] sm:$0xf]
        %v6578 = vld [vmem:[%s6575 + $0x8] sm:$0xf]
        %v6579 = vld [vmem:[%s6575 + $0xc] sm:$0xf]
        %v6580 = vld [vmem:[%s6575 + $0x10] sm:$0xf]
        %v6581 = vld [vmem:[%s6575 + $0x14] sm:$0xf]
        %v6582 = vld [vmem:[%s6575 + $0x18] sm:$0xf]
        %v6583 = vld [vmem:[%s6575 + $0x1c] sm:$0xf]
        %v6584 = vld [vmem:[%s6575 + $0x20] sm:$0xf]
        %v6585 = vld [vmem:[%s6575 + $0x24] sm:$0xf]
        %v6586 = vld [vmem:[%s6575 + $0x28] sm:$0xf]
        %v6587 = vld [vmem:[%s6575 + $0x2c] sm:$0xf]
        %v6588 = vld [vmem:[%s6575 + $0x30] sm:$0xf]
        %v6589 = vld [vmem:[%s6575 + $0x34] sm:$0xf]
        %v6590 = vld [vmem:[%s6575 + $0x38] sm:$0xf]
        %v6591 = vld [vmem:[%s6575 + $0x3c] sm:$0xf]
        %v6608 = vunpack.c.l.b16 %v6576
        %v6609 = vunpack.c.l.b16 %v6577
        %v6610 = vunpack.c.l.b16 %v6578
        %v6611 = vunpack.c.l.b16 %v6579
        %v6612 = vunpack.c.l.b16 %v6580
        %v6613 = vunpack.c.l.b16 %v6581
        %v6614 = vunpack.c.l.b16 %v6582
        %v6615 = vunpack.c.l.b16 %v6583
        %v6616 = vunpack.c.l.b16 %v6584
        %v6617 = vunpack.c.l.b16 %v6585
        %v6618 = vunpack.c.l.b16 %v6586
        %v6619 = vunpack.c.l.b16 %v6587
        %v6620 = vunpack.c.l.b16 %v6588
        %v6621 = vunpack.c.l.b16 %v6589
        %v6622 = vunpack.c.l.b16 %v6590
        %v6623 = vunpack.c.l.b16 %v6591
        %v6624 = vpack.c.b16 %v6609, %v6608
        %v6625 = vpack.c.b16 %v6611, %v6610
        %v6626 = vpack.c.b16 %v6613, %v6612
        %v6627 = vpack.c.b16 %v6615, %v6614
        %v6628 = vpack.c.b16 %v6617, %v6616
        %v6629 = vpack.c.b16 %v6619, %v6618
        %v6630 = vpack.c.b16 %v6621, %v6620
        %v6631 = vpack.c.b16 %v6623, %v6622
        %6640 = vmatprep.subr.bf16.mxu0 0
        %6641 = vmatpush1.bf16.msra.mxu0 %v6624
        %6642 = vmatprep.subr.bf16.mxu0 0
        %6643 = vmatpush1.bf16.msra.mxu0 %v6625
        %6644 = vmatprep.subr.bf16.mxu0 0
        %6645 = vmatpush1.bf16.msra.mxu0 %v6626
        %6646 = vmatprep.subr.bf16.mxu0 0
        %6647 = vmatpush1.bf16.msra.mxu0 %v6627
        %6648 = vmatprep.subr.bf16.mxu0 0
        %6649 = vmatpush1.bf16.msra.mxu0 %v6628
        %6650 = vmatprep.subr.bf16.mxu0 0
        %6651 = vmatpush1.bf16.msra.mxu0 %v6629
        %6652 = vmatprep.subr.bf16.mxu0 0
        %6653 = vmatpush1.bf16.msra.mxu0 %v6630
        %6654 = vmatprep.subr.bf16.mxu0 0
        %6655 = vmatpush1.bf16.msra.mxu0 %v6631
        %6656 = vmatprep.subr.bf16.mxu0 0
        %6657 = vmatpush1.bf16.msra.mxu0 0
        %6658 = vmatprep.subr.bf16.mxu0 0
        %6659 = vmatpush1.bf16.msra.mxu0 0
        %6660 = vmatprep.subr.bf16.mxu0 0
        %6661 = vmatpush1.bf16.msra.mxu0 0
        %6662 = vmatprep.subr.bf16.mxu0 0
        %6663 = vmatpush1.bf16.msra.mxu0 0
        %6664 = vmatprep.subr.bf16.mxu0 0
        %6665 = vmatpush1.bf16.msra.mxu0 0
        %6666 = vmatprep.subr.bf16.mxu0 0
        %6667 = vmatpush1.bf16.msra.mxu0 0
        %6668 = vmatprep.subr.bf16.mxu0 0
        %6669 = vmatpush1.bf16.msra.mxu0 0
        %6670 = vmatprep.subr.bf16.mxu0 0
        %6671 = vmatpush1.bf16.msra.mxu0 0
        %6672 = vmatprep.mubr.bf16.mxu0 0
        %6673 = vmatmul.mubr.bf16.gmra.mrb[0].mxu0 %v6344
        %v6674 = vpop.f32.mrb[0].mxu0
        %v6675 = vadd.f32 0.0, %v6674
        %v6676 = vpop.f32.mrb[0].mxu0
        %v6677 = vpop.f32.mrb[0].mxu0
        %v6678 = vadd.f32 0.0, %v6677
        %v6679 = vpop.f32.mrb[0].mxu0
        %6680 = vmatprep.mubr.bf16.mxu0 0
        %6681 = vmatmul.mubr.bf16.gmra.mrb[0].mxu0 %v6345
        %v6682 = vpop.f32.mrb[0].mxu0
        %v6683 = vadd.f32 0.0, %v6682
        %v6684 = vpop.f32.mrb[0].mxu0
        %v6685 = vpop.f32.mrb[0].mxu0
        %v6686 = vadd.f32 0.0, %v6685
        %v6687 = vpop.f32.mrb[0].mxu0
        %6688 = vdwg.mxu0
        %v6689 = vadd.f32 %v6561, %v6675
        %v6690 = vadd.f32 %v6564, %v6678
        %v6691 = vadd.f32 %v6569, %v6683
        %v6692 = vadd.f32 %v6572, %v6686
        %v6693 = vld [vmem:[%s20] sm:$0x1]
        %v6695 = vlaneseq
        %v6696 = vshrl.u32 %v6695, 7
        %v6697 = vsub.s32 0, %v6696
        %v6698 = vrot.slane %v6693, %v6697
        %v6700 = vadd.f32 %v6689, %v6698
        %v6701 = vadd.f32 %v6690, %v6698
        %v6702 = vadd.f32 %v6691, %v6698
        %v6703 = vadd.f32 %v6692, %v6698
        %6704 = vst [vmem:[%s789] sm:$0xff] %v6700
        %6705 = vst [vmem:[%s789 + $0x8] sm:$0xff] %v6701
        %6706 = vst [vmem:[%s789 + $0x10] sm:$0xff] %v6702
        %6707 = vst [vmem:[%s789 + $0x18] sm:$0xff] %v6703
        %s6708 = smul.u32 4, %s37
        %p6709 = scmp.lt.s32.totalorder %s6708, 7
        %s6710 = scalar_select %p6709, %s6708, 7
        %s6711 = smul.addr %s6710, 8
        %s6712 = scalar_lea.vmem %s21, %s6711
        // Predicated region
        $region141: #{deconvnet_forward.1} parent=103 // pred_check
          %p6713 = pneg %p501
        $region142: #{deconvnet_forward.1} parent=103 // pred_check_branch
          %6715 = sbr.rel (%p6713) target = $region144
        $region143: #{deconvnet_forward.1} parent=103 // pred_region
          %s6716 = smul.u32 4, %s37
        $region144: #{deconvnet_forward.1} parent=103 // pred_fallthru
          _
      $region104: #{deconvnet_forward.1} parent=5 // pred_fallthru
        _
      %p6717 = scmp.le.s32.totalorder 2, %s32
      // Predicated region
      $region145: #{deconvnet_forward.1} parent=5 // pred_check
        %p6718 = pneg %p6717
      $region146: #{deconvnet_forward.1} parent=5 // pred_check_branch
        %6720 = sbr.rel (%p6718) target = $region148
      $region147: #{deconvnet_forward.1} parent=5 // pred_region
        %s6721 = ssub.s32 %s32, 2
        // Predicated region
        $region149: #{deconvnet_forward.1} parent=147 // pred_check
          %p6722 = pneg %p507
        $region150: #{deconvnet_forward.1} parent=147 // pred_check_branch
          %6724 = sbr.rel (%p6722) target = $region152
        $region151: #{deconvnet_forward.1} parent=147 // pred_region
          %s6725 = smul.u32 4, %s38
          %p6726 = scmp.lt.s32.totalorder %s6725, 7
          %s6727 = scalar_select %p6726, %s6725, 7
          %s6728 = smul.addr %s6727, 8
          %s6729 = scalar_lea.vmem %s21, %s6728
        $region152: #{deconvnet_forward.1} parent=147 // pred_fallthru
          _
      $region148: #{deconvnet_forward.1} parent=5 // pred_fallthru
        _
    $region6: #{deconvnet_forward.1} parent=1 // loop_footer
      %s36 = sadd.s32 1, %s32
    $region7: #{deconvnet_forward.1} parent=1 // loop_footer_branch
      %31 = sbr.rel target = $region3
    $region8: #{deconvnet_forward.1} parent=1 // loop_exit
      _
    %6730 = vsyncpa [#allocation4], 1
    %s6731 = scalar_lea.sflag [#allocation4], 1
    %6732 = vsyncpa %s6731, 1
    %6733 = vsyncpa [#allocation6], 1
    %6734 = vsyncpa [#allocation9], 1
    %6735 = vsyncpa [#allocation12], 1
    %6736 = vsyncpa [#allocation15], 1

</llo_original>
